<compile_context>
chip_gen: v7x
topology: tpu7x:2x2x1
jax: 0.10.0
libtpu: 0.0.40
codegen_flags: <defaults>
</compile_context>

<pallas_src>
from functools import partial

import jax
import jax.numpy as jnp
from jax import lax
from jax.experimental import pallas as pl
from jax.experimental.pallas import tpu as pltpu

MXU_INPUT_DTYPE = jnp.float32  # set to jnp.bfloat16 on v6e/v7x (relax the 1e-3 check)


# ---------------------------------------------------------------------------
# Fused inception kernel (per batch element)
# ---------------------------------------------------------------------------
def _make_inception_kernel(H, W, Cin, out1, mid3, out3, mid5, out5, pool,
                           compute_dtype):
    K1 = out1 + mid3 + mid5          # fused 1x1 output width
    Ctot = out1 + out3 + out5 + pool
    Wp3, Wp5 = W + 2, W + 4          # padded widths of the conv scratches
    cd = compute_dtype
    f32 = jnp.float32
    NEG = -jnp.inf

    def kernel(x_ref, w1_ref, b1_ref, w3_ref, b3_ref, w5_ref, b5_ref,
               wp_ref, bp_ref, o_ref, t3p_ref, t5p_ref):
        x = x_ref[0]                                        # (H, W, Cin) unpadded
        xf = x.reshape(H * W, Cin).astype(cd)               # W % 8 == 0 -> layout-free fold

        # ---- fused 1x1 branches: branch1 + 3x3-reduce + 5x5-reduce (one matmul)
        y1 = jnp.dot(xf, w1_ref[...], preferred_element_type=f32) + b1_ref[...]
        y1 = jnp.maximum(y1, 0.0)                           # (H*W, K1), post-ReLU

        # ---- branch2: 3x3 conv (stride 1, pad 1) on the mid3 activations -----
        # Zero only the halo border (interior is fully overwritten each step).
        t3p_ref[0:1, :, :] = jnp.zeros((1, Wp3, mid3), cd)
        t3p_ref[H + 1:H + 2, :, :] = jnp.zeros((1, Wp3, mid3), cd)
        t3p_ref[1:1 + H, 0:1, :] = jnp.zeros((H, 1, mid3), cd)
        t3p_ref[1:1 + H, W + 1:W + 2, :] = jnp.zeros((H, 1, mid3), cd)
        t3p_ref[1:1 + H, 1:1 + W, :] = (
            y1[:, out1:out1 + mid3].reshape(H, W, mid3).astype(cd))

        acc3 = None
        for kh in range(3):
            band = t3p_ref[kh:kh + H]                       # (H, Wp3, mid3), one load per kh
            win = jnp.concatenate([band[:, kw:kw + W, :] for kw in range(3)],
                                  axis=-1)                  # (H, W, 3*mid3): deeper-K dot
            part = jnp.dot(win.reshape(H * W, 3 * mid3),
                           w3_ref[kh * 3 * mid3:(kh + 1) * 3 * mid3, :],
                           preferred_element_type=f32)
            acc3 = part if acc3 is None else acc3 + part
        o3 = jnp.maximum(acc3 + b3_ref[...], 0.0)           # bias added once, post-loop

        # ---- branch3: 5x5 conv (stride 1, pad 2) on the mid5 activations -----
        t5p_ref[0:2, :, :] = jnp.zeros((2, Wp5, mid5), cd)
        t5p_ref[H + 2:H + 4, :, :] = jnp.zeros((2, Wp5, mid5), cd)
        t5p_ref[2:2 + H, 0:2, :] = jnp.zeros((H, 2, mid5), cd)
        t5p_ref[2:2 + H, W + 2:W + 4, :] = jnp.zeros((H, 2, mid5), cd)
        t5p_ref[2:2 + H, 2:2 + W, :] = (
            y1[:, out1 + mid3:K1].reshape(H, W, mid5).astype(cd))

        acc5 = None
        for kh in range(5):
            band = t5p_ref[kh:kh + H]                       # (H, Wp5, mid5)
            win = jnp.concatenate([band[:, kw:kw + W, :] for kw in range(5)],
                                  axis=-1)                  # (H, W, 5*mid5)
            part = jnp.dot(win.reshape(H * W, 5 * mid5),
                           w5_ref[kh * 5 * mid5:(kh + 1) * 5 * mid5, :],
                           preferred_element_type=f32)
            acc5 = part if acc5 is None else acc5 + part
        o5 = jnp.maximum(acc5 + b5_ref[...], 0.0)

        # ---- branch4: separable 3x3/s1/p1 max-pool fused with the 1x1 conv ---
        # Borders handled in-kernel with -inf edges (no padded HBM copy of x).
        ninf_col = jnp.full((H, 1, Cin), NEG, x.dtype)
        left = jnp.concatenate([ninf_col, x[:, :W - 1, :]], axis=1)
        right = jnp.concatenate([x[:, 1:, :], ninf_col], axis=1)
        rmax = jnp.maximum(jnp.maximum(left, x), right)     # row-direction max of 3
        ninf_row = jnp.full((1, W, Cin), NEG, x.dtype)
        up = jnp.concatenate([ninf_row, rmax[:H - 1]], axis=0)
        down = jnp.concatenate([rmax[1:], ninf_row], axis=0)
        pooled = jnp.maximum(jnp.maximum(up, rmax), down)   # (H, W, Cin)
        yp = jnp.dot(pooled.reshape(H * W, Cin).astype(cd), wp_ref[...],
                     preferred_element_type=f32) + bp_ref[...]
        o4 = jnp.maximum(yp, 0.0)

        # ---- single concatenated store (no per-branch masked channel slices) --
        out_cat = jnp.concatenate([y1[:, 0:out1], o3, o5, o4], axis=-1)  # (H*W, Ctot)
        o_ref[0] = out_cat.reshape(H, W, Ctot).astype(o_ref.dtype)

    return kernel


def inception_pallas(x, w1, b1, w3, b3, w5, b5, wp, bp, dims,
                     compute_dtype=MXU_INPUT_DTYPE):
    N, H, W, Cin = x.shape
    out1, mid3, out3, mid5, out5, pool = dims
    Ctot = out1 + out3 + out5 + pool

    kernel = _make_inception_kernel(H, W, Cin, out1, mid3, out3, mid5, out5,
                                    pool, compute_dtype)

    flops = 2 * N * H * W * (Cin * (out1 + mid3 + mid5)
                             + 9 * mid3 * out3 + 25 * mid5 * out5 + Cin * pool)
    bytes_accessed = (4 * x.size + 4 * N * H * W * Ctot
                      + sum(int(a.size) * a.dtype.itemsize
                            for a in (w1, b1, w3, b3, w5, b5, wp, bp)))

    # Weights/biases: memory_space-only specs => whole array resident in VMEM,
    # no double-buffering of constant-index blocks (VMEM headroom on v7x).
    def _resident():
        return pl.BlockSpec(memory_space=pltpu.MemorySpace.VMEM)

    return pl.pallas_call(
        kernel,
        out_shape=jax.ShapeDtypeStruct((N, H, W, Ctot), x.dtype),
        grid=(N,),
        in_specs=[
            pl.BlockSpec((1, H, W, Cin), lambda n: (n, 0, 0, 0)),   # x, read once
            _resident(), _resident(),   # w1, b1
            _resident(), _resident(),   # w3, b3
            _resident(), _resident(),   # w5, b5
            _resident(), _resident(),   # wp, bp
        ],
        out_specs=pl.BlockSpec((1, H, W, Ctot), lambda n: (n, 0, 0, 0)),
        scratch_shapes=[
            pltpu.VMEM((H + 2, W + 2, mid3), compute_dtype),  # zero-halo 3x3 input
            pltpu.VMEM((H + 4, W + 4, mid5), compute_dtype),  # zero-halo 5x5 input
        ],
        compiler_params=pltpu.CompilerParams(
            dimension_semantics=("parallel",),
            # 48 MiB: comfortably above the default scoped cap on v5e/v6e (bigger
            # whole-image tiles at real sizes) while leaving headroom on v7x (64 MiB).
            vmem_limit_bytes=48 * 1024 * 1024,
        ),
        cost_estimate=pl.CostEstimate(flops=flops, transcendentals=0,
                                      bytes_accessed=bytes_accessed),
    )(x, w1, b1, w3, b3, w5, b5, wp, bp)


# ---------------------------------------------------------------------------
# Parameters (PyTorch layout) and one-time MXU-ready prep
# ---------------------------------------------------------------------------
def init_params(key, in_dim, out_dim_1, mid_dim_3, out_dim_3,
                mid_dim_5, out_dim_5, pool_dim):
    def conv_p(k, cout, cin, ksz):
        kw, kb = jax.random.split(k)
        fan_in = cin * ksz * ksz
        bound = 1.0 / (fan_in ** 0.5)
        w = jax.random.uniform(kw, (cout, cin, ksz, ksz), jnp.float32, -bound, bound)
        b = jax.random.uniform(kb, (cout,), jnp.float32, -bound, bound)
        return w, b

    keys = jax.random.split(key, 6)
    return {
        "b1":   conv_p(keys[0], out_dim_1, in_dim, 1),
        "b2_1": conv_p(keys[1], mid_dim_3, in_dim, 1),
        "b2_3": conv_p(keys[2], out_dim_3, mid_dim_3, 3),
        "b3_1": conv_p(keys[3], mid_dim_5, in_dim, 1),
        "b3_5": conv_p(keys[4], out_dim_5, mid_dim_5, 5),
        "b4":   conv_p(keys[5], pool_dim, in_dim, 1),
    }


def prep_params(params, compute_dtype=MXU_INPUT_DTYPE):
    """One-time weight re-layout: fuse 1x1 weights, tap-major (K*K*Cin, Cout),
    pre-cast to the MXU input dtype (no in-kernel weight casts)."""
    def c1_2d(w):  # (cout, cin, 1, 1) -> (cin, cout)
        return jnp.transpose(w[:, :, 0, 0], (1, 0))

    w_b1, b_b1 = params["b1"]
    w_b21, b_b21 = params["b2_1"]
    w_b23, b_b23 = params["b2_3"]
    w_b31, b_b31 = params["b3_1"]
    w_b35, b_b35 = params["b3_5"]
    w_b4, b_b4 = params["b4"]

    out1 = w_b1.shape[0]
    out3, mid3 = w_b23.shape[0], w_b23.shape[1]
    out5, mid5 = w_b35.shape[0], w_b35.shape[1]
    pool = w_b4.shape[0]

    prepped = {
        "w1": jnp.concatenate([c1_2d(w_b1), c1_2d(w_b21), c1_2d(w_b31)],
                              axis=1).astype(compute_dtype),
        "b1": jnp.concatenate([b_b1, b_b21, b_b31]).reshape(1, -1).astype(jnp.float32),
        # tap-major, cin-inner rows: ((kh*K + kw)*Cin + cin, cout)
        "w3": jnp.transpose(w_b23, (2, 3, 1, 0)).reshape(9 * mid3, out3).astype(compute_dtype),
        "b3": b_b23.reshape(1, -1).astype(jnp.float32),
        "w5": jnp.transpose(w_b35, (2, 3, 1, 0)).reshape(25 * mid5, out5).astype(compute_dtype),
        "b5": b_b35.reshape(1, -1).astype(jnp.float32),
        "wp": c1_2d(w_b4).astype(compute_dtype),
        "bp": b_b4.reshape(1, -1).astype(jnp.float32),
    }
    dims = (out1, mid3, out3, mid5, out5, pool)
    return prepped, dims


@partial(jax.jit, static_argnames=("dims",))
def inception_forward(prepped, x_nchw, dims):
    # NCHW -> NHWC only at the module boundary; NO padding passes in the wrapper.
    x = jnp.transpose(x_nchw, (0, 2, 3, 1))
    out = inception_pallas(
        x,
        prepped["w1"], prepped["b1"], prepped["w3"], prepped["b3"],
        prepped["w5"], prepped["b5"], prepped["wp"], prepped["bp"], dims)
    return jnp.transpose(out, (0, 3, 1, 2))                           # NHWC -> NCHW


# ---------------------------------------------------------------------------
# Pure-JAX reference (for correctness check)
# ---------------------------------------------------------------------------
def _conv_ref(x, w, b, pad):
    y = lax.conv_general_dilated(x, w, (1, 1), [(pad, pad), (pad, pad)],
                                 dimension_numbers=("NCHW", "OIHW", "NCHW"))
    return jax.nn.relu(y + b.reshape(1, -1, 1, 1))


def inception_ref(params, x):
    w, b = params["b1"];   o1 = _conv_ref(x, w, b, 0)
    w, b = params["b2_1"]; t = _conv_ref(x, w, b, 0)
    w, b = params["b2_3"]; o2 = _conv_ref(t, w, b, 1)
    w, b = params["b3_1"]; t = _conv_ref(x, w, b, 0)
    w, b = params["b3_5"]; o3 = _conv_ref(t, w, b, 2)
    p = lax.reduce_window(x, -jnp.inf, lax.max, (1, 1, 3, 3), (1, 1, 1, 1),
                          [(0, 0), (0, 0), (1, 1), (1, 1)])
    w, b = params["b4"];   o4 = _conv_ref(p, w, b, 0)
    return jnp.concatenate([o1, o2, o3, o4], axis=1)


if __name__ == "__main__":
    key = jax.random.PRNGKey(0)
    kx, kp = jax.random.split(key)

    in_dim, out_dim_1 = 4, 8
    mid_dim_3, out_dim_3 = 4, 8
    mid_dim_5, out_dim_5 = 4, 8
    pool_dim = 8

    x = jax.random.normal(kx, (2, in_dim, 16, 16), jnp.float32)   # NCHW like PyTorch
    params = init_params(kp, in_dim, out_dim_1, mid_dim_3, out_dim_3,
                         mid_dim_5, out_dim_5, pool_dim)
    prepped, dims = prep_params(params)

    out = inception_forward(prepped, x, dims)
    out = jax.block_until_ready(out)

    assert out.shape == (2, out_dim_1 + out_dim_3 + out_dim_5 + pool_dim, 16, 16)
    ref = inception_ref(params, x)
    assert float(jnp.max(jnp.abs(out - ref))) < 1e-3

    print("KERNEL_OK")
</pallas_src>

<mosaic_0001>
module attributes {stable_mosaic.version = 11 : i64} {
  func.func @kernel(%arg0: i32, %arg1: memref<1x16x16x4xf32, #tpu.memory_space<vmem>>, %arg2: memref<4x16xf32, #tpu.memory_space<vmem>>, %arg3: memref<1x16xf32, #tpu.memory_space<vmem>>, %arg4: memref<36x8xf32, #tpu.memory_space<vmem>>, %arg5: memref<1x8xf32, #tpu.memory_space<vmem>>, %arg6: memref<100x8xf32, #tpu.memory_space<vmem>>, %arg7: memref<1x8xf32, #tpu.memory_space<vmem>>, %arg8: memref<4x8xf32, #tpu.memory_space<vmem>>, %arg9: memref<1x8xf32, #tpu.memory_space<vmem>>, %arg10: memref<1x16x16x32xf32, #tpu.memory_space<vmem>>, %arg11: memref<18x18x4xf32, #tpu.memory_space<vmem>>, %arg12: memref<20x20x4xf32, #tpu.memory_space<vmem>>) attributes {dimension_semantics = [#tpu.dimension_semantics<parallel>], iteration_bounds = array<i64: 2>, scalar_prefetch = 0 : i64, scratch_operands = 2 : i64, tpu.core_type = #tpu.core_type<tc>, window_params = [{transform_indices = @transform_0, window_bounds = array<i64: 1, 16, 16, 4>}, {pipeline_mode = #tpu.pipeline_mode<synchronous>, transform_indices = @transform_1, window_bounds = array<i64: 4, 16>}, {pipeline_mode = #tpu.pipeline_mode<synchronous>, transform_indices = @transform_2, window_bounds = array<i64: 1, 16>}, {pipeline_mode = #tpu.pipeline_mode<synchronous>, transform_indices = @transform_3, window_bounds = array<i64: 36, 8>}, {pipeline_mode = #tpu.pipeline_mode<synchronous>, transform_indices = @transform_4, window_bounds = array<i64: 1, 8>}, {pipeline_mode = #tpu.pipeline_mode<synchronous>, transform_indices = @transform_5, window_bounds = array<i64: 100, 8>}, {pipeline_mode = #tpu.pipeline_mode<synchronous>, transform_indices = @transform_6, window_bounds = array<i64: 1, 8>}, {pipeline_mode = #tpu.pipeline_mode<synchronous>, transform_indices = @transform_7, window_bounds = array<i64: 4, 8>}, {pipeline_mode = #tpu.pipeline_mode<synchronous>, transform_indices = @transform_8, window_bounds = array<i64: 1, 8>}, {transform_indices = @transform_9, window_bounds = array<i64: 1, 16, 16, 32>}]} {
    %c0 = arith.constant 0 : index
    %c0_0 = arith.constant 0 : index
    %c0_1 = arith.constant 0 : index
    %c0_2 = arith.constant 0 : index
    %0 = vector.load %arg1[%c0, %c0_0, %c0_1, %c0_2] : memref<1x16x16x4xf32, #tpu.memory_space<vmem>>, vector<1x16x16x4xf32>
    %1 = vector.shape_cast %0 : vector<1x16x16x4xf32> to vector<16x16x4xf32>
    %2 = vector.shape_cast %1 : vector<16x16x4xf32> to vector<256x4xf32>
    %c0_3 = arith.constant 0 : index
    %c0_4 = arith.constant 0 : index
    %3 = vector.load %arg2[%c0_3, %c0_4] : memref<4x16xf32, #tpu.memory_space<vmem>>, vector<4x16xf32>
    %cst = arith.constant dense<0.000000e+00> : vector<256x16xf32>
    %4 = tpu.matmul %2, %3, %cst {dimension_numbers = #tpu.dot_dimension_numbers<[1], [0], [0], [1], [0, 0, 1, 1], [], []>} : vector<256x4xf32>, vector<4x16xf32>, vector<256x16xf32> -> vector<256x16xf32>
    %c0_5 = arith.constant 0 : index
    %c0_6 = arith.constant 0 : index
    %5 = vector.load %arg3[%c0_5, %c0_6] : memref<1x16xf32, #tpu.memory_space<vmem>>, vector<1x16xf32>
    %6 = vector.broadcast %5 : vector<1x16xf32> to vector<256x16xf32>
    %7 = arith.addf %4, %6 : vector<256x16xf32>
    %cst_7 = arith.constant 0.000000e+00 : f32
    %8 = vector.broadcast %cst_7 : f32 to vector<256x16xf32>
    %9 = arith.maximumf %7, %8 : vector<256x16xf32>
    %cst_8 = arith.constant 0.000000e+00 : f32
    %10 = vector.broadcast %cst_8 : f32 to vector<1x18x4xf32>
    %c0_9 = arith.constant 0 : index
    %c0_10 = arith.constant 0 : index
    %c0_11 = arith.constant 0 : index
    %11 = vector.load %arg11[%c0_9, %c0_10, %c0_11] : memref<18x18x4xf32, #tpu.memory_space<vmem>>, vector<1x18x4xf32>
    tpu.vector_store %arg11[%c0_9, %c0_10, %c0_11], %10 {strides = array<i32>} : memref<18x18x4xf32, #tpu.memory_space<vmem>>, vector<1x18x4xf32>,
    %cst_12 = arith.constant 0.000000e+00 : f32
    %12 = vector.broadcast %cst_12 : f32 to vector<1x18x4xf32>
    %c17 = arith.constant 17 : index
    %c0_13 = arith.constant 0 : index
    %c0_14 = arith.constant 0 : index
    %13 = vector.load %arg11[%c17, %c0_13, %c0_14] : memref<18x18x4xf32, #tpu.memory_space<vmem>>, vector<1x18x4xf32>
    tpu.vector_store %arg11[%c17, %c0_13, %c0_14], %12 {strides = array<i32>} : memref<18x18x4xf32, #tpu.memory_space<vmem>>, vector<1x18x4xf32>,
    %cst_15 = arith.constant 0.000000e+00 : f32
    %14 = vector.broadcast %cst_15 : f32 to vector<16x1x4xf32>
    %c1 = arith.constant 1 : index
    %c0_16 = arith.constant 0 : index
    %c0_17 = arith.constant 0 : index
    %15 = vector.load %arg11[%c1, %c0_16, %c0_17] : memref<18x18x4xf32, #tpu.memory_space<vmem>>, vector<16x1x4xf32>
    tpu.vector_store %arg11[%c1, %c0_16, %c0_17], %14 {strides = array<i32>} : memref<18x18x4xf32, #tpu.memory_space<vmem>>, vector<16x1x4xf32>,
    %cst_18 = arith.constant 0.000000e+00 : f32
    %16 = vector.broadcast %cst_18 : f32 to vector<16x1x4xf32>
    %c1_19 = arith.constant 1 : index
    %c17_20 = arith.constant 17 : index
    %c0_21 = arith.constant 0 : index
    %17 = vector.load %arg11[%c1_19, %c17_20, %c0_21] : memref<18x18x4xf32, #tpu.memory_space<vmem>>, vector<16x1x4xf32>
    tpu.vector_store %arg11[%c1_19, %c17_20, %c0_21], %16 {strides = array<i32>} : memref<18x18x4xf32, #tpu.memory_space<vmem>>, vector<16x1x4xf32>,
    %18 = vector.extract_strided_slice %9 {offsets = [0, 8], sizes = [256, 4], strides = [1, 1]} : vector<256x16xf32> to vector<256x4xf32>
    %19 = vector.shape_cast %18 : vector<256x4xf32> to vector<16x16x4xf32>
    %c1_22 = arith.constant 1 : index
    %c1_23 = arith.constant 1 : index
    %c0_24 = arith.constant 0 : index
    %20 = vector.load %arg11[%c1_22, %c1_23, %c0_24] : memref<18x18x4xf32, #tpu.memory_space<vmem>>, vector<16x16x4xf32>
    tpu.vector_store %arg11[%c1_22, %c1_23, %c0_24], %19 {strides = array<i32>} : memref<18x18x4xf32, #tpu.memory_space<vmem>>, vector<16x16x4xf32>,
    %c0_25 = arith.constant 0 : index
    %c0_26 = arith.constant 0 : index
    %c0_27 = arith.constant 0 : index
    %21 = vector.load %arg11[%c0_25, %c0_26, %c0_27] : memref<18x18x4xf32, #tpu.memory_space<vmem>>, vector<16x18x4xf32>
    %22 = vector.extract_strided_slice %21 {offsets = [0, 0, 0], sizes = [16, 16, 4], strides = [1, 1, 1]} : vector<16x18x4xf32> to vector<16x16x4xf32>
    %23 = vector.extract_strided_slice %21 {offsets = [0, 1, 0], sizes = [16, 16, 4], strides = [1, 1, 1]} : vector<16x18x4xf32> to vector<16x16x4xf32>
    %24 = vector.extract_strided_slice %21 {offsets = [0, 2, 0], sizes = [16, 16, 4], strides = [1, 1, 1]} : vector<16x18x4xf32> to vector<16x16x4xf32>
    %25 = tpu.concatenate %22, %23, %24 in 2 : vector<16x16x4xf32>, vector<16x16x4xf32>, vector<16x16x4xf32> -> vector<16x16x12xf32>
    %26 = vector.shape_cast %25 : vector<16x16x12xf32> to vector<256x12xf32>
    %c0_28 = arith.constant 0 : index
    %c0_29 = arith.constant 0 : index
    %27 = vector.load %arg4[%c0_28, %c0_29] : memref<36x8xf32, #tpu.memory_space<vmem>>, vector<12x8xf32>
    %cst_30 = arith.constant dense<0.000000e+00> : vector<256x8xf32>
    %28 = tpu.matmul %26, %27, %cst_30 {dimension_numbers = #tpu.dot_dimension_numbers<[1], [0], [0], [1], [0, 0, 1, 1], [], []>} : vector<256x12xf32>, vector<12x8xf32>, vector<256x8xf32> -> vector<256x8xf32>
    %c1_31 = arith.constant 1 : index
    %c0_32 = arith.constant 0 : index
    %c0_33 = arith.constant 0 : index
    %29 = vector.load %arg11[%c1_31, %c0_32, %c0_33] : memref<18x18x4xf32, #tpu.memory_space<vmem>>, vector<16x18x4xf32>
    %30 = vector.extract_strided_slice %29 {offsets = [0, 0, 0], sizes = [16, 16, 4], strides = [1, 1, 1]} : vector<16x18x4xf32> to vector<16x16x4xf32>
    %31 = vector.extract_strided_slice %29 {offsets = [0, 1, 0], sizes = [16, 16, 4], strides = [1, 1, 1]} : vector<16x18x4xf32> to vector<16x16x4xf32>
    %32 = vector.extract_strided_slice %29 {offsets = [0, 2, 0], sizes = [16, 16, 4], strides = [1, 1, 1]} : vector<16x18x4xf32> to vector<16x16x4xf32>
    %33 = tpu.concatenate %30, %31, %32 in 2 : vector<16x16x4xf32>, vector<16x16x4xf32>, vector<16x16x4xf32> -> vector<16x16x12xf32>
    %34 = vector.shape_cast %33 : vector<16x16x12xf32> to vector<256x12xf32>
    %c12 = arith.constant 12 : index
    %c0_34 = arith.constant 0 : index
    %35 = vector.load %arg4[%c12, %c0_34] : memref<36x8xf32, #tpu.memory_space<vmem>>, vector<12x8xf32>
    %cst_35 = arith.constant dense<0.000000e+00> : vector<256x8xf32>
    %36 = tpu.matmul %34, %35, %cst_35 {dimension_numbers = #tpu.dot_dimension_numbers<[1], [0], [0], [1], [0, 0, 1, 1], [], []>} : vector<256x12xf32>, vector<12x8xf32>, vector<256x8xf32> -> vector<256x8xf32>
    %37 = arith.addf %28, %36 : vector<256x8xf32>
    %c2 = arith.constant 2 : index
    %c0_36 = arith.constant 0 : index
    %c0_37 = arith.constant 0 : index
    %38 = vector.load %arg11[%c2, %c0_36, %c0_37] : memref<18x18x4xf32, #tpu.memory_space<vmem>>, vector<16x18x4xf32>
    %39 = vector.extract_strided_slice %38 {offsets = [0, 0, 0], sizes = [16, 16, 4], strides = [1, 1, 1]} : vector<16x18x4xf32> to vector<16x16x4xf32>
    %40 = vector.extract_strided_slice %38 {offsets = [0, 1, 0], sizes = [16, 16, 4], strides = [1, 1, 1]} : vector<16x18x4xf32> to vector<16x16x4xf32>
    %41 = vector.extract_strided_slice %38 {offsets = [0, 2, 0], sizes = [16, 16, 4], strides = [1, 1, 1]} : vector<16x18x4xf32> to vector<16x16x4xf32>
    %42 = tpu.concatenate %39, %40, %41 in 2 : vector<16x16x4xf32>, vector<16x16x4xf32>, vector<16x16x4xf32> -> vector<16x16x12xf32>
    %43 = vector.shape_cast %42 : vector<16x16x12xf32> to vector<256x12xf32>
    %c24 = arith.constant 24 : index
    %c0_38 = arith.constant 0 : index
    %44 = vector.load %arg4[%c24, %c0_38] : memref<36x8xf32, #tpu.memory_space<vmem>>, vector<12x8xf32>
    %cst_39 = arith.constant dense<0.000000e+00> : vector<256x8xf32>
    %45 = tpu.matmul %43, %44, %cst_39 {dimension_numbers = #tpu.dot_dimension_numbers<[1], [0], [0], [1], [0, 0, 1, 1], [], []>} : vector<256x12xf32>, vector<12x8xf32>, vector<256x8xf32> -> vector<256x8xf32>
    %46 = arith.addf %37, %45 : vector<256x8xf32>
    %c0_40 = arith.constant 0 : index
    %c0_41 = arith.constant 0 : index
    %47 = vector.load %arg5[%c0_40, %c0_41] : memref<1x8xf32, #tpu.memory_space<vmem>>, vector<1x8xf32>
    %48 = vector.broadcast %47 : vector<1x8xf32> to vector<256x8xf32>
    %49 = arith.addf %46, %48 : vector<256x8xf32>
    %cst_42 = arith.constant 0.000000e+00 : f32
    %50 = vector.broadcast %cst_42 : f32 to vector<256x8xf32>
    %51 = arith.maximumf %49, %50 : vector<256x8xf32>
    %cst_43 = arith.constant 0.000000e+00 : f32
    %52 = vector.broadcast %cst_43 : f32 to vector<2x20x4xf32>
    %c0_44 = arith.constant 0 : index
    %c0_45 = arith.constant 0 : index
    %c0_46 = arith.constant 0 : index
    %53 = vector.load %arg12[%c0_44, %c0_45, %c0_46] : memref<20x20x4xf32, #tpu.memory_space<vmem>>, vector<2x20x4xf32>
    tpu.vector_store %arg12[%c0_44, %c0_45, %c0_46], %52 {strides = array<i32>} : memref<20x20x4xf32, #tpu.memory_space<vmem>>, vector<2x20x4xf32>,
    %cst_47 = arith.constant 0.000000e+00 : f32
    %54 = vector.broadcast %cst_47 : f32 to vector<2x20x4xf32>
    %c18 = arith.constant 18 : index
    %c0_48 = arith.constant 0 : index
    %c0_49 = arith.constant 0 : index
    %55 = vector.load %arg12[%c18, %c0_48, %c0_49] : memref<20x20x4xf32, #tpu.memory_space<vmem>>, vector<2x20x4xf32>
    tpu.vector_store %arg12[%c18, %c0_48, %c0_49], %54 {strides = array<i32>} : memref<20x20x4xf32, #tpu.memory_space<vmem>>, vector<2x20x4xf32>,
    %cst_50 = arith.constant 0.000000e+00 : f32
    %56 = vector.broadcast %cst_50 : f32 to vector<16x2x4xf32>
    %c2_51 = arith.constant 2 : index
    %c0_52 = arith.constant 0 : index
    %c0_53 = arith.constant 0 : index
    %57 = vector.load %arg12[%c2_51, %c0_52, %c0_53] : memref<20x20x4xf32, #tpu.memory_space<vmem>>, vector<16x2x4xf32>
    tpu.vector_store %arg12[%c2_51, %c0_52, %c0_53], %56 {strides = array<i32>} : memref<20x20x4xf32, #tpu.memory_space<vmem>>, vector<16x2x4xf32>,
    %cst_54 = arith.constant 0.000000e+00 : f32
    %58 = vector.broadcast %cst_54 : f32 to vector<16x2x4xf32>
    %c2_55 = arith.constant 2 : index
    %c18_56 = arith.constant 18 : index
    %c0_57 = arith.constant 0 : index
    %59 = vector.load %arg12[%c2_55, %c18_56, %c0_57] : memref<20x20x4xf32, #tpu.memory_space<vmem>>, vector<16x2x4xf32>
    tpu.vector_store %arg12[%c2_55, %c18_56, %c0_57], %58 {strides = array<i32>} : memref<20x20x4xf32, #tpu.memory_space<vmem>>, vector<16x2x4xf32>,
    %60 = vector.extract_strided_slice %9 {offsets = [0, 12], sizes = [256, 4], strides = [1, 1]} : vector<256x16xf32> to vector<256x4xf32>
    %61 = vector.shape_cast %60 : vector<256x4xf32> to vector<16x16x4xf32>
    %c2_58 = arith.constant 2 : index
    %c2_59 = arith.constant 2 : index
    %c0_60 = arith.constant 0 : index
    %62 = vector.load %arg12[%c2_58, %c2_59, %c0_60] : memref<20x20x4xf32, #tpu.memory_space<vmem>>, vector<16x16x4xf32>
    tpu.vector_store %arg12[%c2_58, %c2_59, %c0_60], %61 {strides = array<i32>} : memref<20x20x4xf32, #tpu.memory_space<vmem>>, vector<16x16x4xf32>,
    %c0_61 = arith.constant 0 : index
    %c0_62 = arith.constant 0 : index
    %c0_63 = arith.constant 0 : index
    %63 = vector.load %arg12[%c0_61, %c0_62, %c0_63] : memref<20x20x4xf32, #tpu.memory_space<vmem>>, vector<16x20x4xf32>
    %64 = vector.extract_strided_slice %63 {offsets = [0, 0, 0], sizes = [16, 16, 4], strides = [1, 1, 1]} : vector<16x20x4xf32> to vector<16x16x4xf32>
    %65 = vector.extract_strided_slice %63 {offsets = [0, 1, 0], sizes = [16, 16, 4], strides = [1, 1, 1]} : vector<16x20x4xf32> to vector<16x16x4xf32>
    %66 = vector.extract_strided_slice %63 {offsets = [0, 2, 0], sizes = [16, 16, 4], strides = [1, 1, 1]} : vector<16x20x4xf32> to vector<16x16x4xf32>
    %67 = vector.extract_strided_slice %63 {offsets = [0, 3, 0], sizes = [16, 16, 4], strides = [1, 1, 1]} : vector<16x20x4xf32> to vector<16x16x4xf32>
    %68 = vector.extract_strided_slice %63 {offsets = [0, 4, 0], sizes = [16, 16, 4], strides = [1, 1, 1]} : vector<16x20x4xf32> to vector<16x16x4xf32>
    %69 = tpu.concatenate %64, %65, %66, %67, %68 in 2 : vector<16x16x4xf32>, vector<16x16x4xf32>, vector<16x16x4xf32>, vector<16x16x4xf32>, vector<16x16x4xf32> -> vector<16x16x20xf32>
    %70 = vector.shape_cast %69 : vector<16x16x20xf32> to vector<256x20xf32>
    %c0_64 = arith.constant 0 : index
    %c0_65 = arith.constant 0 : index
    %71 = vector.load %arg6[%c0_64, %c0_65] : memref<100x8xf32, #tpu.memory_space<vmem>>, vector<20x8xf32>
    %cst_66 = arith.constant dense<0.000000e+00> : vector<256x8xf32>
    %72 = tpu.matmul %70, %71, %cst_66 {dimension_numbers = #tpu.dot_dimension_numbers<[1], [0], [0], [1], [0, 0, 1, 1], [], []>} : vector<256x20xf32>, vector<20x8xf32>, vector<256x8xf32> -> vector<256x8xf32>
    %c1_67 = arith.constant 1 : index
    %c0_68 = arith.constant 0 : index
    %c0_69 = arith.constant 0 : index
    %73 = vector.load %arg12[%c1_67, %c0_68, %c0_69] : memref<20x20x4xf32, #tpu.memory_space<vmem>>, vector<16x20x4xf32>
    %74 = vector.extract_strided_slice %73 {offsets = [0, 0, 0], sizes = [16, 16, 4], strides = [1, 1, 1]} : vector<16x20x4xf32> to vector<16x16x4xf32>
    %75 = vector.extract_strided_slice %73 {offsets = [0, 1, 0], sizes = [16, 16, 4], strides = [1, 1, 1]} : vector<16x20x4xf32> to vector<16x16x4xf32>
    %76 = vector.extract_strided_slice %73 {offsets = [0, 2, 0], sizes = [16, 16, 4], strides = [1, 1, 1]} : vector<16x20x4xf32> to vector<16x16x4xf32>
    %77 = vector.extract_strided_slice %73 {offsets = [0, 3, 0], sizes = [16, 16, 4], strides = [1, 1, 1]} : vector<16x20x4xf32> to vector<16x16x4xf32>
    %78 = vector.extract_strided_slice %73 {offsets = [0, 4, 0], sizes = [16, 16, 4], strides = [1, 1, 1]} : vector<16x20x4xf32> to vector<16x16x4xf32>
    %79 = tpu.concatenate %74, %75, %76, %77, %78 in 2 : vector<16x16x4xf32>, vector<16x16x4xf32>, vector<16x16x4xf32>, vector<16x16x4xf32>, vector<16x16x4xf32> -> vector<16x16x20xf32>
    %80 = vector.shape_cast %79 : vector<16x16x20xf32> to vector<256x20xf32>
    %c20 = arith.constant 20 : index
    %c0_70 = arith.constant 0 : index
    %81 = vector.load %arg6[%c20, %c0_70] : memref<100x8xf32, #tpu.memory_space<vmem>>, vector<20x8xf32>
    %cst_71 = arith.constant dense<0.000000e+00> : vector<256x8xf32>
    %82 = tpu.matmul %80, %81, %cst_71 {dimension_numbers = #tpu.dot_dimension_numbers<[1], [0], [0], [1], [0, 0, 1, 1], [], []>} : vector<256x20xf32>, vector<20x8xf32>, vector<256x8xf32> -> vector<256x8xf32>
    %83 = arith.addf %72, %82 : vector<256x8xf32>
    %c2_72 = arith.constant 2 : index
    %c0_73 = arith.constant 0 : index
    %c0_74 = arith.constant 0 : index
    %84 = vector.load %arg12[%c2_72, %c0_73, %c0_74] : memref<20x20x4xf32, #tpu.memory_space<vmem>>, vector<16x20x4xf32>
    %85 = vector.extract_strided_slice %84 {offsets = [0, 0, 0], sizes = [16, 16, 4], strides = [1, 1, 1]} : vector<16x20x4xf32> to vector<16x16x4xf32>
    %86 = vector.extract_strided_slice %84 {offsets = [0, 1, 0], sizes = [16, 16, 4], strides = [1, 1, 1]} : vector<16x20x4xf32> to vector<16x16x4xf32>
    %87 = vector.extract_strided_slice %84 {offsets = [0, 2, 0], sizes = [16, 16, 4], strides = [1, 1, 1]} : vector<16x20x4xf32> to vector<16x16x4xf32>
    %88 = vector.extract_strided_slice %84 {offsets = [0, 3, 0], sizes = [16, 16, 4], strides = [1, 1, 1]} : vector<16x20x4xf32> to vector<16x16x4xf32>
    %89 = vector.extract_strided_slice %84 {offsets = [0, 4, 0], sizes = [16, 16, 4], strides = [1, 1, 1]} : vector<16x20x4xf32> to vector<16x16x4xf32>
    %90 = tpu.concatenate %85, %86, %87, %88, %89 in 2 : vector<16x16x4xf32>, vector<16x16x4xf32>, vector<16x16x4xf32>, vector<16x16x4xf32>, vector<16x16x4xf32> -> vector<16x16x20xf32>
    %91 = vector.shape_cast %90 : vector<16x16x20xf32> to vector<256x20xf32>
    %c40 = arith.constant 40 : index
    %c0_75 = arith.constant 0 : index
    %92 = vector.load %arg6[%c40, %c0_75] : memref<100x8xf32, #tpu.memory_space<vmem>>, vector<20x8xf32>
    %cst_76 = arith.constant dense<0.000000e+00> : vector<256x8xf32>
    %93 = tpu.matmul %91, %92, %cst_76 {dimension_numbers = #tpu.dot_dimension_numbers<[1], [0], [0], [1], [0, 0, 1, 1], [], []>} : vector<256x20xf32>, vector<20x8xf32>, vector<256x8xf32> -> vector<256x8xf32>
    %94 = arith.addf %83, %93 : vector<256x8xf32>
    %c3 = arith.constant 3 : index
    %c0_77 = arith.constant 0 : index
    %c0_78 = arith.constant 0 : index
    %95 = vector.load %arg12[%c3, %c0_77, %c0_78] : memref<20x20x4xf32, #tpu.memory_space<vmem>>, vector<16x20x4xf32>
    %96 = vector.extract_strided_slice %95 {offsets = [0, 0, 0], sizes = [16, 16, 4], strides = [1, 1, 1]} : vector<16x20x4xf32> to vector<16x16x4xf32>
    %97 = vector.extract_strided_slice %95 {offsets = [0, 1, 0], sizes = [16, 16, 4], strides = [1, 1, 1]} : vector<16x20x4xf32> to vector<16x16x4xf32>
    %98 = vector.extract_strided_slice %95 {offsets = [0, 2, 0], sizes = [16, 16, 4], strides = [1, 1, 1]} : vector<16x20x4xf32> to vector<16x16x4xf32>
    %99 = vector.extract_strided_slice %95 {offsets = [0, 3, 0], sizes = [16, 16, 4], strides = [1, 1, 1]} : vector<16x20x4xf32> to vector<16x16x4xf32>
    %100 = vector.extract_strided_slice %95 {offsets = [0, 4, 0], sizes = [16, 16, 4], strides = [1, 1, 1]} : vector<16x20x4xf32> to vector<16x16x4xf32>
    %101 = tpu.concatenate %96, %97, %98, %99, %100 in 2 : vector<16x16x4xf32>, vector<16x16x4xf32>, vector<16x16x4xf32>, vector<16x16x4xf32>, vector<16x16x4xf32> -> vector<16x16x20xf32>
    %102 = vector.shape_cast %101 : vector<16x16x20xf32> to vector<256x20xf32>
    %c60 = arith.constant 60 : index
    %c0_79 = arith.constant 0 : index
    %103 = vector.load %arg6[%c60, %c0_79] : memref<100x8xf32, #tpu.memory_space<vmem>>, vector<20x8xf32>
    %cst_80 = arith.constant dense<0.000000e+00> : vector<256x8xf32>
    %104 = tpu.matmul %102, %103, %cst_80 {dimension_numbers = #tpu.dot_dimension_numbers<[1], [0], [0], [1], [0, 0, 1, 1], [], []>} : vector<256x20xf32>, vector<20x8xf32>, vector<256x8xf32> -> vector<256x8xf32>
    %105 = arith.addf %94, %104 : vector<256x8xf32>
    %c4 = arith.constant 4 : index
    %c0_81 = arith.constant 0 : index
    %c0_82 = arith.constant 0 : index
    %106 = vector.load %arg12[%c4, %c0_81, %c0_82] : memref<20x20x4xf32, #tpu.memory_space<vmem>>, vector<16x20x4xf32>
    %107 = vector.extract_strided_slice %106 {offsets = [0, 0, 0], sizes = [16, 16, 4], strides = [1, 1, 1]} : vector<16x20x4xf32> to vector<16x16x4xf32>
    %108 = vector.extract_strided_slice %106 {offsets = [0, 1, 0], sizes = [16, 16, 4], strides = [1, 1, 1]} : vector<16x20x4xf32> to vector<16x16x4xf32>
    %109 = vector.extract_strided_slice %106 {offsets = [0, 2, 0], sizes = [16, 16, 4], strides = [1, 1, 1]} : vector<16x20x4xf32> to vector<16x16x4xf32>
    %110 = vector.extract_strided_slice %106 {offsets = [0, 3, 0], sizes = [16, 16, 4], strides = [1, 1, 1]} : vector<16x20x4xf32> to vector<16x16x4xf32>
    %111 = vector.extract_strided_slice %106 {offsets = [0, 4, 0], sizes = [16, 16, 4], strides = [1, 1, 1]} : vector<16x20x4xf32> to vector<16x16x4xf32>
    %112 = tpu.concatenate %107, %108, %109, %110, %111 in 2 : vector<16x16x4xf32>, vector<16x16x4xf32>, vector<16x16x4xf32>, vector<16x16x4xf32>, vector<16x16x4xf32> -> vector<16x16x20xf32>
    %113 = vector.shape_cast %112 : vector<16x16x20xf32> to vector<256x20xf32>
    %c80 = arith.constant 80 : index
    %c0_83 = arith.constant 0 : index
    %114 = vector.load %arg6[%c80, %c0_83] : memref<100x8xf32, #tpu.memory_space<vmem>>, vector<20x8xf32>
    %cst_84 = arith.constant dense<0.000000e+00> : vector<256x8xf32>
    %115 = tpu.matmul %113, %114, %cst_84 {dimension_numbers = #tpu.dot_dimension_numbers<[1], [0], [0], [1], [0, 0, 1, 1], [], []>} : vector<256x20xf32>, vector<20x8xf32>, vector<256x8xf32> -> vector<256x8xf32>
    %116 = arith.addf %105, %115 : vector<256x8xf32>
    %c0_85 = arith.constant 0 : index
    %c0_86 = arith.constant 0 : index
    %117 = vector.load %arg7[%c0_85, %c0_86] : memref<1x8xf32, #tpu.memory_space<vmem>>, vector<1x8xf32>
    %118 = vector.broadcast %117 : vector<1x8xf32> to vector<256x8xf32>
    %119 = arith.addf %116, %118 : vector<256x8xf32>
    %cst_87 = arith.constant 0.000000e+00 : f32
    %120 = vector.broadcast %cst_87 : f32 to vector<256x8xf32>
    %121 = arith.maximumf %119, %120 : vector<256x8xf32>
    %cst_88 = arith.constant 0xFF800000 : f32
    %122 = vector.broadcast %cst_88 : f32 to vector<16x1x4xf32>
    %123 = vector.extract_strided_slice %1 {offsets = [0, 0, 0], sizes = [16, 15, 4], strides = [1, 1, 1]} : vector<16x16x4xf32> to vector<16x15x4xf32>
    %124 = tpu.concatenate %122, %123 in 1 : vector<16x1x4xf32>, vector<16x15x4xf32> -> vector<16x16x4xf32>
    %125 = vector.extract_strided_slice %1 {offsets = [0, 1, 0], sizes = [16, 15, 4], strides = [1, 1, 1]} : vector<16x16x4xf32> to vector<16x15x4xf32>
    %126 = tpu.concatenate %125, %122 in 1 : vector<16x15x4xf32>, vector<16x1x4xf32> -> vector<16x16x4xf32>
    %127 = arith.maximumf %124, %1 : vector<16x16x4xf32>
    %128 = arith.maximumf %127, %126 : vector<16x16x4xf32>
    %cst_89 = arith.constant 0xFF800000 : f32
    %129 = vector.broadcast %cst_89 : f32 to vector<1x16x4xf32>
    %130 = vector.extract_strided_slice %128 {offsets = [0, 0, 0], sizes = [15, 16, 4], strides = [1, 1, 1]} : vector<16x16x4xf32> to vector<15x16x4xf32>
    %131 = tpu.concatenate %129, %130 in 0 : vector<1x16x4xf32>, vector<15x16x4xf32> -> vector<16x16x4xf32>
    %132 = vector.extract_strided_slice %128 {offsets = [1, 0, 0], sizes = [15, 16, 4], strides = [1, 1, 1]} : vector<16x16x4xf32> to vector<15x16x4xf32>
    %133 = tpu.concatenate %132, %129 in 0 : vector<15x16x4xf32>, vector<1x16x4xf32> -> vector<16x16x4xf32>
    %134 = arith.maximumf %131, %128 : vector<16x16x4xf32>
    %135 = arith.maximumf %134, %133 : vector<16x16x4xf32>
    %136 = vector.shape_cast %135 : vector<16x16x4xf32> to vector<256x4xf32>
    %c0_90 = arith.constant 0 : index
    %c0_91 = arith.constant 0 : index
    %137 = vector.load %arg8[%c0_90, %c0_91] : memref<4x8xf32, #tpu.memory_space<vmem>>, vector<4x8xf32>
    %cst_92 = arith.constant dense<0.000000e+00> : vector<256x8xf32>
    %138 = tpu.matmul %136, %137, %cst_92 {dimension_numbers = #tpu.dot_dimension_numbers<[1], [0], [0], [1], [0, 0, 1, 1], [], []>} : vector<256x4xf32>, vector<4x8xf32>, vector<256x8xf32> -> vector<256x8xf32>
    %c0_93 = arith.constant 0 : index
    %c0_94 = arith.constant 0 : index
    %139 = vector.load %arg9[%c0_93, %c0_94] : memref<1x8xf32, #tpu.memory_space<vmem>>, vector<1x8xf32>
    %140 = vector.broadcast %139 : vector<1x8xf32> to vector<256x8xf32>
    %141 = arith.addf %138, %140 : vector<256x8xf32>
    %cst_95 = arith.constant 0.000000e+00 : f32
    %142 = vector.broadcast %cst_95 : f32 to vector<256x8xf32>
    %143 = arith.maximumf %141, %142 : vector<256x8xf32>
    %144 = vector.extract_strided_slice %9 {offsets = [0, 0], sizes = [256, 8], strides = [1, 1]} : vector<256x16xf32> to vector<256x8xf32>
    %145 = tpu.concatenate %144, %51, %121, %143 in 1 : vector<256x8xf32>, vector<256x8xf32>, vector<256x8xf32>, vector<256x8xf32> -> vector<256x32xf32>
    %146 = vector.shape_cast %145 : vector<256x32xf32> to vector<16x16x32xf32>
    %c0_96 = arith.constant 0 : index
    %c0_97 = arith.constant 0 : index
    %c0_98 = arith.constant 0 : index
    %c0_99 = arith.constant 0 : index
    %147 = vector.load %arg10[%c0_96, %c0_97, %c0_98, %c0_99] : memref<1x16x16x32xf32, #tpu.memory_space<vmem>>, vector<1x16x16x32xf32>
    %148 = vector.shape_cast %147 : vector<1x16x16x32xf32> to vector<16x16x32xf32>
    %149 = vector.shape_cast %146 : vector<16x16x32xf32> to vector<1x16x16x32xf32>
    tpu.vector_store %arg10[%c0_96, %c0_97, %c0_98, %c0_99], %149 {strides = array<i32>} : memref<1x16x16x32xf32, #tpu.memory_space<vmem>>, vector<1x16x16x32xf32>,
    return
  }
  func.func @transform_0(%arg0: i32) -> (i32, i32, i32, i32) {
    %c0_i32 = arith.constant 0 : i32
    %c0_i32_0 = arith.constant 0 : i32
    %c0_i32_1 = arith.constant 0 : i32
    %c0_i32_2 = arith.constant 0 : i32
    return %arg0, %c0_i32, %c0_i32_0, %c0_i32_1 : i32, i32, i32, i32
  }
  func.func @transform_1(%arg0: i32) -> (i32, i32) {
    %c0_i32 = arith.constant 0 : i32
    %c0_i32_0 = arith.constant 0 : i32
    %c0_i32_1 = arith.constant 0 : i32
    return %c0_i32, %c0_i32_0 : i32, i32
  }
  func.func @transform_2(%arg0: i32) -> (i32, i32) {
    %c0_i32 = arith.constant 0 : i32
    %c0_i32_0 = arith.constant 0 : i32
    %c0_i32_1 = arith.constant 0 : i32
    return %c0_i32, %c0_i32_0 : i32, i32
  }
  func.func @transform_3(%arg0: i32) -> (i32, i32) {
    %c0_i32 = arith.constant 0 : i32
    %c0_i32_0 = arith.constant 0 : i32
    %c0_i32_1 = arith.constant 0 : i32
    return %c0_i32, %c0_i32_0 : i32, i32
  }
  func.func @transform_4(%arg0: i32) -> (i32, i32) {
    %c0_i32 = arith.constant 0 : i32
    %c0_i32_0 = arith.constant 0 : i32
    %c0_i32_1 = arith.constant 0 : i32
    return %c0_i32, %c0_i32_0 : i32, i32
  }
  func.func @transform_5(%arg0: i32) -> (i32, i32) {
    %c0_i32 = arith.constant 0 : i32
    %c0_i32_0 = arith.constant 0 : i32
    %c0_i32_1 = arith.constant 0 : i32
    return %c0_i32, %c0_i32_0 : i32, i32
  }
  func.func @transform_6(%arg0: i32) -> (i32, i32) {
    %c0_i32 = arith.constant 0 : i32
    %c0_i32_0 = arith.constant 0 : i32
    %c0_i32_1 = arith.constant 0 : i32
    return %c0_i32, %c0_i32_0 : i32, i32
  }
  func.func @transform_7(%arg0: i32) -> (i32, i32) {
    %c0_i32 = arith.constant 0 : i32
    %c0_i32_0 = arith.constant 0 : i32
    %c0_i32_1 = arith.constant 0 : i32
    return %c0_i32, %c0_i32_0 : i32, i32
  }
  func.func @transform_8(%arg0: i32) -> (i32, i32) {
    %c0_i32 = arith.constant 0 : i32
    %c0_i32_0 = arith.constant 0 : i32
    %c0_i32_1 = arith.constant 0 : i32
    return %c0_i32, %c0_i32_0 : i32, i32
  }
  func.func @transform_9(%arg0: i32) -> (i32, i32, i32, i32) {
    %c0_i32 = arith.constant 0 : i32
    %c0_i32_0 = arith.constant 0 : i32
    %c0_i32_1 = arith.constant 0 : i32
    %c0_i32_2 = arith.constant 0 : i32
    return %arg0, %c0_i32, %c0_i32_0, %c0_i32_1 : i32, i32, i32, i32
  }
}

</mosaic_0001>

<llo_original>
// kernel: inception_forward.1
$region0: #{inception_forward.1}
  #allocation0 [shape = 'u32[]', space=smem, size = 0x4, offset = 0x4, fixed_abs, tag = 'smem constant byte address 0x4 - core index']
  #allocation1 [shape = 'u32[144,128]{1,0:T(1,128)}', space=vmem, size = 0x12000, scoped, tag = 'internal scratch']
  #allocation2 [shape = 'f32[18,18,4]{2,1,0:T(8,128)}', space=vmem, size = 0x36000, scoped, tag = 'scratch operand']
  #allocation3 [shape = 'f32[20,20,4]{2,1,0:T(8,128)}', space=vmem, size = 0x3c000, scoped, tag = 'scratch operand']
  %s0 = inlined_call_operand.vmem [shape: f32[2,16,16,4], index: 0, kind: input, shape index: {}]
  %s1 = inlined_call_operand.vmem [shape: f32[4,16], index: 1, kind: input, shape index: {}]
  %s2 = inlined_call_operand.vmem [shape: f32[1,16], index: 2, kind: input, shape index: {}]
  %s3 = inlined_call_operand.vmem [shape: f32[36,8], index: 3, kind: input, shape index: {}]
  %s4 = inlined_call_operand.vmem [shape: f32[1,8], index: 4, kind: input, shape index: {}]
  %s5 = inlined_call_operand.vmem [shape: f32[100,8], index: 5, kind: input, shape index: {}]
  %s6 = inlined_call_operand.vmem [shape: f32[1,8], index: 6, kind: input, shape index: {}]
  %s7 = inlined_call_operand.vmem [shape: f32[4,8], index: 7, kind: input, shape index: {}]
  %s8 = inlined_call_operand.vmem [shape: f32[1,8], index: 8, kind: input, shape index: {}]
  %s9 = inlined_call_operand.hbm [shape: f32[2,16,16,32], index: 9, kind: output, shape index: {}]
  %s10 = sld [smem:[#allocation0]]
  $region69: #{inception_forward.1} parent=0
    _
  %s12 = ssub.s32 1, %s10
  %s13 = scalar_select 0, %s12, %s10
  $region1: #{inception_forward.1} parent=0
    #allocation4 [shape = 'u8[262144]{0}', space=vmem, size = 0x40000, scoped, tag = 'output window, operand 0']
    #allocation5 [shape = 's32[2]{0}', space=sflag, size = 0x8, scoped, tag = 'scoped memory for inception_forward.1']
    %14 = vsyncpa [#allocation5], 0
    %s15 = scalar_lea.sflag [#allocation5], 1
    %16 = vsyncpa %s15, 0
    loop: start=0, step=1, limit=4
    $region2: #{inception_forward.1} parent=1 // loop_pre_header
      _
    $region3: #{inception_forward.1} parent=1 // loop_header
      %s18 = sphi 0, %s22
      %p19 = scmp.ge.s32.totalorder %s18, 4
      %s28 = sphi 0, %s30
      %s31 = sphi 0, %s28
      %s32 = sphi 0, %s31
      %s48 = sphi 0, %s32
      %s52 = sphi 0, %s52
      %s54 = sphi 0, %s52
      %s55 = sphi 0, %s54
      %s69 = sphi 0, %s55
      %s73 = sphi 0, %s73
      %s75 = sphi 0, %s73
      %s76 = sphi 0, %s75
      %s90 = sphi 0, %s76
      %s94 = sphi 0, %s94
      %s96 = sphi 0, %s94
      %s97 = sphi 0, %s96
      %s111 = sphi 0, %s97
      %s115 = sphi 0, %s115
      %s117 = sphi 0, %s115
      %s118 = sphi 0, %s117
      %s132 = sphi 0, %s118
      %s136 = sphi 0, %s136
      %s138 = sphi 0, %s136
      %s139 = sphi 0, %s138
      %s153 = sphi 0, %s139
      %s157 = sphi 0, %s157
      %s159 = sphi 0, %s157
      %s160 = sphi 0, %s159
      %s174 = sphi 0, %s160
      %s178 = sphi 0, %s178
      %s180 = sphi 0, %s178
      %s181 = sphi 0, %s180
      %s195 = sphi 0, %s181
      %s199 = sphi 0, %s199
      %s201 = sphi 0, %s199
      %s202 = sphi 0, %s201
      %s216 = sphi 0, %s202
      %s222 = sphi 0, %s224
      %s225 = sphi 0, %s222
      %s226 = sphi 0, %s225
      %s242 = sphi 0, %s226
    $region4: #{inception_forward.1} parent=1 // loop_header_branch
      %21 = sbr.rel (%p19) target = $region8
    $region5: #{inception_forward.1} parent=1 // loop_body
      %s23 = ssub.s32 %s18, 1
      %s24 = ssub.s32 %s18, 2
      %s25 = sadd.s32 %s18, 1
      %s26 = ssub.s32 %s18, %s25
      %p27 = scmp.eq.s32.totalorder %s26, 0
      %s29 = sadd.s32 %s28, 1
      %s30 = scalar_select %p27, %s28, %s29
      %p33 = pneg %p27
      %p34 = scmp.eq.s32.totalorder %s18, 1
      %p35 = por %p33, %p34
      %p36 = scmp.ne.s32.totalorder %s28, %s31
      %p37 = scmp.eq.s32.totalorder %s18, 0
      %p38 = por %p36, %p37
      %p39 = scmp.ne.s32.totalorder %s28, %s31
      %p40 = scmp.eq.s32.totalorder %s23, 1
      %p41 = por %p39, %p40
      %p42 = scmp.ne.s32.totalorder %s31, %s32
      %p43 = scmp.eq.s32.totalorder %s23, 0
      %p44 = por %p42, %p43
      %p45 = scmp.ne.s32.totalorder %s31, %s32
      %p46 = scmp.eq.s32.totalorder %s24, 1
      %p47 = por %p45, %p46
      %p49 = scmp.ne.s32.totalorder %s32, %s48
      %p50 = scmp.eq.s32.totalorder %s24, 0
      %p51 = por %p49, %p50
      %s53 = sadd.s32 %s52, 1
      %p56 = scmp.eq.s32.totalorder %s18, 1
      %p57 = scmp.ne.s32.totalorder %s52, %s54
      %p58 = scmp.eq.s32.totalorder %s18, 0
      %p59 = por %p57, %p58
      %p60 = scmp.ne.s32.totalorder %s52, %s54
      %p61 = scmp.eq.s32.totalorder %s23, 1
      %p62 = por %p60, %p61
      %p63 = scmp.ne.s32.totalorder %s54, %s55
      %p64 = scmp.eq.s32.totalorder %s23, 0
      %p65 = por %p63, %p64
      %p66 = scmp.ne.s32.totalorder %s54, %s55
      %p67 = scmp.eq.s32.totalorder %s24, 1
      %p68 = por %p66, %p67
      %p70 = scmp.ne.s32.totalorder %s55, %s69
      %p71 = scmp.eq.s32.totalorder %s24, 0
      %p72 = por %p70, %p71
      %s74 = sadd.s32 %s73, 1
      %p77 = scmp.eq.s32.totalorder %s18, 1
      %p78 = scmp.ne.s32.totalorder %s73, %s75
      %p79 = scmp.eq.s32.totalorder %s18, 0
      %p80 = por %p78, %p79
      %p81 = scmp.ne.s32.totalorder %s73, %s75
      %p82 = scmp.eq.s32.totalorder %s23, 1
      %p83 = por %p81, %p82
      %p84 = scmp.ne.s32.totalorder %s75, %s76
      %p85 = scmp.eq.s32.totalorder %s23, 0
      %p86 = por %p84, %p85
      %p87 = scmp.ne.s32.totalorder %s75, %s76
      %p88 = scmp.eq.s32.totalorder %s24, 1
      %p89 = por %p87, %p88
      %p91 = scmp.ne.s32.totalorder %s76, %s90
      %p92 = scmp.eq.s32.totalorder %s24, 0
      %p93 = por %p91, %p92
      %s95 = sadd.s32 %s94, 1
      %p98 = scmp.eq.s32.totalorder %s18, 1
      %p99 = scmp.ne.s32.totalorder %s94, %s96
      %p100 = scmp.eq.s32.totalorder %s18, 0
      %p101 = por %p99, %p100
      %p102 = scmp.ne.s32.totalorder %s94, %s96
      %p103 = scmp.eq.s32.totalorder %s23, 1
      %p104 = por %p102, %p103
      %p105 = scmp.ne.s32.totalorder %s96, %s97
      %p106 = scmp.eq.s32.totalorder %s23, 0
      %p107 = por %p105, %p106
      %p108 = scmp.ne.s32.totalorder %s96, %s97
      %p109 = scmp.eq.s32.totalorder %s24, 1
      %p110 = por %p108, %p109
      %p112 = scmp.ne.s32.totalorder %s97, %s111
      %p113 = scmp.eq.s32.totalorder %s24, 0
      %p114 = por %p112, %p113
      %s116 = sadd.s32 %s115, 1
      %p119 = scmp.eq.s32.totalorder %s18, 1
      %p120 = scmp.ne.s32.totalorder %s115, %s117
      %p121 = scmp.eq.s32.totalorder %s18, 0
      %p122 = por %p120, %p121
      %p123 = scmp.ne.s32.totalorder %s115, %s117
      %p124 = scmp.eq.s32.totalorder %s23, 1
      %p125 = por %p123, %p124
      %p126 = scmp.ne.s32.totalorder %s117, %s118
      %p127 = scmp.eq.s32.totalorder %s23, 0
      %p128 = por %p126, %p127
      %p129 = scmp.ne.s32.totalorder %s117, %s118
      %p130 = scmp.eq.s32.totalorder %s24, 1
      %p131 = por %p129, %p130
      %p133 = scmp.ne.s32.totalorder %s118, %s132
      %p134 = scmp.eq.s32.totalorder %s24, 0
      %p135 = por %p133, %p134
      %s137 = sadd.s32 %s136, 1
      %p140 = scmp.eq.s32.totalorder %s18, 1
      %p141 = scmp.ne.s32.totalorder %s136, %s138
      %p142 = scmp.eq.s32.totalorder %s18, 0
      %p143 = por %p141, %p142
      %p144 = scmp.ne.s32.totalorder %s136, %s138
      %p145 = scmp.eq.s32.totalorder %s23, 1
      %p146 = por %p144, %p145
      %p147 = scmp.ne.s32.totalorder %s138, %s139
      %p148 = scmp.eq.s32.totalorder %s23, 0
      %p149 = por %p147, %p148
      %p150 = scmp.ne.s32.totalorder %s138, %s139
      %p151 = scmp.eq.s32.totalorder %s24, 1
      %p152 = por %p150, %p151
      %p154 = scmp.ne.s32.totalorder %s139, %s153
      %p155 = scmp.eq.s32.totalorder %s24, 0
      %p156 = por %p154, %p155
      %s158 = sadd.s32 %s157, 1
      %p161 = scmp.eq.s32.totalorder %s18, 1
      %p162 = scmp.ne.s32.totalorder %s157, %s159
      %p163 = scmp.eq.s32.totalorder %s18, 0
      %p164 = por %p162, %p163
      %p165 = scmp.ne.s32.totalorder %s157, %s159
      %p166 = scmp.eq.s32.totalorder %s23, 1
      %p167 = por %p165, %p166
      %p168 = scmp.ne.s32.totalorder %s159, %s160
      %p169 = scmp.eq.s32.totalorder %s23, 0
      %p170 = por %p168, %p169
      %p171 = scmp.ne.s32.totalorder %s159, %s160
      %p172 = scmp.eq.s32.totalorder %s24, 1
      %p173 = por %p171, %p172
      %p175 = scmp.ne.s32.totalorder %s160, %s174
      %p176 = scmp.eq.s32.totalorder %s24, 0
      %p177 = por %p175, %p176
      %s179 = sadd.s32 %s178, 1
      %p182 = scmp.eq.s32.totalorder %s18, 1
      %p183 = scmp.ne.s32.totalorder %s178, %s180
      %p184 = scmp.eq.s32.totalorder %s18, 0
      %p185 = por %p183, %p184
      %p186 = scmp.ne.s32.totalorder %s178, %s180
      %p187 = scmp.eq.s32.totalorder %s23, 1
      %p188 = por %p186, %p187
      %p189 = scmp.ne.s32.totalorder %s180, %s181
      %p190 = scmp.eq.s32.totalorder %s23, 0
      %p191 = por %p189, %p190
      %p192 = scmp.ne.s32.totalorder %s180, %s181
      %p193 = scmp.eq.s32.totalorder %s24, 1
      %p194 = por %p192, %p193
      %p196 = scmp.ne.s32.totalorder %s181, %s195
      %p197 = scmp.eq.s32.totalorder %s24, 0
      %p198 = por %p196, %p197
      %s200 = sadd.s32 %s199, 1
      %p203 = scmp.eq.s32.totalorder %s18, 1
      %p204 = scmp.ne.s32.totalorder %s199, %s201
      %p205 = scmp.eq.s32.totalorder %s18, 0
      %p206 = por %p204, %p205
      %p207 = scmp.ne.s32.totalorder %s199, %s201
      %p208 = scmp.eq.s32.totalorder %s23, 1
      %p209 = por %p207, %p208
      %p210 = scmp.ne.s32.totalorder %s201, %s202
      %p211 = scmp.eq.s32.totalorder %s23, 0
      %p212 = por %p210, %p211
      %p213 = scmp.ne.s32.totalorder %s201, %s202
      %p214 = scmp.eq.s32.totalorder %s24, 1
      %p215 = por %p213, %p214
      %p217 = scmp.ne.s32.totalorder %s202, %s216
      %p218 = scmp.eq.s32.totalorder %s24, 0
      %p219 = por %p217, %p218
      %s220 = ssub.s32 %s18, %s25
      %p221 = scmp.eq.s32.totalorder %s220, 0
      %s223 = sadd.s32 %s222, 1
      %s224 = scalar_select %p221, %s222, %s223
      %p227 = pneg %p221
      %p228 = scmp.eq.s32.totalorder %s18, 1
      %p229 = por %p227, %p228
      %p230 = scmp.ne.s32.totalorder %s222, %s225
      %p231 = scmp.eq.s32.totalorder %s18, 0
      %p232 = por %p230, %p231
      %p233 = scmp.ne.s32.totalorder %s222, %s225
      %p234 = scmp.eq.s32.totalorder %s23, 1
      %p235 = por %p233, %p234
      %p236 = scmp.ne.s32.totalorder %s225, %s226
      %p237 = scmp.eq.s32.totalorder %s23, 0
      %p238 = por %p236, %p237
      %p239 = scmp.ne.s32.totalorder %s225, %s226
      %p240 = scmp.eq.s32.totalorder %s24, 1
      %p241 = por %p239, %p240
      %p243 = scmp.ne.s32.totalorder %s226, %s242
      %p244 = scmp.eq.s32.totalorder %s24, 0
      %p245 = por %p243, %p244
      %p246 = scmp.le.s32.totalorder 1, %s18
      %p247 = scmp.lt.s32.totalorder %s18, 3
      %p248 = pnand %p246, %p247
      %p249 = pneg %p248
      // Predicated region
      $region9: #{inception_forward.1} parent=5 // pred_check
        _
      $region10: #{inception_forward.1} parent=5 // pred_check_branch
        %251 = sbr.rel (%p248) target = $region12
      $region11: #{inception_forward.1} parent=5 // pred_region
        %s252 = ssub.s32 %s18, 1
        // Predicated region
        $region13: #{inception_forward.1} parent=11 // pred_check
          %p253 = pneg %p65
        $region14: #{inception_forward.1} parent=11 // pred_check_branch
          %255 = sbr.rel (%p253) target = $region16
        $region15: #{inception_forward.1} parent=11 // pred_region
          _
        $region16: #{inception_forward.1} parent=11 // pred_fallthru
          _
        // Predicated region
        $region17: #{inception_forward.1} parent=11 // pred_check
          %p256 = pneg %p86
        $region18: #{inception_forward.1} parent=11 // pred_check_branch
          %258 = sbr.rel (%p256) target = $region20
        $region19: #{inception_forward.1} parent=11 // pred_region
          _
        $region20: #{inception_forward.1} parent=11 // pred_fallthru
          _
        // Predicated region
        $region21: #{inception_forward.1} parent=11 // pred_check
          %p259 = pneg %p107
        $region22: #{inception_forward.1} parent=11 // pred_check_branch
          %261 = sbr.rel (%p259) target = $region24
        $region23: #{inception_forward.1} parent=11 // pred_region
          _
        $region24: #{inception_forward.1} parent=11 // pred_fallthru
          _
        // Predicated region
        $region25: #{inception_forward.1} parent=11 // pred_check
          %p262 = pneg %p128
        $region26: #{inception_forward.1} parent=11 // pred_check_branch
          %264 = sbr.rel (%p262) target = $region28
        $region27: #{inception_forward.1} parent=11 // pred_region
          _
        $region28: #{inception_forward.1} parent=11 // pred_fallthru
          _
        // Predicated region
        $region29: #{inception_forward.1} parent=11 // pred_check
          %p265 = pneg %p149
        $region30: #{inception_forward.1} parent=11 // pred_check_branch
          %267 = sbr.rel (%p265) target = $region32
        $region31: #{inception_forward.1} parent=11 // pred_region
          _
        $region32: #{inception_forward.1} parent=11 // pred_fallthru
          _
        // Predicated region
        $region33: #{inception_forward.1} parent=11 // pred_check
          %p268 = pneg %p170
        $region34: #{inception_forward.1} parent=11 // pred_check_branch
          %270 = sbr.rel (%p268) target = $region36
        $region35: #{inception_forward.1} parent=11 // pred_region
          _
        $region36: #{inception_forward.1} parent=11 // pred_fallthru
          _
        // Predicated region
        $region37: #{inception_forward.1} parent=11 // pred_check
          %p271 = pneg %p191
        $region38: #{inception_forward.1} parent=11 // pred_check_branch
          %273 = sbr.rel (%p271) target = $region40
        $region39: #{inception_forward.1} parent=11 // pred_region
          _
        $region40: #{inception_forward.1} parent=11 // pred_fallthru
          _
        // Predicated region
        $region41: #{inception_forward.1} parent=11 // pred_check
          %p274 = pneg %p212
        $region42: #{inception_forward.1} parent=11 // pred_check_branch
          %276 = sbr.rel (%p274) target = $region44
        $region43: #{inception_forward.1} parent=11 // pred_region
          _
        $region44: #{inception_forward.1} parent=11 // pred_fallthru
          _
      $region12: #{inception_forward.1} parent=5 // pred_fallthru
        _
      %p277 = scmp.lt.s32.totalorder %s18, 2
      // Predicated region
      $region45: #{inception_forward.1} parent=5 // pred_check
        %p278 = pneg %p277
      $region46: #{inception_forward.1} parent=5 // pred_check_branch
        %280 = sbr.rel (%p278) target = $region48
      $region47: #{inception_forward.1} parent=5 // pred_region
        // Predicated region
        $region49: #{inception_forward.1} parent=47 // pred_check
          %p281 = pneg %p38
        $region50: #{inception_forward.1} parent=47 // pred_check_branch
          %283 = sbr.rel (%p281) target = $region52
        $region51: #{inception_forward.1} parent=47 // pred_region
          %p284 = scmp.lt.s32.totalorder %s18, 1
          %s285 = scalar_select %p284, %s18, 1
          %s286 = smul.addr %s285, 32
          %s287 = smul.addr %s286, 8
          %s288 = scalar_lea.vmem %s0, %s287
        $region52: #{inception_forward.1} parent=47 // pred_fallthru
          _
      $region48: #{inception_forward.1} parent=5 // pred_fallthru
        _
      %p289 = scmp.le.s32.totalorder 1, %s18
      %p290 = scmp.lt.s32.totalorder %s18, 3
      %p291 = pnand %p289, %p290
      %p292 = pneg %p291
      // Predicated region
      $region53: #{inception_forward.1} parent=5 // pred_check
        _
      $region54: #{inception_forward.1} parent=5 // pred_check_branch
        %294 = sbr.rel (%p291) target = $region56
      $region55: #{inception_forward.1} parent=5 // pred_region
        %s295 = ssub.s32 %s18, 1
        %p296 = scmp.lt.s32.totalorder %s23, 1
        %s297 = scalar_select %p296, %s23, 1
        %s298 = smul.addr %s297, 32
        %s299 = smul.addr %s298, 8
        %s300 = scalar_lea.vmem %s0, %s299
        %p301 = pneg %p44
        %p302 = pneg %p41
        %p303 = pneg %p65
        %p304 = pneg %p62
        %p305 = pneg %p86
        %p306 = pneg %p83
        %p307 = pneg %p107
        %p308 = pneg %p104
        %p309 = pneg %p128
        %p310 = pneg %p125
        %p311 = pneg %p149
        %p312 = pneg %p146
        %p313 = pneg %p170
        %p314 = pneg %p167
        %p315 = pneg %p191
        %p316 = pneg %p188
        %p317 = pneg %p212
        %p318 = pneg %p209
        %p319 = pneg %p238
        %p320 = pneg %p235
        %s321 = sand.u32 %s225, 1
        %s322 = scalar_lea.sflag [#allocation5], %s321
        %s323 = sand.u32 %s225, 1
        %s324 = smul.addr %s323, 256
        %s325 = scalar_lea.vmem [#allocation4], %s324
        %p326 = scmp.lt.s32.totalorder %s23, 1
        %s327 = scalar_select %p326, %s23, 1
        %s328 = smul.addr %s327, 32
        %s329 = smul.addr %s328, 8
        %s330 = scalar_lea.vmem %s0, %s329
        %v331 = vld [vmem:[%s330] sm:$0xff]
        %v332 = vld [vmem:[%s330 + $0x8] sm:$0xff]
        %v333 = vld [vmem:[%s330 + $0x10] sm:$0xff]
        %v334 = vld [vmem:[%s330 + $0x18] sm:$0xff]
        %v335 = vld [vmem:[%s330 + $0x20] sm:$0xff]
        %v336 = vld [vmem:[%s330 + $0x28] sm:$0xff]
        %v337 = vld [vmem:[%s330 + $0x30] sm:$0xff]
        %v338 = vld [vmem:[%s330 + $0x38] sm:$0xff]
        %v339 = vld [vmem:[%s330 + $0x40] sm:$0xff]
        %v340 = vld [vmem:[%s330 + $0x48] sm:$0xff]
        %v341 = vld [vmem:[%s330 + $0x50] sm:$0xff]
        %v342 = vld [vmem:[%s330 + $0x58] sm:$0xff]
        %v343 = vld [vmem:[%s330 + $0x60] sm:$0xff]
        %v344 = vld [vmem:[%s330 + $0x68] sm:$0xff]
        %v345 = vld [vmem:[%s330 + $0x70] sm:$0xff]
        %v346 = vld [vmem:[%s330 + $0x78] sm:$0xff]
        %v347 = vld [vmem:[%s330 + $0x80] sm:$0xff]
        %v348 = vld [vmem:[%s330 + $0x88] sm:$0xff]
        %v349 = vld [vmem:[%s330 + $0x90] sm:$0xff]
        %v350 = vld [vmem:[%s330 + $0x98] sm:$0xff]
        %v351 = vld [vmem:[%s330 + $0xa0] sm:$0xff]
        %v352 = vld [vmem:[%s330 + $0xa8] sm:$0xff]
        %v353 = vld [vmem:[%s330 + $0xb0] sm:$0xff]
        %v354 = vld [vmem:[%s330 + $0xb8] sm:$0xff]
        %v355 = vld [vmem:[%s330 + $0xc0] sm:$0xff]
        %v356 = vld [vmem:[%s330 + $0xc8] sm:$0xff]
        %v357 = vld [vmem:[%s330 + $0xd0] sm:$0xff]
        %v358 = vld [vmem:[%s330 + $0xd8] sm:$0xff]
        %v359 = vld [vmem:[%s330 + $0xe0] sm:$0xff]
        %v360 = vld [vmem:[%s330 + $0xe8] sm:$0xff]
        %v361 = vld [vmem:[%s330 + $0xf0] sm:$0xff]
        %v362 = vld [vmem:[%s330 + $0xf8] sm:$0xff]
        %v363 = vld [vmem:[%s1] sm:$0xf]
        %v364 = vld [vmem:[%s2] sm:$0x1]
        %v366 = vlaneseq
        %v367 = vshrl.u32 %v366, 7
        %v368 = vsub.s32 0, %v367
        %v369 = vrot.slane %v364, %v368
        %vm371 = vcmask 31744
        %v373 = vsel %vm371, %v331, 0
        %v376 = vsel %vm371, %v332, 0
        %v379 = vsel %vm371, %v333, 0
        %v382 = vsel %vm371, %v334, 0
        %v385 = vsel %vm371, %v335, 0
        %v388 = vsel %vm371, %v336, 0
        %v391 = vsel %vm371, %v337, 0
        %v394 = vsel %vm371, %v338, 0
        %v397 = vsel %vm371, %v339, 0
        %v400 = vsel %vm371, %v340, 0
        %v403 = vsel %vm371, %v341, 0
        %v406 = vsel %vm371, %v342, 0
        %v409 = vsel %vm371, %v343, 0
        %v412 = vsel %vm371, %v344, 0
        %v415 = vsel %vm371, %v345, 0
        %v418 = vsel %vm371, %v346, 0
        %v421 = vsel %vm371, %v347, 0
        %v424 = vsel %vm371, %v348, 0
        %v427 = vsel %vm371, %v349, 0
        %v430 = vsel %vm371, %v350, 0
        %v433 = vsel %vm371, %v351, 0
        %v436 = vsel %vm371, %v352, 0
        %v439 = vsel %vm371, %v353, 0
        %v442 = vsel %vm371, %v354, 0
        %v445 = vsel %vm371, %v355, 0
        %v448 = vsel %vm371, %v356, 0
        %v451 = vsel %vm371, %v357, 0
        %v454 = vsel %vm371, %v358, 0
        %v457 = vsel %vm371, %v359, 0
        %v460 = vsel %vm371, %v360, 0
        %v463 = vsel %vm371, %v361, 0
        %v466 = vsel %vm371, %v362, 0
        %vm468 = vcmask 1043456
        %v470 = vsel %vm468, %v363, 0
        %472 = vmatprep.subr.mxu0 0.0
        %473 = vmatpush1.msra.mxu0 %v470
        %474 = vmatprep.subr.mxu0 0.0
        %475 = vmatpush1.msra.mxu0 0.0
        %476 = vmatprep.subr.mxu0 0.0
        %477 = vmatpush1.msra.mxu0 0.0
        %478 = vmatprep.subr.mxu0 0.0
        %479 = vmatpush1.msra.mxu0 0.0
        %480 = vmatprep.subr.mxu0 0.0
        %481 = vmatpush1.msra.mxu0 0.0
        %482 = vmatprep.subr.mxu0 0.0
        %483 = vmatpush1.msra.mxu0 0.0
        %484 = vmatprep.subr.mxu0 0.0
        %485 = vmatpush1.msra.mxu0 0.0
        %486 = vmatprep.subr.mxu0 0.0
        %487 = vmatpush1.msra.mxu0 0.0
        %488 = vmatprep.subr.mxu0 0.0
        %489 = vmatpush1.msra.mxu0 0.0
        %490 = vmatprep.subr.mxu0 0.0
        %491 = vmatpush1.msra.mxu0 0.0
        %492 = vmatprep.subr.mxu0 0.0
        %493 = vmatpush1.msra.mxu0 0.0
        %494 = vmatprep.subr.mxu0 0.0
        %495 = vmatpush1.msra.mxu0 0.0
        %496 = vmatprep.subr.mxu0 0.0
        %497 = vmatpush1.msra.mxu0 0.0
        %498 = vmatprep.subr.mxu0 0.0
        %499 = vmatpush1.msra.mxu0 0.0
        %500 = vmatprep.subr.mxu0 0.0
        %501 = vmatpush1.msra.mxu0 0.0
        %502 = vmatprep.subr.mxu0 0.0
        %503 = vmatpush1.msra.mxu0 0.0
        %504 = vmatprep.subr.mxu0 0.0
        %505 = vmatpush1.msra.mxu0 0.0
        %506 = vmatprep.subr.mxu0 0.0
        %507 = vmatpush1.msra.mxu0 0.0
        %508 = vmatprep.subr.mxu0 0.0
        %509 = vmatpush1.msra.mxu0 0.0
        %510 = vmatprep.subr.mxu0 0.0
        %511 = vmatpush1.msra.mxu0 0.0
        %512 = vmatprep.subr.mxu0 0.0
        %513 = vmatpush1.msra.mxu0 0.0
        %514 = vmatprep.subr.mxu0 0.0
        %515 = vmatpush1.msra.mxu0 0.0
        %516 = vmatprep.subr.mxu0 0.0
        %517 = vmatpush1.msra.mxu0 0.0
        %518 = vmatprep.subr.mxu0 0.0
        %519 = vmatpush1.msra.mxu0 0.0
        %520 = vmatprep.subr.mxu0 0.0
        %521 = vmatpush1.msra.mxu0 0.0
        %522 = vmatprep.subr.mxu0 0.0
        %523 = vmatpush1.msra.mxu0 0.0
        %524 = vmatprep.subr.mxu0 0.0
        %525 = vmatpush1.msra.mxu0 0.0
        %526 = vmatprep.subr.mxu0 0.0
        %527 = vmatpush1.msra.mxu0 0.0
        %528 = vmatprep.subr.mxu0 0.0
        %529 = vmatpush1.msra.mxu0 0.0
        %530 = vmatprep.subr.mxu0 0.0
        %531 = vmatpush1.msra.mxu0 0.0
        %532 = vmatprep.subr.mxu0 0.0
        %533 = vmatpush1.msra.mxu0 0.0
        %534 = vmatprep.subr.mxu0 0.0
        %535 = vmatpush1.msra.mxu0 0.0
        %536 = vmatprep.mubr.f32.mxu0 0.0
        %537 = vmatmul.mubr.f32.gmra.mrb[0].mxu0 %v373
        %v538 = vpop.f32.mrb[0].mxu0
        %v539 = vadd.f32 %v369, %v538
        %v540 = vpop.f32.mrb[0].mxu0
        %541 = vmatprep.mubr.f32.mxu0 0.0
        %542 = vmatmul.mubr.f32.gmra.mrb[0].mxu0 %v376
        %v543 = vpop.f32.mrb[0].mxu0
        %v544 = vadd.f32 %v369, %v543
        %v545 = vpop.f32.mrb[0].mxu0
        %546 = vmatprep.mubr.f32.mxu0 0.0
        %547 = vmatmul.mubr.f32.gmra.mrb[0].mxu0 %v379
        %v548 = vpop.f32.mrb[0].mxu0
        %v549 = vadd.f32 %v369, %v548
        %v550 = vpop.f32.mrb[0].mxu0
        %551 = vmatprep.mubr.f32.mxu0 0.0
        %552 = vmatmul.mubr.f32.gmra.mrb[0].mxu0 %v382
        %v553 = vpop.f32.mrb[0].mxu0
        %v554 = vadd.f32 %v369, %v553
        %v555 = vpop.f32.mrb[0].mxu0
        %556 = vmatprep.mubr.f32.mxu0 0.0
        %557 = vmatmul.mubr.f32.gmra.mrb[0].mxu0 %v385
        %v558 = vpop.f32.mrb[0].mxu0
        %v559 = vadd.f32 %v369, %v558
        %v560 = vpop.f32.mrb[0].mxu0
        %561 = vmatprep.mubr.f32.mxu0 0.0
        %562 = vmatmul.mubr.f32.gmra.mrb[0].mxu0 %v388
        %v563 = vpop.f32.mrb[0].mxu0
        %v564 = vadd.f32 %v369, %v563
        %v565 = vpop.f32.mrb[0].mxu0
        %566 = vmatprep.mubr.f32.mxu0 0.0
        %567 = vmatmul.mubr.f32.gmra.mrb[0].mxu0 %v391
        %v568 = vpop.f32.mrb[0].mxu0
        %v569 = vadd.f32 %v369, %v568
        %v570 = vpop.f32.mrb[0].mxu0
        %571 = vmatprep.mubr.f32.mxu0 0.0
        %572 = vmatmul.mubr.f32.gmra.mrb[0].mxu0 %v394
        %v573 = vpop.f32.mrb[0].mxu0
        %v574 = vadd.f32 %v369, %v573
        %v575 = vpop.f32.mrb[0].mxu0
        %576 = vmatprep.mubr.f32.mxu0 0.0
        %577 = vmatmul.mubr.f32.gmra.mrb[0].mxu0 %v397
        %v578 = vpop.f32.mrb[0].mxu0
        %v579 = vadd.f32 %v369, %v578
        %v580 = vpop.f32.mrb[0].mxu0
        %581 = vmatprep.mubr.f32.mxu0 0.0
        %582 = vmatmul.mubr.f32.gmra.mrb[0].mxu0 %v400
        %v583 = vpop.f32.mrb[0].mxu0
        %v584 = vadd.f32 %v369, %v583
        %v585 = vpop.f32.mrb[0].mxu0
        %586 = vmatprep.mubr.f32.mxu0 0.0
        %587 = vmatmul.mubr.f32.gmra.mrb[0].mxu0 %v403
        %v588 = vpop.f32.mrb[0].mxu0
        %v589 = vadd.f32 %v369, %v588
        %v590 = vpop.f32.mrb[0].mxu0
        %591 = vmatprep.mubr.f32.mxu0 0.0
        %592 = vmatmul.mubr.f32.gmra.mrb[0].mxu0 %v406
        %v593 = vpop.f32.mrb[0].mxu0
        %v594 = vadd.f32 %v369, %v593
        %v595 = vpop.f32.mrb[0].mxu0
        %596 = vmatprep.mubr.f32.mxu0 0.0
        %597 = vmatmul.mubr.f32.gmra.mrb[0].mxu0 %v409
        %v598 = vpop.f32.mrb[0].mxu0
        %v599 = vadd.f32 %v369, %v598
        %v600 = vpop.f32.mrb[0].mxu0
        %601 = vmatprep.mubr.f32.mxu0 0.0
        %602 = vmatmul.mubr.f32.gmra.mrb[0].mxu0 %v412
        %v603 = vpop.f32.mrb[0].mxu0
        %v604 = vadd.f32 %v369, %v603
        %v605 = vpop.f32.mrb[0].mxu0
        %606 = vmatprep.mubr.f32.mxu0 0.0
        %607 = vmatmul.mubr.f32.gmra.mrb[0].mxu0 %v415
        %v608 = vpop.f32.mrb[0].mxu0
        %v609 = vadd.f32 %v369, %v608
        %v610 = vpop.f32.mrb[0].mxu0
        %611 = vmatprep.mubr.f32.mxu0 0.0
        %612 = vmatmul.mubr.f32.gmra.mrb[0].mxu0 %v418
        %v613 = vpop.f32.mrb[0].mxu0
        %v614 = vadd.f32 %v369, %v613
        %v615 = vpop.f32.mrb[0].mxu0
        %616 = vmatprep.mubr.f32.mxu0 0.0
        %617 = vmatmul.mubr.f32.gmra.mrb[0].mxu0 %v421
        %v618 = vpop.f32.mrb[0].mxu0
        %v619 = vadd.f32 %v369, %v618
        %v620 = vpop.f32.mrb[0].mxu0
        %621 = vmatprep.mubr.f32.mxu0 0.0
        %622 = vmatmul.mubr.f32.gmra.mrb[0].mxu0 %v424
        %v623 = vpop.f32.mrb[0].mxu0
        %v624 = vadd.f32 %v369, %v623
        %v625 = vpop.f32.mrb[0].mxu0
        %626 = vmatprep.mubr.f32.mxu0 0.0
        %627 = vmatmul.mubr.f32.gmra.mrb[0].mxu0 %v427
        %v628 = vpop.f32.mrb[0].mxu0
        %v629 = vadd.f32 %v369, %v628
        %v630 = vpop.f32.mrb[0].mxu0
        %631 = vmatprep.mubr.f32.mxu0 0.0
        %632 = vmatmul.mubr.f32.gmra.mrb[0].mxu0 %v430
        %v633 = vpop.f32.mrb[0].mxu0
        %v634 = vadd.f32 %v369, %v633
        %v635 = vpop.f32.mrb[0].mxu0
        %636 = vmatprep.mubr.f32.mxu0 0.0
        %637 = vmatmul.mubr.f32.gmra.mrb[0].mxu0 %v433
        %v638 = vpop.f32.mrb[0].mxu0
        %v639 = vadd.f32 %v369, %v638
        %v640 = vpop.f32.mrb[0].mxu0
        %641 = vmatprep.mubr.f32.mxu0 0.0
        %642 = vmatmul.mubr.f32.gmra.mrb[0].mxu0 %v436
        %v643 = vpop.f32.mrb[0].mxu0
        %v644 = vadd.f32 %v369, %v643
        %v645 = vpop.f32.mrb[0].mxu0
        %646 = vmatprep.mubr.f32.mxu0 0.0
        %647 = vmatmul.mubr.f32.gmra.mrb[0].mxu0 %v439
        %v648 = vpop.f32.mrb[0].mxu0
        %v649 = vadd.f32 %v369, %v648
        %v650 = vpop.f32.mrb[0].mxu0
        %651 = vmatprep.mubr.f32.mxu0 0.0
        %652 = vmatmul.mubr.f32.gmra.mrb[0].mxu0 %v442
        %v653 = vpop.f32.mrb[0].mxu0
        %v654 = vadd.f32 %v369, %v653
        %v655 = vpop.f32.mrb[0].mxu0
        %656 = vmatprep.mubr.f32.mxu0 0.0
        %657 = vmatmul.mubr.f32.gmra.mrb[0].mxu0 %v445
        %v658 = vpop.f32.mrb[0].mxu0
        %v659 = vadd.f32 %v369, %v658
        %v660 = vpop.f32.mrb[0].mxu0
        %661 = vmatprep.mubr.f32.mxu0 0.0
        %662 = vmatmul.mubr.f32.gmra.mrb[0].mxu0 %v448
        %v663 = vpop.f32.mrb[0].mxu0
        %v664 = vadd.f32 %v369, %v663
        %v665 = vpop.f32.mrb[0].mxu0
        %666 = vmatprep.mubr.f32.mxu0 0.0
        %667 = vmatmul.mubr.f32.gmra.mrb[0].mxu0 %v451
        %v668 = vpop.f32.mrb[0].mxu0
        %v669 = vadd.f32 %v369, %v668
        %v670 = vpop.f32.mrb[0].mxu0
        %671 = vmatprep.mubr.f32.mxu0 0.0
        %672 = vmatmul.mubr.f32.gmra.mrb[0].mxu0 %v454
        %v673 = vpop.f32.mrb[0].mxu0
        %v674 = vadd.f32 %v369, %v673
        %v675 = vpop.f32.mrb[0].mxu0
        %676 = vmatprep.mubr.f32.mxu0 0.0
        %677 = vmatmul.mubr.f32.gmra.mrb[0].mxu0 %v457
        %v678 = vpop.f32.mrb[0].mxu0
        %v679 = vadd.f32 %v369, %v678
        %v680 = vpop.f32.mrb[0].mxu0
        %681 = vmatprep.mubr.f32.mxu0 0.0
        %682 = vmatmul.mubr.f32.gmra.mrb[0].mxu0 %v460
        %v683 = vpop.f32.mrb[0].mxu0
        %v684 = vadd.f32 %v369, %v683
        %v685 = vpop.f32.mrb[0].mxu0
        %686 = vmatprep.mubr.f32.mxu0 0.0
        %687 = vmatmul.mubr.f32.gmra.mrb[0].mxu0 %v463
        %v688 = vpop.f32.mrb[0].mxu0
        %v689 = vadd.f32 %v369, %v688
        %v690 = vpop.f32.mrb[0].mxu0
        %691 = vmatprep.mubr.f32.mxu0 0.0
        %692 = vmatmul.mubr.f32.gmra.mrb[0].mxu0 %v466
        %v693 = vpop.f32.mrb[0].mxu0
        %v694 = vadd.f32 %v369, %v693
        %v695 = vpop.f32.mrb[0].mxu0
        %696 = vdwg.mxu0
        %v697 = vmax.f32 %v539, 0.0
        %v698 = vmax.f32 %v544, 0.0
        %v699 = vmax.f32 %v549, 0.0
        %v700 = vmax.f32 %v554, 0.0
        %v701 = vmax.f32 %v559, 0.0
        %v702 = vmax.f32 %v564, 0.0
        %v703 = vmax.f32 %v569, 0.0
        %v704 = vmax.f32 %v574, 0.0
        %v705 = vmax.f32 %v579, 0.0
        %v706 = vmax.f32 %v584, 0.0
        %v707 = vmax.f32 %v589, 0.0
        %v708 = vmax.f32 %v594, 0.0
        %v709 = vmax.f32 %v599, 0.0
        %v710 = vmax.f32 %v604, 0.0
        %v711 = vmax.f32 %v609, 0.0
        %v712 = vmax.f32 %v614, 0.0
        %v713 = vmax.f32 %v619, 0.0
        %v714 = vmax.f32 %v624, 0.0
        %v715 = vmax.f32 %v629, 0.0
        %v716 = vmax.f32 %v634, 0.0
        %v717 = vmax.f32 %v639, 0.0
        %v718 = vmax.f32 %v644, 0.0
        %v719 = vmax.f32 %v649, 0.0
        %v720 = vmax.f32 %v654, 0.0
        %v721 = vmax.f32 %v659, 0.0
        %v722 = vmax.f32 %v664, 0.0
        %v723 = vmax.f32 %v669, 0.0
        %v724 = vmax.f32 %v674, 0.0
        %v725 = vmax.f32 %v679, 0.0
        %v726 = vmax.f32 %v684, 0.0
        %v727 = vmax.f32 %v689, 0.0
        %v728 = vmax.f32 %v694, 0.0
        %729 = vst.msk [vmem:[#allocation2] sm:$0xff] %vm371, 0.0
        %730 = vst.msk [vmem:[#allocation2 + $0x8] sm:$0xff] %vm371, 0.0
        %vm731 = vcmask 25600
        %732 = vst.msk [vmem:[#allocation2 + $0x10] sm:$0x3] %vm731, 0.0
        %s733 = scalar_lea.vmem [#allocation2], 408
        %734 = vst.msk [vmem:[%s733] sm:$0xff] %vm371, 0.0
        %735 = vst.msk [vmem:[%s733 + $0x8] sm:$0xff] %vm371, 0.0
        %736 = vst.msk [vmem:[%s733 + $0x10] sm:$0x3] %vm731, 0.0
        %s737 = scalar_lea.vmem [#allocation2], 24
        %vm738 = vcmask 24576
        %739 = vst.msk [vmem:[%s737] sm:$0x1] %vm738, 0.0
        %740 = vst.msk [vmem:[%s737 + $0x18] sm:$0x1] %vm738, 0.0
        %741 = vst.msk [vmem:[%s737 + $0x30] sm:$0x1] %vm738, 0.0
        %742 = vst.msk [vmem:[%s737 + $0x48] sm:$0x1] %vm738, 0.0
        %743 = vst.msk [vmem:[%s737 + $0x60] sm:$0x1] %vm738, 0.0
        %744 = vst.msk [vmem:[%s737 + $0x78] sm:$0x1] %vm738, 0.0
        %745 = vst.msk [vmem:[%s737 + $0x90] sm:$0x1] %vm738, 0.0
        %746 = vst.msk [vmem:[%s737 + $0xa8] sm:$0x1] %vm738, 0.0
        %747 = vst.msk [vmem:[%s737 + $0xc0] sm:$0x1] %vm738, 0.0
        %748 = vst.msk [vmem:[%s737 + $0xd8] sm:$0x1] %vm738, 0.0
        %749 = vst.msk [vmem:[%s737 + $0xf0] sm:$0x1] %vm738, 0.0
        %750 = vst.msk [vmem:[%s737 + $0x108] sm:$0x1] %vm738, 0.0
        %751 = vst.msk [vmem:[%s737 + $0x120] sm:$0x1] %vm738, 0.0
        %752 = vst.msk [vmem:[%s737 + $0x138] sm:$0x1] %vm738, 0.0
        %753 = vst.msk [vmem:[%s737 + $0x150] sm:$0x1] %vm738, 0.0
        %754 = vst.msk [vmem:[%s737 + $0x168] sm:$0x1] %vm738, 0.0
        %755 = vst.msk [vmem:[%s737 + $0x11] sm:$0x1] %vm738, 0.0
        %756 = vst.msk [vmem:[%s737 + $0x29] sm:$0x1] %vm738, 0.0
        %757 = vst.msk [vmem:[%s737 + $0x41] sm:$0x1] %vm738, 0.0
        %758 = vst.msk [vmem:[%s737 + $0x59] sm:$0x1] %vm738, 0.0
        %759 = vst.msk [vmem:[%s737 + $0x71] sm:$0x1] %vm738, 0.0
        %760 = vst.msk [vmem:[%s737 + $0x89] sm:$0x1] %vm738, 0.0
        %761 = vst.msk [vmem:[%s737 + $0xa1] sm:$0x1] %vm738, 0.0
        %762 = vst.msk [vmem:[%s737 + $0xb9] sm:$0x1] %vm738, 0.0
        %763 = vst.msk [vmem:[%s737 + $0xd1] sm:$0x1] %vm738, 0.0
        %764 = vst.msk [vmem:[%s737 + $0xe9] sm:$0x1] %vm738, 0.0
        %765 = vst.msk [vmem:[%s737 + $0x101] sm:$0x1] %vm738, 0.0
        %766 = vst.msk [vmem:[%s737 + $0x119] sm:$0x1] %vm738, 0.0
        %767 = vst.msk [vmem:[%s737 + $0x131] sm:$0x1] %vm738, 0.0
        %768 = vst.msk [vmem:[%s737 + $0x149] sm:$0x1] %vm738, 0.0
        %769 = vst.msk [vmem:[%s737 + $0x161] sm:$0x1] %vm738, 0.0
        %770 = vst.msk [vmem:[%s737 + $0x179] sm:$0x1] %vm738, 0.0
        %803 = vrot.lane.b32.xlu0 %v697, 120
        %v804 = vpop.permute.xlu0 %803
        %805 = vrot.lane.b32.xlu0 %v698, 120
        %v806 = vpop.permute.xlu0 %805
        %807 = vrot.lane.b32.xlu0 %v699, 120
        %v808 = vpop.permute.xlu0 %807
        %809 = vrot.lane.b32.xlu0 %v700, 120
        %v810 = vpop.permute.xlu0 %809
        %811 = vrot.lane.b32.xlu0 %v701, 120
        %v812 = vpop.permute.xlu0 %811
        %813 = vrot.lane.b32.xlu0 %v702, 120
        %v814 = vpop.permute.xlu0 %813
        %815 = vrot.lane.b32.xlu0 %v703, 120
        %v816 = vpop.permute.xlu0 %815
        %817 = vrot.lane.b32.xlu0 %v704, 120
        %v818 = vpop.permute.xlu0 %817
        %819 = vrot.lane.b32.xlu0 %v705, 120
        %v820 = vpop.permute.xlu0 %819
        %821 = vrot.lane.b32.xlu0 %v706, 120
        %v822 = vpop.permute.xlu0 %821
        %823 = vrot.lane.b32.xlu0 %v707, 120
        %v824 = vpop.permute.xlu0 %823
        %825 = vrot.lane.b32.xlu0 %v708, 120
        %v826 = vpop.permute.xlu0 %825
        %827 = vrot.lane.b32.xlu0 %v709, 120
        %v828 = vpop.permute.xlu0 %827
        %829 = vrot.lane.b32.xlu0 %v710, 120
        %v830 = vpop.permute.xlu0 %829
        %831 = vrot.lane.b32.xlu0 %v711, 120
        %v832 = vpop.permute.xlu0 %831
        %833 = vrot.lane.b32.xlu0 %v712, 120
        %v834 = vpop.permute.xlu0 %833
        %835 = vrot.lane.b32.xlu0 %v713, 120
        %v836 = vpop.permute.xlu0 %835
        %837 = vrot.lane.b32.xlu0 %v714, 120
        %v838 = vpop.permute.xlu0 %837
        %839 = vrot.lane.b32.xlu0 %v715, 120
        %v840 = vpop.permute.xlu0 %839
        %841 = vrot.lane.b32.xlu0 %v716, 120
        %v842 = vpop.permute.xlu0 %841
        %843 = vrot.lane.b32.xlu0 %v717, 120
        %v844 = vpop.permute.xlu0 %843
        %845 = vrot.lane.b32.xlu0 %v718, 120
        %v846 = vpop.permute.xlu0 %845
        %847 = vrot.lane.b32.xlu0 %v719, 120
        %v848 = vpop.permute.xlu0 %847
        %849 = vrot.lane.b32.xlu0 %v720, 120
        %v850 = vpop.permute.xlu0 %849
        %851 = vrot.lane.b32.xlu0 %v721, 120
        %v852 = vpop.permute.xlu0 %851
        %853 = vrot.lane.b32.xlu0 %v722, 120
        %v854 = vpop.permute.xlu0 %853
        %855 = vrot.lane.b32.xlu0 %v723, 120
        %v856 = vpop.permute.xlu0 %855
        %857 = vrot.lane.b32.xlu0 %v724, 120
        %v858 = vpop.permute.xlu0 %857
        %859 = vrot.lane.b32.xlu0 %v725, 120
        %v860 = vpop.permute.xlu0 %859
        %861 = vrot.lane.b32.xlu0 %v726, 120
        %v862 = vpop.permute.xlu0 %861
        %863 = vrot.lane.b32.xlu0 %v727, 120
        %v864 = vpop.permute.xlu0 %863
        %865 = vrot.lane.b32.xlu0 %v728, 120
        %v866 = vpop.permute.xlu0 %865
        %899 = vst.msk [vmem:[%s737 + $0x1] sm:$0xff] %vm371, %v804
        %900 = vst.msk [vmem:[%s737 + $0x9] sm:$0xff] %vm371, %v806
        %901 = vst.msk [vmem:[%s737 + $0x19] sm:$0xff] %vm371, %v808
        %902 = vst.msk [vmem:[%s737 + $0x21] sm:$0xff] %vm371, %v810
        %903 = vst.msk [vmem:[%s737 + $0x31] sm:$0xff] %vm371, %v812
        %904 = vst.msk [vmem:[%s737 + $0x39] sm:$0xff] %vm371, %v814
        %905 = vst.msk [vmem:[%s737 + $0x49] sm:$0xff] %vm371, %v816
        %906 = vst.msk [vmem:[%s737 + $0x51] sm:$0xff] %vm371, %v818
        %907 = vst.msk [vmem:[%s737 + $0x61] sm:$0xff] %vm371, %v820
        %908 = vst.msk [vmem:[%s737 + $0x69] sm:$0xff] %vm371, %v822
        %909 = vst.msk [vmem:[%s737 + $0x79] sm:$0xff] %vm371, %v824
        %910 = vst.msk [vmem:[%s737 + $0x81] sm:$0xff] %vm371, %v826
        %911 = vst.msk [vmem:[%s737 + $0x91] sm:$0xff] %vm371, %v828
        %912 = vst.msk [vmem:[%s737 + $0x99] sm:$0xff] %vm371, %v830
        %913 = vst.msk [vmem:[%s737 + $0xa9] sm:$0xff] %vm371, %v832
        %914 = vst.msk [vmem:[%s737 + $0xb1] sm:$0xff] %vm371, %v834
        %915 = vst.msk [vmem:[%s737 + $0xc1] sm:$0xff] %vm371, %v836
        %916 = vst.msk [vmem:[%s737 + $0xc9] sm:$0xff] %vm371, %v838
        %917 = vst.msk [vmem:[%s737 + $0xd9] sm:$0xff] %vm371, %v840
        %918 = vst.msk [vmem:[%s737 + $0xe1] sm:$0xff] %vm371, %v842
        %919 = vst.msk [vmem:[%s737 + $0xf1] sm:$0xff] %vm371, %v844
        %920 = vst.msk [vmem:[%s737 + $0xf9] sm:$0xff] %vm371, %v846
        %921 = vst.msk [vmem:[%s737 + $0x109] sm:$0xff] %vm371, %v848
        %922 = vst.msk [vmem:[%s737 + $0x111] sm:$0xff] %vm371, %v850
        %923 = vst.msk [vmem:[%s737 + $0x121] sm:$0xff] %vm371, %v852
        %924 = vst.msk [vmem:[%s737 + $0x129] sm:$0xff] %vm371, %v854
        %925 = vst.msk [vmem:[%s737 + $0x139] sm:$0xff] %vm371, %v856
        %926 = vst.msk [vmem:[%s737 + $0x141] sm:$0xff] %vm371, %v858
        %927 = vst.msk [vmem:[%s737 + $0x151] sm:$0xff] %vm371, %v860
        %928 = vst.msk [vmem:[%s737 + $0x159] sm:$0xff] %vm371, %v862
        %929 = vst.msk [vmem:[%s737 + $0x169] sm:$0xff] %vm371, %v864
        %930 = vst.msk [vmem:[%s737 + $0x171] sm:$0xff] %vm371, %v866
        %v931 = vld [vmem:[#allocation2] sm:$0xff]
        %v932 = vld [vmem:[#allocation2 + $0x8] sm:$0xff]
        %v933 = vld [vmem:[#allocation2 + $0x10] sm:$0x3]
        %v934 = vld [vmem:[#allocation2 + $0x18] sm:$0xff]
        %v935 = vld [vmem:[#allocation2 + $0x20] sm:$0xff]
        %v936 = vld [vmem:[#allocation2 + $0x28] sm:$0x3]
        %v937 = vld [vmem:[#allocation2 + $0x30] sm:$0xff]
        %v938 = vld [vmem:[#allocation2 + $0x38] sm:$0xff]
        %v939 = vld [vmem:[#allocation2 + $0x40] sm:$0x3]
        %v940 = vld [vmem:[#allocation2 + $0x48] sm:$0xff]
        %v941 = vld [vmem:[#allocation2 + $0x50] sm:$0xff]
        %v942 = vld [vmem:[#allocation2 + $0x58] sm:$0x3]
        %v943 = vld [vmem:[#allocation2 + $0x60] sm:$0xff]
        %v944 = vld [vmem:[#allocation2 + $0x68] sm:$0xff]
        %v945 = vld [vmem:[#allocation2 + $0x70] sm:$0x3]
        %v946 = vld [vmem:[#allocation2 + $0x78] sm:$0xff]
        %v947 = vld [vmem:[#allocation2 + $0x80] sm:$0xff]
        %v948 = vld [vmem:[#allocation2 + $0x88] sm:$0x3]
        %v949 = vld [vmem:[#allocation2 + $0x90] sm:$0xff]
        %v950 = vld [vmem:[#allocation2 + $0x98] sm:$0xff]
        %v951 = vld [vmem:[#allocation2 + $0xa0] sm:$0x3]
        %v952 = vld [vmem:[#allocation2 + $0xa8] sm:$0xff]
        %v953 = vld [vmem:[#allocation2 + $0xb0] sm:$0xff]
        %v954 = vld [vmem:[#allocation2 + $0xb8] sm:$0x3]
        %v955 = vld [vmem:[#allocation2 + $0xc0] sm:$0xff]
        %v956 = vld [vmem:[#allocation2 + $0xc8] sm:$0xff]
        %v957 = vld [vmem:[#allocation2 + $0xd0] sm:$0x3]
        %v958 = vld [vmem:[#allocation2 + $0xd8] sm:$0xff]
        %v959 = vld [vmem:[#allocation2 + $0xe0] sm:$0xff]
        %v960 = vld [vmem:[#allocation2 + $0xe8] sm:$0x3]
        %v961 = vld [vmem:[#allocation2 + $0xf0] sm:$0xff]
        %v962 = vld [vmem:[#allocation2 + $0xf8] sm:$0xff]
        %v963 = vld [vmem:[#allocation2 + $0x100] sm:$0x3]
        %v964 = vld [vmem:[#allocation2 + $0x108] sm:$0xff]
        %v965 = vld [vmem:[#allocation2 + $0x110] sm:$0xff]
        %v966 = vld [vmem:[#allocation2 + $0x118] sm:$0x3]
        %v967 = vld [vmem:[#allocation2 + $0x120] sm:$0xff]
        %v968 = vld [vmem:[#allocation2 + $0x128] sm:$0xff]
        %v969 = vld [vmem:[#allocation2 + $0x130] sm:$0x3]
        %v970 = vld [vmem:[#allocation2 + $0x138] sm:$0xff]
        %v971 = vld [vmem:[#allocation2 + $0x140] sm:$0xff]
        %v972 = vld [vmem:[#allocation2 + $0x148] sm:$0x3]
        %v973 = vld [vmem:[#allocation2 + $0x150] sm:$0xff]
        %v974 = vld [vmem:[#allocation2 + $0x158] sm:$0xff]
        %v975 = vld [vmem:[#allocation2 + $0x160] sm:$0x3]
        %v976 = vld [vmem:[#allocation2 + $0x168] sm:$0xff]
        %v977 = vld [vmem:[#allocation2 + $0x170] sm:$0xff]
        %v978 = vld [vmem:[#allocation2 + $0x178] sm:$0x3]
        %vm1027 = vcmask 1046528
        %v1028 = vrot.slane %v931, 1
        %v1029 = vrot.slane %v932, 1
        %v1030 = vsel %vm1027, %v1028, %v1029
        %v1031 = vrot.slane %v933, 1
        %v1032 = vsel %vm1027, %v1029, %v1031
        %v1033 = vrot.slane %v934, 1
        %v1034 = vrot.slane %v935, 1
        %v1035 = vsel %vm1027, %v1033, %v1034
        %v1036 = vrot.slane %v936, 1
        %v1037 = vsel %vm1027, %v1034, %v1036
        %v1038 = vrot.slane %v937, 1
        %v1039 = vrot.slane %v938, 1
        %v1040 = vsel %vm1027, %v1038, %v1039
        %v1041 = vrot.slane %v939, 1
        %v1042 = vsel %vm1027, %v1039, %v1041
        %v1043 = vrot.slane %v940, 1
        %v1044 = vrot.slane %v941, 1
        %v1045 = vsel %vm1027, %v1043, %v1044
        %v1046 = vrot.slane %v942, 1
        %v1047 = vsel %vm1027, %v1044, %v1046
        %v1048 = vrot.slane %v943, 1
        %v1049 = vrot.slane %v944, 1
        %v1050 = vsel %vm1027, %v1048, %v1049
        %v1051 = vrot.slane %v945, 1
        %v1052 = vsel %vm1027, %v1049, %v1051
        %v1053 = vrot.slane %v946, 1
        %v1054 = vrot.slane %v947, 1
        %v1055 = vsel %vm1027, %v1053, %v1054
        %v1056 = vrot.slane %v948, 1
        %v1057 = vsel %vm1027, %v1054, %v1056
        %v1058 = vrot.slane %v949, 1
        %v1059 = vrot.slane %v950, 1
        %v1060 = vsel %vm1027, %v1058, %v1059
        %v1061 = vrot.slane %v951, 1
        %v1062 = vsel %vm1027, %v1059, %v1061
        %v1063 = vrot.slane %v952, 1
        %v1064 = vrot.slane %v953, 1
        %v1065 = vsel %vm1027, %v1063, %v1064
        %v1066 = vrot.slane %v954, 1
        %v1067 = vsel %vm1027, %v1064, %v1066
        %v1068 = vrot.slane %v955, 1
        %v1069 = vrot.slane %v956, 1
        %v1070 = vsel %vm1027, %v1068, %v1069
        %v1071 = vrot.slane %v957, 1
        %v1072 = vsel %vm1027, %v1069, %v1071
        %v1073 = vrot.slane %v958, 1
        %v1074 = vrot.slane %v959, 1
        %v1075 = vsel %vm1027, %v1073, %v1074
        %v1076 = vrot.slane %v960, 1
        %v1077 = vsel %vm1027, %v1074, %v1076
        %v1078 = vrot.slane %v961, 1
        %v1079 = vrot.slane %v962, 1
        %v1080 = vsel %vm1027, %v1078, %v1079
        %v1081 = vrot.slane %v963, 1
        %v1082 = vsel %vm1027, %v1079, %v1081
        %v1083 = vrot.slane %v964, 1
        %v1084 = vrot.slane %v965, 1
        %v1085 = vsel %vm1027, %v1083, %v1084
        %v1086 = vrot.slane %v966, 1
        %v1087 = vsel %vm1027, %v1084, %v1086
        %v1088 = vrot.slane %v967, 1
        %v1089 = vrot.slane %v968, 1
        %v1090 = vsel %vm1027, %v1088, %v1089
        %v1091 = vrot.slane %v969, 1
        %v1092 = vsel %vm1027, %v1089, %v1091
        %v1093 = vrot.slane %v970, 1
        %v1094 = vrot.slane %v971, 1
        %v1095 = vsel %vm1027, %v1093, %v1094
        %v1096 = vrot.slane %v972, 1
        %v1097 = vsel %vm1027, %v1094, %v1096
        %v1098 = vrot.slane %v973, 1
        %v1099 = vrot.slane %v974, 1
        %v1100 = vsel %vm1027, %v1098, %v1099
        %v1101 = vrot.slane %v975, 1
        %v1102 = vsel %vm1027, %v1099, %v1101
        %v1103 = vrot.slane %v976, 1
        %v1104 = vrot.slane %v977, 1
        %v1105 = vsel %vm1027, %v1103, %v1104
        %v1106 = vrot.slane %v978, 1
        %v1107 = vsel %vm1027, %v1104, %v1106
        %1108 = vrot.lane.b32.xlu0 %v1030, 4
        %v1109 = vpop.permute.xlu0 %1108
        %1110 = vrot.lane.b32.xlu0 %v1032, 4
        %v1111 = vpop.permute.xlu0 %1110
        %1112 = vrot.lane.b32.xlu0 %v1035, 4
        %v1113 = vpop.permute.xlu0 %1112
        %1114 = vrot.lane.b32.xlu0 %v1037, 4
        %v1115 = vpop.permute.xlu0 %1114
        %1116 = vrot.lane.b32.xlu0 %v1040, 4
        %v1117 = vpop.permute.xlu0 %1116
        %1118 = vrot.lane.b32.xlu0 %v1042, 4
        %v1119 = vpop.permute.xlu0 %1118
        %1120 = vrot.lane.b32.xlu0 %v1045, 4
        %v1121 = vpop.permute.xlu0 %1120
        %1122 = vrot.lane.b32.xlu0 %v1047, 4
        %v1123 = vpop.permute.xlu0 %1122
        %1124 = vrot.lane.b32.xlu0 %v1050, 4
        %v1125 = vpop.permute.xlu0 %1124
        %1126 = vrot.lane.b32.xlu0 %v1052, 4
        %v1127 = vpop.permute.xlu0 %1126
        %1128 = vrot.lane.b32.xlu0 %v1055, 4
        %v1129 = vpop.permute.xlu0 %1128
        %1130 = vrot.lane.b32.xlu0 %v1057, 4
        %v1131 = vpop.permute.xlu0 %1130
        %1132 = vrot.lane.b32.xlu0 %v1060, 4
        %v1133 = vpop.permute.xlu0 %1132
        %1134 = vrot.lane.b32.xlu0 %v1062, 4
        %v1135 = vpop.permute.xlu0 %1134
        %1136 = vrot.lane.b32.xlu0 %v1065, 4
        %v1137 = vpop.permute.xlu0 %1136
        %1138 = vrot.lane.b32.xlu0 %v1067, 4
        %v1139 = vpop.permute.xlu0 %1138
        %1140 = vrot.lane.b32.xlu0 %v1070, 4
        %v1141 = vpop.permute.xlu0 %1140
        %1142 = vrot.lane.b32.xlu0 %v1072, 4
        %v1143 = vpop.permute.xlu0 %1142
        %1144 = vrot.lane.b32.xlu0 %v1075, 4
        %v1145 = vpop.permute.xlu0 %1144
        %1146 = vrot.lane.b32.xlu0 %v1077, 4
        %v1147 = vpop.permute.xlu0 %1146
        %1148 = vrot.lane.b32.xlu0 %v1080, 4
        %v1149 = vpop.permute.xlu0 %1148
        %1150 = vrot.lane.b32.xlu0 %v1082, 4
        %v1151 = vpop.permute.xlu0 %1150
        %1152 = vrot.lane.b32.xlu0 %v1085, 4
        %v1153 = vpop.permute.xlu0 %1152
        %1154 = vrot.lane.b32.xlu0 %v1087, 4
        %v1155 = vpop.permute.xlu0 %1154
        %1156 = vrot.lane.b32.xlu0 %v1090, 4
        %v1157 = vpop.permute.xlu0 %1156
        %1158 = vrot.lane.b32.xlu0 %v1092, 4
        %v1159 = vpop.permute.xlu0 %1158
        %1160 = vrot.lane.b32.xlu0 %v1095, 4
        %v1161 = vpop.permute.xlu0 %1160
        %1162 = vrot.lane.b32.xlu0 %v1097, 4
        %v1163 = vpop.permute.xlu0 %1162
        %1164 = vrot.lane.b32.xlu0 %v1100, 4
        %v1165 = vpop.permute.xlu0 %1164
        %1166 = vrot.lane.b32.xlu0 %v1102, 4
        %v1167 = vpop.permute.xlu0 %1166
        %1168 = vrot.lane.b32.xlu0 %v1105, 4
        %v1169 = vpop.permute.xlu0 %1168
        %1170 = vrot.lane.b32.xlu0 %v1107, 4
        %v1171 = vpop.permute.xlu0 %1170
        %vm1204 = vcmask 1045504
        %v1205 = vrot.slane %v931, 2
        %v1206 = vrot.slane %v932, 2
        %v1207 = vsel %vm1204, %v1205, %v1206
        %v1208 = vrot.slane %v933, 2
        %v1209 = vsel %vm1204, %v1206, %v1208
        %v1210 = vrot.slane %v934, 2
        %v1211 = vrot.slane %v935, 2
        %v1212 = vsel %vm1204, %v1210, %v1211
        %v1213 = vrot.slane %v936, 2
        %v1214 = vsel %vm1204, %v1211, %v1213
        %v1215 = vrot.slane %v937, 2
        %v1216 = vrot.slane %v938, 2
        %v1217 = vsel %vm1204, %v1215, %v1216
        %v1218 = vrot.slane %v939, 2
        %v1219 = vsel %vm1204, %v1216, %v1218
        %v1220 = vrot.slane %v940, 2
        %v1221 = vrot.slane %v941, 2
        %v1222 = vsel %vm1204, %v1220, %v1221
        %v1223 = vrot.slane %v942, 2
        %v1224 = vsel %vm1204, %v1221, %v1223
        %v1225 = vrot.slane %v943, 2
        %v1226 = vrot.slane %v944, 2
        %v1227 = vsel %vm1204, %v1225, %v1226
        %v1228 = vrot.slane %v945, 2
        %v1229 = vsel %vm1204, %v1226, %v1228
        %v1230 = vrot.slane %v946, 2
        %v1231 = vrot.slane %v947, 2
        %v1232 = vsel %vm1204, %v1230, %v1231
        %v1233 = vrot.slane %v948, 2
        %v1234 = vsel %vm1204, %v1231, %v1233
        %v1235 = vrot.slane %v949, 2
        %v1236 = vrot.slane %v950, 2
        %v1237 = vsel %vm1204, %v1235, %v1236
        %v1238 = vrot.slane %v951, 2
        %v1239 = vsel %vm1204, %v1236, %v1238
        %v1240 = vrot.slane %v952, 2
        %v1241 = vrot.slane %v953, 2
        %v1242 = vsel %vm1204, %v1240, %v1241
        %v1243 = vrot.slane %v954, 2
        %v1244 = vsel %vm1204, %v1241, %v1243
        %v1245 = vrot.slane %v955, 2
        %v1246 = vrot.slane %v956, 2
        %v1247 = vsel %vm1204, %v1245, %v1246
        %v1248 = vrot.slane %v957, 2
        %v1249 = vsel %vm1204, %v1246, %v1248
        %v1250 = vrot.slane %v958, 2
        %v1251 = vrot.slane %v959, 2
        %v1252 = vsel %vm1204, %v1250, %v1251
        %v1253 = vrot.slane %v960, 2
        %v1254 = vsel %vm1204, %v1251, %v1253
        %v1255 = vrot.slane %v961, 2
        %v1256 = vrot.slane %v962, 2
        %v1257 = vsel %vm1204, %v1255, %v1256
        %v1258 = vrot.slane %v963, 2
        %v1259 = vsel %vm1204, %v1256, %v1258
        %v1260 = vrot.slane %v964, 2
        %v1261 = vrot.slane %v965, 2
        %v1262 = vsel %vm1204, %v1260, %v1261
        %v1263 = vrot.slane %v966, 2
        %v1264 = vsel %vm1204, %v1261, %v1263
        %v1265 = vrot.slane %v967, 2
        %v1266 = vrot.slane %v968, 2
        %v1267 = vsel %vm1204, %v1265, %v1266
        %v1268 = vrot.slane %v969, 2
        %v1269 = vsel %vm1204, %v1266, %v1268
        %v1270 = vrot.slane %v970, 2
        %v1271 = vrot.slane %v971, 2
        %v1272 = vsel %vm1204, %v1270, %v1271
        %v1273 = vrot.slane %v972, 2
        %v1274 = vsel %vm1204, %v1271, %v1273
        %v1275 = vrot.slane %v973, 2
        %v1276 = vrot.slane %v974, 2
        %v1277 = vsel %vm1204, %v1275, %v1276
        %v1278 = vrot.slane %v975, 2
        %v1279 = vsel %vm1204, %v1276, %v1278
        %v1280 = vrot.slane %v976, 2
        %v1281 = vrot.slane %v977, 2
        %v1282 = vsel %vm1204, %v1280, %v1281
        %v1283 = vrot.slane %v978, 2
        %v1284 = vsel %vm1204, %v1281, %v1283
        %1285 = vrot.lane.b32.xlu0 %v1207, 8
        %v1286 = vpop.permute.xlu0 %1285
        %1287 = vrot.lane.b32.xlu0 %v1209, 8
        %v1288 = vpop.permute.xlu0 %1287
        %1289 = vrot.lane.b32.xlu0 %v1212, 8
        %v1290 = vpop.permute.xlu0 %1289
        %1291 = vrot.lane.b32.xlu0 %v1214, 8
        %v1292 = vpop.permute.xlu0 %1291
        %1293 = vrot.lane.b32.xlu0 %v1217, 8
        %v1294 = vpop.permute.xlu0 %1293
        %1295 = vrot.lane.b32.xlu0 %v1219, 8
        %v1296 = vpop.permute.xlu0 %1295
        %1297 = vrot.lane.b32.xlu0 %v1222, 8
        %v1298 = vpop.permute.xlu0 %1297
        %1299 = vrot.lane.b32.xlu0 %v1224, 8
        %v1300 = vpop.permute.xlu0 %1299
        %1301 = vrot.lane.b32.xlu0 %v1227, 8
        %v1302 = vpop.permute.xlu0 %1301
        %1303 = vrot.lane.b32.xlu0 %v1229, 8
        %v1304 = vpop.permute.xlu0 %1303
        %1305 = vrot.lane.b32.xlu0 %v1232, 8
        %v1306 = vpop.permute.xlu0 %1305
        %1307 = vrot.lane.b32.xlu0 %v1234, 8
        %v1308 = vpop.permute.xlu0 %1307
        %1309 = vrot.lane.b32.xlu0 %v1237, 8
        %v1310 = vpop.permute.xlu0 %1309
        %1311 = vrot.lane.b32.xlu0 %v1239, 8
        %v1312 = vpop.permute.xlu0 %1311
        %1313 = vrot.lane.b32.xlu0 %v1242, 8
        %v1314 = vpop.permute.xlu0 %1313
        %1315 = vrot.lane.b32.xlu0 %v1244, 8
        %v1316 = vpop.permute.xlu0 %1315
        %1317 = vrot.lane.b32.xlu0 %v1247, 8
        %v1318 = vpop.permute.xlu0 %1317
        %1319 = vrot.lane.b32.xlu0 %v1249, 8
        %v1320 = vpop.permute.xlu0 %1319
        %1321 = vrot.lane.b32.xlu0 %v1252, 8
        %v1322 = vpop.permute.xlu0 %1321
        %1323 = vrot.lane.b32.xlu0 %v1254, 8
        %v1324 = vpop.permute.xlu0 %1323
        %1325 = vrot.lane.b32.xlu0 %v1257, 8
        %v1326 = vpop.permute.xlu0 %1325
        %1327 = vrot.lane.b32.xlu0 %v1259, 8
        %v1328 = vpop.permute.xlu0 %1327
        %1329 = vrot.lane.b32.xlu0 %v1262, 8
        %v1330 = vpop.permute.xlu0 %1329
        %1331 = vrot.lane.b32.xlu0 %v1264, 8
        %v1332 = vpop.permute.xlu0 %1331
        %1333 = vrot.lane.b32.xlu0 %v1267, 8
        %v1334 = vpop.permute.xlu0 %1333
        %1335 = vrot.lane.b32.xlu0 %v1269, 8
        %v1336 = vpop.permute.xlu0 %1335
        %1337 = vrot.lane.b32.xlu0 %v1272, 8
        %v1338 = vpop.permute.xlu0 %1337
        %1339 = vrot.lane.b32.xlu0 %v1274, 8
        %v1340 = vpop.permute.xlu0 %1339
        %1341 = vrot.lane.b32.xlu0 %v1277, 8
        %v1342 = vpop.permute.xlu0 %1341
        %1343 = vrot.lane.b32.xlu0 %v1279, 8
        %v1344 = vpop.permute.xlu0 %1343
        %1345 = vrot.lane.b32.xlu0 %v1282, 8
        %v1346 = vpop.permute.xlu0 %1345
        %1347 = vrot.lane.b32.xlu0 %v1284, 8
        %v1348 = vpop.permute.xlu0 %1347
        %v1381 = vsel %vm371, %v931, %v1109
        %v1382 = vsel %vm371, %v932, %v1111
        %v1383 = vsel %vm371, %v934, %v1113
        %v1384 = vsel %vm371, %v935, %v1115
        %v1385 = vsel %vm371, %v937, %v1117
        %v1386 = vsel %vm371, %v938, %v1119
        %v1387 = vsel %vm371, %v940, %v1121
        %v1388 = vsel %vm371, %v941, %v1123
        %v1389 = vsel %vm371, %v943, %v1125
        %v1390 = vsel %vm371, %v944, %v1127
        %v1391 = vsel %vm371, %v946, %v1129
        %v1392 = vsel %vm371, %v947, %v1131
        %v1393 = vsel %vm371, %v949, %v1133
        %v1394 = vsel %vm371, %v950, %v1135
        %v1395 = vsel %vm371, %v952, %v1137
        %v1396 = vsel %vm371, %v953, %v1139
        %v1397 = vsel %vm371, %v955, %v1141
        %v1398 = vsel %vm371, %v956, %v1143
        %v1399 = vsel %vm371, %v958, %v1145
        %v1400 = vsel %vm371, %v959, %v1147
        %v1401 = vsel %vm371, %v961, %v1149
        %v1402 = vsel %vm371, %v962, %v1151
        %v1403 = vsel %vm371, %v964, %v1153
        %v1404 = vsel %vm371, %v965, %v1155
        %v1405 = vsel %vm371, %v967, %v1157
        %v1406 = vsel %vm371, %v968, %v1159
        %v1407 = vsel %vm371, %v970, %v1161
        %v1408 = vsel %vm371, %v971, %v1163
        %v1409 = vsel %vm371, %v973, %v1165
        %v1410 = vsel %vm371, %v974, %v1167
        %v1411 = vsel %vm371, %v976, %v1169
        %v1412 = vsel %vm371, %v977, %v1171
        %vm1413 = vcmask 64512
        %v1414 = vsel %vm1413, %v1381, %v1286
        %v1415 = vsel %vm1413, %v1382, %v1288
        %v1416 = vsel %vm1413, %v1383, %v1290
        %v1417 = vsel %vm1413, %v1384, %v1292
        %v1418 = vsel %vm1413, %v1385, %v1294
        %v1419 = vsel %vm1413, %v1386, %v1296
        %v1420 = vsel %vm1413, %v1387, %v1298
        %v1421 = vsel %vm1413, %v1388, %v1300
        %v1422 = vsel %vm1413, %v1389, %v1302
        %v1423 = vsel %vm1413, %v1390, %v1304
        %v1424 = vsel %vm1413, %v1391, %v1306
        %v1425 = vsel %vm1413, %v1392, %v1308
        %v1426 = vsel %vm1413, %v1393, %v1310
        %v1427 = vsel %vm1413, %v1394, %v1312
        %v1428 = vsel %vm1413, %v1395, %v1314
        %v1429 = vsel %vm1413, %v1396, %v1316
        %v1430 = vsel %vm1413, %v1397, %v1318
        %v1431 = vsel %vm1413, %v1398, %v1320
        %v1432 = vsel %vm1413, %v1399, %v1322
        %v1433 = vsel %vm1413, %v1400, %v1324
        %v1434 = vsel %vm1413, %v1401, %v1326
        %v1435 = vsel %vm1413, %v1402, %v1328
        %v1436 = vsel %vm1413, %v1403, %v1330
        %v1437 = vsel %vm1413, %v1404, %v1332
        %v1438 = vsel %vm1413, %v1405, %v1334
        %v1439 = vsel %vm1413, %v1406, %v1336
        %v1440 = vsel %vm1413, %v1407, %v1338
        %v1441 = vsel %vm1413, %v1408, %v1340
        %v1442 = vsel %vm1413, %v1409, %v1342
        %v1443 = vsel %vm1413, %v1410, %v1344
        %v1444 = vsel %vm1413, %v1411, %v1346
        %v1445 = vsel %vm1413, %v1412, %v1348
        %v1446 = vld [vmem:[%s3] sm:$0xff]
        %v1447 = vld [vmem:[%s3 + $0x8] sm:$0xf]
        %v1448 = vld [vmem:[%s737] sm:$0xff]
        %v1449 = vld [vmem:[%s737 + $0x8] sm:$0xff]
        %v1450 = vld [vmem:[%s737 + $0x10] sm:$0x3]
        %v1451 = vld [vmem:[%s737 + $0x18] sm:$0xff]
        %v1452 = vld [vmem:[%s737 + $0x20] sm:$0xff]
        %v1453 = vld [vmem:[%s737 + $0x28] sm:$0x3]
        %v1454 = vld [vmem:[%s737 + $0x30] sm:$0xff]
        %v1455 = vld [vmem:[%s737 + $0x38] sm:$0xff]
        %v1456 = vld [vmem:[%s737 + $0x40] sm:$0x3]
        %v1457 = vld [vmem:[%s737 + $0x48] sm:$0xff]
        %v1458 = vld [vmem:[%s737 + $0x50] sm:$0xff]
        %v1459 = vld [vmem:[%s737 + $0x58] sm:$0x3]
        %v1460 = vld [vmem:[%s737 + $0x60] sm:$0xff]
        %v1461 = vld [vmem:[%s737 + $0x68] sm:$0xff]
        %v1462 = vld [vmem:[%s737 + $0x70] sm:$0x3]
        %v1463 = vld [vmem:[%s737 + $0x78] sm:$0xff]
        %v1464 = vld [vmem:[%s737 + $0x80] sm:$0xff]
        %v1465 = vld [vmem:[%s737 + $0x88] sm:$0x3]
        %v1466 = vld [vmem:[%s737 + $0x90] sm:$0xff]
        %v1467 = vld [vmem:[%s737 + $0x98] sm:$0xff]
        %v1468 = vld [vmem:[%s737 + $0xa0] sm:$0x3]
        %v1469 = vld [vmem:[%s737 + $0xa8] sm:$0xff]
        %v1470 = vld [vmem:[%s737 + $0xb0] sm:$0xff]
        %v1471 = vld [vmem:[%s737 + $0xb8] sm:$0x3]
        %v1472 = vld [vmem:[%s737 + $0xc0] sm:$0xff]
        %v1473 = vld [vmem:[%s737 + $0xc8] sm:$0xff]
        %v1474 = vld [vmem:[%s737 + $0xd0] sm:$0x3]
        %v1475 = vld [vmem:[%s737 + $0xd8] sm:$0xff]
        %v1476 = vld [vmem:[%s737 + $0xe0] sm:$0xff]
        %v1477 = vld [vmem:[%s737 + $0xe8] sm:$0x3]
        %v1478 = vld [vmem:[%s737 + $0xf0] sm:$0xff]
        %v1479 = vld [vmem:[%s737 + $0xf8] sm:$0xff]
        %v1480 = vld [vmem:[%s737 + $0x100] sm:$0x3]
        %v1481 = vld [vmem:[%s737 + $0x108] sm:$0xff]
        %v1482 = vld [vmem:[%s737 + $0x110] sm:$0xff]
        %v1483 = vld [vmem:[%s737 + $0x118] sm:$0x3]
        %v1484 = vld [vmem:[%s737 + $0x120] sm:$0xff]
        %v1485 = vld [vmem:[%s737 + $0x128] sm:$0xff]
        %v1486 = vld [vmem:[%s737 + $0x130] sm:$0x3]
        %v1487 = vld [vmem:[%s737 + $0x138] sm:$0xff]
        %v1488 = vld [vmem:[%s737 + $0x140] sm:$0xff]
        %v1489 = vld [vmem:[%s737 + $0x148] sm:$0x3]
        %v1490 = vld [vmem:[%s737 + $0x150] sm:$0xff]
        %v1491 = vld [vmem:[%s737 + $0x158] sm:$0xff]
        %v1492 = vld [vmem:[%s737 + $0x160] sm:$0x3]
        %v1493 = vld [vmem:[%s737 + $0x168] sm:$0xff]
        %v1494 = vld [vmem:[%s737 + $0x170] sm:$0xff]
        %v1495 = vld [vmem:[%s737 + $0x178] sm:$0x3]
        %v1544 = vrot.slane %v1448, 1
        %v1545 = vrot.slane %v1449, 1
        %v1546 = vsel %vm1027, %v1544, %v1545
        %v1547 = vrot.slane %v1450, 1
        %v1548 = vsel %vm1027, %v1545, %v1547
        %v1549 = vrot.slane %v1451, 1
        %v1550 = vrot.slane %v1452, 1
        %v1551 = vsel %vm1027, %v1549, %v1550
        %v1552 = vrot.slane %v1453, 1
        %v1553 = vsel %vm1027, %v1550, %v1552
        %v1554 = vrot.slane %v1454, 1
        %v1555 = vrot.slane %v1455, 1
        %v1556 = vsel %vm1027, %v1554, %v1555
        %v1557 = vrot.slane %v1456, 1
        %v1558 = vsel %vm1027, %v1555, %v1557
        %v1559 = vrot.slane %v1457, 1
        %v1560 = vrot.slane %v1458, 1
        %v1561 = vsel %vm1027, %v1559, %v1560
        %v1562 = vrot.slane %v1459, 1
        %v1563 = vsel %vm1027, %v1560, %v1562
        %v1564 = vrot.slane %v1460, 1
        %v1565 = vrot.slane %v1461, 1
        %v1566 = vsel %vm1027, %v1564, %v1565
        %v1567 = vrot.slane %v1462, 1
        %v1568 = vsel %vm1027, %v1565, %v1567
        %v1569 = vrot.slane %v1463, 1
        %v1570 = vrot.slane %v1464, 1
        %v1571 = vsel %vm1027, %v1569, %v1570
        %v1572 = vrot.slane %v1465, 1
        %v1573 = vsel %vm1027, %v1570, %v1572
        %v1574 = vrot.slane %v1466, 1
        %v1575 = vrot.slane %v1467, 1
        %v1576 = vsel %vm1027, %v1574, %v1575
        %v1577 = vrot.slane %v1468, 1
        %v1578 = vsel %vm1027, %v1575, %v1577
        %v1579 = vrot.slane %v1469, 1
        %v1580 = vrot.slane %v1470, 1
        %v1581 = vsel %vm1027, %v1579, %v1580
        %v1582 = vrot.slane %v1471, 1
        %v1583 = vsel %vm1027, %v1580, %v1582
        %v1584 = vrot.slane %v1472, 1
        %v1585 = vrot.slane %v1473, 1
        %v1586 = vsel %vm1027, %v1584, %v1585
        %v1587 = vrot.slane %v1474, 1
        %v1588 = vsel %vm1027, %v1585, %v1587
        %v1589 = vrot.slane %v1475, 1
        %v1590 = vrot.slane %v1476, 1
        %v1591 = vsel %vm1027, %v1589, %v1590
        %v1592 = vrot.slane %v1477, 1
        %v1593 = vsel %vm1027, %v1590, %v1592
        %v1594 = vrot.slane %v1478, 1
        %v1595 = vrot.slane %v1479, 1
        %v1596 = vsel %vm1027, %v1594, %v1595
        %v1597 = vrot.slane %v1480, 1
        %v1598 = vsel %vm1027, %v1595, %v1597
        %v1599 = vrot.slane %v1481, 1
        %v1600 = vrot.slane %v1482, 1
        %v1601 = vsel %vm1027, %v1599, %v1600
        %v1602 = vrot.slane %v1483, 1
        %v1603 = vsel %vm1027, %v1600, %v1602
        %v1604 = vrot.slane %v1484, 1
        %v1605 = vrot.slane %v1485, 1
        %v1606 = vsel %vm1027, %v1604, %v1605
        %v1607 = vrot.slane %v1486, 1
        %v1608 = vsel %vm1027, %v1605, %v1607
        %v1609 = vrot.slane %v1487, 1
        %v1610 = vrot.slane %v1488, 1
        %v1611 = vsel %vm1027, %v1609, %v1610
        %v1612 = vrot.slane %v1489, 1
        %v1613 = vsel %vm1027, %v1610, %v1612
        %v1614 = vrot.slane %v1490, 1
        %v1615 = vrot.slane %v1491, 1
        %v1616 = vsel %vm1027, %v1614, %v1615
        %v1617 = vrot.slane %v1492, 1
        %v1618 = vsel %vm1027, %v1615, %v1617
        %v1619 = vrot.slane %v1493, 1
        %v1620 = vrot.slane %v1494, 1
        %v1621 = vsel %vm1027, %v1619, %v1620
        %v1622 = vrot.slane %v1495, 1
        %v1623 = vsel %vm1027, %v1620, %v1622
        %1624 = vrot.lane.b32.xlu0 %v1546, 4
        %v1625 = vpop.permute.xlu0 %1624
        %1626 = vrot.lane.b32.xlu0 %v1548, 4
        %v1627 = vpop.permute.xlu0 %1626
        %1628 = vrot.lane.b32.xlu0 %v1551, 4
        %v1629 = vpop.permute.xlu0 %1628
        %1630 = vrot.lane.b32.xlu0 %v1553, 4
        %v1631 = vpop.permute.xlu0 %1630
        %1632 = vrot.lane.b32.xlu0 %v1556, 4
        %v1633 = vpop.permute.xlu0 %1632
        %1634 = vrot.lane.b32.xlu0 %v1558, 4
        %v1635 = vpop.permute.xlu0 %1634
        %1636 = vrot.lane.b32.xlu0 %v1561, 4
        %v1637 = vpop.permute.xlu0 %1636
        %1638 = vrot.lane.b32.xlu0 %v1563, 4
        %v1639 = vpop.permute.xlu0 %1638
        %1640 = vrot.lane.b32.xlu0 %v1566, 4
        %v1641 = vpop.permute.xlu0 %1640
        %1642 = vrot.lane.b32.xlu0 %v1568, 4
        %v1643 = vpop.permute.xlu0 %1642
        %1644 = vrot.lane.b32.xlu0 %v1571, 4
        %v1645 = vpop.permute.xlu0 %1644
        %1646 = vrot.lane.b32.xlu0 %v1573, 4
        %v1647 = vpop.permute.xlu0 %1646
        %1648 = vrot.lane.b32.xlu0 %v1576, 4
        %v1649 = vpop.permute.xlu0 %1648
        %1650 = vrot.lane.b32.xlu0 %v1578, 4
        %v1651 = vpop.permute.xlu0 %1650
        %1652 = vrot.lane.b32.xlu0 %v1581, 4
        %v1653 = vpop.permute.xlu0 %1652
        %1654 = vrot.lane.b32.xlu0 %v1583, 4
        %v1655 = vpop.permute.xlu0 %1654
        %1656 = vrot.lane.b32.xlu0 %v1586, 4
        %v1657 = vpop.permute.xlu0 %1656
        %1658 = vrot.lane.b32.xlu0 %v1588, 4
        %v1659 = vpop.permute.xlu0 %1658
        %1660 = vrot.lane.b32.xlu0 %v1591, 4
        %v1661 = vpop.permute.xlu0 %1660
        %1662 = vrot.lane.b32.xlu0 %v1593, 4
        %v1663 = vpop.permute.xlu0 %1662
        %1664 = vrot.lane.b32.xlu0 %v1596, 4
        %v1665 = vpop.permute.xlu0 %1664
        %1666 = vrot.lane.b32.xlu0 %v1598, 4
        %v1667 = vpop.permute.xlu0 %1666
        %1668 = vrot.lane.b32.xlu0 %v1601, 4
        %v1669 = vpop.permute.xlu0 %1668
        %1670 = vrot.lane.b32.xlu0 %v1603, 4
        %v1671 = vpop.permute.xlu0 %1670
        %1672 = vrot.lane.b32.xlu0 %v1606, 4
        %v1673 = vpop.permute.xlu0 %1672
        %1674 = vrot.lane.b32.xlu0 %v1608, 4
        %v1675 = vpop.permute.xlu0 %1674
        %1676 = vrot.lane.b32.xlu0 %v1611, 4
        %v1677 = vpop.permute.xlu0 %1676
        %1678 = vrot.lane.b32.xlu0 %v1613, 4
        %v1679 = vpop.permute.xlu0 %1678
        %1680 = vrot.lane.b32.xlu0 %v1616, 4
        %v1681 = vpop.permute.xlu0 %1680
        %1682 = vrot.lane.b32.xlu0 %v1618, 4
        %v1683 = vpop.permute.xlu0 %1682
        %1684 = vrot.lane.b32.xlu0 %v1621, 4
        %v1685 = vpop.permute.xlu0 %1684
        %1686 = vrot.lane.b32.xlu0 %v1623, 4
        %v1687 = vpop.permute.xlu0 %1686
        %v1720 = vrot.slane %v1448, 2
        %v1721 = vrot.slane %v1449, 2
        %v1722 = vsel %vm1204, %v1720, %v1721
        %v1723 = vrot.slane %v1450, 2
        %v1724 = vsel %vm1204, %v1721, %v1723
        %v1725 = vrot.slane %v1451, 2
        %v1726 = vrot.slane %v1452, 2
        %v1727 = vsel %vm1204, %v1725, %v1726
        %v1728 = vrot.slane %v1453, 2
        %v1729 = vsel %vm1204, %v1726, %v1728
        %v1730 = vrot.slane %v1454, 2
        %v1731 = vrot.slane %v1455, 2
        %v1732 = vsel %vm1204, %v1730, %v1731
        %v1733 = vrot.slane %v1456, 2
        %v1734 = vsel %vm1204, %v1731, %v1733
        %v1735 = vrot.slane %v1457, 2
        %v1736 = vrot.slane %v1458, 2
        %v1737 = vsel %vm1204, %v1735, %v1736
        %v1738 = vrot.slane %v1459, 2
        %v1739 = vsel %vm1204, %v1736, %v1738
        %v1740 = vrot.slane %v1460, 2
        %v1741 = vrot.slane %v1461, 2
        %v1742 = vsel %vm1204, %v1740, %v1741
        %v1743 = vrot.slane %v1462, 2
        %v1744 = vsel %vm1204, %v1741, %v1743
        %v1745 = vrot.slane %v1463, 2
        %v1746 = vrot.slane %v1464, 2
        %v1747 = vsel %vm1204, %v1745, %v1746
        %v1748 = vrot.slane %v1465, 2
        %v1749 = vsel %vm1204, %v1746, %v1748
        %v1750 = vrot.slane %v1466, 2
        %v1751 = vrot.slane %v1467, 2
        %v1752 = vsel %vm1204, %v1750, %v1751
        %v1753 = vrot.slane %v1468, 2
        %v1754 = vsel %vm1204, %v1751, %v1753
        %v1755 = vrot.slane %v1469, 2
        %v1756 = vrot.slane %v1470, 2
        %v1757 = vsel %vm1204, %v1755, %v1756
        %v1758 = vrot.slane %v1471, 2
        %v1759 = vsel %vm1204, %v1756, %v1758
        %v1760 = vrot.slane %v1472, 2
        %v1761 = vrot.slane %v1473, 2
        %v1762 = vsel %vm1204, %v1760, %v1761
        %v1763 = vrot.slane %v1474, 2
        %v1764 = vsel %vm1204, %v1761, %v1763
        %v1765 = vrot.slane %v1475, 2
        %v1766 = vrot.slane %v1476, 2
        %v1767 = vsel %vm1204, %v1765, %v1766
        %v1768 = vrot.slane %v1477, 2
        %v1769 = vsel %vm1204, %v1766, %v1768
        %v1770 = vrot.slane %v1478, 2
        %v1771 = vrot.slane %v1479, 2
        %v1772 = vsel %vm1204, %v1770, %v1771
        %v1773 = vrot.slane %v1480, 2
        %v1774 = vsel %vm1204, %v1771, %v1773
        %v1775 = vrot.slane %v1481, 2
        %v1776 = vrot.slane %v1482, 2
        %v1777 = vsel %vm1204, %v1775, %v1776
        %v1778 = vrot.slane %v1483, 2
        %v1779 = vsel %vm1204, %v1776, %v1778
        %v1780 = vrot.slane %v1484, 2
        %v1781 = vrot.slane %v1485, 2
        %v1782 = vsel %vm1204, %v1780, %v1781
        %v1783 = vrot.slane %v1486, 2
        %v1784 = vsel %vm1204, %v1781, %v1783
        %v1785 = vrot.slane %v1487, 2
        %v1786 = vrot.slane %v1488, 2
        %v1787 = vsel %vm1204, %v1785, %v1786
        %v1788 = vrot.slane %v1489, 2
        %v1789 = vsel %vm1204, %v1786, %v1788
        %v1790 = vrot.slane %v1490, 2
        %v1791 = vrot.slane %v1491, 2
        %v1792 = vsel %vm1204, %v1790, %v1791
        %v1793 = vrot.slane %v1492, 2
        %v1794 = vsel %vm1204, %v1791, %v1793
        %v1795 = vrot.slane %v1493, 2
        %v1796 = vrot.slane %v1494, 2
        %v1797 = vsel %vm1204, %v1795, %v1796
        %v1798 = vrot.slane %v1495, 2
        %v1799 = vsel %vm1204, %v1796, %v1798
        %1800 = vrot.lane.b32.xlu0 %v1722, 8
        %v1801 = vpop.permute.xlu0 %1800
        %1802 = vrot.lane.b32.xlu0 %v1724, 8
        %v1803 = vpop.permute.xlu0 %1802
        %1804 = vrot.lane.b32.xlu0 %v1727, 8
        %v1805 = vpop.permute.xlu0 %1804
        %1806 = vrot.lane.b32.xlu0 %v1729, 8
        %v1807 = vpop.permute.xlu0 %1806
        %1808 = vrot.lane.b32.xlu0 %v1732, 8
        %v1809 = vpop.permute.xlu0 %1808
        %1810 = vrot.lane.b32.xlu0 %v1734, 8
        %v1811 = vpop.permute.xlu0 %1810
        %1812 = vrot.lane.b32.xlu0 %v1737, 8
        %v1813 = vpop.permute.xlu0 %1812
        %1814 = vrot.lane.b32.xlu0 %v1739, 8
        %v1815 = vpop.permute.xlu0 %1814
        %1816 = vrot.lane.b32.xlu0 %v1742, 8
        %v1817 = vpop.permute.xlu0 %1816
        %1818 = vrot.lane.b32.xlu0 %v1744, 8
        %v1819 = vpop.permute.xlu0 %1818
        %1820 = vrot.lane.b32.xlu0 %v1747, 8
        %v1821 = vpop.permute.xlu0 %1820
        %1822 = vrot.lane.b32.xlu0 %v1749, 8
        %v1823 = vpop.permute.xlu0 %1822
        %1824 = vrot.lane.b32.xlu0 %v1752, 8
        %v1825 = vpop.permute.xlu0 %1824
        %1826 = vrot.lane.b32.xlu0 %v1754, 8
        %v1827 = vpop.permute.xlu0 %1826
        %1828 = vrot.lane.b32.xlu0 %v1757, 8
        %v1829 = vpop.permute.xlu0 %1828
        %1830 = vrot.lane.b32.xlu0 %v1759, 8
        %v1831 = vpop.permute.xlu0 %1830
        %1832 = vrot.lane.b32.xlu0 %v1762, 8
        %v1833 = vpop.permute.xlu0 %1832
        %1834 = vrot.lane.b32.xlu0 %v1764, 8
        %v1835 = vpop.permute.xlu0 %1834
        %1836 = vrot.lane.b32.xlu0 %v1767, 8
        %v1837 = vpop.permute.xlu0 %1836
        %1838 = vrot.lane.b32.xlu0 %v1769, 8
        %v1839 = vpop.permute.xlu0 %1838
        %1840 = vrot.lane.b32.xlu0 %v1772, 8
        %v1841 = vpop.permute.xlu0 %1840
        %1842 = vrot.lane.b32.xlu0 %v1774, 8
        %v1843 = vpop.permute.xlu0 %1842
        %1844 = vrot.lane.b32.xlu0 %v1777, 8
        %v1845 = vpop.permute.xlu0 %1844
        %1846 = vrot.lane.b32.xlu0 %v1779, 8
        %v1847 = vpop.permute.xlu0 %1846
        %1848 = vrot.lane.b32.xlu0 %v1782, 8
        %v1849 = vpop.permute.xlu0 %1848
        %1850 = vrot.lane.b32.xlu0 %v1784, 8
        %v1851 = vpop.permute.xlu0 %1850
        %1852 = vrot.lane.b32.xlu0 %v1787, 8
        %v1853 = vpop.permute.xlu0 %1852
        %1854 = vrot.lane.b32.xlu0 %v1789, 8
        %v1855 = vpop.permute.xlu0 %1854
        %1856 = vrot.lane.b32.xlu0 %v1792, 8
        %v1857 = vpop.permute.xlu0 %1856
        %1858 = vrot.lane.b32.xlu0 %v1794, 8
        %v1859 = vpop.permute.xlu0 %1858
        %1860 = vrot.lane.b32.xlu0 %v1797, 8
        %v1861 = vpop.permute.xlu0 %1860
        %1862 = vrot.lane.b32.xlu0 %v1799, 8
        %v1863 = vpop.permute.xlu0 %1862
        %v1896 = vsel %vm371, %v1448, %v1625
        %v1897 = vsel %vm371, %v1449, %v1627
        %v1898 = vsel %vm371, %v1451, %v1629
        %v1899 = vsel %vm371, %v1452, %v1631
        %v1900 = vsel %vm371, %v1454, %v1633
        %v1901 = vsel %vm371, %v1455, %v1635
        %v1902 = vsel %vm371, %v1457, %v1637
        %v1903 = vsel %vm371, %v1458, %v1639
        %v1904 = vsel %vm371, %v1460, %v1641
        %v1905 = vsel %vm371, %v1461, %v1643
        %v1906 = vsel %vm371, %v1463, %v1645
        %v1907 = vsel %vm371, %v1464, %v1647
        %v1908 = vsel %vm371, %v1466, %v1649
        %v1909 = vsel %vm371, %v1467, %v1651
        %v1910 = vsel %vm371, %v1469, %v1653
        %v1911 = vsel %vm371, %v1470, %v1655
        %v1912 = vsel %vm371, %v1472, %v1657
        %v1913 = vsel %vm371, %v1473, %v1659
        %v1914 = vsel %vm371, %v1475, %v1661
        %v1915 = vsel %vm371, %v1476, %v1663
        %v1916 = vsel %vm371, %v1478, %v1665
        %v1917 = vsel %vm371, %v1479, %v1667
        %v1918 = vsel %vm371, %v1481, %v1669
        %v1919 = vsel %vm371, %v1482, %v1671
        %v1920 = vsel %vm371, %v1484, %v1673
        %v1921 = vsel %vm371, %v1485, %v1675
        %v1922 = vsel %vm371, %v1487, %v1677
        %v1923 = vsel %vm371, %v1488, %v1679
        %v1924 = vsel %vm371, %v1490, %v1681
        %v1925 = vsel %vm371, %v1491, %v1683
        %v1926 = vsel %vm371, %v1493, %v1685
        %v1927 = vsel %vm371, %v1494, %v1687
        %v1928 = vsel %vm1413, %v1896, %v1801
        %v1929 = vsel %vm1413, %v1897, %v1803
        %v1930 = vsel %vm1413, %v1898, %v1805
        %v1931 = vsel %vm1413, %v1899, %v1807
        %v1932 = vsel %vm1413, %v1900, %v1809
        %v1933 = vsel %vm1413, %v1901, %v1811
        %v1934 = vsel %vm1413, %v1902, %v1813
        %v1935 = vsel %vm1413, %v1903, %v1815
        %v1936 = vsel %vm1413, %v1904, %v1817
        %v1937 = vsel %vm1413, %v1905, %v1819
        %v1938 = vsel %vm1413, %v1906, %v1821
        %v1939 = vsel %vm1413, %v1907, %v1823
        %v1940 = vsel %vm1413, %v1908, %v1825
        %v1941 = vsel %vm1413, %v1909, %v1827
        %v1942 = vsel %vm1413, %v1910, %v1829
        %v1943 = vsel %vm1413, %v1911, %v1831
        %v1944 = vsel %vm1413, %v1912, %v1833
        %v1945 = vsel %vm1413, %v1913, %v1835
        %v1946 = vsel %vm1413, %v1914, %v1837
        %v1947 = vsel %vm1413, %v1915, %v1839
        %v1948 = vsel %vm1413, %v1916, %v1841
        %v1949 = vsel %vm1413, %v1917, %v1843
        %v1950 = vsel %vm1413, %v1918, %v1845
        %v1951 = vsel %vm1413, %v1919, %v1847
        %v1952 = vsel %vm1413, %v1920, %v1849
        %v1953 = vsel %vm1413, %v1921, %v1851
        %v1954 = vsel %vm1413, %v1922, %v1853
        %v1955 = vsel %vm1413, %v1923, %v1855
        %v1956 = vsel %vm1413, %v1924, %v1857
        %v1957 = vsel %vm1413, %v1925, %v1859
        %v1958 = vsel %vm1413, %v1926, %v1861
        %v1959 = vsel %vm1413, %v1927, %v1863
        %v1960 = vld [vmem:[%s3 + $0xc] sm:$0xff]
        %v1961 = vld [vmem:[%s3 + $0x14] sm:$0xf]
        %vm1962 = vcmask 97280
        %v1964 = vsel %vm1962, %v1928, 0
        %v1967 = vsel %vm1962, %v1929, 0
        %v1970 = vsel %vm1962, %v1930, 0
        %v1973 = vsel %vm1962, %v1931, 0
        %v1976 = vsel %vm1962, %v1932, 0
        %v1979 = vsel %vm1962, %v1933, 0
        %v1982 = vsel %vm1962, %v1934, 0
        %v1985 = vsel %vm1962, %v1935, 0
        %v1988 = vsel %vm1962, %v1936, 0
        %v1991 = vsel %vm1962, %v1937, 0
        %v1994 = vsel %vm1962, %v1938, 0
        %v1997 = vsel %vm1962, %v1939, 0
        %v2000 = vsel %vm1962, %v1940, 0
        %v2003 = vsel %vm1962, %v1941, 0
        %v2006 = vsel %vm1962, %v1942, 0
        %v2009 = vsel %vm1962, %v1943, 0
        %v2012 = vsel %vm1962, %v1944, 0
        %v2015 = vsel %vm1962, %v1945, 0
        %v2018 = vsel %vm1962, %v1946, 0
        %v2021 = vsel %vm1962, %v1947, 0
        %v2024 = vsel %vm1962, %v1948, 0
        %v2027 = vsel %vm1962, %v1949, 0
        %v2030 = vsel %vm1962, %v1950, 0
        %v2033 = vsel %vm1962, %v1951, 0
        %v2036 = vsel %vm1962, %v1952, 0
        %v2039 = vsel %vm1962, %v1953, 0
        %v2042 = vsel %vm1962, %v1954, 0
        %v2045 = vsel %vm1962, %v1955, 0
        %v2048 = vsel %vm1962, %v1956, 0
        %v2051 = vsel %vm1962, %v1957, 0
        %v2054 = vsel %vm1962, %v1958, 0
        %v2057 = vsel %vm1962, %v1959, 0
        %v2060 = vsel %vm468, %v1961, 0
        %2062 = vmatprep.subr.mxu0 0.0
        %2063 = vmatpush1.msra.mxu0 %v1960
        %2064 = vmatprep.subr.mxu0 0.0
        %2065 = vmatpush1.msra.mxu0 %v2060
        %2066 = vmatprep.subr.mxu0 0.0
        %2067 = vmatpush1.msra.mxu0 0.0
        %2068 = vmatprep.subr.mxu0 0.0
        %2069 = vmatpush1.msra.mxu0 0.0
        %2070 = vmatprep.subr.mxu0 0.0
        %2071 = vmatpush1.msra.mxu0 0.0
        %2072 = vmatprep.subr.mxu0 0.0
        %2073 = vmatpush1.msra.mxu0 0.0
        %2074 = vmatprep.subr.mxu0 0.0
        %2075 = vmatpush1.msra.mxu0 0.0
        %2076 = vmatprep.subr.mxu0 0.0
        %2077 = vmatpush1.msra.mxu0 0.0
        %2078 = vmatprep.subr.mxu0 0.0
        %2079 = vmatpush1.msra.mxu0 0.0
        %2080 = vmatprep.subr.mxu0 0.0
        %2081 = vmatpush1.msra.mxu0 0.0
        %2082 = vmatprep.subr.mxu0 0.0
        %2083 = vmatpush1.msra.mxu0 0.0
        %2084 = vmatprep.subr.mxu0 0.0
        %2085 = vmatpush1.msra.mxu0 0.0
        %2086 = vmatprep.subr.mxu0 0.0
        %2087 = vmatpush1.msra.mxu0 0.0
        %2088 = vmatprep.subr.mxu0 0.0
        %2089 = vmatpush1.msra.mxu0 0.0
        %2090 = vmatprep.subr.mxu0 0.0
        %2091 = vmatpush1.msra.mxu0 0.0
        %2092 = vmatprep.subr.mxu0 0.0
        %2093 = vmatpush1.msra.mxu0 0.0
        %2094 = vmatprep.subr.mxu0 0.0
        %2095 = vmatpush1.msra.mxu0 0.0
        %2096 = vmatprep.subr.mxu0 0.0
        %2097 = vmatpush1.msra.mxu0 0.0
        %2098 = vmatprep.subr.mxu0 0.0
        %2099 = vmatpush1.msra.mxu0 0.0
        %2100 = vmatprep.subr.mxu0 0.0
        %2101 = vmatpush1.msra.mxu0 0.0
        %2102 = vmatprep.subr.mxu0 0.0
        %2103 = vmatpush1.msra.mxu0 0.0
        %2104 = vmatprep.subr.mxu0 0.0
        %2105 = vmatpush1.msra.mxu0 0.0
        %2106 = vmatprep.subr.mxu0 0.0
        %2107 = vmatpush1.msra.mxu0 0.0
        %2108 = vmatprep.subr.mxu0 0.0
        %2109 = vmatpush1.msra.mxu0 0.0
        %2110 = vmatprep.subr.mxu0 0.0
        %2111 = vmatpush1.msra.mxu0 0.0
        %2112 = vmatprep.subr.mxu0 0.0
        %2113 = vmatpush1.msra.mxu0 0.0
        %2114 = vmatprep.subr.mxu0 0.0
        %2115 = vmatpush1.msra.mxu0 0.0
        %2116 = vmatprep.subr.mxu0 0.0
        %2117 = vmatpush1.msra.mxu0 0.0
        %2118 = vmatprep.subr.mxu0 0.0
        %2119 = vmatpush1.msra.mxu0 0.0
        %2120 = vmatprep.subr.mxu0 0.0
        %2121 = vmatpush1.msra.mxu0 0.0
        %2122 = vmatprep.subr.mxu0 0.0
        %2123 = vmatpush1.msra.mxu0 0.0
        %2124 = vmatprep.subr.mxu0 0.0
        %2125 = vmatpush1.msra.mxu0 0.0
        %2126 = vmatprep.mubr.f32.mxu0 0.0
        %2127 = vmatmul.mubr.f32.gmra.mrb[0].mxu0 %v1964
        %v2128 = vpop.f32.mrb[0].mxu0
        %v2129 = vadd.f32 0.0, %v2128
        %v2130 = vpop.f32.mrb[0].mxu0
        %2131 = vmatprep.mubr.f32.mxu0 0.0
        %2132 = vmatmul.mubr.f32.gmra.mrb[0].mxu0 %v1967
        %v2133 = vpop.f32.mrb[0].mxu0
        %v2134 = vadd.f32 0.0, %v2133
        %v2135 = vpop.f32.mrb[0].mxu0
        %2136 = vmatprep.mubr.f32.mxu0 0.0
        %2137 = vmatmul.mubr.f32.gmra.mrb[0].mxu0 %v1970
        %v2138 = vpop.f32.mrb[0].mxu0
        %v2139 = vadd.f32 0.0, %v2138
        %v2140 = vpop.f32.mrb[0].mxu0
        %2141 = vmatprep.mubr.f32.mxu0 0.0
        %2142 = vmatmul.mubr.f32.gmra.mrb[0].mxu0 %v1973
        %v2143 = vpop.f32.mrb[0].mxu0
        %v2144 = vadd.f32 0.0, %v2143
        %v2145 = vpop.f32.mrb[0].mxu0
        %2146 = vmatprep.mubr.f32.mxu0 0.0
        %2147 = vmatmul.mubr.f32.gmra.mrb[0].mxu0 %v1976
        %v2148 = vpop.f32.mrb[0].mxu0
        %v2149 = vadd.f32 0.0, %v2148
        %v2150 = vpop.f32.mrb[0].mxu0
        %2151 = vmatprep.mubr.f32.mxu0 0.0
        %2152 = vmatmul.mubr.f32.gmra.mrb[0].mxu0 %v1979
        %v2153 = vpop.f32.mrb[0].mxu0
        %v2154 = vadd.f32 0.0, %v2153
        %v2155 = vpop.f32.mrb[0].mxu0
        %2156 = vmatprep.mubr.f32.mxu0 0.0
        %2157 = vmatmul.mubr.f32.gmra.mrb[0].mxu0 %v1982
        %v2158 = vpop.f32.mrb[0].mxu0
        %v2159 = vadd.f32 0.0, %v2158
        %v2160 = vpop.f32.mrb[0].mxu0
        %2161 = vmatprep.mubr.f32.mxu0 0.0
        %2162 = vmatmul.mubr.f32.gmra.mrb[0].mxu0 %v1985
        %v2163 = vpop.f32.mrb[0].mxu0
        %v2164 = vadd.f32 0.0, %v2163
        %v2165 = vpop.f32.mrb[0].mxu0
        %2166 = vmatprep.mubr.f32.mxu0 0.0
        %2167 = vmatmul.mubr.f32.gmra.mrb[0].mxu0 %v1988
        %v2168 = vpop.f32.mrb[0].mxu0
        %v2169 = vadd.f32 0.0, %v2168
        %v2170 = vpop.f32.mrb[0].mxu0
        %2171 = vmatprep.mubr.f32.mxu0 0.0
        %2172 = vmatmul.mubr.f32.gmra.mrb[0].mxu0 %v1991
        %v2173 = vpop.f32.mrb[0].mxu0
        %v2174 = vadd.f32 0.0, %v2173
        %v2175 = vpop.f32.mrb[0].mxu0
        %2176 = vmatprep.mubr.f32.mxu0 0.0
        %2177 = vmatmul.mubr.f32.gmra.mrb[0].mxu0 %v1994
        %v2178 = vpop.f32.mrb[0].mxu0
        %v2179 = vadd.f32 0.0, %v2178
        %v2180 = vpop.f32.mrb[0].mxu0
        %2181 = vmatprep.mubr.f32.mxu0 0.0
        %2182 = vmatmul.mubr.f32.gmra.mrb[0].mxu0 %v1997
        %v2183 = vpop.f32.mrb[0].mxu0
        %v2184 = vadd.f32 0.0, %v2183
        %v2185 = vpop.f32.mrb[0].mxu0
        %2186 = vmatprep.mubr.f32.mxu0 0.0
        %2187 = vmatmul.mubr.f32.gmra.mrb[0].mxu0 %v2000
        %v2188 = vpop.f32.mrb[0].mxu0
        %v2189 = vadd.f32 0.0, %v2188
        %v2190 = vpop.f32.mrb[0].mxu0
        %2191 = vmatprep.mubr.f32.mxu0 0.0
        %2192 = vmatmul.mubr.f32.gmra.mrb[0].mxu0 %v2003
        %v2193 = vpop.f32.mrb[0].mxu0
        %v2194 = vadd.f32 0.0, %v2193
        %v2195 = vpop.f32.mrb[0].mxu0
        %2196 = vmatprep.mubr.f32.mxu0 0.0
        %2197 = vmatmul.mubr.f32.gmra.mrb[0].mxu0 %v2006
        %v2198 = vpop.f32.mrb[0].mxu0
        %v2199 = vadd.f32 0.0, %v2198
        %v2200 = vpop.f32.mrb[0].mxu0
        %2201 = vmatprep.mubr.f32.mxu0 0.0
        %2202 = vmatmul.mubr.f32.gmra.mrb[0].mxu0 %v2009
        %v2203 = vpop.f32.mrb[0].mxu0
        %v2204 = vadd.f32 0.0, %v2203
        %v2205 = vpop.f32.mrb[0].mxu0
        %2206 = vmatprep.mubr.f32.mxu0 0.0
        %2207 = vmatmul.mubr.f32.gmra.mrb[0].mxu0 %v2012
        %v2208 = vpop.f32.mrb[0].mxu0
        %v2209 = vadd.f32 0.0, %v2208
        %v2210 = vpop.f32.mrb[0].mxu0
        %2211 = vmatprep.mubr.f32.mxu0 0.0
        %2212 = vmatmul.mubr.f32.gmra.mrb[0].mxu0 %v2015
        %v2213 = vpop.f32.mrb[0].mxu0
        %v2214 = vadd.f32 0.0, %v2213
        %v2215 = vpop.f32.mrb[0].mxu0
        %2216 = vmatprep.mubr.f32.mxu0 0.0
        %2217 = vmatmul.mubr.f32.gmra.mrb[0].mxu0 %v2018
        %v2218 = vpop.f32.mrb[0].mxu0
        %v2219 = vadd.f32 0.0, %v2218
        %v2220 = vpop.f32.mrb[0].mxu0
        %2221 = vmatprep.mubr.f32.mxu0 0.0
        %2222 = vmatmul.mubr.f32.gmra.mrb[0].mxu0 %v2021
        %v2223 = vpop.f32.mrb[0].mxu0
        %v2224 = vadd.f32 0.0, %v2223
        %v2225 = vpop.f32.mrb[0].mxu0
        %2226 = vmatprep.mubr.f32.mxu0 0.0
        %2227 = vmatmul.mubr.f32.gmra.mrb[0].mxu0 %v2024
        %v2228 = vpop.f32.mrb[0].mxu0
        %v2229 = vadd.f32 0.0, %v2228
        %v2230 = vpop.f32.mrb[0].mxu0
        %2231 = vmatprep.mubr.f32.mxu0 0.0
        %2232 = vmatmul.mubr.f32.gmra.mrb[0].mxu0 %v2027
        %v2233 = vpop.f32.mrb[0].mxu0
        %v2234 = vadd.f32 0.0, %v2233
        %v2235 = vpop.f32.mrb[0].mxu0
        %2236 = vmatprep.mubr.f32.mxu0 0.0
        %2237 = vmatmul.mubr.f32.gmra.mrb[0].mxu0 %v2030
        %v2238 = vpop.f32.mrb[0].mxu0
        %v2239 = vadd.f32 0.0, %v2238
        %v2240 = vpop.f32.mrb[0].mxu0
        %2241 = vmatprep.mubr.f32.mxu0 0.0
        %2242 = vmatmul.mubr.f32.gmra.mrb[0].mxu0 %v2033
        %v2243 = vpop.f32.mrb[0].mxu0
        %v2244 = vadd.f32 0.0, %v2243
        %v2245 = vpop.f32.mrb[0].mxu0
        %2246 = vmatprep.mubr.f32.mxu0 0.0
        %2247 = vmatmul.mubr.f32.gmra.mrb[0].mxu0 %v2036
        %v2248 = vpop.f32.mrb[0].mxu0
        %v2249 = vadd.f32 0.0, %v2248
        %v2250 = vpop.f32.mrb[0].mxu0
        %2251 = vmatprep.mubr.f32.mxu0 0.0
        %2252 = vmatmul.mubr.f32.gmra.mrb[0].mxu0 %v2039
        %v2253 = vpop.f32.mrb[0].mxu0
        %v2254 = vadd.f32 0.0, %v2253
        %v2255 = vpop.f32.mrb[0].mxu0
        %2256 = vmatprep.mubr.f32.mxu0 0.0
        %2257 = vmatmul.mubr.f32.gmra.mrb[0].mxu0 %v2042
        %v2258 = vpop.f32.mrb[0].mxu0
        %v2259 = vadd.f32 0.0, %v2258
        %v2260 = vpop.f32.mrb[0].mxu0
        %2261 = vmatprep.mubr.f32.mxu0 0.0
        %2262 = vmatmul.mubr.f32.gmra.mrb[0].mxu0 %v2045
        %v2263 = vpop.f32.mrb[0].mxu0
        %v2264 = vadd.f32 0.0, %v2263
        %v2265 = vpop.f32.mrb[0].mxu0
        %2266 = vmatprep.mubr.f32.mxu0 0.0
        %2267 = vmatmul.mubr.f32.gmra.mrb[0].mxu0 %v2048
        %v2268 = vpop.f32.mrb[0].mxu0
        %v2269 = vadd.f32 0.0, %v2268
        %v2270 = vpop.f32.mrb[0].mxu0
        %2271 = vmatprep.mubr.f32.mxu0 0.0
        %2272 = vmatmul.mubr.f32.gmra.mrb[0].mxu0 %v2051
        %v2273 = vpop.f32.mrb[0].mxu0
        %v2274 = vadd.f32 0.0, %v2273
        %v2275 = vpop.f32.mrb[0].mxu0
        %2276 = vmatprep.mubr.f32.mxu0 0.0
        %2277 = vmatmul.mubr.f32.gmra.mrb[0].mxu0 %v2054
        %v2278 = vpop.f32.mrb[0].mxu0
        %v2279 = vadd.f32 0.0, %v2278
        %v2280 = vpop.f32.mrb[0].mxu0
        %2281 = vmatprep.mubr.f32.mxu0 0.0
        %2282 = vmatmul.mubr.f32.gmra.mrb[0].mxu0 %v2057
        %v2283 = vpop.f32.mrb[0].mxu0
        %v2284 = vadd.f32 0.0, %v2283
        %v2285 = vpop.f32.mrb[0].mxu0
        %2286 = vdwg.mxu0
        %v2288 = vsel %vm1962, %v1414, 0
        %v2291 = vsel %vm1962, %v1415, 0
        %v2294 = vsel %vm1962, %v1416, 0
        %v2297 = vsel %vm1962, %v1417, 0
        %v2300 = vsel %vm1962, %v1418, 0
        %v2303 = vsel %vm1962, %v1419, 0
        %v2306 = vsel %vm1962, %v1420, 0
        %v2309 = vsel %vm1962, %v1421, 0
        %v2312 = vsel %vm1962, %v1422, 0
        %v2315 = vsel %vm1962, %v1423, 0
        %v2318 = vsel %vm1962, %v1424, 0
        %v2321 = vsel %vm1962, %v1425, 0
        %v2324 = vsel %vm1962, %v1426, 0
        %v2327 = vsel %vm1962, %v1427, 0
        %v2330 = vsel %vm1962, %v1428, 0
        %v2333 = vsel %vm1962, %v1429, 0
        %v2336 = vsel %vm1962, %v1430, 0
        %v2339 = vsel %vm1962, %v1431, 0
        %v2342 = vsel %vm1962, %v1432, 0
        %v2345 = vsel %vm1962, %v1433, 0
        %v2348 = vsel %vm1962, %v1434, 0
        %v2351 = vsel %vm1962, %v1435, 0
        %v2354 = vsel %vm1962, %v1436, 0
        %v2357 = vsel %vm1962, %v1437, 0
        %v2360 = vsel %vm1962, %v1438, 0
        %v2363 = vsel %vm1962, %v1439, 0
        %v2366 = vsel %vm1962, %v1440, 0
        %v2369 = vsel %vm1962, %v1441, 0
        %v2372 = vsel %vm1962, %v1442, 0
        %v2375 = vsel %vm1962, %v1443, 0
        %v2378 = vsel %vm1962, %v1444, 0
        %v2381 = vsel %vm1962, %v1445, 0
        %v2384 = vsel %vm468, %v1447, 0
        %2386 = vmatprep.subr.mxu0 0.0
        %2387 = vmatpush1.msra.mxu0 %v1446
        %2388 = vmatprep.subr.mxu0 0.0
        %2389 = vmatpush1.msra.mxu0 %v2384
        %2390 = vmatprep.subr.mxu0 0.0
        %2391 = vmatpush1.msra.mxu0 0.0
        %2392 = vmatprep.subr.mxu0 0.0
        %2393 = vmatpush1.msra.mxu0 0.0
        %2394 = vmatprep.subr.mxu0 0.0
        %2395 = vmatpush1.msra.mxu0 0.0
        %2396 = vmatprep.subr.mxu0 0.0
        %2397 = vmatpush1.msra.mxu0 0.0
        %2398 = vmatprep.subr.mxu0 0.0
        %2399 = vmatpush1.msra.mxu0 0.0
        %2400 = vmatprep.subr.mxu0 0.0
        %2401 = vmatpush1.msra.mxu0 0.0
        %2402 = vmatprep.subr.mxu0 0.0
        %2403 = vmatpush1.msra.mxu0 0.0
        %2404 = vmatprep.subr.mxu0 0.0
        %2405 = vmatpush1.msra.mxu0 0.0
        %2406 = vmatprep.subr.mxu0 0.0
        %2407 = vmatpush1.msra.mxu0 0.0
        %2408 = vmatprep.subr.mxu0 0.0
        %2409 = vmatpush1.msra.mxu0 0.0
        %2410 = vmatprep.subr.mxu0 0.0
        %2411 = vmatpush1.msra.mxu0 0.0
        %2412 = vmatprep.subr.mxu0 0.0
        %2413 = vmatpush1.msra.mxu0 0.0
        %2414 = vmatprep.subr.mxu0 0.0
        %2415 = vmatpush1.msra.mxu0 0.0
        %2416 = vmatprep.subr.mxu0 0.0
        %2417 = vmatpush1.msra.mxu0 0.0
        %2418 = vmatprep.subr.mxu0 0.0
        %2419 = vmatpush1.msra.mxu0 0.0
        %2420 = vmatprep.subr.mxu0 0.0
        %2421 = vmatpush1.msra.mxu0 0.0
        %2422 = vmatprep.subr.mxu0 0.0
        %2423 = vmatpush1.msra.mxu0 0.0
        %2424 = vmatprep.subr.mxu0 0.0
        %2425 = vmatpush1.msra.mxu0 0.0
        %2426 = vmatprep.subr.mxu0 0.0
        %2427 = vmatpush1.msra.mxu0 0.0
        %2428 = vmatprep.subr.mxu0 0.0
        %2429 = vmatpush1.msra.mxu0 0.0
        %2430 = vmatprep.subr.mxu0 0.0
        %2431 = vmatpush1.msra.mxu0 0.0
        %2432 = vmatprep.subr.mxu0 0.0
        %2433 = vmatpush1.msra.mxu0 0.0
        %2434 = vmatprep.subr.mxu0 0.0
        %2435 = vmatpush1.msra.mxu0 0.0
        %2436 = vmatprep.subr.mxu0 0.0
        %2437 = vmatpush1.msra.mxu0 0.0
        %2438 = vmatprep.subr.mxu0 0.0
        %2439 = vmatpush1.msra.mxu0 0.0
        %2440 = vmatprep.subr.mxu0 0.0
        %2441 = vmatpush1.msra.mxu0 0.0
        %2442 = vmatprep.subr.mxu0 0.0
        %2443 = vmatpush1.msra.mxu0 0.0
        %2444 = vmatprep.subr.mxu0 0.0
        %2445 = vmatpush1.msra.mxu0 0.0
        %2446 = vmatprep.subr.mxu0 0.0
        %2447 = vmatpush1.msra.mxu0 0.0
        %2448 = vmatprep.subr.mxu0 0.0
        %2449 = vmatpush1.msra.mxu0 0.0
        %2450 = vmatprep.mubr.f32.mxu0 0.0
        %2451 = vmatmul.mubr.f32.gmra.mrb[0].mxu0 %v2288
        %v2452 = vpop.f32.mrb[0].mxu0
        %v2453 = vadd.f32 %v2129, %v2452
        %v2454 = vpop.f32.mrb[0].mxu0
        %2455 = vmatprep.mubr.f32.mxu0 0.0
        %2456 = vmatmul.mubr.f32.gmra.mrb[0].mxu0 %v2291
        %v2457 = vpop.f32.mrb[0].mxu0
        %v2458 = vadd.f32 %v2134, %v2457
        %v2459 = vpop.f32.mrb[0].mxu0
        %2460 = vmatprep.mubr.f32.mxu0 0.0
        %2461 = vmatmul.mubr.f32.gmra.mrb[0].mxu0 %v2294
        %v2462 = vpop.f32.mrb[0].mxu0
        %v2463 = vadd.f32 %v2139, %v2462
        %v2464 = vpop.f32.mrb[0].mxu0
        %2465 = vmatprep.mubr.f32.mxu0 0.0
        %2466 = vmatmul.mubr.f32.gmra.mrb[0].mxu0 %v2297
        %v2467 = vpop.f32.mrb[0].mxu0
        %v2468 = vadd.f32 %v2144, %v2467
        %v2469 = vpop.f32.mrb[0].mxu0
        %2470 = vmatprep.mubr.f32.mxu0 0.0
        %2471 = vmatmul.mubr.f32.gmra.mrb[0].mxu0 %v2300
        %v2472 = vpop.f32.mrb[0].mxu0
        %v2473 = vadd.f32 %v2149, %v2472
        %v2474 = vpop.f32.mrb[0].mxu0
        %2475 = vmatprep.mubr.f32.mxu0 0.0
        %2476 = vmatmul.mubr.f32.gmra.mrb[0].mxu0 %v2303
        %v2477 = vpop.f32.mrb[0].mxu0
        %v2478 = vadd.f32 %v2154, %v2477
        %v2479 = vpop.f32.mrb[0].mxu0
        %2480 = vmatprep.mubr.f32.mxu0 0.0
        %2481 = vmatmul.mubr.f32.gmra.mrb[0].mxu0 %v2306
        %v2482 = vpop.f32.mrb[0].mxu0
        %v2483 = vadd.f32 %v2159, %v2482
        %v2484 = vpop.f32.mrb[0].mxu0
        %2485 = vmatprep.mubr.f32.mxu0 0.0
        %2486 = vmatmul.mubr.f32.gmra.mrb[0].mxu0 %v2309
        %v2487 = vpop.f32.mrb[0].mxu0
        %v2488 = vadd.f32 %v2164, %v2487
        %v2489 = vpop.f32.mrb[0].mxu0
        %2490 = vmatprep.mubr.f32.mxu0 0.0
        %2491 = vmatmul.mubr.f32.gmra.mrb[0].mxu0 %v2312
        %v2492 = vpop.f32.mrb[0].mxu0
        %v2493 = vadd.f32 %v2169, %v2492
        %v2494 = vpop.f32.mrb[0].mxu0
        %2495 = vmatprep.mubr.f32.mxu0 0.0
        %2496 = vmatmul.mubr.f32.gmra.mrb[0].mxu0 %v2315
        %v2497 = vpop.f32.mrb[0].mxu0
        %v2498 = vadd.f32 %v2174, %v2497
        %v2499 = vpop.f32.mrb[0].mxu0
        %2500 = vmatprep.mubr.f32.mxu0 0.0
        %2501 = vmatmul.mubr.f32.gmra.mrb[0].mxu0 %v2318
        %v2502 = vpop.f32.mrb[0].mxu0
        %v2503 = vadd.f32 %v2179, %v2502
        %v2504 = vpop.f32.mrb[0].mxu0
        %2505 = vmatprep.mubr.f32.mxu0 0.0
        %2506 = vmatmul.mubr.f32.gmra.mrb[0].mxu0 %v2321
        %v2507 = vpop.f32.mrb[0].mxu0
        %v2508 = vadd.f32 %v2184, %v2507
        %v2509 = vpop.f32.mrb[0].mxu0
        %2510 = vmatprep.mubr.f32.mxu0 0.0
        %2511 = vmatmul.mubr.f32.gmra.mrb[0].mxu0 %v2324
        %v2512 = vpop.f32.mrb[0].mxu0
        %v2513 = vadd.f32 %v2189, %v2512
        %v2514 = vpop.f32.mrb[0].mxu0
        %2515 = vmatprep.mubr.f32.mxu0 0.0
        %2516 = vmatmul.mubr.f32.gmra.mrb[0].mxu0 %v2327
        %v2517 = vpop.f32.mrb[0].mxu0
        %v2518 = vadd.f32 %v2194, %v2517
        %v2519 = vpop.f32.mrb[0].mxu0
        %2520 = vmatprep.mubr.f32.mxu0 0.0
        %2521 = vmatmul.mubr.f32.gmra.mrb[0].mxu0 %v2330
        %v2522 = vpop.f32.mrb[0].mxu0
        %v2523 = vadd.f32 %v2199, %v2522
        %v2524 = vpop.f32.mrb[0].mxu0
        %2525 = vmatprep.mubr.f32.mxu0 0.0
        %2526 = vmatmul.mubr.f32.gmra.mrb[0].mxu0 %v2333
        %v2527 = vpop.f32.mrb[0].mxu0
        %v2528 = vadd.f32 %v2204, %v2527
        %v2529 = vpop.f32.mrb[0].mxu0
        %2530 = vmatprep.mubr.f32.mxu0 0.0
        %2531 = vmatmul.mubr.f32.gmra.mrb[0].mxu0 %v2336
        %v2532 = vpop.f32.mrb[0].mxu0
        %v2533 = vadd.f32 %v2209, %v2532
        %v2534 = vpop.f32.mrb[0].mxu0
        %2535 = vmatprep.mubr.f32.mxu0 0.0
        %2536 = vmatmul.mubr.f32.gmra.mrb[0].mxu0 %v2339
        %v2537 = vpop.f32.mrb[0].mxu0
        %v2538 = vadd.f32 %v2214, %v2537
        %v2539 = vpop.f32.mrb[0].mxu0
        %2540 = vmatprep.mubr.f32.mxu0 0.0
        %2541 = vmatmul.mubr.f32.gmra.mrb[0].mxu0 %v2342
        %v2542 = vpop.f32.mrb[0].mxu0
        %v2543 = vadd.f32 %v2219, %v2542
        %v2544 = vpop.f32.mrb[0].mxu0
        %2545 = vmatprep.mubr.f32.mxu0 0.0
        %2546 = vmatmul.mubr.f32.gmra.mrb[0].mxu0 %v2345
        %v2547 = vpop.f32.mrb[0].mxu0
        %v2548 = vadd.f32 %v2224, %v2547
        %v2549 = vpop.f32.mrb[0].mxu0
        %2550 = vmatprep.mubr.f32.mxu0 0.0
        %2551 = vmatmul.mubr.f32.gmra.mrb[0].mxu0 %v2348
        %v2552 = vpop.f32.mrb[0].mxu0
        %v2553 = vadd.f32 %v2229, %v2552
        %v2554 = vpop.f32.mrb[0].mxu0
        %2555 = vmatprep.mubr.f32.mxu0 0.0
        %2556 = vmatmul.mubr.f32.gmra.mrb[0].mxu0 %v2351
        %v2557 = vpop.f32.mrb[0].mxu0
        %v2558 = vadd.f32 %v2234, %v2557
        %v2559 = vpop.f32.mrb[0].mxu0
        %2560 = vmatprep.mubr.f32.mxu0 0.0
        %2561 = vmatmul.mubr.f32.gmra.mrb[0].mxu0 %v2354
        %v2562 = vpop.f32.mrb[0].mxu0
        %v2563 = vadd.f32 %v2239, %v2562
        %v2564 = vpop.f32.mrb[0].mxu0
        %2565 = vmatprep.mubr.f32.mxu0 0.0
        %2566 = vmatmul.mubr.f32.gmra.mrb[0].mxu0 %v2357
        %v2567 = vpop.f32.mrb[0].mxu0
        %v2568 = vadd.f32 %v2244, %v2567
        %v2569 = vpop.f32.mrb[0].mxu0
        %2570 = vmatprep.mubr.f32.mxu0 0.0
        %2571 = vmatmul.mubr.f32.gmra.mrb[0].mxu0 %v2360
        %v2572 = vpop.f32.mrb[0].mxu0
        %v2573 = vadd.f32 %v2249, %v2572
        %v2574 = vpop.f32.mrb[0].mxu0
        %2575 = vmatprep.mubr.f32.mxu0 0.0
        %2576 = vmatmul.mubr.f32.gmra.mrb[0].mxu0 %v2363
        %v2577 = vpop.f32.mrb[0].mxu0
        %v2578 = vadd.f32 %v2254, %v2577
        %v2579 = vpop.f32.mrb[0].mxu0
        %2580 = vmatprep.mubr.f32.mxu0 0.0
        %2581 = vmatmul.mubr.f32.gmra.mrb[0].mxu0 %v2366
        %v2582 = vpop.f32.mrb[0].mxu0
        %v2583 = vadd.f32 %v2259, %v2582
        %v2584 = vpop.f32.mrb[0].mxu0
        %2585 = vmatprep.mubr.f32.mxu0 0.0
        %2586 = vmatmul.mubr.f32.gmra.mrb[0].mxu0 %v2369
        %v2587 = vpop.f32.mrb[0].mxu0
        %v2588 = vadd.f32 %v2264, %v2587
        %v2589 = vpop.f32.mrb[0].mxu0
        %2590 = vmatprep.mubr.f32.mxu0 0.0
        %2591 = vmatmul.mubr.f32.gmra.mrb[0].mxu0 %v2372
        %v2592 = vpop.f32.mrb[0].mxu0
        %v2593 = vadd.f32 %v2269, %v2592
        %v2594 = vpop.f32.mrb[0].mxu0
        %2595 = vmatprep.mubr.f32.mxu0 0.0
        %2596 = vmatmul.mubr.f32.gmra.mrb[0].mxu0 %v2375
        %v2597 = vpop.f32.mrb[0].mxu0
        %v2598 = vadd.f32 %v2274, %v2597
        %v2599 = vpop.f32.mrb[0].mxu0
        %2600 = vmatprep.mubr.f32.mxu0 0.0
        %2601 = vmatmul.mubr.f32.gmra.mrb[0].mxu0 %v2378
        %v2602 = vpop.f32.mrb[0].mxu0
        %v2603 = vadd.f32 %v2279, %v2602
        %v2604 = vpop.f32.mrb[0].mxu0
        %2605 = vmatprep.mubr.f32.mxu0 0.0
        %2606 = vmatmul.mubr.f32.gmra.mrb[0].mxu0 %v2381
        %v2607 = vpop.f32.mrb[0].mxu0
        %v2608 = vadd.f32 %v2284, %v2607
        %v2609 = vpop.f32.mrb[0].mxu0
        %2610 = vdwg.mxu0
        %s2611 = scalar_lea.vmem [#allocation2], 48
        %v2612 = vld [vmem:[%s2611] sm:$0xff]
        %v2613 = vld [vmem:[%s2611 + $0x8] sm:$0xff]
        %v2614 = vld [vmem:[%s2611 + $0x10] sm:$0x3]
        %v2615 = vld [vmem:[%s2611 + $0x18] sm:$0xff]
        %v2616 = vld [vmem:[%s2611 + $0x20] sm:$0xff]
        %v2617 = vld [vmem:[%s2611 + $0x28] sm:$0x3]
        %v2618 = vld [vmem:[%s2611 + $0x30] sm:$0xff]
        %v2619 = vld [vmem:[%s2611 + $0x38] sm:$0xff]
        %v2620 = vld [vmem:[%s2611 + $0x40] sm:$0x3]
        %v2621 = vld [vmem:[%s2611 + $0x48] sm:$0xff]
        %v2622 = vld [vmem:[%s2611 + $0x50] sm:$0xff]
        %v2623 = vld [vmem:[%s2611 + $0x58] sm:$0x3]
        %v2624 = vld [vmem:[%s2611 + $0x60] sm:$0xff]
        %v2625 = vld [vmem:[%s2611 + $0x68] sm:$0xff]
        %v2626 = vld [vmem:[%s2611 + $0x70] sm:$0x3]
        %v2627 = vld [vmem:[%s2611 + $0x78] sm:$0xff]
        %v2628 = vld [vmem:[%s2611 + $0x80] sm:$0xff]
        %v2629 = vld [vmem:[%s2611 + $0x88] sm:$0x3]
        %v2630 = vld [vmem:[%s2611 + $0x90] sm:$0xff]
        %v2631 = vld [vmem:[%s2611 + $0x98] sm:$0xff]
        %v2632 = vld [vmem:[%s2611 + $0xa0] sm:$0x3]
        %v2633 = vld [vmem:[%s2611 + $0xa8] sm:$0xff]
        %v2634 = vld [vmem:[%s2611 + $0xb0] sm:$0xff]
        %v2635 = vld [vmem:[%s2611 + $0xb8] sm:$0x3]
        %v2636 = vld [vmem:[%s2611 + $0xc0] sm:$0xff]
        %v2637 = vld [vmem:[%s2611 + $0xc8] sm:$0xff]
        %v2638 = vld [vmem:[%s2611 + $0xd0] sm:$0x3]
        %v2639 = vld [vmem:[%s2611 + $0xd8] sm:$0xff]
        %v2640 = vld [vmem:[%s2611 + $0xe0] sm:$0xff]
        %v2641 = vld [vmem:[%s2611 + $0xe8] sm:$0x3]
        %v2642 = vld [vmem:[%s2611 + $0xf0] sm:$0xff]
        %v2643 = vld [vmem:[%s2611 + $0xf8] sm:$0xff]
        %v2644 = vld [vmem:[%s2611 + $0x100] sm:$0x3]
        %v2645 = vld [vmem:[%s2611 + $0x108] sm:$0xff]
        %v2646 = vld [vmem:[%s2611 + $0x110] sm:$0xff]
        %v2647 = vld [vmem:[%s2611 + $0x118] sm:$0x3]
        %v2648 = vld [vmem:[%s2611 + $0x120] sm:$0xff]
        %v2649 = vld [vmem:[%s2611 + $0x128] sm:$0xff]
        %v2650 = vld [vmem:[%s2611 + $0x130] sm:$0x3]
        %v2651 = vld [vmem:[%s2611 + $0x138] sm:$0xff]
        %v2652 = vld [vmem:[%s2611 + $0x140] sm:$0xff]
        %v2653 = vld [vmem:[%s2611 + $0x148] sm:$0x3]
        %v2654 = vld [vmem:[%s2611 + $0x150] sm:$0xff]
        %v2655 = vld [vmem:[%s2611 + $0x158] sm:$0xff]
        %v2656 = vld [vmem:[%s2611 + $0x160] sm:$0x3]
        %v2657 = vld [vmem:[%s2611 + $0x168] sm:$0xff]
        %v2658 = vld [vmem:[%s2611 + $0x170] sm:$0xff]
        %v2659 = vld [vmem:[%s2611 + $0x178] sm:$0x3]
        %v2708 = vrot.slane %v2612, 1
        %v2709 = vrot.slane %v2613, 1
        %v2710 = vsel %vm1027, %v2708, %v2709
        %v2711 = vrot.slane %v2614, 1
        %v2712 = vsel %vm1027, %v2709, %v2711
        %v2713 = vrot.slane %v2615, 1
        %v2714 = vrot.slane %v2616, 1
        %v2715 = vsel %vm1027, %v2713, %v2714
        %v2716 = vrot.slane %v2617, 1
        %v2717 = vsel %vm1027, %v2714, %v2716
        %v2718 = vrot.slane %v2618, 1
        %v2719 = vrot.slane %v2619, 1
        %v2720 = vsel %vm1027, %v2718, %v2719
        %v2721 = vrot.slane %v2620, 1
        %v2722 = vsel %vm1027, %v2719, %v2721
        %v2723 = vrot.slane %v2621, 1
        %v2724 = vrot.slane %v2622, 1
        %v2725 = vsel %vm1027, %v2723, %v2724
        %v2726 = vrot.slane %v2623, 1
        %v2727 = vsel %vm1027, %v2724, %v2726
        %v2728 = vrot.slane %v2624, 1
        %v2729 = vrot.slane %v2625, 1
        %v2730 = vsel %vm1027, %v2728, %v2729
        %v2731 = vrot.slane %v2626, 1
        %v2732 = vsel %vm1027, %v2729, %v2731
        %v2733 = vrot.slane %v2627, 1
        %v2734 = vrot.slane %v2628, 1
        %v2735 = vsel %vm1027, %v2733, %v2734
        %v2736 = vrot.slane %v2629, 1
        %v2737 = vsel %vm1027, %v2734, %v2736
        %v2738 = vrot.slane %v2630, 1
        %v2739 = vrot.slane %v2631, 1
        %v2740 = vsel %vm1027, %v2738, %v2739
        %v2741 = vrot.slane %v2632, 1
        %v2742 = vsel %vm1027, %v2739, %v2741
        %v2743 = vrot.slane %v2633, 1
        %v2744 = vrot.slane %v2634, 1
        %v2745 = vsel %vm1027, %v2743, %v2744
        %v2746 = vrot.slane %v2635, 1
        %v2747 = vsel %vm1027, %v2744, %v2746
        %v2748 = vrot.slane %v2636, 1
        %v2749 = vrot.slane %v2637, 1
        %v2750 = vsel %vm1027, %v2748, %v2749
        %v2751 = vrot.slane %v2638, 1
        %v2752 = vsel %vm1027, %v2749, %v2751
        %v2753 = vrot.slane %v2639, 1
        %v2754 = vrot.slane %v2640, 1
        %v2755 = vsel %vm1027, %v2753, %v2754
        %v2756 = vrot.slane %v2641, 1
        %v2757 = vsel %vm1027, %v2754, %v2756
        %v2758 = vrot.slane %v2642, 1
        %v2759 = vrot.slane %v2643, 1
        %v2760 = vsel %vm1027, %v2758, %v2759
        %v2761 = vrot.slane %v2644, 1
        %v2762 = vsel %vm1027, %v2759, %v2761
        %v2763 = vrot.slane %v2645, 1
        %v2764 = vrot.slane %v2646, 1
        %v2765 = vsel %vm1027, %v2763, %v2764
        %v2766 = vrot.slane %v2647, 1
        %v2767 = vsel %vm1027, %v2764, %v2766
        %v2768 = vrot.slane %v2648, 1
        %v2769 = vrot.slane %v2649, 1
        %v2770 = vsel %vm1027, %v2768, %v2769
        %v2771 = vrot.slane %v2650, 1
        %v2772 = vsel %vm1027, %v2769, %v2771
        %v2773 = vrot.slane %v2651, 1
        %v2774 = vrot.slane %v2652, 1
        %v2775 = vsel %vm1027, %v2773, %v2774
        %v2776 = vrot.slane %v2653, 1
        %v2777 = vsel %vm1027, %v2774, %v2776
        %v2778 = vrot.slane %v2654, 1
        %v2779 = vrot.slane %v2655, 1
        %v2780 = vsel %vm1027, %v2778, %v2779
        %v2781 = vrot.slane %v2656, 1
        %v2782 = vsel %vm1027, %v2779, %v2781
        %v2783 = vrot.slane %v2657, 1
        %v2784 = vrot.slane %v2658, 1
        %v2785 = vsel %vm1027, %v2783, %v2784
        %v2786 = vrot.slane %v2659, 1
        %v2787 = vsel %vm1027, %v2784, %v2786
        %2788 = vrot.lane.b32.xlu0 %v2710, 4
        %v2789 = vpop.permute.xlu0 %2788
        %2790 = vrot.lane.b32.xlu0 %v2712, 4
        %v2791 = vpop.permute.xlu0 %2790
        %2792 = vrot.lane.b32.xlu0 %v2715, 4
        %v2793 = vpop.permute.xlu0 %2792
        %2794 = vrot.lane.b32.xlu0 %v2717, 4
        %v2795 = vpop.permute.xlu0 %2794
        %2796 = vrot.lane.b32.xlu0 %v2720, 4
        %v2797 = vpop.permute.xlu0 %2796
        %2798 = vrot.lane.b32.xlu0 %v2722, 4
        %v2799 = vpop.permute.xlu0 %2798
        %2800 = vrot.lane.b32.xlu0 %v2725, 4
        %v2801 = vpop.permute.xlu0 %2800
        %2802 = vrot.lane.b32.xlu0 %v2727, 4
        %v2803 = vpop.permute.xlu0 %2802
        %2804 = vrot.lane.b32.xlu0 %v2730, 4
        %v2805 = vpop.permute.xlu0 %2804
        %2806 = vrot.lane.b32.xlu0 %v2732, 4
        %v2807 = vpop.permute.xlu0 %2806
        %2808 = vrot.lane.b32.xlu0 %v2735, 4
        %v2809 = vpop.permute.xlu0 %2808
        %2810 = vrot.lane.b32.xlu0 %v2737, 4
        %v2811 = vpop.permute.xlu0 %2810
        %2812 = vrot.lane.b32.xlu0 %v2740, 4
        %v2813 = vpop.permute.xlu0 %2812
        %2814 = vrot.lane.b32.xlu0 %v2742, 4
        %v2815 = vpop.permute.xlu0 %2814
        %2816 = vrot.lane.b32.xlu0 %v2745, 4
        %v2817 = vpop.permute.xlu0 %2816
        %2818 = vrot.lane.b32.xlu0 %v2747, 4
        %v2819 = vpop.permute.xlu0 %2818
        %2820 = vrot.lane.b32.xlu0 %v2750, 4
        %v2821 = vpop.permute.xlu0 %2820
        %2822 = vrot.lane.b32.xlu0 %v2752, 4
        %v2823 = vpop.permute.xlu0 %2822
        %2824 = vrot.lane.b32.xlu0 %v2755, 4
        %v2825 = vpop.permute.xlu0 %2824
        %2826 = vrot.lane.b32.xlu0 %v2757, 4
        %v2827 = vpop.permute.xlu0 %2826
        %2828 = vrot.lane.b32.xlu0 %v2760, 4
        %v2829 = vpop.permute.xlu0 %2828
        %2830 = vrot.lane.b32.xlu0 %v2762, 4
        %v2831 = vpop.permute.xlu0 %2830
        %2832 = vrot.lane.b32.xlu0 %v2765, 4
        %v2833 = vpop.permute.xlu0 %2832
        %2834 = vrot.lane.b32.xlu0 %v2767, 4
        %v2835 = vpop.permute.xlu0 %2834
        %2836 = vrot.lane.b32.xlu0 %v2770, 4
        %v2837 = vpop.permute.xlu0 %2836
        %2838 = vrot.lane.b32.xlu0 %v2772, 4
        %v2839 = vpop.permute.xlu0 %2838
        %2840 = vrot.lane.b32.xlu0 %v2775, 4
        %v2841 = vpop.permute.xlu0 %2840
        %2842 = vrot.lane.b32.xlu0 %v2777, 4
        %v2843 = vpop.permute.xlu0 %2842
        %2844 = vrot.lane.b32.xlu0 %v2780, 4
        %v2845 = vpop.permute.xlu0 %2844
        %2846 = vrot.lane.b32.xlu0 %v2782, 4
        %v2847 = vpop.permute.xlu0 %2846
        %2848 = vrot.lane.b32.xlu0 %v2785, 4
        %v2849 = vpop.permute.xlu0 %2848
        %2850 = vrot.lane.b32.xlu0 %v2787, 4
        %v2851 = vpop.permute.xlu0 %2850
        %v2884 = vrot.slane %v2612, 2
        %v2885 = vrot.slane %v2613, 2
        %v2886 = vsel %vm1204, %v2884, %v2885
        %v2887 = vrot.slane %v2614, 2
        %v2888 = vsel %vm1204, %v2885, %v2887
        %v2889 = vrot.slane %v2615, 2
        %v2890 = vrot.slane %v2616, 2
        %v2891 = vsel %vm1204, %v2889, %v2890
        %v2892 = vrot.slane %v2617, 2
        %v2893 = vsel %vm1204, %v2890, %v2892
        %v2894 = vrot.slane %v2618, 2
        %v2895 = vrot.slane %v2619, 2
        %v2896 = vsel %vm1204, %v2894, %v2895
        %v2897 = vrot.slane %v2620, 2
        %v2898 = vsel %vm1204, %v2895, %v2897
        %v2899 = vrot.slane %v2621, 2
        %v2900 = vrot.slane %v2622, 2
        %v2901 = vsel %vm1204, %v2899, %v2900
        %v2902 = vrot.slane %v2623, 2
        %v2903 = vsel %vm1204, %v2900, %v2902
        %v2904 = vrot.slane %v2624, 2
        %v2905 = vrot.slane %v2625, 2
        %v2906 = vsel %vm1204, %v2904, %v2905
        %v2907 = vrot.slane %v2626, 2
        %v2908 = vsel %vm1204, %v2905, %v2907
        %v2909 = vrot.slane %v2627, 2
        %v2910 = vrot.slane %v2628, 2
        %v2911 = vsel %vm1204, %v2909, %v2910
        %v2912 = vrot.slane %v2629, 2
        %v2913 = vsel %vm1204, %v2910, %v2912
        %v2914 = vrot.slane %v2630, 2
        %v2915 = vrot.slane %v2631, 2
        %v2916 = vsel %vm1204, %v2914, %v2915
        %v2917 = vrot.slane %v2632, 2
        %v2918 = vsel %vm1204, %v2915, %v2917
        %v2919 = vrot.slane %v2633, 2
        %v2920 = vrot.slane %v2634, 2
        %v2921 = vsel %vm1204, %v2919, %v2920
        %v2922 = vrot.slane %v2635, 2
        %v2923 = vsel %vm1204, %v2920, %v2922
        %v2924 = vrot.slane %v2636, 2
        %v2925 = vrot.slane %v2637, 2
        %v2926 = vsel %vm1204, %v2924, %v2925
        %v2927 = vrot.slane %v2638, 2
        %v2928 = vsel %vm1204, %v2925, %v2927
        %v2929 = vrot.slane %v2639, 2
        %v2930 = vrot.slane %v2640, 2
        %v2931 = vsel %vm1204, %v2929, %v2930
        %v2932 = vrot.slane %v2641, 2
        %v2933 = vsel %vm1204, %v2930, %v2932
        %v2934 = vrot.slane %v2642, 2
        %v2935 = vrot.slane %v2643, 2
        %v2936 = vsel %vm1204, %v2934, %v2935
        %v2937 = vrot.slane %v2644, 2
        %v2938 = vsel %vm1204, %v2935, %v2937
        %v2939 = vrot.slane %v2645, 2
        %v2940 = vrot.slane %v2646, 2
        %v2941 = vsel %vm1204, %v2939, %v2940
        %v2942 = vrot.slane %v2647, 2
        %v2943 = vsel %vm1204, %v2940, %v2942
        %v2944 = vrot.slane %v2648, 2
        %v2945 = vrot.slane %v2649, 2
        %v2946 = vsel %vm1204, %v2944, %v2945
        %v2947 = vrot.slane %v2650, 2
        %v2948 = vsel %vm1204, %v2945, %v2947
        %v2949 = vrot.slane %v2651, 2
        %v2950 = vrot.slane %v2652, 2
        %v2951 = vsel %vm1204, %v2949, %v2950
        %v2952 = vrot.slane %v2653, 2
        %v2953 = vsel %vm1204, %v2950, %v2952
        %v2954 = vrot.slane %v2654, 2
        %v2955 = vrot.slane %v2655, 2
        %v2956 = vsel %vm1204, %v2954, %v2955
        %v2957 = vrot.slane %v2656, 2
        %v2958 = vsel %vm1204, %v2955, %v2957
        %v2959 = vrot.slane %v2657, 2
        %v2960 = vrot.slane %v2658, 2
        %v2961 = vsel %vm1204, %v2959, %v2960
        %v2962 = vrot.slane %v2659, 2
        %v2963 = vsel %vm1204, %v2960, %v2962
        %2964 = vrot.lane.b32.xlu0 %v2886, 8
        %v2965 = vpop.permute.xlu0 %2964
        %2966 = vrot.lane.b32.xlu0 %v2888, 8
        %v2967 = vpop.permute.xlu0 %2966
        %2968 = vrot.lane.b32.xlu0 %v2891, 8
        %v2969 = vpop.permute.xlu0 %2968
        %2970 = vrot.lane.b32.xlu0 %v2893, 8
        %v2971 = vpop.permute.xlu0 %2970
        %2972 = vrot.lane.b32.xlu0 %v2896, 8
        %v2973 = vpop.permute.xlu0 %2972
        %2974 = vrot.lane.b32.xlu0 %v2898, 8
        %v2975 = vpop.permute.xlu0 %2974
        %2976 = vrot.lane.b32.xlu0 %v2901, 8
        %v2977 = vpop.permute.xlu0 %2976
        %2978 = vrot.lane.b32.xlu0 %v2903, 8
        %v2979 = vpop.permute.xlu0 %2978
        %2980 = vrot.lane.b32.xlu0 %v2906, 8
        %v2981 = vpop.permute.xlu0 %2980
        %2982 = vrot.lane.b32.xlu0 %v2908, 8
        %v2983 = vpop.permute.xlu0 %2982
        %2984 = vrot.lane.b32.xlu0 %v2911, 8
        %v2985 = vpop.permute.xlu0 %2984
        %2986 = vrot.lane.b32.xlu0 %v2913, 8
        %v2987 = vpop.permute.xlu0 %2986
        %2988 = vrot.lane.b32.xlu0 %v2916, 8
        %v2989 = vpop.permute.xlu0 %2988
        %2990 = vrot.lane.b32.xlu0 %v2918, 8
        %v2991 = vpop.permute.xlu0 %2990
        %2992 = vrot.lane.b32.xlu0 %v2921, 8
        %v2993 = vpop.permute.xlu0 %2992
        %2994 = vrot.lane.b32.xlu0 %v2923, 8
        %v2995 = vpop.permute.xlu0 %2994
        %2996 = vrot.lane.b32.xlu0 %v2926, 8
        %v2997 = vpop.permute.xlu0 %2996
        %2998 = vrot.lane.b32.xlu0 %v2928, 8
        %v2999 = vpop.permute.xlu0 %2998
        %3000 = vrot.lane.b32.xlu0 %v2931, 8
        %v3001 = vpop.permute.xlu0 %3000
        %3002 = vrot.lane.b32.xlu0 %v2933, 8
        %v3003 = vpop.permute.xlu0 %3002
        %3004 = vrot.lane.b32.xlu0 %v2936, 8
        %v3005 = vpop.permute.xlu0 %3004
        %3006 = vrot.lane.b32.xlu0 %v2938, 8
        %v3007 = vpop.permute.xlu0 %3006
        %3008 = vrot.lane.b32.xlu0 %v2941, 8
        %v3009 = vpop.permute.xlu0 %3008
        %3010 = vrot.lane.b32.xlu0 %v2943, 8
        %v3011 = vpop.permute.xlu0 %3010
        %3012 = vrot.lane.b32.xlu0 %v2946, 8
        %v3013 = vpop.permute.xlu0 %3012
        %3014 = vrot.lane.b32.xlu0 %v2948, 8
        %v3015 = vpop.permute.xlu0 %3014
        %3016 = vrot.lane.b32.xlu0 %v2951, 8
        %v3017 = vpop.permute.xlu0 %3016
        %3018 = vrot.lane.b32.xlu0 %v2953, 8
        %v3019 = vpop.permute.xlu0 %3018
        %3020 = vrot.lane.b32.xlu0 %v2956, 8
        %v3021 = vpop.permute.xlu0 %3020
        %3022 = vrot.lane.b32.xlu0 %v2958, 8
        %v3023 = vpop.permute.xlu0 %3022
        %3024 = vrot.lane.b32.xlu0 %v2961, 8
        %v3025 = vpop.permute.xlu0 %3024
        %3026 = vrot.lane.b32.xlu0 %v2963, 8
        %v3027 = vpop.permute.xlu0 %3026
        %v3060 = vsel %vm371, %v2612, %v2789
        %v3061 = vsel %vm371, %v2613, %v2791
        %v3062 = vsel %vm371, %v2615, %v2793
        %v3063 = vsel %vm371, %v2616, %v2795
        %v3064 = vsel %vm371, %v2618, %v2797
        %v3065 = vsel %vm371, %v2619, %v2799
        %v3066 = vsel %vm371, %v2621, %v2801
        %v3067 = vsel %vm371, %v2622, %v2803
        %v3068 = vsel %vm371, %v2624, %v2805
        %v3069 = vsel %vm371, %v2625, %v2807
        %v3070 = vsel %vm371, %v2627, %v2809
        %v3071 = vsel %vm371, %v2628, %v2811
        %v3072 = vsel %vm371, %v2630, %v2813
        %v3073 = vsel %vm371, %v2631, %v2815
        %v3074 = vsel %vm371, %v2633, %v2817
        %v3075 = vsel %vm371, %v2634, %v2819
        %v3076 = vsel %vm371, %v2636, %v2821
        %v3077 = vsel %vm371, %v2637, %v2823
        %v3078 = vsel %vm371, %v2639, %v2825
        %v3079 = vsel %vm371, %v2640, %v2827
        %v3080 = vsel %vm371, %v2642, %v2829
        %v3081 = vsel %vm371, %v2643, %v2831
        %v3082 = vsel %vm371, %v2645, %v2833
        %v3083 = vsel %vm371, %v2646, %v2835
        %v3084 = vsel %vm371, %v2648, %v2837
        %v3085 = vsel %vm371, %v2649, %v2839
        %v3086 = vsel %vm371, %v2651, %v2841
        %v3087 = vsel %vm371, %v2652, %v2843
        %v3088 = vsel %vm371, %v2654, %v2845
        %v3089 = vsel %vm371, %v2655, %v2847
        %v3090 = vsel %vm371, %v2657, %v2849
        %v3091 = vsel %vm371, %v2658, %v2851
        %v3092 = vsel %vm1413, %v3060, %v2965
        %v3093 = vsel %vm1413, %v3061, %v2967
        %v3094 = vsel %vm1413, %v3062, %v2969
        %v3095 = vsel %vm1413, %v3063, %v2971
        %v3096 = vsel %vm1413, %v3064, %v2973
        %v3097 = vsel %vm1413, %v3065, %v2975
        %v3098 = vsel %vm1413, %v3066, %v2977
        %v3099 = vsel %vm1413, %v3067, %v2979
        %v3100 = vsel %vm1413, %v3068, %v2981
        %v3101 = vsel %vm1413, %v3069, %v2983
        %v3102 = vsel %vm1413, %v3070, %v2985
        %v3103 = vsel %vm1413, %v3071, %v2987
        %v3104 = vsel %vm1413, %v3072, %v2989
        %v3105 = vsel %vm1413, %v3073, %v2991
        %v3106 = vsel %vm1413, %v3074, %v2993
        %v3107 = vsel %vm1413, %v3075, %v2995
        %v3108 = vsel %vm1413, %v3076, %v2997
        %v3109 = vsel %vm1413, %v3077, %v2999
        %v3110 = vsel %vm1413, %v3078, %v3001
        %v3111 = vsel %vm1413, %v3079, %v3003
        %v3112 = vsel %vm1413, %v3080, %v3005
        %v3113 = vsel %vm1413, %v3081, %v3007
        %v3114 = vsel %vm1413, %v3082, %v3009
        %v3115 = vsel %vm1413, %v3083, %v3011
        %v3116 = vsel %vm1413, %v3084, %v3013
        %v3117 = vsel %vm1413, %v3085, %v3015
        %v3118 = vsel %vm1413, %v3086, %v3017
        %v3119 = vsel %vm1413, %v3087, %v3019
        %v3120 = vsel %vm1413, %v3088, %v3021
        %v3121 = vsel %vm1413, %v3089, %v3023
        %v3122 = vsel %vm1413, %v3090, %v3025
        %v3123 = vsel %vm1413, %v3091, %v3027
        %v3124 = vld [vmem:[%s3 + $0x18] sm:$0xff]
        %v3125 = vld [vmem:[%s3 + $0x20] sm:$0xf]
        %v3127 = vsel %vm1962, %v3092, 0
        %v3130 = vsel %vm1962, %v3093, 0
        %v3133 = vsel %vm1962, %v3094, 0
        %v3136 = vsel %vm1962, %v3095, 0
        %v3139 = vsel %vm1962, %v3096, 0
        %v3142 = vsel %vm1962, %v3097, 0
        %v3145 = vsel %vm1962, %v3098, 0
        %v3148 = vsel %vm1962, %v3099, 0
        %v3151 = vsel %vm1962, %v3100, 0
        %v3154 = vsel %vm1962, %v3101, 0
        %v3157 = vsel %vm1962, %v3102, 0
        %v3160 = vsel %vm1962, %v3103, 0
        %v3163 = vsel %vm1962, %v3104, 0
        %v3166 = vsel %vm1962, %v3105, 0
        %v3169 = vsel %vm1962, %v3106, 0
        %v3172 = vsel %vm1962, %v3107, 0
        %v3175 = vsel %vm1962, %v3108, 0
        %v3178 = vsel %vm1962, %v3109, 0
        %v3181 = vsel %vm1962, %v3110, 0
        %v3184 = vsel %vm1962, %v3111, 0
        %v3187 = vsel %vm1962, %v3112, 0
        %v3190 = vsel %vm1962, %v3113, 0
        %v3193 = vsel %vm1962, %v3114, 0
        %v3196 = vsel %vm1962, %v3115, 0
        %v3199 = vsel %vm1962, %v3116, 0
        %v3202 = vsel %vm1962, %v3117, 0
        %v3205 = vsel %vm1962, %v3118, 0
        %v3208 = vsel %vm1962, %v3119, 0
        %v3211 = vsel %vm1962, %v3120, 0
        %v3214 = vsel %vm1962, %v3121, 0
        %v3217 = vsel %vm1962, %v3122, 0
        %v3220 = vsel %vm1962, %v3123, 0
        %v3223 = vsel %vm468, %v3125, 0
        %3225 = vmatprep.subr.mxu0 0.0
        %3226 = vmatpush1.msra.mxu0 %v3124
        %3227 = vmatprep.subr.mxu0 0.0
        %3228 = vmatpush1.msra.mxu0 %v3223
        %3229 = vmatprep.subr.mxu0 0.0
        %3230 = vmatpush1.msra.mxu0 0.0
        %3231 = vmatprep.subr.mxu0 0.0
        %3232 = vmatpush1.msra.mxu0 0.0
        %3233 = vmatprep.subr.mxu0 0.0
        %3234 = vmatpush1.msra.mxu0 0.0
        %3235 = vmatprep.subr.mxu0 0.0
        %3236 = vmatpush1.msra.mxu0 0.0
        %3237 = vmatprep.subr.mxu0 0.0
        %3238 = vmatpush1.msra.mxu0 0.0
        %3239 = vmatprep.subr.mxu0 0.0
        %3240 = vmatpush1.msra.mxu0 0.0
        %3241 = vmatprep.subr.mxu0 0.0
        %3242 = vmatpush1.msra.mxu0 0.0
        %3243 = vmatprep.subr.mxu0 0.0
        %3244 = vmatpush1.msra.mxu0 0.0
        %3245 = vmatprep.subr.mxu0 0.0
        %3246 = vmatpush1.msra.mxu0 0.0
        %3247 = vmatprep.subr.mxu0 0.0
        %3248 = vmatpush1.msra.mxu0 0.0
        %3249 = vmatprep.subr.mxu0 0.0
        %3250 = vmatpush1.msra.mxu0 0.0
        %3251 = vmatprep.subr.mxu0 0.0
        %3252 = vmatpush1.msra.mxu0 0.0
        %3253 = vmatprep.subr.mxu0 0.0
        %3254 = vmatpush1.msra.mxu0 0.0
        %3255 = vmatprep.subr.mxu0 0.0
        %3256 = vmatpush1.msra.mxu0 0.0
        %3257 = vmatprep.subr.mxu0 0.0
        %3258 = vmatpush1.msra.mxu0 0.0
        %3259 = vmatprep.subr.mxu0 0.0
        %3260 = vmatpush1.msra.mxu0 0.0
        %3261 = vmatprep.subr.mxu0 0.0
        %3262 = vmatpush1.msra.mxu0 0.0
        %3263 = vmatprep.subr.mxu0 0.0
        %3264 = vmatpush1.msra.mxu0 0.0
        %3265 = vmatprep.subr.mxu0 0.0
        %3266 = vmatpush1.msra.mxu0 0.0
        %3267 = vmatprep.subr.mxu0 0.0
        %3268 = vmatpush1.msra.mxu0 0.0
        %3269 = vmatprep.subr.mxu0 0.0
        %3270 = vmatpush1.msra.mxu0 0.0
        %3271 = vmatprep.subr.mxu0 0.0
        %3272 = vmatpush1.msra.mxu0 0.0
        %3273 = vmatprep.subr.mxu0 0.0
        %3274 = vmatpush1.msra.mxu0 0.0
        %3275 = vmatprep.subr.mxu0 0.0
        %3276 = vmatpush1.msra.mxu0 0.0
        %3277 = vmatprep.subr.mxu0 0.0
        %3278 = vmatpush1.msra.mxu0 0.0
        %3279 = vmatprep.subr.mxu0 0.0
        %3280 = vmatpush1.msra.mxu0 0.0
        %3281 = vmatprep.subr.mxu0 0.0
        %3282 = vmatpush1.msra.mxu0 0.0
        %3283 = vmatprep.subr.mxu0 0.0
        %3284 = vmatpush1.msra.mxu0 0.0
        %3285 = vmatprep.subr.mxu0 0.0
        %3286 = vmatpush1.msra.mxu0 0.0
        %3287 = vmatprep.subr.mxu0 0.0
        %3288 = vmatpush1.msra.mxu0 0.0
        %3289 = vmatprep.mubr.f32.mxu0 0.0
        %3290 = vmatmul.mubr.f32.gmra.mrb[0].mxu0 %v3127
        %v3291 = vpop.f32.mrb[0].mxu0
        %v3292 = vadd.f32 0.0, %v3291
        %v3293 = vpop.f32.mrb[0].mxu0
        %3294 = vmatprep.mubr.f32.mxu0 0.0
        %3295 = vmatmul.mubr.f32.gmra.mrb[0].mxu0 %v3130
        %v3296 = vpop.f32.mrb[0].mxu0
        %v3297 = vadd.f32 0.0, %v3296
        %v3298 = vpop.f32.mrb[0].mxu0
        %3299 = vmatprep.mubr.f32.mxu0 0.0
        %3300 = vmatmul.mubr.f32.gmra.mrb[0].mxu0 %v3133
        %v3301 = vpop.f32.mrb[0].mxu0
        %v3302 = vadd.f32 0.0, %v3301
        %v3303 = vpop.f32.mrb[0].mxu0
        %3304 = vmatprep.mubr.f32.mxu0 0.0
        %3305 = vmatmul.mubr.f32.gmra.mrb[0].mxu0 %v3136
        %v3306 = vpop.f32.mrb[0].mxu0
        %v3307 = vadd.f32 0.0, %v3306
        %v3308 = vpop.f32.mrb[0].mxu0
        %3309 = vmatprep.mubr.f32.mxu0 0.0
        %3310 = vmatmul.mubr.f32.gmra.mrb[0].mxu0 %v3139
        %v3311 = vpop.f32.mrb[0].mxu0
        %v3312 = vadd.f32 0.0, %v3311
        %v3313 = vpop.f32.mrb[0].mxu0
        %3314 = vmatprep.mubr.f32.mxu0 0.0
        %3315 = vmatmul.mubr.f32.gmra.mrb[0].mxu0 %v3142
        %v3316 = vpop.f32.mrb[0].mxu0
        %v3317 = vadd.f32 0.0, %v3316
        %v3318 = vpop.f32.mrb[0].mxu0
        %3319 = vmatprep.mubr.f32.mxu0 0.0
        %3320 = vmatmul.mubr.f32.gmra.mrb[0].mxu0 %v3145
        %v3321 = vpop.f32.mrb[0].mxu0
        %v3322 = vadd.f32 0.0, %v3321
        %v3323 = vpop.f32.mrb[0].mxu0
        %3324 = vmatprep.mubr.f32.mxu0 0.0
        %3325 = vmatmul.mubr.f32.gmra.mrb[0].mxu0 %v3148
        %v3326 = vpop.f32.mrb[0].mxu0
        %v3327 = vadd.f32 0.0, %v3326
        %v3328 = vpop.f32.mrb[0].mxu0
        %3329 = vmatprep.mubr.f32.mxu0 0.0
        %3330 = vmatmul.mubr.f32.gmra.mrb[0].mxu0 %v3151
        %v3331 = vpop.f32.mrb[0].mxu0
        %v3332 = vadd.f32 0.0, %v3331
        %v3333 = vpop.f32.mrb[0].mxu0
        %3334 = vmatprep.mubr.f32.mxu0 0.0
        %3335 = vmatmul.mubr.f32.gmra.mrb[0].mxu0 %v3154
        %v3336 = vpop.f32.mrb[0].mxu0
        %v3337 = vadd.f32 0.0, %v3336
        %v3338 = vpop.f32.mrb[0].mxu0
        %3339 = vmatprep.mubr.f32.mxu0 0.0
        %3340 = vmatmul.mubr.f32.gmra.mrb[0].mxu0 %v3157
        %v3341 = vpop.f32.mrb[0].mxu0
        %v3342 = vadd.f32 0.0, %v3341
        %v3343 = vpop.f32.mrb[0].mxu0
        %3344 = vmatprep.mubr.f32.mxu0 0.0
        %3345 = vmatmul.mubr.f32.gmra.mrb[0].mxu0 %v3160
        %v3346 = vpop.f32.mrb[0].mxu0
        %v3347 = vadd.f32 0.0, %v3346
        %v3348 = vpop.f32.mrb[0].mxu0
        %3349 = vmatprep.mubr.f32.mxu0 0.0
        %3350 = vmatmul.mubr.f32.gmra.mrb[0].mxu0 %v3163
        %v3351 = vpop.f32.mrb[0].mxu0
        %v3352 = vadd.f32 0.0, %v3351
        %v3353 = vpop.f32.mrb[0].mxu0
        %3354 = vmatprep.mubr.f32.mxu0 0.0
        %3355 = vmatmul.mubr.f32.gmra.mrb[0].mxu0 %v3166
        %v3356 = vpop.f32.mrb[0].mxu0
        %v3357 = vadd.f32 0.0, %v3356
        %v3358 = vpop.f32.mrb[0].mxu0
        %3359 = vmatprep.mubr.f32.mxu0 0.0
        %3360 = vmatmul.mubr.f32.gmra.mrb[0].mxu0 %v3169
        %v3361 = vpop.f32.mrb[0].mxu0
        %v3362 = vadd.f32 0.0, %v3361
        %v3363 = vpop.f32.mrb[0].mxu0
        %3364 = vmatprep.mubr.f32.mxu0 0.0
        %3365 = vmatmul.mubr.f32.gmra.mrb[0].mxu0 %v3172
        %v3366 = vpop.f32.mrb[0].mxu0
        %v3367 = vadd.f32 0.0, %v3366
        %v3368 = vpop.f32.mrb[0].mxu0
        %3369 = vmatprep.mubr.f32.mxu0 0.0
        %3370 = vmatmul.mubr.f32.gmra.mrb[0].mxu0 %v3175
        %v3371 = vpop.f32.mrb[0].mxu0
        %v3372 = vadd.f32 0.0, %v3371
        %v3373 = vpop.f32.mrb[0].mxu0
        %3374 = vmatprep.mubr.f32.mxu0 0.0
        %3375 = vmatmul.mubr.f32.gmra.mrb[0].mxu0 %v3178
        %v3376 = vpop.f32.mrb[0].mxu0
        %v3377 = vadd.f32 0.0, %v3376
        %v3378 = vpop.f32.mrb[0].mxu0
        %3379 = vmatprep.mubr.f32.mxu0 0.0
        %3380 = vmatmul.mubr.f32.gmra.mrb[0].mxu0 %v3181
        %v3381 = vpop.f32.mrb[0].mxu0
        %v3382 = vadd.f32 0.0, %v3381
        %v3383 = vpop.f32.mrb[0].mxu0
        %3384 = vmatprep.mubr.f32.mxu0 0.0
        %3385 = vmatmul.mubr.f32.gmra.mrb[0].mxu0 %v3184
        %v3386 = vpop.f32.mrb[0].mxu0
        %v3387 = vadd.f32 0.0, %v3386
        %v3388 = vpop.f32.mrb[0].mxu0
        %3389 = vmatprep.mubr.f32.mxu0 0.0
        %3390 = vmatmul.mubr.f32.gmra.mrb[0].mxu0 %v3187
        %v3391 = vpop.f32.mrb[0].mxu0
        %v3392 = vadd.f32 0.0, %v3391
        %v3393 = vpop.f32.mrb[0].mxu0
        %3394 = vmatprep.mubr.f32.mxu0 0.0
        %3395 = vmatmul.mubr.f32.gmra.mrb[0].mxu0 %v3190
        %v3396 = vpop.f32.mrb[0].mxu0
        %v3397 = vadd.f32 0.0, %v3396
        %v3398 = vpop.f32.mrb[0].mxu0
        %3399 = vmatprep.mubr.f32.mxu0 0.0
        %3400 = vmatmul.mubr.f32.gmra.mrb[0].mxu0 %v3193
        %v3401 = vpop.f32.mrb[0].mxu0
        %v3402 = vadd.f32 0.0, %v3401
        %v3403 = vpop.f32.mrb[0].mxu0
        %3404 = vmatprep.mubr.f32.mxu0 0.0
        %3405 = vmatmul.mubr.f32.gmra.mrb[0].mxu0 %v3196
        %v3406 = vpop.f32.mrb[0].mxu0
        %v3407 = vadd.f32 0.0, %v3406
        %v3408 = vpop.f32.mrb[0].mxu0
        %3409 = vmatprep.mubr.f32.mxu0 0.0
        %3410 = vmatmul.mubr.f32.gmra.mrb[0].mxu0 %v3199
        %v3411 = vpop.f32.mrb[0].mxu0
        %v3412 = vadd.f32 0.0, %v3411
        %v3413 = vpop.f32.mrb[0].mxu0
        %3414 = vmatprep.mubr.f32.mxu0 0.0
        %3415 = vmatmul.mubr.f32.gmra.mrb[0].mxu0 %v3202
        %v3416 = vpop.f32.mrb[0].mxu0
        %v3417 = vadd.f32 0.0, %v3416
        %v3418 = vpop.f32.mrb[0].mxu0
        %3419 = vmatprep.mubr.f32.mxu0 0.0
        %3420 = vmatmul.mubr.f32.gmra.mrb[0].mxu0 %v3205
        %v3421 = vpop.f32.mrb[0].mxu0
        %v3422 = vadd.f32 0.0, %v3421
        %v3423 = vpop.f32.mrb[0].mxu0
        %3424 = vmatprep.mubr.f32.mxu0 0.0
        %3425 = vmatmul.mubr.f32.gmra.mrb[0].mxu0 %v3208
        %v3426 = vpop.f32.mrb[0].mxu0
        %v3427 = vadd.f32 0.0, %v3426
        %v3428 = vpop.f32.mrb[0].mxu0
        %3429 = vmatprep.mubr.f32.mxu0 0.0
        %3430 = vmatmul.mubr.f32.gmra.mrb[0].mxu0 %v3211
        %v3431 = vpop.f32.mrb[0].mxu0
        %v3432 = vadd.f32 0.0, %v3431
        %v3433 = vpop.f32.mrb[0].mxu0
        %3434 = vmatprep.mubr.f32.mxu0 0.0
        %3435 = vmatmul.mubr.f32.gmra.mrb[0].mxu0 %v3214
        %v3436 = vpop.f32.mrb[0].mxu0
        %v3437 = vadd.f32 0.0, %v3436
        %v3438 = vpop.f32.mrb[0].mxu0
        %3439 = vmatprep.mubr.f32.mxu0 0.0
        %3440 = vmatmul.mubr.f32.gmra.mrb[0].mxu0 %v3217
        %v3441 = vpop.f32.mrb[0].mxu0
        %v3442 = vadd.f32 0.0, %v3441
        %v3443 = vpop.f32.mrb[0].mxu0
        %3444 = vmatprep.mubr.f32.mxu0 0.0
        %3445 = vmatmul.mubr.f32.gmra.mrb[0].mxu0 %v3220
        %v3446 = vpop.f32.mrb[0].mxu0
        %v3447 = vadd.f32 0.0, %v3446
        %v3448 = vpop.f32.mrb[0].mxu0
        %3449 = vdwg.mxu0
        %v3450 = vadd.f32 %v2453, %v3292
        %v3451 = vadd.f32 %v2458, %v3297
        %v3452 = vadd.f32 %v2463, %v3302
        %v3453 = vadd.f32 %v2468, %v3307
        %v3454 = vadd.f32 %v2473, %v3312
        %v3455 = vadd.f32 %v2478, %v3317
        %v3456 = vadd.f32 %v2483, %v3322
        %v3457 = vadd.f32 %v2488, %v3327
        %v3458 = vadd.f32 %v2493, %v3332
        %v3459 = vadd.f32 %v2498, %v3337
        %v3460 = vadd.f32 %v2503, %v3342
        %v3461 = vadd.f32 %v2508, %v3347
        %v3462 = vadd.f32 %v2513, %v3352
        %v3463 = vadd.f32 %v2518, %v3357
        %v3464 = vadd.f32 %v2523, %v3362
        %v3465 = vadd.f32 %v2528, %v3367
        %v3466 = vadd.f32 %v2533, %v3372
        %v3467 = vadd.f32 %v2538, %v3377
        %v3468 = vadd.f32 %v2543, %v3382
        %v3469 = vadd.f32 %v2548, %v3387
        %v3470 = vadd.f32 %v2553, %v3392
        %v3471 = vadd.f32 %v2558, %v3397
        %v3472 = vadd.f32 %v2563, %v3402
        %v3473 = vadd.f32 %v2568, %v3407
        %v3474 = vadd.f32 %v2573, %v3412
        %v3475 = vadd.f32 %v2578, %v3417
        %v3476 = vadd.f32 %v2583, %v3422
        %v3477 = vadd.f32 %v2588, %v3427
        %v3478 = vadd.f32 %v2593, %v3432
        %v3479 = vadd.f32 %v2598, %v3437
        %v3480 = vadd.f32 %v2603, %v3442
        %v3481 = vadd.f32 %v2608, %v3447
        %v3482 = vld [vmem:[%s4] sm:$0x1]
        %v3484 = vlaneseq
        %v3485 = vshrl.u32 %v3484, 7
        %v3486 = vsub.s32 0, %v3485
        %v3487 = vrot.slane %v3482, %v3486
        %v3489 = vadd.f32 %v3450, %v3487
        %v3490 = vadd.f32 %v3451, %v3487
        %v3491 = vadd.f32 %v3452, %v3487
        %v3492 = vadd.f32 %v3453, %v3487
        %v3493 = vadd.f32 %v3454, %v3487
        %v3494 = vadd.f32 %v3455, %v3487
        %v3495 = vadd.f32 %v3456, %v3487
        %v3496 = vadd.f32 %v3457, %v3487
        %v3497 = vadd.f32 %v3458, %v3487
        %v3498 = vadd.f32 %v3459, %v3487
        %v3499 = vadd.f32 %v3460, %v3487
        %v3500 = vadd.f32 %v3461, %v3487
        %v3501 = vadd.f32 %v3462, %v3487
        %v3502 = vadd.f32 %v3463, %v3487
        %v3503 = vadd.f32 %v3464, %v3487
        %v3504 = vadd.f32 %v3465, %v3487
        %v3505 = vadd.f32 %v3466, %v3487
        %v3506 = vadd.f32 %v3467, %v3487
        %v3507 = vadd.f32 %v3468, %v3487
        %v3508 = vadd.f32 %v3469, %v3487
        %v3509 = vadd.f32 %v3470, %v3487
        %v3510 = vadd.f32 %v3471, %v3487
        %v3511 = vadd.f32 %v3472, %v3487
        %v3512 = vadd.f32 %v3473, %v3487
        %v3513 = vadd.f32 %v3474, %v3487
        %v3514 = vadd.f32 %v3475, %v3487
        %v3515 = vadd.f32 %v3476, %v3487
        %v3516 = vadd.f32 %v3477, %v3487
        %v3517 = vadd.f32 %v3478, %v3487
        %v3518 = vadd.f32 %v3479, %v3487
        %v3519 = vadd.f32 %v3480, %v3487
        %v3520 = vadd.f32 %v3481, %v3487
        %v3521 = vmax.f32 %v3489, 0.0
        %v3522 = vmax.f32 %v3490, 0.0
        %v3523 = vmax.f32 %v3491, 0.0
        %v3524 = vmax.f32 %v3492, 0.0
        %v3525 = vmax.f32 %v3493, 0.0
        %v3526 = vmax.f32 %v3494, 0.0
        %v3527 = vmax.f32 %v3495, 0.0
        %v3528 = vmax.f32 %v3496, 0.0
        %v3529 = vmax.f32 %v3497, 0.0
        %v3530 = vmax.f32 %v3498, 0.0
        %v3531 = vmax.f32 %v3499, 0.0
        %v3532 = vmax.f32 %v3500, 0.0
        %v3533 = vmax.f32 %v3501, 0.0
        %v3534 = vmax.f32 %v3502, 0.0
        %v3535 = vmax.f32 %v3503, 0.0
        %v3536 = vmax.f32 %v3504, 0.0
        %v3537 = vmax.f32 %v3505, 0.0
        %v3538 = vmax.f32 %v3506, 0.0
        %v3539 = vmax.f32 %v3507, 0.0
        %v3540 = vmax.f32 %v3508, 0.0
        %v3541 = vmax.f32 %v3509, 0.0
        %v3542 = vmax.f32 %v3510, 0.0
        %v3543 = vmax.f32 %v3511, 0.0
        %v3544 = vmax.f32 %v3512, 0.0
        %v3545 = vmax.f32 %v3513, 0.0
        %v3546 = vmax.f32 %v3514, 0.0
        %v3547 = vmax.f32 %v3515, 0.0
        %v3548 = vmax.f32 %v3516, 0.0
        %v3549 = vmax.f32 %v3517, 0.0
        %v3550 = vmax.f32 %v3518, 0.0
        %v3551 = vmax.f32 %v3519, 0.0
        %v3552 = vmax.f32 %v3520, 0.0
        %3553 = vst.msk [vmem:[#allocation3] sm:$0xff] %vm371, 0.0
        %3554 = vst.msk [vmem:[#allocation3 + $0x8] sm:$0xff] %vm371, 0.0
        %vm3555 = vcmask 27648
        %3556 = vst.msk [vmem:[#allocation3 + $0x10] sm:$0xf] %vm3555, 0.0
        %3557 = vst.msk [vmem:[#allocation3 + $0x18] sm:$0xff] %vm371, 0.0
        %3558 = vst.msk [vmem:[#allocation3 + $0x20] sm:$0xff] %vm371, 0.0
        %3559 = vst.msk [vmem:[#allocation3 + $0x28] sm:$0xf] %vm3555, 0.0
        %s3560 = scalar_lea.vmem [#allocation3], 432
        %3561 = vst.msk [vmem:[%s3560] sm:$0xff] %vm371, 0.0
        %3562 = vst.msk [vmem:[%s3560 + $0x8] sm:$0xff] %vm371, 0.0
        %3563 = vst.msk [vmem:[%s3560 + $0x10] sm:$0xf] %vm3555, 0.0
        %3564 = vst.msk [vmem:[%s3560 + $0x18] sm:$0xff] %vm371, 0.0
        %3565 = vst.msk [vmem:[%s3560 + $0x20] sm:$0xff] %vm371, 0.0
        %3566 = vst.msk [vmem:[%s3560 + $0x28] sm:$0xf] %vm3555, 0.0
        %s3567 = scalar_lea.vmem [#allocation3], 48
        %3568 = vst.msk [vmem:[%s3567] sm:$0x3] %vm731, 0.0
        %3569 = vst.msk [vmem:[%s3567 + $0x18] sm:$0x3] %vm731, 0.0
        %3570 = vst.msk [vmem:[%s3567 + $0x30] sm:$0x3] %vm731, 0.0
        %3571 = vst.msk [vmem:[%s3567 + $0x48] sm:$0x3] %vm731, 0.0
        %3572 = vst.msk [vmem:[%s3567 + $0x60] sm:$0x3] %vm731, 0.0
        %3573 = vst.msk [vmem:[%s3567 + $0x78] sm:$0x3] %vm731, 0.0
        %3574 = vst.msk [vmem:[%s3567 + $0x90] sm:$0x3] %vm731, 0.0
        %3575 = vst.msk [vmem:[%s3567 + $0xa8] sm:$0x3] %vm731, 0.0
        %3576 = vst.msk [vmem:[%s3567 + $0xc0] sm:$0x3] %vm731, 0.0
        %3577 = vst.msk [vmem:[%s3567 + $0xd8] sm:$0x3] %vm731, 0.0
        %3578 = vst.msk [vmem:[%s3567 + $0xf0] sm:$0x3] %vm731, 0.0
        %3579 = vst.msk [vmem:[%s3567 + $0x108] sm:$0x3] %vm731, 0.0
        %3580 = vst.msk [vmem:[%s3567 + $0x120] sm:$0x3] %vm731, 0.0
        %3581 = vst.msk [vmem:[%s3567 + $0x138] sm:$0x3] %vm731, 0.0
        %3582 = vst.msk [vmem:[%s3567 + $0x150] sm:$0x3] %vm731, 0.0
        %3583 = vst.msk [vmem:[%s3567 + $0x168] sm:$0x3] %vm731, 0.0
        %3584 = vst.msk [vmem:[%s3567 + $0x12] sm:$0x3] %vm731, 0.0
        %3585 = vst.msk [vmem:[%s3567 + $0x2a] sm:$0x3] %vm731, 0.0
        %3586 = vst.msk [vmem:[%s3567 + $0x42] sm:$0x3] %vm731, 0.0
        %3587 = vst.msk [vmem:[%s3567 + $0x5a] sm:$0x3] %vm731, 0.0
        %3588 = vst.msk [vmem:[%s3567 + $0x72] sm:$0x3] %vm731, 0.0
        %3589 = vst.msk [vmem:[%s3567 + $0x8a] sm:$0x3] %vm731, 0.0
        %3590 = vst.msk [vmem:[%s3567 + $0xa2] sm:$0x3] %vm731, 0.0
        %3591 = vst.msk [vmem:[%s3567 + $0xba] sm:$0x3] %vm731, 0.0
        %3592 = vst.msk [vmem:[%s3567 + $0xd2] sm:$0x3] %vm731, 0.0
        %3593 = vst.msk [vmem:[%s3567 + $0xea] sm:$0x3] %vm731, 0.0
        %3594 = vst.msk [vmem:[%s3567 + $0x102] sm:$0x3] %vm731, 0.0
        %3595 = vst.msk [vmem:[%s3567 + $0x11a] sm:$0x3] %vm731, 0.0
        %3596 = vst.msk [vmem:[%s3567 + $0x132] sm:$0x3] %vm731, 0.0
        %3597 = vst.msk [vmem:[%s3567 + $0x14a] sm:$0x3] %vm731, 0.0
        %3598 = vst.msk [vmem:[%s3567 + $0x162] sm:$0x3] %vm731, 0.0
        %3599 = vst.msk [vmem:[%s3567 + $0x17a] sm:$0x3] %vm731, 0.0
        %3600 = vrot.lane.b32.xlu0 %v697, 116
        %v3601 = vpop.permute.xlu0 %3600
        %3602 = vrot.lane.b32.xlu0 %v698, 116
        %v3603 = vpop.permute.xlu0 %3602
        %3604 = vrot.lane.b32.xlu0 %v699, 116
        %v3605 = vpop.permute.xlu0 %3604
        %3606 = vrot.lane.b32.xlu0 %v700, 116
        %v3607 = vpop.permute.xlu0 %3606
        %3608 = vrot.lane.b32.xlu0 %v701, 116
        %v3609 = vpop.permute.xlu0 %3608
        %3610 = vrot.lane.b32.xlu0 %v702, 116
        %v3611 = vpop.permute.xlu0 %3610
        %3612 = vrot.lane.b32.xlu0 %v703, 116
        %v3613 = vpop.permute.xlu0 %3612
        %3614 = vrot.lane.b32.xlu0 %v704, 116
        %v3615 = vpop.permute.xlu0 %3614
        %3616 = vrot.lane.b32.xlu0 %v705, 116
        %v3617 = vpop.permute.xlu0 %3616
        %3618 = vrot.lane.b32.xlu0 %v706, 116
        %v3619 = vpop.permute.xlu0 %3618
        %3620 = vrot.lane.b32.xlu0 %v707, 116
        %v3621 = vpop.permute.xlu0 %3620
        %3622 = vrot.lane.b32.xlu0 %v708, 116
        %v3623 = vpop.permute.xlu0 %3622
        %3624 = vrot.lane.b32.xlu0 %v709, 116
        %v3625 = vpop.permute.xlu0 %3624
        %3626 = vrot.lane.b32.xlu0 %v710, 116
        %v3627 = vpop.permute.xlu0 %3626
        %3628 = vrot.lane.b32.xlu0 %v711, 116
        %v3629 = vpop.permute.xlu0 %3628
        %3630 = vrot.lane.b32.xlu0 %v712, 116
        %v3631 = vpop.permute.xlu0 %3630
        %3632 = vrot.lane.b32.xlu0 %v713, 116
        %v3633 = vpop.permute.xlu0 %3632
        %3634 = vrot.lane.b32.xlu0 %v714, 116
        %v3635 = vpop.permute.xlu0 %3634
        %3636 = vrot.lane.b32.xlu0 %v715, 116
        %v3637 = vpop.permute.xlu0 %3636
        %3638 = vrot.lane.b32.xlu0 %v716, 116
        %v3639 = vpop.permute.xlu0 %3638
        %3640 = vrot.lane.b32.xlu0 %v717, 116
        %v3641 = vpop.permute.xlu0 %3640
        %3642 = vrot.lane.b32.xlu0 %v718, 116
        %v3643 = vpop.permute.xlu0 %3642
        %3644 = vrot.lane.b32.xlu0 %v719, 116
        %v3645 = vpop.permute.xlu0 %3644
        %3646 = vrot.lane.b32.xlu0 %v720, 116
        %v3647 = vpop.permute.xlu0 %3646
        %3648 = vrot.lane.b32.xlu0 %v721, 116
        %v3649 = vpop.permute.xlu0 %3648
        %3650 = vrot.lane.b32.xlu0 %v722, 116
        %v3651 = vpop.permute.xlu0 %3650
        %3652 = vrot.lane.b32.xlu0 %v723, 116
        %v3653 = vpop.permute.xlu0 %3652
        %3654 = vrot.lane.b32.xlu0 %v724, 116
        %v3655 = vpop.permute.xlu0 %3654
        %3656 = vrot.lane.b32.xlu0 %v725, 116
        %v3657 = vpop.permute.xlu0 %3656
        %3658 = vrot.lane.b32.xlu0 %v726, 116
        %v3659 = vpop.permute.xlu0 %3658
        %3660 = vrot.lane.b32.xlu0 %v727, 116
        %v3661 = vpop.permute.xlu0 %3660
        %3662 = vrot.lane.b32.xlu0 %v728, 116
        %v3663 = vpop.permute.xlu0 %3662
        %3696 = vst.msk [vmem:[%s3567 + $0x2] sm:$0xff] %vm371, %v3601
        %3697 = vst.msk [vmem:[%s3567 + $0xa] sm:$0xff] %vm371, %v3603
        %3698 = vst.msk [vmem:[%s3567 + $0x1a] sm:$0xff] %vm371, %v3605
        %3699 = vst.msk [vmem:[%s3567 + $0x22] sm:$0xff] %vm371, %v3607
        %3700 = vst.msk [vmem:[%s3567 + $0x32] sm:$0xff] %vm371, %v3609
        %3701 = vst.msk [vmem:[%s3567 + $0x3a] sm:$0xff] %vm371, %v3611
        %3702 = vst.msk [vmem:[%s3567 + $0x4a] sm:$0xff] %vm371, %v3613
        %3703 = vst.msk [vmem:[%s3567 + $0x52] sm:$0xff] %vm371, %v3615
        %3704 = vst.msk [vmem:[%s3567 + $0x62] sm:$0xff] %vm371, %v3617
        %3705 = vst.msk [vmem:[%s3567 + $0x6a] sm:$0xff] %vm371, %v3619
        %3706 = vst.msk [vmem:[%s3567 + $0x7a] sm:$0xff] %vm371, %v3621
        %3707 = vst.msk [vmem:[%s3567 + $0x82] sm:$0xff] %vm371, %v3623
        %3708 = vst.msk [vmem:[%s3567 + $0x92] sm:$0xff] %vm371, %v3625
        %3709 = vst.msk [vmem:[%s3567 + $0x9a] sm:$0xff] %vm371, %v3627
        %3710 = vst.msk [vmem:[%s3567 + $0xaa] sm:$0xff] %vm371, %v3629
        %3711 = vst.msk [vmem:[%s3567 + $0xb2] sm:$0xff] %vm371, %v3631
        %3712 = vst.msk [vmem:[%s3567 + $0xc2] sm:$0xff] %vm371, %v3633
        %3713 = vst.msk [vmem:[%s3567 + $0xca] sm:$0xff] %vm371, %v3635
        %3714 = vst.msk [vmem:[%s3567 + $0xda] sm:$0xff] %vm371, %v3637
        %3715 = vst.msk [vmem:[%s3567 + $0xe2] sm:$0xff] %vm371, %v3639
        %3716 = vst.msk [vmem:[%s3567 + $0xf2] sm:$0xff] %vm371, %v3641
        %3717 = vst.msk [vmem:[%s3567 + $0xfa] sm:$0xff] %vm371, %v3643
        %3718 = vst.msk [vmem:[%s3567 + $0x10a] sm:$0xff] %vm371, %v3645
        %3719 = vst.msk [vmem:[%s3567 + $0x112] sm:$0xff] %vm371, %v3647
        %3720 = vst.msk [vmem:[%s3567 + $0x122] sm:$0xff] %vm371, %v3649
        %3721 = vst.msk [vmem:[%s3567 + $0x12a] sm:$0xff] %vm371, %v3651
        %3722 = vst.msk [vmem:[%s3567 + $0x13a] sm:$0xff] %vm371, %v3653
        %3723 = vst.msk [vmem:[%s3567 + $0x142] sm:$0xff] %vm371, %v3655
        %3724 = vst.msk [vmem:[%s3567 + $0x152] sm:$0xff] %vm371, %v3657
        %3725 = vst.msk [vmem:[%s3567 + $0x15a] sm:$0xff] %vm371, %v3659
        %3726 = vst.msk [vmem:[%s3567 + $0x16a] sm:$0xff] %vm371, %v3661
        %3727 = vst.msk [vmem:[%s3567 + $0x172] sm:$0xff] %vm371, %v3663
        %v3728 = vld [vmem:[#allocation3] sm:$0xff]
        %v3729 = vld [vmem:[#allocation3 + $0x8] sm:$0xff]
        %v3730 = vld [vmem:[#allocation3 + $0x10] sm:$0xf]
        %v3731 = vld [vmem:[#allocation3 + $0x18] sm:$0xff]
        %v3732 = vld [vmem:[#allocation3 + $0x20] sm:$0xff]
        %v3733 = vld [vmem:[#allocation3 + $0x28] sm:$0xf]
        %v3734 = vld [vmem:[#allocation3 + $0x30] sm:$0xff]
        %v3735 = vld [vmem:[#allocation3 + $0x38] sm:$0xff]
        %v3736 = vld [vmem:[#allocation3 + $0x40] sm:$0xf]
        %v3737 = vld [vmem:[#allocation3 + $0x48] sm:$0xff]
        %v3738 = vld [vmem:[#allocation3 + $0x50] sm:$0xff]
        %v3739 = vld [vmem:[#allocation3 + $0x58] sm:$0xf]
        %v3740 = vld [vmem:[#allocation3 + $0x60] sm:$0xff]
        %v3741 = vld [vmem:[#allocation3 + $0x68] sm:$0xff]
        %v3742 = vld [vmem:[#allocation3 + $0x70] sm:$0xf]
        %v3743 = vld [vmem:[#allocation3 + $0x78] sm:$0xff]
        %v3744 = vld [vmem:[#allocation3 + $0x80] sm:$0xff]
        %v3745 = vld [vmem:[#allocation3 + $0x88] sm:$0xf]
        %v3746 = vld [vmem:[#allocation3 + $0x90] sm:$0xff]
        %v3747 = vld [vmem:[#allocation3 + $0x98] sm:$0xff]
        %v3748 = vld [vmem:[#allocation3 + $0xa0] sm:$0xf]
        %v3749 = vld [vmem:[#allocation3 + $0xa8] sm:$0xff]
        %v3750 = vld [vmem:[#allocation3 + $0xb0] sm:$0xff]
        %v3751 = vld [vmem:[#allocation3 + $0xb8] sm:$0xf]
        %v3752 = vld [vmem:[#allocation3 + $0xc0] sm:$0xff]
        %v3753 = vld [vmem:[#allocation3 + $0xc8] sm:$0xff]
        %v3754 = vld [vmem:[#allocation3 + $0xd0] sm:$0xf]
        %v3755 = vld [vmem:[#allocation3 + $0xd8] sm:$0xff]
        %v3756 = vld [vmem:[#allocation3 + $0xe0] sm:$0xff]
        %v3757 = vld [vmem:[#allocation3 + $0xe8] sm:$0xf]
        %v3758 = vld [vmem:[#allocation3 + $0xf0] sm:$0xff]
        %v3759 = vld [vmem:[#allocation3 + $0xf8] sm:$0xff]
        %v3760 = vld [vmem:[#allocation3 + $0x100] sm:$0xf]
        %v3761 = vld [vmem:[#allocation3 + $0x108] sm:$0xff]
        %v3762 = vld [vmem:[#allocation3 + $0x110] sm:$0xff]
        %v3763 = vld [vmem:[#allocation3 + $0x118] sm:$0xf]
        %v3764 = vld [vmem:[#allocation3 + $0x120] sm:$0xff]
        %v3765 = vld [vmem:[#allocation3 + $0x128] sm:$0xff]
        %v3766 = vld [vmem:[#allocation3 + $0x130] sm:$0xf]
        %v3767 = vld [vmem:[#allocation3 + $0x138] sm:$0xff]
        %v3768 = vld [vmem:[#allocation3 + $0x140] sm:$0xff]
        %v3769 = vld [vmem:[#allocation3 + $0x148] sm:$0xf]
        %v3770 = vld [vmem:[#allocation3 + $0x150] sm:$0xff]
        %v3771 = vld [vmem:[#allocation3 + $0x158] sm:$0xff]
        %v3772 = vld [vmem:[#allocation3 + $0x160] sm:$0xf]
        %v3773 = vld [vmem:[#allocation3 + $0x168] sm:$0xff]
        %v3774 = vld [vmem:[#allocation3 + $0x170] sm:$0xff]
        %v3775 = vld [vmem:[#allocation3 + $0x178] sm:$0xf]
        %v3824 = vrot.slane %v3728, 1
        %v3825 = vrot.slane %v3729, 1
        %v3826 = vsel %vm1027, %v3824, %v3825
        %v3827 = vrot.slane %v3730, 1
        %v3828 = vsel %vm1027, %v3825, %v3827
        %v3829 = vrot.slane %v3731, 1
        %v3830 = vrot.slane %v3732, 1
        %v3831 = vsel %vm1027, %v3829, %v3830
        %v3832 = vrot.slane %v3733, 1
        %v3833 = vsel %vm1027, %v3830, %v3832
        %v3834 = vrot.slane %v3734, 1
        %v3835 = vrot.slane %v3735, 1
        %v3836 = vsel %vm1027, %v3834, %v3835
        %v3837 = vrot.slane %v3736, 1
        %v3838 = vsel %vm1027, %v3835, %v3837
        %v3839 = vrot.slane %v3737, 1
        %v3840 = vrot.slane %v3738, 1
        %v3841 = vsel %vm1027, %v3839, %v3840
        %v3842 = vrot.slane %v3739, 1
        %v3843 = vsel %vm1027, %v3840, %v3842
        %v3844 = vrot.slane %v3740, 1
        %v3845 = vrot.slane %v3741, 1
        %v3846 = vsel %vm1027, %v3844, %v3845
        %v3847 = vrot.slane %v3742, 1
        %v3848 = vsel %vm1027, %v3845, %v3847
        %v3849 = vrot.slane %v3743, 1
        %v3850 = vrot.slane %v3744, 1
        %v3851 = vsel %vm1027, %v3849, %v3850
        %v3852 = vrot.slane %v3745, 1
        %v3853 = vsel %vm1027, %v3850, %v3852
        %v3854 = vrot.slane %v3746, 1
        %v3855 = vrot.slane %v3747, 1
        %v3856 = vsel %vm1027, %v3854, %v3855
        %v3857 = vrot.slane %v3748, 1
        %v3858 = vsel %vm1027, %v3855, %v3857
        %v3859 = vrot.slane %v3749, 1
        %v3860 = vrot.slane %v3750, 1
        %v3861 = vsel %vm1027, %v3859, %v3860
        %v3862 = vrot.slane %v3751, 1
        %v3863 = vsel %vm1027, %v3860, %v3862
        %v3864 = vrot.slane %v3752, 1
        %v3865 = vrot.slane %v3753, 1
        %v3866 = vsel %vm1027, %v3864, %v3865
        %v3867 = vrot.slane %v3754, 1
        %v3868 = vsel %vm1027, %v3865, %v3867
        %v3869 = vrot.slane %v3755, 1
        %v3870 = vrot.slane %v3756, 1
        %v3871 = vsel %vm1027, %v3869, %v3870
        %v3872 = vrot.slane %v3757, 1
        %v3873 = vsel %vm1027, %v3870, %v3872
        %v3874 = vrot.slane %v3758, 1
        %v3875 = vrot.slane %v3759, 1
        %v3876 = vsel %vm1027, %v3874, %v3875
        %v3877 = vrot.slane %v3760, 1
        %v3878 = vsel %vm1027, %v3875, %v3877
        %v3879 = vrot.slane %v3761, 1
        %v3880 = vrot.slane %v3762, 1
        %v3881 = vsel %vm1027, %v3879, %v3880
        %v3882 = vrot.slane %v3763, 1
        %v3883 = vsel %vm1027, %v3880, %v3882
        %v3884 = vrot.slane %v3764, 1
        %v3885 = vrot.slane %v3765, 1
        %v3886 = vsel %vm1027, %v3884, %v3885
        %v3887 = vrot.slane %v3766, 1
        %v3888 = vsel %vm1027, %v3885, %v3887
        %v3889 = vrot.slane %v3767, 1
        %v3890 = vrot.slane %v3768, 1
        %v3891 = vsel %vm1027, %v3889, %v3890
        %v3892 = vrot.slane %v3769, 1
        %v3893 = vsel %vm1027, %v3890, %v3892
        %v3894 = vrot.slane %v3770, 1
        %v3895 = vrot.slane %v3771, 1
        %v3896 = vsel %vm1027, %v3894, %v3895
        %v3897 = vrot.slane %v3772, 1
        %v3898 = vsel %vm1027, %v3895, %v3897
        %v3899 = vrot.slane %v3773, 1
        %v3900 = vrot.slane %v3774, 1
        %v3901 = vsel %vm1027, %v3899, %v3900
        %v3902 = vrot.slane %v3775, 1
        %v3903 = vsel %vm1027, %v3900, %v3902
        %3904 = vrot.lane.b32.xlu0 %v3826, 4
        %v3905 = vpop.permute.xlu0 %3904
        %3906 = vrot.lane.b32.xlu0 %v3828, 4
        %v3907 = vpop.permute.xlu0 %3906
        %3908 = vrot.lane.b32.xlu0 %v3831, 4
        %v3909 = vpop.permute.xlu0 %3908
        %3910 = vrot.lane.b32.xlu0 %v3833, 4
        %v3911 = vpop.permute.xlu0 %3910
        %3912 = vrot.lane.b32.xlu0 %v3836, 4
        %v3913 = vpop.permute.xlu0 %3912
        %3914 = vrot.lane.b32.xlu0 %v3838, 4
        %v3915 = vpop.permute.xlu0 %3914
        %3916 = vrot.lane.b32.xlu0 %v3841, 4
        %v3917 = vpop.permute.xlu0 %3916
        %3918 = vrot.lane.b32.xlu0 %v3843, 4
        %v3919 = vpop.permute.xlu0 %3918
        %3920 = vrot.lane.b32.xlu0 %v3846, 4
        %v3921 = vpop.permute.xlu0 %3920
        %3922 = vrot.lane.b32.xlu0 %v3848, 4
        %v3923 = vpop.permute.xlu0 %3922
        %3924 = vrot.lane.b32.xlu0 %v3851, 4
        %v3925 = vpop.permute.xlu0 %3924
        %3926 = vrot.lane.b32.xlu0 %v3853, 4
        %v3927 = vpop.permute.xlu0 %3926
        %3928 = vrot.lane.b32.xlu0 %v3856, 4
        %v3929 = vpop.permute.xlu0 %3928
        %3930 = vrot.lane.b32.xlu0 %v3858, 4
        %v3931 = vpop.permute.xlu0 %3930
        %3932 = vrot.lane.b32.xlu0 %v3861, 4
        %v3933 = vpop.permute.xlu0 %3932
        %3934 = vrot.lane.b32.xlu0 %v3863, 4
        %v3935 = vpop.permute.xlu0 %3934
        %3936 = vrot.lane.b32.xlu0 %v3866, 4
        %v3937 = vpop.permute.xlu0 %3936
        %3938 = vrot.lane.b32.xlu0 %v3868, 4
        %v3939 = vpop.permute.xlu0 %3938
        %3940 = vrot.lane.b32.xlu0 %v3871, 4
        %v3941 = vpop.permute.xlu0 %3940
        %3942 = vrot.lane.b32.xlu0 %v3873, 4
        %v3943 = vpop.permute.xlu0 %3942
        %3944 = vrot.lane.b32.xlu0 %v3876, 4
        %v3945 = vpop.permute.xlu0 %3944
        %3946 = vrot.lane.b32.xlu0 %v3878, 4
        %v3947 = vpop.permute.xlu0 %3946
        %3948 = vrot.lane.b32.xlu0 %v3881, 4
        %v3949 = vpop.permute.xlu0 %3948
        %3950 = vrot.lane.b32.xlu0 %v3883, 4
        %v3951 = vpop.permute.xlu0 %3950
        %3952 = vrot.lane.b32.xlu0 %v3886, 4
        %v3953 = vpop.permute.xlu0 %3952
        %3954 = vrot.lane.b32.xlu0 %v3888, 4
        %v3955 = vpop.permute.xlu0 %3954
        %3956 = vrot.lane.b32.xlu0 %v3891, 4
        %v3957 = vpop.permute.xlu0 %3956
        %3958 = vrot.lane.b32.xlu0 %v3893, 4
        %v3959 = vpop.permute.xlu0 %3958
        %3960 = vrot.lane.b32.xlu0 %v3896, 4
        %v3961 = vpop.permute.xlu0 %3960
        %3962 = vrot.lane.b32.xlu0 %v3898, 4
        %v3963 = vpop.permute.xlu0 %3962
        %3964 = vrot.lane.b32.xlu0 %v3901, 4
        %v3965 = vpop.permute.xlu0 %3964
        %3966 = vrot.lane.b32.xlu0 %v3903, 4
        %v3967 = vpop.permute.xlu0 %3966
        %v4000 = vrot.slane %v3728, 2
        %v4001 = vrot.slane %v3729, 2
        %v4002 = vsel %vm1204, %v4000, %v4001
        %v4003 = vrot.slane %v3730, 2
        %v4004 = vsel %vm1204, %v4001, %v4003
        %v4005 = vrot.slane %v3731, 2
        %v4006 = vrot.slane %v3732, 2
        %v4007 = vsel %vm1204, %v4005, %v4006
        %v4008 = vrot.slane %v3733, 2
        %v4009 = vsel %vm1204, %v4006, %v4008
        %v4010 = vrot.slane %v3734, 2
        %v4011 = vrot.slane %v3735, 2
        %v4012 = vsel %vm1204, %v4010, %v4011
        %v4013 = vrot.slane %v3736, 2
        %v4014 = vsel %vm1204, %v4011, %v4013
        %v4015 = vrot.slane %v3737, 2
        %v4016 = vrot.slane %v3738, 2
        %v4017 = vsel %vm1204, %v4015, %v4016
        %v4018 = vrot.slane %v3739, 2
        %v4019 = vsel %vm1204, %v4016, %v4018
        %v4020 = vrot.slane %v3740, 2
        %v4021 = vrot.slane %v3741, 2
        %v4022 = vsel %vm1204, %v4020, %v4021
        %v4023 = vrot.slane %v3742, 2
        %v4024 = vsel %vm1204, %v4021, %v4023
        %v4025 = vrot.slane %v3743, 2
        %v4026 = vrot.slane %v3744, 2
        %v4027 = vsel %vm1204, %v4025, %v4026
        %v4028 = vrot.slane %v3745, 2
        %v4029 = vsel %vm1204, %v4026, %v4028
        %v4030 = vrot.slane %v3746, 2
        %v4031 = vrot.slane %v3747, 2
        %v4032 = vsel %vm1204, %v4030, %v4031
        %v4033 = vrot.slane %v3748, 2
        %v4034 = vsel %vm1204, %v4031, %v4033
        %v4035 = vrot.slane %v3749, 2
        %v4036 = vrot.slane %v3750, 2
        %v4037 = vsel %vm1204, %v4035, %v4036
        %v4038 = vrot.slane %v3751, 2
        %v4039 = vsel %vm1204, %v4036, %v4038
        %v4040 = vrot.slane %v3752, 2
        %v4041 = vrot.slane %v3753, 2
        %v4042 = vsel %vm1204, %v4040, %v4041
        %v4043 = vrot.slane %v3754, 2
        %v4044 = vsel %vm1204, %v4041, %v4043
        %v4045 = vrot.slane %v3755, 2
        %v4046 = vrot.slane %v3756, 2
        %v4047 = vsel %vm1204, %v4045, %v4046
        %v4048 = vrot.slane %v3757, 2
        %v4049 = vsel %vm1204, %v4046, %v4048
        %v4050 = vrot.slane %v3758, 2
        %v4051 = vrot.slane %v3759, 2
        %v4052 = vsel %vm1204, %v4050, %v4051
        %v4053 = vrot.slane %v3760, 2
        %v4054 = vsel %vm1204, %v4051, %v4053
        %v4055 = vrot.slane %v3761, 2
        %v4056 = vrot.slane %v3762, 2
        %v4057 = vsel %vm1204, %v4055, %v4056
        %v4058 = vrot.slane %v3763, 2
        %v4059 = vsel %vm1204, %v4056, %v4058
        %v4060 = vrot.slane %v3764, 2
        %v4061 = vrot.slane %v3765, 2
        %v4062 = vsel %vm1204, %v4060, %v4061
        %v4063 = vrot.slane %v3766, 2
        %v4064 = vsel %vm1204, %v4061, %v4063
        %v4065 = vrot.slane %v3767, 2
        %v4066 = vrot.slane %v3768, 2
        %v4067 = vsel %vm1204, %v4065, %v4066
        %v4068 = vrot.slane %v3769, 2
        %v4069 = vsel %vm1204, %v4066, %v4068
        %v4070 = vrot.slane %v3770, 2
        %v4071 = vrot.slane %v3771, 2
        %v4072 = vsel %vm1204, %v4070, %v4071
        %v4073 = vrot.slane %v3772, 2
        %v4074 = vsel %vm1204, %v4071, %v4073
        %v4075 = vrot.slane %v3773, 2
        %v4076 = vrot.slane %v3774, 2
        %v4077 = vsel %vm1204, %v4075, %v4076
        %v4078 = vrot.slane %v3775, 2
        %v4079 = vsel %vm1204, %v4076, %v4078
        %4080 = vrot.lane.b32.xlu0 %v4002, 8
        %v4081 = vpop.permute.xlu0 %4080
        %4082 = vrot.lane.b32.xlu0 %v4004, 8
        %v4083 = vpop.permute.xlu0 %4082
        %4084 = vrot.lane.b32.xlu0 %v4007, 8
        %v4085 = vpop.permute.xlu0 %4084
        %4086 = vrot.lane.b32.xlu0 %v4009, 8
        %v4087 = vpop.permute.xlu0 %4086
        %4088 = vrot.lane.b32.xlu0 %v4012, 8
        %v4089 = vpop.permute.xlu0 %4088
        %4090 = vrot.lane.b32.xlu0 %v4014, 8
        %v4091 = vpop.permute.xlu0 %4090
        %4092 = vrot.lane.b32.xlu0 %v4017, 8
        %v4093 = vpop.permute.xlu0 %4092
        %4094 = vrot.lane.b32.xlu0 %v4019, 8
        %v4095 = vpop.permute.xlu0 %4094
        %4096 = vrot.lane.b32.xlu0 %v4022, 8
        %v4097 = vpop.permute.xlu0 %4096
        %4098 = vrot.lane.b32.xlu0 %v4024, 8
        %v4099 = vpop.permute.xlu0 %4098
        %4100 = vrot.lane.b32.xlu0 %v4027, 8
        %v4101 = vpop.permute.xlu0 %4100
        %4102 = vrot.lane.b32.xlu0 %v4029, 8
        %v4103 = vpop.permute.xlu0 %4102
        %4104 = vrot.lane.b32.xlu0 %v4032, 8
        %v4105 = vpop.permute.xlu0 %4104
        %4106 = vrot.lane.b32.xlu0 %v4034, 8
        %v4107 = vpop.permute.xlu0 %4106
        %4108 = vrot.lane.b32.xlu0 %v4037, 8
        %v4109 = vpop.permute.xlu0 %4108
        %4110 = vrot.lane.b32.xlu0 %v4039, 8
        %v4111 = vpop.permute.xlu0 %4110
        %4112 = vrot.lane.b32.xlu0 %v4042, 8
        %v4113 = vpop.permute.xlu0 %4112
        %4114 = vrot.lane.b32.xlu0 %v4044, 8
        %v4115 = vpop.permute.xlu0 %4114
        %4116 = vrot.lane.b32.xlu0 %v4047, 8
        %v4117 = vpop.permute.xlu0 %4116
        %4118 = vrot.lane.b32.xlu0 %v4049, 8
        %v4119 = vpop.permute.xlu0 %4118
        %4120 = vrot.lane.b32.xlu0 %v4052, 8
        %v4121 = vpop.permute.xlu0 %4120
        %4122 = vrot.lane.b32.xlu0 %v4054, 8
        %v4123 = vpop.permute.xlu0 %4122
        %4124 = vrot.lane.b32.xlu0 %v4057, 8
        %v4125 = vpop.permute.xlu0 %4124
        %4126 = vrot.lane.b32.xlu0 %v4059, 8
        %v4127 = vpop.permute.xlu0 %4126
        %4128 = vrot.lane.b32.xlu0 %v4062, 8
        %v4129 = vpop.permute.xlu0 %4128
        %4130 = vrot.lane.b32.xlu0 %v4064, 8
        %v4131 = vpop.permute.xlu0 %4130
        %4132 = vrot.lane.b32.xlu0 %v4067, 8
        %v4133 = vpop.permute.xlu0 %4132
        %4134 = vrot.lane.b32.xlu0 %v4069, 8
        %v4135 = vpop.permute.xlu0 %4134
        %4136 = vrot.lane.b32.xlu0 %v4072, 8
        %v4137 = vpop.permute.xlu0 %4136
        %4138 = vrot.lane.b32.xlu0 %v4074, 8
        %v4139 = vpop.permute.xlu0 %4138
        %4140 = vrot.lane.b32.xlu0 %v4077, 8
        %v4141 = vpop.permute.xlu0 %4140
        %4142 = vrot.lane.b32.xlu0 %v4079, 8
        %v4143 = vpop.permute.xlu0 %4142
        %vm4176 = vcmask 1044480
        %v4177 = vrot.slane %v3728, 3
        %v4178 = vrot.slane %v3729, 3
        %v4179 = vsel %vm4176, %v4177, %v4178
        %v4180 = vrot.slane %v3730, 3
        %v4181 = vsel %vm4176, %v4178, %v4180
        %v4182 = vrot.slane %v3731, 3
        %v4183 = vrot.slane %v3732, 3
        %v4184 = vsel %vm4176, %v4182, %v4183
        %v4185 = vrot.slane %v3733, 3
        %v4186 = vsel %vm4176, %v4183, %v4185
        %v4187 = vrot.slane %v3734, 3
        %v4188 = vrot.slane %v3735, 3
        %v4189 = vsel %vm4176, %v4187, %v4188
        %v4190 = vrot.slane %v3736, 3
        %v4191 = vsel %vm4176, %v4188, %v4190
        %v4192 = vrot.slane %v3737, 3
        %v4193 = vrot.slane %v3738, 3
        %v4194 = vsel %vm4176, %v4192, %v4193
        %v4195 = vrot.slane %v3739, 3
        %v4196 = vsel %vm4176, %v4193, %v4195
        %v4197 = vrot.slane %v3740, 3
        %v4198 = vrot.slane %v3741, 3
        %v4199 = vsel %vm4176, %v4197, %v4198
        %v4200 = vrot.slane %v3742, 3
        %v4201 = vsel %vm4176, %v4198, %v4200
        %v4202 = vrot.slane %v3743, 3
        %v4203 = vrot.slane %v3744, 3
        %v4204 = vsel %vm4176, %v4202, %v4203
        %v4205 = vrot.slane %v3745, 3
        %v4206 = vsel %vm4176, %v4203, %v4205
        %v4207 = vrot.slane %v3746, 3
        %v4208 = vrot.slane %v3747, 3
        %v4209 = vsel %vm4176, %v4207, %v4208
        %v4210 = vrot.slane %v3748, 3
        %v4211 = vsel %vm4176, %v4208, %v4210
        %v4212 = vrot.slane %v3749, 3
        %v4213 = vrot.slane %v3750, 3
        %v4214 = vsel %vm4176, %v4212, %v4213
        %v4215 = vrot.slane %v3751, 3
        %v4216 = vsel %vm4176, %v4213, %v4215
        %v4217 = vrot.slane %v3752, 3
        %v4218 = vrot.slane %v3753, 3
        %v4219 = vsel %vm4176, %v4217, %v4218
        %v4220 = vrot.slane %v3754, 3
        %v4221 = vsel %vm4176, %v4218, %v4220
        %v4222 = vrot.slane %v3755, 3
        %v4223 = vrot.slane %v3756, 3
        %v4224 = vsel %vm4176, %v4222, %v4223
        %v4225 = vrot.slane %v3757, 3
        %v4226 = vsel %vm4176, %v4223, %v4225
        %v4227 = vrot.slane %v3758, 3
        %v4228 = vrot.slane %v3759, 3
        %v4229 = vsel %vm4176, %v4227, %v4228
        %v4230 = vrot.slane %v3760, 3
        %v4231 = vsel %vm4176, %v4228, %v4230
        %v4232 = vrot.slane %v3761, 3
        %v4233 = vrot.slane %v3762, 3
        %v4234 = vsel %vm4176, %v4232, %v4233
        %v4235 = vrot.slane %v3763, 3
        %v4236 = vsel %vm4176, %v4233, %v4235
        %v4237 = vrot.slane %v3764, 3
        %v4238 = vrot.slane %v3765, 3
        %v4239 = vsel %vm4176, %v4237, %v4238
        %v4240 = vrot.slane %v3766, 3
        %v4241 = vsel %vm4176, %v4238, %v4240
        %v4242 = vrot.slane %v3767, 3
        %v4243 = vrot.slane %v3768, 3
        %v4244 = vsel %vm4176, %v4242, %v4243
        %v4245 = vrot.slane %v3769, 3
        %v4246 = vsel %vm4176, %v4243, %v4245
        %v4247 = vrot.slane %v3770, 3
        %v4248 = vrot.slane %v3771, 3
        %v4249 = vsel %vm4176, %v4247, %v4248
        %v4250 = vrot.slane %v3772, 3
        %v4251 = vsel %vm4176, %v4248, %v4250
        %v4252 = vrot.slane %v3773, 3
        %v4253 = vrot.slane %v3774, 3
        %v4254 = vsel %vm4176, %v4252, %v4253
        %v4255 = vrot.slane %v3775, 3
        %v4256 = vsel %vm4176, %v4253, %v4255
        %4257 = vrot.lane.b32.xlu0 %v4179, 12
        %v4258 = vpop.permute.xlu0 %4257
        %4259 = vrot.lane.b32.xlu0 %v4181, 12
        %v4260 = vpop.permute.xlu0 %4259
        %4261 = vrot.lane.b32.xlu0 %v4184, 12
        %v4262 = vpop.permute.xlu0 %4261
        %4263 = vrot.lane.b32.xlu0 %v4186, 12
        %v4264 = vpop.permute.xlu0 %4263
        %4265 = vrot.lane.b32.xlu0 %v4189, 12
        %v4266 = vpop.permute.xlu0 %4265
        %4267 = vrot.lane.b32.xlu0 %v4191, 12
        %v4268 = vpop.permute.xlu0 %4267
        %4269 = vrot.lane.b32.xlu0 %v4194, 12
        %v4270 = vpop.permute.xlu0 %4269
        %4271 = vrot.lane.b32.xlu0 %v4196, 12
        %v4272 = vpop.permute.xlu0 %4271
        %4273 = vrot.lane.b32.xlu0 %v4199, 12
        %v4274 = vpop.permute.xlu0 %4273
        %4275 = vrot.lane.b32.xlu0 %v4201, 12
        %v4276 = vpop.permute.xlu0 %4275
        %4277 = vrot.lane.b32.xlu0 %v4204, 12
        %v4278 = vpop.permute.xlu0 %4277
        %4279 = vrot.lane.b32.xlu0 %v4206, 12
        %v4280 = vpop.permute.xlu0 %4279
        %4281 = vrot.lane.b32.xlu0 %v4209, 12
        %v4282 = vpop.permute.xlu0 %4281
        %4283 = vrot.lane.b32.xlu0 %v4211, 12
        %v4284 = vpop.permute.xlu0 %4283
        %4285 = vrot.lane.b32.xlu0 %v4214, 12
        %v4286 = vpop.permute.xlu0 %4285
        %4287 = vrot.lane.b32.xlu0 %v4216, 12
        %v4288 = vpop.permute.xlu0 %4287
        %4289 = vrot.lane.b32.xlu0 %v4219, 12
        %v4290 = vpop.permute.xlu0 %4289
        %4291 = vrot.lane.b32.xlu0 %v4221, 12
        %v4292 = vpop.permute.xlu0 %4291
        %4293 = vrot.lane.b32.xlu0 %v4224, 12
        %v4294 = vpop.permute.xlu0 %4293
        %4295 = vrot.lane.b32.xlu0 %v4226, 12
        %v4296 = vpop.permute.xlu0 %4295
        %4297 = vrot.lane.b32.xlu0 %v4229, 12
        %v4298 = vpop.permute.xlu0 %4297
        %4299 = vrot.lane.b32.xlu0 %v4231, 12
        %v4300 = vpop.permute.xlu0 %4299
        %4301 = vrot.lane.b32.xlu0 %v4234, 12
        %v4302 = vpop.permute.xlu0 %4301
        %4303 = vrot.lane.b32.xlu0 %v4236, 12
        %v4304 = vpop.permute.xlu0 %4303
        %4305 = vrot.lane.b32.xlu0 %v4239, 12
        %v4306 = vpop.permute.xlu0 %4305
        %4307 = vrot.lane.b32.xlu0 %v4241, 12
        %v4308 = vpop.permute.xlu0 %4307
        %4309 = vrot.lane.b32.xlu0 %v4244, 12
        %v4310 = vpop.permute.xlu0 %4309
        %4311 = vrot.lane.b32.xlu0 %v4246, 12
        %v4312 = vpop.permute.xlu0 %4311
        %4313 = vrot.lane.b32.xlu0 %v4249, 12
        %v4314 = vpop.permute.xlu0 %4313
        %4315 = vrot.lane.b32.xlu0 %v4251, 12
        %v4316 = vpop.permute.xlu0 %4315
        %4317 = vrot.lane.b32.xlu0 %v4254, 12
        %v4318 = vpop.permute.xlu0 %4317
        %4319 = vrot.lane.b32.xlu0 %v4256, 12
        %v4320 = vpop.permute.xlu0 %4319
        %v4353 = vrot.slane %v3728, 4
        %v4354 = vrot.slane %v3729, 4
        %v4355 = vsel %vm468, %v4353, %v4354
        %v4356 = vrot.slane %v3730, 4
        %v4357 = vsel %vm468, %v4354, %v4356
        %v4358 = vrot.slane %v3731, 4
        %v4359 = vrot.slane %v3732, 4
        %v4360 = vsel %vm468, %v4358, %v4359
        %v4361 = vrot.slane %v3733, 4
        %v4362 = vsel %vm468, %v4359, %v4361
        %v4363 = vrot.slane %v3734, 4
        %v4364 = vrot.slane %v3735, 4
        %v4365 = vsel %vm468, %v4363, %v4364
        %v4366 = vrot.slane %v3736, 4
        %v4367 = vsel %vm468, %v4364, %v4366
        %v4368 = vrot.slane %v3737, 4
        %v4369 = vrot.slane %v3738, 4
        %v4370 = vsel %vm468, %v4368, %v4369
        %v4371 = vrot.slane %v3739, 4
        %v4372 = vsel %vm468, %v4369, %v4371
        %v4373 = vrot.slane %v3740, 4
        %v4374 = vrot.slane %v3741, 4
        %v4375 = vsel %vm468, %v4373, %v4374
        %v4376 = vrot.slane %v3742, 4
        %v4377 = vsel %vm468, %v4374, %v4376
        %v4378 = vrot.slane %v3743, 4
        %v4379 = vrot.slane %v3744, 4
        %v4380 = vsel %vm468, %v4378, %v4379
        %v4381 = vrot.slane %v3745, 4
        %v4382 = vsel %vm468, %v4379, %v4381
        %v4383 = vrot.slane %v3746, 4
        %v4384 = vrot.slane %v3747, 4
        %v4385 = vsel %vm468, %v4383, %v4384
        %v4386 = vrot.slane %v3748, 4
        %v4387 = vsel %vm468, %v4384, %v4386
        %v4388 = vrot.slane %v3749, 4
        %v4389 = vrot.slane %v3750, 4
        %v4390 = vsel %vm468, %v4388, %v4389
        %v4391 = vrot.slane %v3751, 4
        %v4392 = vsel %vm468, %v4389, %v4391
        %v4393 = vrot.slane %v3752, 4
        %v4394 = vrot.slane %v3753, 4
        %v4395 = vsel %vm468, %v4393, %v4394
        %v4396 = vrot.slane %v3754, 4
        %v4397 = vsel %vm468, %v4394, %v4396
        %v4398 = vrot.slane %v3755, 4
        %v4399 = vrot.slane %v3756, 4
        %v4400 = vsel %vm468, %v4398, %v4399
        %v4401 = vrot.slane %v3757, 4
        %v4402 = vsel %vm468, %v4399, %v4401
        %v4403 = vrot.slane %v3758, 4
        %v4404 = vrot.slane %v3759, 4
        %v4405 = vsel %vm468, %v4403, %v4404
        %v4406 = vrot.slane %v3760, 4
        %v4407 = vsel %vm468, %v4404, %v4406
        %v4408 = vrot.slane %v3761, 4
        %v4409 = vrot.slane %v3762, 4
        %v4410 = vsel %vm468, %v4408, %v4409
        %v4411 = vrot.slane %v3763, 4
        %v4412 = vsel %vm468, %v4409, %v4411
        %v4413 = vrot.slane %v3764, 4
        %v4414 = vrot.slane %v3765, 4
        %v4415 = vsel %vm468, %v4413, %v4414
        %v4416 = vrot.slane %v3766, 4
        %v4417 = vsel %vm468, %v4414, %v4416
        %v4418 = vrot.slane %v3767, 4
        %v4419 = vrot.slane %v3768, 4
        %v4420 = vsel %vm468, %v4418, %v4419
        %v4421 = vrot.slane %v3769, 4
        %v4422 = vsel %vm468, %v4419, %v4421
        %v4423 = vrot.slane %v3770, 4
        %v4424 = vrot.slane %v3771, 4
        %v4425 = vsel %vm468, %v4423, %v4424
        %v4426 = vrot.slane %v3772, 4
        %v4427 = vsel %vm468, %v4424, %v4426
        %v4428 = vrot.slane %v3773, 4
        %v4429 = vrot.slane %v3774, 4
        %v4430 = vsel %vm468, %v4428, %v4429
        %v4431 = vrot.slane %v3775, 4
        %v4432 = vsel %vm468, %v4429, %v4431
        %4433 = vrot.lane.b32.xlu0 %v4355, 16
        %v4434 = vpop.permute.xlu0 %4433
        %4435 = vrot.lane.b32.xlu0 %v4357, 16
        %v4436 = vpop.permute.xlu0 %4435
        %4437 = vrot.lane.b32.xlu0 %v4360, 16
        %v4438 = vpop.permute.xlu0 %4437
        %4439 = vrot.lane.b32.xlu0 %v4362, 16
        %v4440 = vpop.permute.xlu0 %4439
        %4441 = vrot.lane.b32.xlu0 %v4365, 16
        %v4442 = vpop.permute.xlu0 %4441
        %4443 = vrot.lane.b32.xlu0 %v4367, 16
        %v4444 = vpop.permute.xlu0 %4443
        %4445 = vrot.lane.b32.xlu0 %v4370, 16
        %v4446 = vpop.permute.xlu0 %4445
        %4447 = vrot.lane.b32.xlu0 %v4372, 16
        %v4448 = vpop.permute.xlu0 %4447
        %4449 = vrot.lane.b32.xlu0 %v4375, 16
        %v4450 = vpop.permute.xlu0 %4449
        %4451 = vrot.lane.b32.xlu0 %v4377, 16
        %v4452 = vpop.permute.xlu0 %4451
        %4453 = vrot.lane.b32.xlu0 %v4380, 16
        %v4454 = vpop.permute.xlu0 %4453
        %4455 = vrot.lane.b32.xlu0 %v4382, 16
        %v4456 = vpop.permute.xlu0 %4455
        %4457 = vrot.lane.b32.xlu0 %v4385, 16
        %v4458 = vpop.permute.xlu0 %4457
        %4459 = vrot.lane.b32.xlu0 %v4387, 16
        %v4460 = vpop.permute.xlu0 %4459
        %4461 = vrot.lane.b32.xlu0 %v4390, 16
        %v4462 = vpop.permute.xlu0 %4461
        %4463 = vrot.lane.b32.xlu0 %v4392, 16
        %v4464 = vpop.permute.xlu0 %4463
        %4465 = vrot.lane.b32.xlu0 %v4395, 16
        %v4466 = vpop.permute.xlu0 %4465
        %4467 = vrot.lane.b32.xlu0 %v4397, 16
        %v4468 = vpop.permute.xlu0 %4467
        %4469 = vrot.lane.b32.xlu0 %v4400, 16
        %v4470 = vpop.permute.xlu0 %4469
        %4471 = vrot.lane.b32.xlu0 %v4402, 16
        %v4472 = vpop.permute.xlu0 %4471
        %4473 = vrot.lane.b32.xlu0 %v4405, 16
        %v4474 = vpop.permute.xlu0 %4473
        %4475 = vrot.lane.b32.xlu0 %v4407, 16
        %v4476 = vpop.permute.xlu0 %4475
        %4477 = vrot.lane.b32.xlu0 %v4410, 16
        %v4478 = vpop.permute.xlu0 %4477
        %4479 = vrot.lane.b32.xlu0 %v4412, 16
        %v4480 = vpop.permute.xlu0 %4479
        %4481 = vrot.lane.b32.xlu0 %v4415, 16
        %v4482 = vpop.permute.xlu0 %4481
        %4483 = vrot.lane.b32.xlu0 %v4417, 16
        %v4484 = vpop.permute.xlu0 %4483
        %4485 = vrot.lane.b32.xlu0 %v4420, 16
        %v4486 = vpop.permute.xlu0 %4485
        %4487 = vrot.lane.b32.xlu0 %v4422, 16
        %v4488 = vpop.permute.xlu0 %4487
        %4489 = vrot.lane.b32.xlu0 %v4425, 16
        %v4490 = vpop.permute.xlu0 %4489
        %4491 = vrot.lane.b32.xlu0 %v4427, 16
        %v4492 = vpop.permute.xlu0 %4491
        %4493 = vrot.lane.b32.xlu0 %v4430, 16
        %v4494 = vpop.permute.xlu0 %4493
        %4495 = vrot.lane.b32.xlu0 %v4432, 16
        %v4496 = vpop.permute.xlu0 %4495
        %v4529 = vsel %vm371, %v3728, %v3905
        %v4530 = vsel %vm371, %v3729, %v3907
        %v4531 = vsel %vm371, %v3731, %v3909
        %v4532 = vsel %vm371, %v3732, %v3911
        %v4533 = vsel %vm371, %v3734, %v3913
        %v4534 = vsel %vm371, %v3735, %v3915
        %v4535 = vsel %vm371, %v3737, %v3917
        %v4536 = vsel %vm371, %v3738, %v3919
        %v4537 = vsel %vm371, %v3740, %v3921
        %v4538 = vsel %vm371, %v3741, %v3923
        %v4539 = vsel %vm371, %v3743, %v3925
        %v4540 = vsel %vm371, %v3744, %v3927
        %v4541 = vsel %vm371, %v3746, %v3929
        %v4542 = vsel %vm371, %v3747, %v3931
        %v4543 = vsel %vm371, %v3749, %v3933
        %v4544 = vsel %vm371, %v3750, %v3935
        %v4545 = vsel %vm371, %v3752, %v3937
        %v4546 = vsel %vm371, %v3753, %v3939
        %v4547 = vsel %vm371, %v3755, %v3941
        %v4548 = vsel %vm371, %v3756, %v3943
        %v4549 = vsel %vm371, %v3758, %v3945
        %v4550 = vsel %vm371, %v3759, %v3947
        %v4551 = vsel %vm371, %v3761, %v3949
        %v4552 = vsel %vm371, %v3762, %v3951
        %v4553 = vsel %vm371, %v3764, %v3953
        %v4554 = vsel %vm371, %v3765, %v3955
        %v4555 = vsel %vm371, %v3767, %v3957
        %v4556 = vsel %vm371, %v3768, %v3959
        %v4557 = vsel %vm371, %v3770, %v3961
        %v4558 = vsel %vm371, %v3771, %v3963
        %v4559 = vsel %vm371, %v3773, %v3965
        %v4560 = vsel %vm371, %v3774, %v3967
        %v4561 = vsel %vm1413, %v4529, %v4081
        %v4562 = vsel %vm1413, %v4530, %v4083
        %v4563 = vsel %vm1413, %v4531, %v4085
        %v4564 = vsel %vm1413, %v4532, %v4087
        %v4565 = vsel %vm1413, %v4533, %v4089
        %v4566 = vsel %vm1413, %v4534, %v4091
        %v4567 = vsel %vm1413, %v4535, %v4093
        %v4568 = vsel %vm1413, %v4536, %v4095
        %v4569 = vsel %vm1413, %v4537, %v4097
        %v4570 = vsel %vm1413, %v4538, %v4099
        %v4571 = vsel %vm1413, %v4539, %v4101
        %v4572 = vsel %vm1413, %v4540, %v4103
        %v4573 = vsel %vm1413, %v4541, %v4105
        %v4574 = vsel %vm1413, %v4542, %v4107
        %v4575 = vsel %vm1413, %v4543, %v4109
        %v4576 = vsel %vm1413, %v4544, %v4111
        %v4577 = vsel %vm1413, %v4545, %v4113
        %v4578 = vsel %vm1413, %v4546, %v4115
        %v4579 = vsel %vm1413, %v4547, %v4117
        %v4580 = vsel %vm1413, %v4548, %v4119
        %v4581 = vsel %vm1413, %v4549, %v4121
        %v4582 = vsel %vm1413, %v4550, %v4123
        %v4583 = vsel %vm1413, %v4551, %v4125
        %v4584 = vsel %vm1413, %v4552, %v4127
        %v4585 = vsel %vm1413, %v4553, %v4129
        %v4586 = vsel %vm1413, %v4554, %v4131
        %v4587 = vsel %vm1413, %v4555, %v4133
        %v4588 = vsel %vm1413, %v4556, %v4135
        %v4589 = vsel %vm1413, %v4557, %v4137
        %v4590 = vsel %vm1413, %v4558, %v4139
        %v4591 = vsel %vm1413, %v4559, %v4141
        %v4592 = vsel %vm1413, %v4560, %v4143
        %v4593 = vsel %vm1962, %v4561, %v4258
        %v4594 = vsel %vm1962, %v4562, %v4260
        %v4595 = vsel %vm1962, %v4563, %v4262
        %v4596 = vsel %vm1962, %v4564, %v4264
        %v4597 = vsel %vm1962, %v4565, %v4266
        %v4598 = vsel %vm1962, %v4566, %v4268
        %v4599 = vsel %vm1962, %v4567, %v4270
        %v4600 = vsel %vm1962, %v4568, %v4272
        %v4601 = vsel %vm1962, %v4569, %v4274
        %v4602 = vsel %vm1962, %v4570, %v4276
        %v4603 = vsel %vm1962, %v4571, %v4278
        %v4604 = vsel %vm1962, %v4572, %v4280
        %v4605 = vsel %vm1962, %v4573, %v4282
        %v4606 = vsel %vm1962, %v4574, %v4284
        %v4607 = vsel %vm1962, %v4575, %v4286
        %v4608 = vsel %vm1962, %v4576, %v4288
        %v4609 = vsel %vm1962, %v4577, %v4290
        %v4610 = vsel %vm1962, %v4578, %v4292
        %v4611 = vsel %vm1962, %v4579, %v4294
        %v4612 = vsel %vm1962, %v4580, %v4296
        %v4613 = vsel %vm1962, %v4581, %v4298
        %v4614 = vsel %vm1962, %v4582, %v4300
        %v4615 = vsel %vm1962, %v4583, %v4302
        %v4616 = vsel %vm1962, %v4584, %v4304
        %v4617 = vsel %vm1962, %v4585, %v4306
        %v4618 = vsel %vm1962, %v4586, %v4308
        %v4619 = vsel %vm1962, %v4587, %v4310
        %v4620 = vsel %vm1962, %v4588, %v4312
        %v4621 = vsel %vm1962, %v4589, %v4314
        %v4622 = vsel %vm1962, %v4590, %v4316
        %v4623 = vsel %vm1962, %v4591, %v4318
        %v4624 = vsel %vm1962, %v4592, %v4320
        %vm4625 = vcmask 130048
        %v4626 = vsel %vm4625, %v4593, %v4434
        %v4627 = vsel %vm4625, %v4594, %v4436
        %v4628 = vsel %vm4625, %v4595, %v4438
        %v4629 = vsel %vm4625, %v4596, %v4440
        %v4630 = vsel %vm4625, %v4597, %v4442
        %v4631 = vsel %vm4625, %v4598, %v4444
        %v4632 = vsel %vm4625, %v4599, %v4446
        %v4633 = vsel %vm4625, %v4600, %v4448
        %v4634 = vsel %vm4625, %v4601, %v4450
        %v4635 = vsel %vm4625, %v4602, %v4452
        %v4636 = vsel %vm4625, %v4603, %v4454
        %v4637 = vsel %vm4625, %v4604, %v4456
        %v4638 = vsel %vm4625, %v4605, %v4458
        %v4639 = vsel %vm4625, %v4606, %v4460
        %v4640 = vsel %vm4625, %v4607, %v4462
        %v4641 = vsel %vm4625, %v4608, %v4464
        %v4642 = vsel %vm4625, %v4609, %v4466
        %v4643 = vsel %vm4625, %v4610, %v4468
        %v4644 = vsel %vm4625, %v4611, %v4470
        %v4645 = vsel %vm4625, %v4612, %v4472
        %v4646 = vsel %vm4625, %v4613, %v4474
        %v4647 = vsel %vm4625, %v4614, %v4476
        %v4648 = vsel %vm4625, %v4615, %v4478
        %v4649 = vsel %vm4625, %v4616, %v4480
        %v4650 = vsel %vm4625, %v4617, %v4482
        %v4651 = vsel %vm4625, %v4618, %v4484
        %v4652 = vsel %vm4625, %v4619, %v4486
        %v4653 = vsel %vm4625, %v4620, %v4488
        %v4654 = vsel %vm4625, %v4621, %v4490
        %v4655 = vsel %vm4625, %v4622, %v4492
        %v4656 = vsel %vm4625, %v4623, %v4494
        %v4657 = vsel %vm4625, %v4624, %v4496
        %v4658 = vld [vmem:[%s5] sm:$0xff]
        %v4659 = vld [vmem:[%s5 + $0x8] sm:$0xff]
        %v4660 = vld [vmem:[%s5 + $0x10] sm:$0xf]
        %s4661 = scalar_lea.vmem [#allocation3], 24
        %v4662 = vld [vmem:[%s4661] sm:$0xff]
        %v4663 = vld [vmem:[%s4661 + $0x8] sm:$0xff]
        %v4664 = vld [vmem:[%s4661 + $0x10] sm:$0xf]
        %v4665 = vld [vmem:[%s4661 + $0x18] sm:$0xff]
        %v4666 = vld [vmem:[%s4661 + $0x20] sm:$0xff]
        %v4667 = vld [vmem:[%s4661 + $0x28] sm:$0xf]
        %v4668 = vld [vmem:[%s4661 + $0x30] sm:$0xff]
        %v4669 = vld [vmem:[%s4661 + $0x38] sm:$0xff]
        %v4670 = vld [vmem:[%s4661 + $0x40] sm:$0xf]
        %v4671 = vld [vmem:[%s4661 + $0x48] sm:$0xff]
        %v4672 = vld [vmem:[%s4661 + $0x50] sm:$0xff]
        %v4673 = vld [vmem:[%s4661 + $0x58] sm:$0xf]
        %v4674 = vld [vmem:[%s4661 + $0x60] sm:$0xff]
        %v4675 = vld [vmem:[%s4661 + $0x68] sm:$0xff]
        %v4676 = vld [vmem:[%s4661 + $0x70] sm:$0xf]
        %v4677 = vld [vmem:[%s4661 + $0x78] sm:$0xff]
        %v4678 = vld [vmem:[%s4661 + $0x80] sm:$0xff]
        %v4679 = vld [vmem:[%s4661 + $0x88] sm:$0xf]
        %v4680 = vld [vmem:[%s4661 + $0x90] sm:$0xff]
        %v4681 = vld [vmem:[%s4661 + $0x98] sm:$0xff]
        %v4682 = vld [vmem:[%s4661 + $0xa0] sm:$0xf]
        %v4683 = vld [vmem:[%s4661 + $0xa8] sm:$0xff]
        %v4684 = vld [vmem:[%s4661 + $0xb0] sm:$0xff]
        %v4685 = vld [vmem:[%s4661 + $0xb8] sm:$0xf]
        %v4686 = vld [vmem:[%s4661 + $0xc0] sm:$0xff]
        %v4687 = vld [vmem:[%s4661 + $0xc8] sm:$0xff]
        %v4688 = vld [vmem:[%s4661 + $0xd0] sm:$0xf]
        %v4689 = vld [vmem:[%s4661 + $0xd8] sm:$0xff]
        %v4690 = vld [vmem:[%s4661 + $0xe0] sm:$0xff]
        %v4691 = vld [vmem:[%s4661 + $0xe8] sm:$0xf]
        %v4692 = vld [vmem:[%s4661 + $0xf0] sm:$0xff]
        %v4693 = vld [vmem:[%s4661 + $0xf8] sm:$0xff]
        %v4694 = vld [vmem:[%s4661 + $0x100] sm:$0xf]
        %v4695 = vld [vmem:[%s4661 + $0x108] sm:$0xff]
        %v4696 = vld [vmem:[%s4661 + $0x110] sm:$0xff]
        %v4697 = vld [vmem:[%s4661 + $0x118] sm:$0xf]
        %v4698 = vld [vmem:[%s4661 + $0x120] sm:$0xff]
        %v4699 = vld [vmem:[%s4661 + $0x128] sm:$0xff]
        %v4700 = vld [vmem:[%s4661 + $0x130] sm:$0xf]
        %v4701 = vld [vmem:[%s4661 + $0x138] sm:$0xff]
        %v4702 = vld [vmem:[%s4661 + $0x140] sm:$0xff]
        %v4703 = vld [vmem:[%s4661 + $0x148] sm:$0xf]
        %v4704 = vld [vmem:[%s4661 + $0x150] sm:$0xff]
        %v4705 = vld [vmem:[%s4661 + $0x158] sm:$0xff]
        %v4706 = vld [vmem:[%s4661 + $0x160] sm:$0xf]
        %v4707 = vld [vmem:[%s4661 + $0x168] sm:$0xff]
        %v4708 = vld [vmem:[%s4661 + $0x170] sm:$0xff]
        %v4709 = vld [vmem:[%s4661 + $0x178] sm:$0xf]
        %v4758 = vrot.slane %v4662, 1
        %v4759 = vrot.slane %v4663, 1
        %v4760 = vsel %vm1027, %v4758, %v4759
        %v4761 = vrot.slane %v4664, 1
        %v4762 = vsel %vm1027, %v4759, %v4761
        %v4763 = vrot.slane %v4665, 1
        %v4764 = vrot.slane %v4666, 1
        %v4765 = vsel %vm1027, %v4763, %v4764
        %v4766 = vrot.slane %v4667, 1
        %v4767 = vsel %vm1027, %v4764, %v4766
        %v4768 = vrot.slane %v4668, 1
        %v4769 = vrot.slane %v4669, 1
        %v4770 = vsel %vm1027, %v4768, %v4769
        %v4771 = vrot.slane %v4670, 1
        %v4772 = vsel %vm1027, %v4769, %v4771
        %v4773 = vrot.slane %v4671, 1
        %v4774 = vrot.slane %v4672, 1
        %v4775 = vsel %vm1027, %v4773, %v4774
        %v4776 = vrot.slane %v4673, 1
        %v4777 = vsel %vm1027, %v4774, %v4776
        %v4778 = vrot.slane %v4674, 1
        %v4779 = vrot.slane %v4675, 1
        %v4780 = vsel %vm1027, %v4778, %v4779
        %v4781 = vrot.slane %v4676, 1
        %v4782 = vsel %vm1027, %v4779, %v4781
        %v4783 = vrot.slane %v4677, 1
        %v4784 = vrot.slane %v4678, 1
        %v4785 = vsel %vm1027, %v4783, %v4784
        %v4786 = vrot.slane %v4679, 1
        %v4787 = vsel %vm1027, %v4784, %v4786
        %v4788 = vrot.slane %v4680, 1
        %v4789 = vrot.slane %v4681, 1
        %v4790 = vsel %vm1027, %v4788, %v4789
        %v4791 = vrot.slane %v4682, 1
        %v4792 = vsel %vm1027, %v4789, %v4791
        %v4793 = vrot.slane %v4683, 1
        %v4794 = vrot.slane %v4684, 1
        %v4795 = vsel %vm1027, %v4793, %v4794
        %v4796 = vrot.slane %v4685, 1
        %v4797 = vsel %vm1027, %v4794, %v4796
        %v4798 = vrot.slane %v4686, 1
        %v4799 = vrot.slane %v4687, 1
        %v4800 = vsel %vm1027, %v4798, %v4799
        %v4801 = vrot.slane %v4688, 1
        %v4802 = vsel %vm1027, %v4799, %v4801
        %v4803 = vrot.slane %v4689, 1
        %v4804 = vrot.slane %v4690, 1
        %v4805 = vsel %vm1027, %v4803, %v4804
        %v4806 = vrot.slane %v4691, 1
        %v4807 = vsel %vm1027, %v4804, %v4806
        %v4808 = vrot.slane %v4692, 1
        %v4809 = vrot.slane %v4693, 1
        %v4810 = vsel %vm1027, %v4808, %v4809
        %v4811 = vrot.slane %v4694, 1
        %v4812 = vsel %vm1027, %v4809, %v4811
        %v4813 = vrot.slane %v4695, 1
        %v4814 = vrot.slane %v4696, 1
        %v4815 = vsel %vm1027, %v4813, %v4814
        %v4816 = vrot.slane %v4697, 1
        %v4817 = vsel %vm1027, %v4814, %v4816
        %v4818 = vrot.slane %v4698, 1
        %v4819 = vrot.slane %v4699, 1
        %v4820 = vsel %vm1027, %v4818, %v4819
        %v4821 = vrot.slane %v4700, 1
        %v4822 = vsel %vm1027, %v4819, %v4821
        %v4823 = vrot.slane %v4701, 1
        %v4824 = vrot.slane %v4702, 1
        %v4825 = vsel %vm1027, %v4823, %v4824
        %v4826 = vrot.slane %v4703, 1
        %v4827 = vsel %vm1027, %v4824, %v4826
        %v4828 = vrot.slane %v4704, 1
        %v4829 = vrot.slane %v4705, 1
        %v4830 = vsel %vm1027, %v4828, %v4829
        %v4831 = vrot.slane %v4706, 1
        %v4832 = vsel %vm1027, %v4829, %v4831
        %v4833 = vrot.slane %v4707, 1
        %v4834 = vrot.slane %v4708, 1
        %v4835 = vsel %vm1027, %v4833, %v4834
        %v4836 = vrot.slane %v4709, 1
        %v4837 = vsel %vm1027, %v4834, %v4836
        %4838 = vrot.lane.b32.xlu0 %v4760, 4
        %v4839 = vpop.permute.xlu0 %4838
        %4840 = vrot.lane.b32.xlu0 %v4762, 4
        %v4841 = vpop.permute.xlu0 %4840
        %4842 = vrot.lane.b32.xlu0 %v4765, 4
        %v4843 = vpop.permute.xlu0 %4842
        %4844 = vrot.lane.b32.xlu0 %v4767, 4
        %v4845 = vpop.permute.xlu0 %4844
        %4846 = vrot.lane.b32.xlu0 %v4770, 4
        %v4847 = vpop.permute.xlu0 %4846
        %4848 = vrot.lane.b32.xlu0 %v4772, 4
        %v4849 = vpop.permute.xlu0 %4848
        %4850 = vrot.lane.b32.xlu0 %v4775, 4
        %v4851 = vpop.permute.xlu0 %4850
        %4852 = vrot.lane.b32.xlu0 %v4777, 4
        %v4853 = vpop.permute.xlu0 %4852
        %4854 = vrot.lane.b32.xlu0 %v4780, 4
        %v4855 = vpop.permute.xlu0 %4854
        %4856 = vrot.lane.b32.xlu0 %v4782, 4
        %v4857 = vpop.permute.xlu0 %4856
        %4858 = vrot.lane.b32.xlu0 %v4785, 4
        %v4859 = vpop.permute.xlu0 %4858
        %4860 = vrot.lane.b32.xlu0 %v4787, 4
        %v4861 = vpop.permute.xlu0 %4860
        %4862 = vrot.lane.b32.xlu0 %v4790, 4
        %v4863 = vpop.permute.xlu0 %4862
        %4864 = vrot.lane.b32.xlu0 %v4792, 4
        %v4865 = vpop.permute.xlu0 %4864
        %4866 = vrot.lane.b32.xlu0 %v4795, 4
        %v4867 = vpop.permute.xlu0 %4866
        %4868 = vrot.lane.b32.xlu0 %v4797, 4
        %v4869 = vpop.permute.xlu0 %4868
        %4870 = vrot.lane.b32.xlu0 %v4800, 4
        %v4871 = vpop.permute.xlu0 %4870
        %4872 = vrot.lane.b32.xlu0 %v4802, 4
        %v4873 = vpop.permute.xlu0 %4872
        %4874 = vrot.lane.b32.xlu0 %v4805, 4
        %v4875 = vpop.permute.xlu0 %4874
        %4876 = vrot.lane.b32.xlu0 %v4807, 4
        %v4877 = vpop.permute.xlu0 %4876
        %4878 = vrot.lane.b32.xlu0 %v4810, 4
        %v4879 = vpop.permute.xlu0 %4878
        %4880 = vrot.lane.b32.xlu0 %v4812, 4
        %v4881 = vpop.permute.xlu0 %4880
        %4882 = vrot.lane.b32.xlu0 %v4815, 4
        %v4883 = vpop.permute.xlu0 %4882
        %4884 = vrot.lane.b32.xlu0 %v4817, 4
        %v4885 = vpop.permute.xlu0 %4884
        %4886 = vrot.lane.b32.xlu0 %v4820, 4
        %v4887 = vpop.permute.xlu0 %4886
        %4888 = vrot.lane.b32.xlu0 %v4822, 4
        %v4889 = vpop.permute.xlu0 %4888
        %4890 = vrot.lane.b32.xlu0 %v4825, 4
        %v4891 = vpop.permute.xlu0 %4890
        %4892 = vrot.lane.b32.xlu0 %v4827, 4
        %v4893 = vpop.permute.xlu0 %4892
        %4894 = vrot.lane.b32.xlu0 %v4830, 4
        %v4895 = vpop.permute.xlu0 %4894
        %4896 = vrot.lane.b32.xlu0 %v4832, 4
        %v4897 = vpop.permute.xlu0 %4896
        %4898 = vrot.lane.b32.xlu0 %v4835, 4
        %v4899 = vpop.permute.xlu0 %4898
        %4900 = vrot.lane.b32.xlu0 %v4837, 4
        %v4901 = vpop.permute.xlu0 %4900
        %v4934 = vrot.slane %v4662, 2
        %v4935 = vrot.slane %v4663, 2
        %v4936 = vsel %vm1204, %v4934, %v4935
        %v4937 = vrot.slane %v4664, 2
        %v4938 = vsel %vm1204, %v4935, %v4937
        %v4939 = vrot.slane %v4665, 2
        %v4940 = vrot.slane %v4666, 2
        %v4941 = vsel %vm1204, %v4939, %v4940
        %v4942 = vrot.slane %v4667, 2
        %v4943 = vsel %vm1204, %v4940, %v4942
        %v4944 = vrot.slane %v4668, 2
        %v4945 = vrot.slane %v4669, 2
        %v4946 = vsel %vm1204, %v4944, %v4945
        %v4947 = vrot.slane %v4670, 2
        %v4948 = vsel %vm1204, %v4945, %v4947
        %v4949 = vrot.slane %v4671, 2
        %v4950 = vrot.slane %v4672, 2
        %v4951 = vsel %vm1204, %v4949, %v4950
        %v4952 = vrot.slane %v4673, 2
        %v4953 = vsel %vm1204, %v4950, %v4952
        %v4954 = vrot.slane %v4674, 2
        %v4955 = vrot.slane %v4675, 2
        %v4956 = vsel %vm1204, %v4954, %v4955
        %v4957 = vrot.slane %v4676, 2
        %v4958 = vsel %vm1204, %v4955, %v4957
        %v4959 = vrot.slane %v4677, 2
        %v4960 = vrot.slane %v4678, 2
        %v4961 = vsel %vm1204, %v4959, %v4960
        %v4962 = vrot.slane %v4679, 2
        %v4963 = vsel %vm1204, %v4960, %v4962
        %v4964 = vrot.slane %v4680, 2
        %v4965 = vrot.slane %v4681, 2
        %v4966 = vsel %vm1204, %v4964, %v4965
        %v4967 = vrot.slane %v4682, 2
        %v4968 = vsel %vm1204, %v4965, %v4967
        %v4969 = vrot.slane %v4683, 2
        %v4970 = vrot.slane %v4684, 2
        %v4971 = vsel %vm1204, %v4969, %v4970
        %v4972 = vrot.slane %v4685, 2
        %v4973 = vsel %vm1204, %v4970, %v4972
        %v4974 = vrot.slane %v4686, 2
        %v4975 = vrot.slane %v4687, 2
        %v4976 = vsel %vm1204, %v4974, %v4975
        %v4977 = vrot.slane %v4688, 2
        %v4978 = vsel %vm1204, %v4975, %v4977
        %v4979 = vrot.slane %v4689, 2
        %v4980 = vrot.slane %v4690, 2
        %v4981 = vsel %vm1204, %v4979, %v4980
        %v4982 = vrot.slane %v4691, 2
        %v4983 = vsel %vm1204, %v4980, %v4982
        %v4984 = vrot.slane %v4692, 2
        %v4985 = vrot.slane %v4693, 2
        %v4986 = vsel %vm1204, %v4984, %v4985
        %v4987 = vrot.slane %v4694, 2
        %v4988 = vsel %vm1204, %v4985, %v4987
        %v4989 = vrot.slane %v4695, 2
        %v4990 = vrot.slane %v4696, 2
        %v4991 = vsel %vm1204, %v4989, %v4990
        %v4992 = vrot.slane %v4697, 2
        %v4993 = vsel %vm1204, %v4990, %v4992
        %v4994 = vrot.slane %v4698, 2
        %v4995 = vrot.slane %v4699, 2
        %v4996 = vsel %vm1204, %v4994, %v4995
        %v4997 = vrot.slane %v4700, 2
        %v4998 = vsel %vm1204, %v4995, %v4997
        %v4999 = vrot.slane %v4701, 2
        %v5000 = vrot.slane %v4702, 2
        %v5001 = vsel %vm1204, %v4999, %v5000
        %v5002 = vrot.slane %v4703, 2
        %v5003 = vsel %vm1204, %v5000, %v5002
        %v5004 = vrot.slane %v4704, 2
        %v5005 = vrot.slane %v4705, 2
        %v5006 = vsel %vm1204, %v5004, %v5005
        %v5007 = vrot.slane %v4706, 2
        %v5008 = vsel %vm1204, %v5005, %v5007
        %v5009 = vrot.slane %v4707, 2
        %v5010 = vrot.slane %v4708, 2
        %v5011 = vsel %vm1204, %v5009, %v5010
        %v5012 = vrot.slane %v4709, 2
        %v5013 = vsel %vm1204, %v5010, %v5012
        %5014 = vrot.lane.b32.xlu0 %v4936, 8
        %v5015 = vpop.permute.xlu0 %5014
        %5016 = vrot.lane.b32.xlu0 %v4938, 8
        %v5017 = vpop.permute.xlu0 %5016
        %5018 = vrot.lane.b32.xlu0 %v4941, 8
        %v5019 = vpop.permute.xlu0 %5018
        %5020 = vrot.lane.b32.xlu0 %v4943, 8
        %v5021 = vpop.permute.xlu0 %5020
        %5022 = vrot.lane.b32.xlu0 %v4946, 8
        %v5023 = vpop.permute.xlu0 %5022
        %5024 = vrot.lane.b32.xlu0 %v4948, 8
        %v5025 = vpop.permute.xlu0 %5024
        %5026 = vrot.lane.b32.xlu0 %v4951, 8
        %v5027 = vpop.permute.xlu0 %5026
        %5028 = vrot.lane.b32.xlu0 %v4953, 8
        %v5029 = vpop.permute.xlu0 %5028
        %5030 = vrot.lane.b32.xlu0 %v4956, 8
        %v5031 = vpop.permute.xlu0 %5030
        %5032 = vrot.lane.b32.xlu0 %v4958, 8
        %v5033 = vpop.permute.xlu0 %5032
        %5034 = vrot.lane.b32.xlu0 %v4961, 8
        %v5035 = vpop.permute.xlu0 %5034
        %5036 = vrot.lane.b32.xlu0 %v4963, 8
        %v5037 = vpop.permute.xlu0 %5036
        %5038 = vrot.lane.b32.xlu0 %v4966, 8
        %v5039 = vpop.permute.xlu0 %5038
        %5040 = vrot.lane.b32.xlu0 %v4968, 8
        %v5041 = vpop.permute.xlu0 %5040
        %5042 = vrot.lane.b32.xlu0 %v4971, 8
        %v5043 = vpop.permute.xlu0 %5042
        %5044 = vrot.lane.b32.xlu0 %v4973, 8
        %v5045 = vpop.permute.xlu0 %5044
        %5046 = vrot.lane.b32.xlu0 %v4976, 8
        %v5047 = vpop.permute.xlu0 %5046
        %5048 = vrot.lane.b32.xlu0 %v4978, 8
        %v5049 = vpop.permute.xlu0 %5048
        %5050 = vrot.lane.b32.xlu0 %v4981, 8
        %v5051 = vpop.permute.xlu0 %5050
        %5052 = vrot.lane.b32.xlu0 %v4983, 8
        %v5053 = vpop.permute.xlu0 %5052
        %5054 = vrot.lane.b32.xlu0 %v4986, 8
        %v5055 = vpop.permute.xlu0 %5054
        %5056 = vrot.lane.b32.xlu0 %v4988, 8
        %v5057 = vpop.permute.xlu0 %5056
        %5058 = vrot.lane.b32.xlu0 %v4991, 8
        %v5059 = vpop.permute.xlu0 %5058
        %5060 = vrot.lane.b32.xlu0 %v4993, 8
        %v5061 = vpop.permute.xlu0 %5060
        %5062 = vrot.lane.b32.xlu0 %v4996, 8
        %v5063 = vpop.permute.xlu0 %5062
        %5064 = vrot.lane.b32.xlu0 %v4998, 8
        %v5065 = vpop.permute.xlu0 %5064
        %5066 = vrot.lane.b32.xlu0 %v5001, 8
        %v5067 = vpop.permute.xlu0 %5066
        %5068 = vrot.lane.b32.xlu0 %v5003, 8
        %v5069 = vpop.permute.xlu0 %5068
        %5070 = vrot.lane.b32.xlu0 %v5006, 8
        %v5071 = vpop.permute.xlu0 %5070
        %5072 = vrot.lane.b32.xlu0 %v5008, 8
        %v5073 = vpop.permute.xlu0 %5072
        %5074 = vrot.lane.b32.xlu0 %v5011, 8
        %v5075 = vpop.permute.xlu0 %5074
        %5076 = vrot.lane.b32.xlu0 %v5013, 8
        %v5077 = vpop.permute.xlu0 %5076
        %v5110 = vrot.slane %v4662, 3
        %v5111 = vrot.slane %v4663, 3
        %v5112 = vsel %vm4176, %v5110, %v5111
        %v5113 = vrot.slane %v4664, 3
        %v5114 = vsel %vm4176, %v5111, %v5113
        %v5115 = vrot.slane %v4665, 3
        %v5116 = vrot.slane %v4666, 3
        %v5117 = vsel %vm4176, %v5115, %v5116
        %v5118 = vrot.slane %v4667, 3
        %v5119 = vsel %vm4176, %v5116, %v5118
        %v5120 = vrot.slane %v4668, 3
        %v5121 = vrot.slane %v4669, 3
        %v5122 = vsel %vm4176, %v5120, %v5121
        %v5123 = vrot.slane %v4670, 3
        %v5124 = vsel %vm4176, %v5121, %v5123
        %v5125 = vrot.slane %v4671, 3
        %v5126 = vrot.slane %v4672, 3
        %v5127 = vsel %vm4176, %v5125, %v5126
        %v5128 = vrot.slane %v4673, 3
        %v5129 = vsel %vm4176, %v5126, %v5128
        %v5130 = vrot.slane %v4674, 3
        %v5131 = vrot.slane %v4675, 3
        %v5132 = vsel %vm4176, %v5130, %v5131
        %v5133 = vrot.slane %v4676, 3
        %v5134 = vsel %vm4176, %v5131, %v5133
        %v5135 = vrot.slane %v4677, 3
        %v5136 = vrot.slane %v4678, 3
        %v5137 = vsel %vm4176, %v5135, %v5136
        %v5138 = vrot.slane %v4679, 3
        %v5139 = vsel %vm4176, %v5136, %v5138
        %v5140 = vrot.slane %v4680, 3
        %v5141 = vrot.slane %v4681, 3
        %v5142 = vsel %vm4176, %v5140, %v5141
        %v5143 = vrot.slane %v4682, 3
        %v5144 = vsel %vm4176, %v5141, %v5143
        %v5145 = vrot.slane %v4683, 3
        %v5146 = vrot.slane %v4684, 3
        %v5147 = vsel %vm4176, %v5145, %v5146
        %v5148 = vrot.slane %v4685, 3
        %v5149 = vsel %vm4176, %v5146, %v5148
        %v5150 = vrot.slane %v4686, 3
        %v5151 = vrot.slane %v4687, 3
        %v5152 = vsel %vm4176, %v5150, %v5151
        %v5153 = vrot.slane %v4688, 3
        %v5154 = vsel %vm4176, %v5151, %v5153
        %v5155 = vrot.slane %v4689, 3
        %v5156 = vrot.slane %v4690, 3
        %v5157 = vsel %vm4176, %v5155, %v5156
        %v5158 = vrot.slane %v4691, 3
        %v5159 = vsel %vm4176, %v5156, %v5158
        %v5160 = vrot.slane %v4692, 3
        %v5161 = vrot.slane %v4693, 3
        %v5162 = vsel %vm4176, %v5160, %v5161
        %v5163 = vrot.slane %v4694, 3
        %v5164 = vsel %vm4176, %v5161, %v5163
        %v5165 = vrot.slane %v4695, 3
        %v5166 = vrot.slane %v4696, 3
        %v5167 = vsel %vm4176, %v5165, %v5166
        %v5168 = vrot.slane %v4697, 3
        %v5169 = vsel %vm4176, %v5166, %v5168
        %v5170 = vrot.slane %v4698, 3
        %v5171 = vrot.slane %v4699, 3
        %v5172 = vsel %vm4176, %v5170, %v5171
        %v5173 = vrot.slane %v4700, 3
        %v5174 = vsel %vm4176, %v5171, %v5173
        %v5175 = vrot.slane %v4701, 3
        %v5176 = vrot.slane %v4702, 3
        %v5177 = vsel %vm4176, %v5175, %v5176
        %v5178 = vrot.slane %v4703, 3
        %v5179 = vsel %vm4176, %v5176, %v5178
        %v5180 = vrot.slane %v4704, 3
        %v5181 = vrot.slane %v4705, 3
        %v5182 = vsel %vm4176, %v5180, %v5181
        %v5183 = vrot.slane %v4706, 3
        %v5184 = vsel %vm4176, %v5181, %v5183
        %v5185 = vrot.slane %v4707, 3
        %v5186 = vrot.slane %v4708, 3
        %v5187 = vsel %vm4176, %v5185, %v5186
        %v5188 = vrot.slane %v4709, 3
        %v5189 = vsel %vm4176, %v5186, %v5188
        %5190 = vrot.lane.b32.xlu0 %v5112, 12
        %v5191 = vpop.permute.xlu0 %5190
        %5192 = vrot.lane.b32.xlu0 %v5114, 12
        %v5193 = vpop.permute.xlu0 %5192
        %5194 = vrot.lane.b32.xlu0 %v5117, 12
        %v5195 = vpop.permute.xlu0 %5194
        %5196 = vrot.lane.b32.xlu0 %v5119, 12
        %v5197 = vpop.permute.xlu0 %5196
        %5198 = vrot.lane.b32.xlu0 %v5122, 12
        %v5199 = vpop.permute.xlu0 %5198
        %5200 = vrot.lane.b32.xlu0 %v5124, 12
        %v5201 = vpop.permute.xlu0 %5200
        %5202 = vrot.lane.b32.xlu0 %v5127, 12
        %v5203 = vpop.permute.xlu0 %5202
        %5204 = vrot.lane.b32.xlu0 %v5129, 12
        %v5205 = vpop.permute.xlu0 %5204
        %5206 = vrot.lane.b32.xlu0 %v5132, 12
        %v5207 = vpop.permute.xlu0 %5206
        %5208 = vrot.lane.b32.xlu0 %v5134, 12
        %v5209 = vpop.permute.xlu0 %5208
        %5210 = vrot.lane.b32.xlu0 %v5137, 12
        %v5211 = vpop.permute.xlu0 %5210
        %5212 = vrot.lane.b32.xlu0 %v5139, 12
        %v5213 = vpop.permute.xlu0 %5212
        %5214 = vrot.lane.b32.xlu0 %v5142, 12
        %v5215 = vpop.permute.xlu0 %5214
        %5216 = vrot.lane.b32.xlu0 %v5144, 12
        %v5217 = vpop.permute.xlu0 %5216
        %5218 = vrot.lane.b32.xlu0 %v5147, 12
        %v5219 = vpop.permute.xlu0 %5218
        %5220 = vrot.lane.b32.xlu0 %v5149, 12
        %v5221 = vpop.permute.xlu0 %5220
        %5222 = vrot.lane.b32.xlu0 %v5152, 12
        %v5223 = vpop.permute.xlu0 %5222
        %5224 = vrot.lane.b32.xlu0 %v5154, 12
        %v5225 = vpop.permute.xlu0 %5224
        %5226 = vrot.lane.b32.xlu0 %v5157, 12
        %v5227 = vpop.permute.xlu0 %5226
        %5228 = vrot.lane.b32.xlu0 %v5159, 12
        %v5229 = vpop.permute.xlu0 %5228
        %5230 = vrot.lane.b32.xlu0 %v5162, 12
        %v5231 = vpop.permute.xlu0 %5230
        %5232 = vrot.lane.b32.xlu0 %v5164, 12
        %v5233 = vpop.permute.xlu0 %5232
        %5234 = vrot.lane.b32.xlu0 %v5167, 12
        %v5235 = vpop.permute.xlu0 %5234
        %5236 = vrot.lane.b32.xlu0 %v5169, 12
        %v5237 = vpop.permute.xlu0 %5236
        %5238 = vrot.lane.b32.xlu0 %v5172, 12
        %v5239 = vpop.permute.xlu0 %5238
        %5240 = vrot.lane.b32.xlu0 %v5174, 12
        %v5241 = vpop.permute.xlu0 %5240
        %5242 = vrot.lane.b32.xlu0 %v5177, 12
        %v5243 = vpop.permute.xlu0 %5242
        %5244 = vrot.lane.b32.xlu0 %v5179, 12
        %v5245 = vpop.permute.xlu0 %5244
        %5246 = vrot.lane.b32.xlu0 %v5182, 12
        %v5247 = vpop.permute.xlu0 %5246
        %5248 = vrot.lane.b32.xlu0 %v5184, 12
        %v5249 = vpop.permute.xlu0 %5248
        %5250 = vrot.lane.b32.xlu0 %v5187, 12
        %v5251 = vpop.permute.xlu0 %5250
        %5252 = vrot.lane.b32.xlu0 %v5189, 12
        %v5253 = vpop.permute.xlu0 %5252
        %v5286 = vrot.slane %v4662, 4
        %v5287 = vrot.slane %v4663, 4
        %v5288 = vsel %vm468, %v5286, %v5287
        %v5289 = vrot.slane %v4664, 4
        %v5290 = vsel %vm468, %v5287, %v5289
        %v5291 = vrot.slane %v4665, 4
        %v5292 = vrot.slane %v4666, 4
        %v5293 = vsel %vm468, %v5291, %v5292
        %v5294 = vrot.slane %v4667, 4
        %v5295 = vsel %vm468, %v5292, %v5294
        %v5296 = vrot.slane %v4668, 4
        %v5297 = vrot.slane %v4669, 4
        %v5298 = vsel %vm468, %v5296, %v5297
        %v5299 = vrot.slane %v4670, 4
        %v5300 = vsel %vm468, %v5297, %v5299
        %v5301 = vrot.slane %v4671, 4
        %v5302 = vrot.slane %v4672, 4
        %v5303 = vsel %vm468, %v5301, %v5302
        %v5304 = vrot.slane %v4673, 4
        %v5305 = vsel %vm468, %v5302, %v5304
        %v5306 = vrot.slane %v4674, 4
        %v5307 = vrot.slane %v4675, 4
        %v5308 = vsel %vm468, %v5306, %v5307
        %v5309 = vrot.slane %v4676, 4
        %v5310 = vsel %vm468, %v5307, %v5309
        %v5311 = vrot.slane %v4677, 4
        %v5312 = vrot.slane %v4678, 4
        %v5313 = vsel %vm468, %v5311, %v5312
        %v5314 = vrot.slane %v4679, 4
        %v5315 = vsel %vm468, %v5312, %v5314
        %v5316 = vrot.slane %v4680, 4
        %v5317 = vrot.slane %v4681, 4
        %v5318 = vsel %vm468, %v5316, %v5317
        %v5319 = vrot.slane %v4682, 4
        %v5320 = vsel %vm468, %v5317, %v5319
        %v5321 = vrot.slane %v4683, 4
        %v5322 = vrot.slane %v4684, 4
        %v5323 = vsel %vm468, %v5321, %v5322
        %v5324 = vrot.slane %v4685, 4
        %v5325 = vsel %vm468, %v5322, %v5324
        %v5326 = vrot.slane %v4686, 4
        %v5327 = vrot.slane %v4687, 4
        %v5328 = vsel %vm468, %v5326, %v5327
        %v5329 = vrot.slane %v4688, 4
        %v5330 = vsel %vm468, %v5327, %v5329
        %v5331 = vrot.slane %v4689, 4
        %v5332 = vrot.slane %v4690, 4
        %v5333 = vsel %vm468, %v5331, %v5332
        %v5334 = vrot.slane %v4691, 4
        %v5335 = vsel %vm468, %v5332, %v5334
        %v5336 = vrot.slane %v4692, 4
        %v5337 = vrot.slane %v4693, 4
        %v5338 = vsel %vm468, %v5336, %v5337
        %v5339 = vrot.slane %v4694, 4
        %v5340 = vsel %vm468, %v5337, %v5339
        %v5341 = vrot.slane %v4695, 4
        %v5342 = vrot.slane %v4696, 4
        %v5343 = vsel %vm468, %v5341, %v5342
        %v5344 = vrot.slane %v4697, 4
        %v5345 = vsel %vm468, %v5342, %v5344
        %v5346 = vrot.slane %v4698, 4
        %v5347 = vrot.slane %v4699, 4
        %v5348 = vsel %vm468, %v5346, %v5347
        %v5349 = vrot.slane %v4700, 4
        %v5350 = vsel %vm468, %v5347, %v5349
        %v5351 = vrot.slane %v4701, 4
        %v5352 = vrot.slane %v4702, 4
        %v5353 = vsel %vm468, %v5351, %v5352
        %v5354 = vrot.slane %v4703, 4
        %v5355 = vsel %vm468, %v5352, %v5354
        %v5356 = vrot.slane %v4704, 4
        %v5357 = vrot.slane %v4705, 4
        %v5358 = vsel %vm468, %v5356, %v5357
        %v5359 = vrot.slane %v4706, 4
        %v5360 = vsel %vm468, %v5357, %v5359
        %v5361 = vrot.slane %v4707, 4
        %v5362 = vrot.slane %v4708, 4
        %v5363 = vsel %vm468, %v5361, %v5362
        %v5364 = vrot.slane %v4709, 4
        %v5365 = vsel %vm468, %v5362, %v5364
        %5366 = vrot.lane.b32.xlu0 %v5288, 16
        %v5367 = vpop.permute.xlu0 %5366
        %5368 = vrot.lane.b32.xlu0 %v5290, 16
        %v5369 = vpop.permute.xlu0 %5368
        %5370 = vrot.lane.b32.xlu0 %v5293, 16
        %v5371 = vpop.permute.xlu0 %5370
        %5372 = vrot.lane.b32.xlu0 %v5295, 16
        %v5373 = vpop.permute.xlu0 %5372
        %5374 = vrot.lane.b32.xlu0 %v5298, 16
        %v5375 = vpop.permute.xlu0 %5374
        %5376 = vrot.lane.b32.xlu0 %v5300, 16
        %v5377 = vpop.permute.xlu0 %5376
        %5378 = vrot.lane.b32.xlu0 %v5303, 16
        %v5379 = vpop.permute.xlu0 %5378
        %5380 = vrot.lane.b32.xlu0 %v5305, 16
        %v5381 = vpop.permute.xlu0 %5380
        %5382 = vrot.lane.b32.xlu0 %v5308, 16
        %v5383 = vpop.permute.xlu0 %5382
        %5384 = vrot.lane.b32.xlu0 %v5310, 16
        %v5385 = vpop.permute.xlu0 %5384
        %5386 = vrot.lane.b32.xlu0 %v5313, 16
        %v5387 = vpop.permute.xlu0 %5386
        %5388 = vrot.lane.b32.xlu0 %v5315, 16
        %v5389 = vpop.permute.xlu0 %5388
        %5390 = vrot.lane.b32.xlu0 %v5318, 16
        %v5391 = vpop.permute.xlu0 %5390
        %5392 = vrot.lane.b32.xlu0 %v5320, 16
        %v5393 = vpop.permute.xlu0 %5392
        %5394 = vrot.lane.b32.xlu0 %v5323, 16
        %v5395 = vpop.permute.xlu0 %5394
        %5396 = vrot.lane.b32.xlu0 %v5325, 16
        %v5397 = vpop.permute.xlu0 %5396
        %5398 = vrot.lane.b32.xlu0 %v5328, 16
        %v5399 = vpop.permute.xlu0 %5398
        %5400 = vrot.lane.b32.xlu0 %v5330, 16
        %v5401 = vpop.permute.xlu0 %5400
        %5402 = vrot.lane.b32.xlu0 %v5333, 16
        %v5403 = vpop.permute.xlu0 %5402
        %5404 = vrot.lane.b32.xlu0 %v5335, 16
        %v5405 = vpop.permute.xlu0 %5404
        %5406 = vrot.lane.b32.xlu0 %v5338, 16
        %v5407 = vpop.permute.xlu0 %5406
        %5408 = vrot.lane.b32.xlu0 %v5340, 16
        %v5409 = vpop.permute.xlu0 %5408
        %5410 = vrot.lane.b32.xlu0 %v5343, 16
        %v5411 = vpop.permute.xlu0 %5410
        %5412 = vrot.lane.b32.xlu0 %v5345, 16
        %v5413 = vpop.permute.xlu0 %5412
        %5414 = vrot.lane.b32.xlu0 %v5348, 16
        %v5415 = vpop.permute.xlu0 %5414
        %5416 = vrot.lane.b32.xlu0 %v5350, 16
        %v5417 = vpop.permute.xlu0 %5416
        %5418 = vrot.lane.b32.xlu0 %v5353, 16
        %v5419 = vpop.permute.xlu0 %5418
        %5420 = vrot.lane.b32.xlu0 %v5355, 16
        %v5421 = vpop.permute.xlu0 %5420
        %5422 = vrot.lane.b32.xlu0 %v5358, 16
        %v5423 = vpop.permute.xlu0 %5422
        %5424 = vrot.lane.b32.xlu0 %v5360, 16
        %v5425 = vpop.permute.xlu0 %5424
        %5426 = vrot.lane.b32.xlu0 %v5363, 16
        %v5427 = vpop.permute.xlu0 %5426
        %5428 = vrot.lane.b32.xlu0 %v5365, 16
        %v5429 = vpop.permute.xlu0 %5428
        %v5462 = vsel %vm371, %v4662, %v4839
        %v5463 = vsel %vm371, %v4663, %v4841
        %v5464 = vsel %vm371, %v4665, %v4843
        %v5465 = vsel %vm371, %v4666, %v4845
        %v5466 = vsel %vm371, %v4668, %v4847
        %v5467 = vsel %vm371, %v4669, %v4849
        %v5468 = vsel %vm371, %v4671, %v4851
        %v5469 = vsel %vm371, %v4672, %v4853
        %v5470 = vsel %vm371, %v4674, %v4855
        %v5471 = vsel %vm371, %v4675, %v4857
        %v5472 = vsel %vm371, %v4677, %v4859
        %v5473 = vsel %vm371, %v4678, %v4861
        %v5474 = vsel %vm371, %v4680, %v4863
        %v5475 = vsel %vm371, %v4681, %v4865
        %v5476 = vsel %vm371, %v4683, %v4867
        %v5477 = vsel %vm371, %v4684, %v4869
        %v5478 = vsel %vm371, %v4686, %v4871
        %v5479 = vsel %vm371, %v4687, %v4873
        %v5480 = vsel %vm371, %v4689, %v4875
        %v5481 = vsel %vm371, %v4690, %v4877
        %v5482 = vsel %vm371, %v4692, %v4879
        %v5483 = vsel %vm371, %v4693, %v4881
        %v5484 = vsel %vm371, %v4695, %v4883
        %v5485 = vsel %vm371, %v4696, %v4885
        %v5486 = vsel %vm371, %v4698, %v4887
        %v5487 = vsel %vm371, %v4699, %v4889
        %v5488 = vsel %vm371, %v4701, %v4891
        %v5489 = vsel %vm371, %v4702, %v4893
        %v5490 = vsel %vm371, %v4704, %v4895
        %v5491 = vsel %vm371, %v4705, %v4897
        %v5492 = vsel %vm371, %v4707, %v4899
        %v5493 = vsel %vm371, %v4708, %v4901
        %v5494 = vsel %vm1413, %v5462, %v5015
        %v5495 = vsel %vm1413, %v5463, %v5017
        %v5496 = vsel %vm1413, %v5464, %v5019
        %v5497 = vsel %vm1413, %v5465, %v5021
        %v5498 = vsel %vm1413, %v5466, %v5023
        %v5499 = vsel %vm1413, %v5467, %v5025
        %v5500 = vsel %vm1413, %v5468, %v5027
        %v5501 = vsel %vm1413, %v5469, %v5029
        %v5502 = vsel %vm1413, %v5470, %v5031
        %v5503 = vsel %vm1413, %v5471, %v5033
        %v5504 = vsel %vm1413, %v5472, %v5035
        %v5505 = vsel %vm1413, %v5473, %v5037
        %v5506 = vsel %vm1413, %v5474, %v5039
        %v5507 = vsel %vm1413, %v5475, %v5041
        %v5508 = vsel %vm1413, %v5476, %v5043
        %v5509 = vsel %vm1413, %v5477, %v5045
        %v5510 = vsel %vm1413, %v5478, %v5047
        %v5511 = vsel %vm1413, %v5479, %v5049
        %v5512 = vsel %vm1413, %v5480, %v5051
        %v5513 = vsel %vm1413, %v5481, %v5053
        %v5514 = vsel %vm1413, %v5482, %v5055
        %v5515 = vsel %vm1413, %v5483, %v5057
        %v5516 = vsel %vm1413, %v5484, %v5059
        %v5517 = vsel %vm1413, %v5485, %v5061
        %v5518 = vsel %vm1413, %v5486, %v5063
        %v5519 = vsel %vm1413, %v5487, %v5065
        %v5520 = vsel %vm1413, %v5488, %v5067
        %v5521 = vsel %vm1413, %v5489, %v5069
        %v5522 = vsel %vm1413, %v5490, %v5071
        %v5523 = vsel %vm1413, %v5491, %v5073
        %v5524 = vsel %vm1413, %v5492, %v5075
        %v5525 = vsel %vm1413, %v5493, %v5077
        %v5526 = vsel %vm1962, %v5494, %v5191
        %v5527 = vsel %vm1962, %v5495, %v5193
        %v5528 = vsel %vm1962, %v5496, %v5195
        %v5529 = vsel %vm1962, %v5497, %v5197
        %v5530 = vsel %vm1962, %v5498, %v5199
        %v5531 = vsel %vm1962, %v5499, %v5201
        %v5532 = vsel %vm1962, %v5500, %v5203
        %v5533 = vsel %vm1962, %v5501, %v5205
        %v5534 = vsel %vm1962, %v5502, %v5207
        %v5535 = vsel %vm1962, %v5503, %v5209
        %v5536 = vsel %vm1962, %v5504, %v5211
        %v5537 = vsel %vm1962, %v5505, %v5213
        %v5538 = vsel %vm1962, %v5506, %v5215
        %v5539 = vsel %vm1962, %v5507, %v5217
        %v5540 = vsel %vm1962, %v5508, %v5219
        %v5541 = vsel %vm1962, %v5509, %v5221
        %v5542 = vsel %vm1962, %v5510, %v5223
        %v5543 = vsel %vm1962, %v5511, %v5225
        %v5544 = vsel %vm1962, %v5512, %v5227
        %v5545 = vsel %vm1962, %v5513, %v5229
        %v5546 = vsel %vm1962, %v5514, %v5231
        %v5547 = vsel %vm1962, %v5515, %v5233
        %v5548 = vsel %vm1962, %v5516, %v5235
        %v5549 = vsel %vm1962, %v5517, %v5237
        %v5550 = vsel %vm1962, %v5518, %v5239
        %v5551 = vsel %vm1962, %v5519, %v5241
        %v5552 = vsel %vm1962, %v5520, %v5243
        %v5553 = vsel %vm1962, %v5521, %v5245
        %v5554 = vsel %vm1962, %v5522, %v5247
        %v5555 = vsel %vm1962, %v5523, %v5249
        %v5556 = vsel %vm1962, %v5524, %v5251
        %v5557 = vsel %vm1962, %v5525, %v5253
        %v5558 = vsel %vm4625, %v5526, %v5367
        %v5559 = vsel %vm4625, %v5527, %v5369
        %v5560 = vsel %vm4625, %v5528, %v5371
        %v5561 = vsel %vm4625, %v5529, %v5373
        %v5562 = vsel %vm4625, %v5530, %v5375
        %v5563 = vsel %vm4625, %v5531, %v5377
        %v5564 = vsel %vm4625, %v5532, %v5379
        %v5565 = vsel %vm4625, %v5533, %v5381
        %v5566 = vsel %vm4625, %v5534, %v5383
        %v5567 = vsel %vm4625, %v5535, %v5385
        %v5568 = vsel %vm4625, %v5536, %v5387
        %v5569 = vsel %vm4625, %v5537, %v5389
        %v5570 = vsel %vm4625, %v5538, %v5391
        %v5571 = vsel %vm4625, %v5539, %v5393
        %v5572 = vsel %vm4625, %v5540, %v5395
        %v5573 = vsel %vm4625, %v5541, %v5397
        %v5574 = vsel %vm4625, %v5542, %v5399
        %v5575 = vsel %vm4625, %v5543, %v5401
        %v5576 = vsel %vm4625, %v5544, %v5403
        %v5577 = vsel %vm4625, %v5545, %v5405
        %v5578 = vsel %vm4625, %v5546, %v5407
        %v5579 = vsel %vm4625, %v5547, %v5409
        %v5580 = vsel %vm4625, %v5548, %v5411
        %v5581 = vsel %vm4625, %v5549, %v5413
        %v5582 = vsel %vm4625, %v5550, %v5415
        %v5583 = vsel %vm4625, %v5551, %v5417
        %v5584 = vsel %vm4625, %v5552, %v5419
        %v5585 = vsel %vm4625, %v5553, %v5421
        %v5586 = vsel %vm4625, %v5554, %v5423
        %v5587 = vsel %vm4625, %v5555, %v5425
        %v5588 = vsel %vm4625, %v5556, %v5427
        %v5589 = vsel %vm4625, %v5557, %v5429
        %v5590 = vld [vmem:[%s5 + $0x14] sm:$0xff]
        %v5591 = vld [vmem:[%s5 + $0x1c] sm:$0xff]
        %v5592 = vld [vmem:[%s5 + $0x24] sm:$0xf]
        %vm5593 = vcmask 162816
        %v5595 = vsel %vm5593, %v5558, 0
        %v5598 = vsel %vm5593, %v5559, 0
        %v5601 = vsel %vm5593, %v5560, 0
        %v5604 = vsel %vm5593, %v5561, 0
        %v5607 = vsel %vm5593, %v5562, 0
        %v5610 = vsel %vm5593, %v5563, 0
        %v5613 = vsel %vm5593, %v5564, 0
        %v5616 = vsel %vm5593, %v5565, 0
        %v5619 = vsel %vm5593, %v5566, 0
        %v5622 = vsel %vm5593, %v5567, 0
        %v5625 = vsel %vm5593, %v5568, 0
        %v5628 = vsel %vm5593, %v5569, 0
        %v5631 = vsel %vm5593, %v5570, 0
        %v5634 = vsel %vm5593, %v5571, 0
        %v5637 = vsel %vm5593, %v5572, 0
        %v5640 = vsel %vm5593, %v5573, 0
        %v5643 = vsel %vm5593, %v5574, 0
        %v5646 = vsel %vm5593, %v5575, 0
        %v5649 = vsel %vm5593, %v5576, 0
        %v5652 = vsel %vm5593, %v5577, 0
        %v5655 = vsel %vm5593, %v5578, 0
        %v5658 = vsel %vm5593, %v5579, 0
        %v5661 = vsel %vm5593, %v5580, 0
        %v5664 = vsel %vm5593, %v5581, 0
        %v5667 = vsel %vm5593, %v5582, 0
        %v5670 = vsel %vm5593, %v5583, 0
        %v5673 = vsel %vm5593, %v5584, 0
        %v5676 = vsel %vm5593, %v5585, 0
        %v5679 = vsel %vm5593, %v5586, 0
        %v5682 = vsel %vm5593, %v5587, 0
        %v5685 = vsel %vm5593, %v5588, 0
        %v5688 = vsel %vm5593, %v5589, 0
        %v5691 = vsel %vm468, %v5592, 0
        %5693 = vmatprep.subr.mxu0 0.0
        %5694 = vmatpush1.msra.mxu0 %v5590
        %5695 = vmatprep.subr.mxu0 0.0
        %5696 = vmatpush1.msra.mxu0 %v5591
        %5697 = vmatprep.subr.mxu0 0.0
        %5698 = vmatpush1.msra.mxu0 %v5691
        %5699 = vmatprep.subr.mxu0 0.0
        %5700 = vmatpush1.msra.mxu0 0.0
        %5701 = vmatprep.subr.mxu0 0.0
        %5702 = vmatpush1.msra.mxu0 0.0
        %5703 = vmatprep.subr.mxu0 0.0
        %5704 = vmatpush1.msra.mxu0 0.0
        %5705 = vmatprep.subr.mxu0 0.0
        %5706 = vmatpush1.msra.mxu0 0.0
        %5707 = vmatprep.subr.mxu0 0.0
        %5708 = vmatpush1.msra.mxu0 0.0
        %5709 = vmatprep.subr.mxu0 0.0
        %5710 = vmatpush1.msra.mxu0 0.0
        %5711 = vmatprep.subr.mxu0 0.0
        %5712 = vmatpush1.msra.mxu0 0.0
        %5713 = vmatprep.subr.mxu0 0.0
        %5714 = vmatpush1.msra.mxu0 0.0
        %5715 = vmatprep.subr.mxu0 0.0
        %5716 = vmatpush1.msra.mxu0 0.0
        %5717 = vmatprep.subr.mxu0 0.0
        %5718 = vmatpush1.msra.mxu0 0.0
        %5719 = vmatprep.subr.mxu0 0.0
        %5720 = vmatpush1.msra.mxu0 0.0
        %5721 = vmatprep.subr.mxu0 0.0
        %5722 = vmatpush1.msra.mxu0 0.0
        %5723 = vmatprep.subr.mxu0 0.0
        %5724 = vmatpush1.msra.mxu0 0.0
        %5725 = vmatprep.subr.mxu0 0.0
        %5726 = vmatpush1.msra.mxu0 0.0
        %5727 = vmatprep.subr.mxu0 0.0
        %5728 = vmatpush1.msra.mxu0 0.0
        %5729 = vmatprep.subr.mxu0 0.0
        %5730 = vmatpush1.msra.mxu0 0.0
        %5731 = vmatprep.subr.mxu0 0.0
        %5732 = vmatpush1.msra.mxu0 0.0
        %5733 = vmatprep.subr.mxu0 0.0
        %5734 = vmatpush1.msra.mxu0 0.0
        %5735 = vmatprep.subr.mxu0 0.0
        %5736 = vmatpush1.msra.mxu0 0.0
        %5737 = vmatprep.subr.mxu0 0.0
        %5738 = vmatpush1.msra.mxu0 0.0
        %5739 = vmatprep.subr.mxu0 0.0
        %5740 = vmatpush1.msra.mxu0 0.0
        %5741 = vmatprep.subr.mxu0 0.0
        %5742 = vmatpush1.msra.mxu0 0.0
        %5743 = vmatprep.subr.mxu0 0.0
        %5744 = vmatpush1.msra.mxu0 0.0
        %5745 = vmatprep.subr.mxu0 0.0
        %5746 = vmatpush1.msra.mxu0 0.0
        %5747 = vmatprep.subr.mxu0 0.0
        %5748 = vmatpush1.msra.mxu0 0.0
        %5749 = vmatprep.subr.mxu0 0.0
        %5750 = vmatpush1.msra.mxu0 0.0
        %5751 = vmatprep.subr.mxu0 0.0
        %5752 = vmatpush1.msra.mxu0 0.0
        %5753 = vmatprep.subr.mxu0 0.0
        %5754 = vmatpush1.msra.mxu0 0.0
        %5755 = vmatprep.subr.mxu0 0.0
        %5756 = vmatpush1.msra.mxu0 0.0
        %5757 = vmatprep.mubr.f32.mxu0 0.0
        %5758 = vmatmul.mubr.f32.gmra.mrb[0].mxu0 %v5595
        %v5759 = vpop.f32.mrb[0].mxu0
        %v5760 = vadd.f32 0.0, %v5759
        %v5761 = vpop.f32.mrb[0].mxu0
        %5762 = vmatprep.mubr.f32.mxu0 0.0
        %5763 = vmatmul.mubr.f32.gmra.mrb[0].mxu0 %v5598
        %v5764 = vpop.f32.mrb[0].mxu0
        %v5765 = vadd.f32 0.0, %v5764
        %v5766 = vpop.f32.mrb[0].mxu0
        %5767 = vmatprep.mubr.f32.mxu0 0.0
        %5768 = vmatmul.mubr.f32.gmra.mrb[0].mxu0 %v5601
        %v5769 = vpop.f32.mrb[0].mxu0
        %v5770 = vadd.f32 0.0, %v5769
        %v5771 = vpop.f32.mrb[0].mxu0
        %5772 = vmatprep.mubr.f32.mxu0 0.0
        %5773 = vmatmul.mubr.f32.gmra.mrb[0].mxu0 %v5604
        %v5774 = vpop.f32.mrb[0].mxu0
        %v5775 = vadd.f32 0.0, %v5774
        %v5776 = vpop.f32.mrb[0].mxu0
        %5777 = vmatprep.mubr.f32.mxu0 0.0
        %5778 = vmatmul.mubr.f32.gmra.mrb[0].mxu0 %v5607
        %v5779 = vpop.f32.mrb[0].mxu0
        %v5780 = vadd.f32 0.0, %v5779
        %v5781 = vpop.f32.mrb[0].mxu0
        %5782 = vmatprep.mubr.f32.mxu0 0.0
        %5783 = vmatmul.mubr.f32.gmra.mrb[0].mxu0 %v5610
        %v5784 = vpop.f32.mrb[0].mxu0
        %v5785 = vadd.f32 0.0, %v5784
        %v5786 = vpop.f32.mrb[0].mxu0
        %5787 = vmatprep.mubr.f32.mxu0 0.0
        %5788 = vmatmul.mubr.f32.gmra.mrb[0].mxu0 %v5613
        %v5789 = vpop.f32.mrb[0].mxu0
        %v5790 = vadd.f32 0.0, %v5789
        %v5791 = vpop.f32.mrb[0].mxu0
        %5792 = vmatprep.mubr.f32.mxu0 0.0
        %5793 = vmatmul.mubr.f32.gmra.mrb[0].mxu0 %v5616
        %v5794 = vpop.f32.mrb[0].mxu0
        %v5795 = vadd.f32 0.0, %v5794
        %v5796 = vpop.f32.mrb[0].mxu0
        %5797 = vmatprep.mubr.f32.mxu0 0.0
        %5798 = vmatmul.mubr.f32.gmra.mrb[0].mxu0 %v5619
        %v5799 = vpop.f32.mrb[0].mxu0
        %v5800 = vadd.f32 0.0, %v5799
        %v5801 = vpop.f32.mrb[0].mxu0
        %5802 = vmatprep.mubr.f32.mxu0 0.0
        %5803 = vmatmul.mubr.f32.gmra.mrb[0].mxu0 %v5622
        %v5804 = vpop.f32.mrb[0].mxu0
        %v5805 = vadd.f32 0.0, %v5804
        %v5806 = vpop.f32.mrb[0].mxu0
        %5807 = vmatprep.mubr.f32.mxu0 0.0
        %5808 = vmatmul.mubr.f32.gmra.mrb[0].mxu0 %v5625
        %v5809 = vpop.f32.mrb[0].mxu0
        %v5810 = vadd.f32 0.0, %v5809
        %v5811 = vpop.f32.mrb[0].mxu0
        %5812 = vmatprep.mubr.f32.mxu0 0.0
        %5813 = vmatmul.mubr.f32.gmra.mrb[0].mxu0 %v5628
        %v5814 = vpop.f32.mrb[0].mxu0
        %v5815 = vadd.f32 0.0, %v5814
        %v5816 = vpop.f32.mrb[0].mxu0
        %5817 = vmatprep.mubr.f32.mxu0 0.0
        %5818 = vmatmul.mubr.f32.gmra.mrb[0].mxu0 %v5631
        %v5819 = vpop.f32.mrb[0].mxu0
        %v5820 = vadd.f32 0.0, %v5819
        %v5821 = vpop.f32.mrb[0].mxu0
        %5822 = vmatprep.mubr.f32.mxu0 0.0
        %5823 = vmatmul.mubr.f32.gmra.mrb[0].mxu0 %v5634
        %v5824 = vpop.f32.mrb[0].mxu0
        %v5825 = vadd.f32 0.0, %v5824
        %v5826 = vpop.f32.mrb[0].mxu0
        %5827 = vmatprep.mubr.f32.mxu0 0.0
        %5828 = vmatmul.mubr.f32.gmra.mrb[0].mxu0 %v5637
        %v5829 = vpop.f32.mrb[0].mxu0
        %v5830 = vadd.f32 0.0, %v5829
        %v5831 = vpop.f32.mrb[0].mxu0
        %5832 = vmatprep.mubr.f32.mxu0 0.0
        %5833 = vmatmul.mubr.f32.gmra.mrb[0].mxu0 %v5640
        %v5834 = vpop.f32.mrb[0].mxu0
        %v5835 = vadd.f32 0.0, %v5834
        %v5836 = vpop.f32.mrb[0].mxu0
        %5837 = vmatprep.mubr.f32.mxu0 0.0
        %5838 = vmatmul.mubr.f32.gmra.mrb[0].mxu0 %v5643
        %v5839 = vpop.f32.mrb[0].mxu0
        %v5840 = vadd.f32 0.0, %v5839
        %v5841 = vpop.f32.mrb[0].mxu0
        %5842 = vmatprep.mubr.f32.mxu0 0.0
        %5843 = vmatmul.mubr.f32.gmra.mrb[0].mxu0 %v5646
        %v5844 = vpop.f32.mrb[0].mxu0
        %v5845 = vadd.f32 0.0, %v5844
        %v5846 = vpop.f32.mrb[0].mxu0
        %5847 = vmatprep.mubr.f32.mxu0 0.0
        %5848 = vmatmul.mubr.f32.gmra.mrb[0].mxu0 %v5649
        %v5849 = vpop.f32.mrb[0].mxu0
        %v5850 = vadd.f32 0.0, %v5849
        %v5851 = vpop.f32.mrb[0].mxu0
        %5852 = vmatprep.mubr.f32.mxu0 0.0
        %5853 = vmatmul.mubr.f32.gmra.mrb[0].mxu0 %v5652
        %v5854 = vpop.f32.mrb[0].mxu0
        %v5855 = vadd.f32 0.0, %v5854
        %v5856 = vpop.f32.mrb[0].mxu0
        %5857 = vmatprep.mubr.f32.mxu0 0.0
        %5858 = vmatmul.mubr.f32.gmra.mrb[0].mxu0 %v5655
        %v5859 = vpop.f32.mrb[0].mxu0
        %v5860 = vadd.f32 0.0, %v5859
        %v5861 = vpop.f32.mrb[0].mxu0
        %5862 = vmatprep.mubr.f32.mxu0 0.0
        %5863 = vmatmul.mubr.f32.gmra.mrb[0].mxu0 %v5658
        %v5864 = vpop.f32.mrb[0].mxu0
        %v5865 = vadd.f32 0.0, %v5864
        %v5866 = vpop.f32.mrb[0].mxu0
        %5867 = vmatprep.mubr.f32.mxu0 0.0
        %5868 = vmatmul.mubr.f32.gmra.mrb[0].mxu0 %v5661
        %v5869 = vpop.f32.mrb[0].mxu0
        %v5870 = vadd.f32 0.0, %v5869
        %v5871 = vpop.f32.mrb[0].mxu0
        %5872 = vmatprep.mubr.f32.mxu0 0.0
        %5873 = vmatmul.mubr.f32.gmra.mrb[0].mxu0 %v5664
        %v5874 = vpop.f32.mrb[0].mxu0
        %v5875 = vadd.f32 0.0, %v5874
        %v5876 = vpop.f32.mrb[0].mxu0
        %5877 = vmatprep.mubr.f32.mxu0 0.0
        %5878 = vmatmul.mubr.f32.gmra.mrb[0].mxu0 %v5667
        %v5879 = vpop.f32.mrb[0].mxu0
        %v5880 = vadd.f32 0.0, %v5879
        %v5881 = vpop.f32.mrb[0].mxu0
        %5882 = vmatprep.mubr.f32.mxu0 0.0
        %5883 = vmatmul.mubr.f32.gmra.mrb[0].mxu0 %v5670
        %v5884 = vpop.f32.mrb[0].mxu0
        %v5885 = vadd.f32 0.0, %v5884
        %v5886 = vpop.f32.mrb[0].mxu0
        %5887 = vmatprep.mubr.f32.mxu0 0.0
        %5888 = vmatmul.mubr.f32.gmra.mrb[0].mxu0 %v5673
        %v5889 = vpop.f32.mrb[0].mxu0
        %v5890 = vadd.f32 0.0, %v5889
        %v5891 = vpop.f32.mrb[0].mxu0
        %5892 = vmatprep.mubr.f32.mxu0 0.0
        %5893 = vmatmul.mubr.f32.gmra.mrb[0].mxu0 %v5676
        %v5894 = vpop.f32.mrb[0].mxu0
        %v5895 = vadd.f32 0.0, %v5894
        %v5896 = vpop.f32.mrb[0].mxu0
        %5897 = vmatprep.mubr.f32.mxu0 0.0
        %5898 = vmatmul.mubr.f32.gmra.mrb[0].mxu0 %v5679
        %v5899 = vpop.f32.mrb[0].mxu0
        %v5900 = vadd.f32 0.0, %v5899
        %v5901 = vpop.f32.mrb[0].mxu0
        %5902 = vmatprep.mubr.f32.mxu0 0.0
        %5903 = vmatmul.mubr.f32.gmra.mrb[0].mxu0 %v5682
        %v5904 = vpop.f32.mrb[0].mxu0
        %v5905 = vadd.f32 0.0, %v5904
        %v5906 = vpop.f32.mrb[0].mxu0
        %5907 = vmatprep.mubr.f32.mxu0 0.0
        %5908 = vmatmul.mubr.f32.gmra.mrb[0].mxu0 %v5685
        %v5909 = vpop.f32.mrb[0].mxu0
        %v5910 = vadd.f32 0.0, %v5909
        %v5911 = vpop.f32.mrb[0].mxu0
        %5912 = vmatprep.mubr.f32.mxu0 0.0
        %5913 = vmatmul.mubr.f32.gmra.mrb[0].mxu0 %v5688
        %v5914 = vpop.f32.mrb[0].mxu0
        %v5915 = vadd.f32 0.0, %v5914
        %v5916 = vpop.f32.mrb[0].mxu0
        %5917 = vdwg.mxu0
        %v5919 = vsel %vm5593, %v4626, 0
        %v5922 = vsel %vm5593, %v4627, 0
        %v5925 = vsel %vm5593, %v4628, 0
        %v5928 = vsel %vm5593, %v4629, 0
        %v5931 = vsel %vm5593, %v4630, 0
        %v5934 = vsel %vm5593, %v4631, 0
        %v5937 = vsel %vm5593, %v4632, 0
        %v5940 = vsel %vm5593, %v4633, 0
        %v5943 = vsel %vm5593, %v4634, 0
        %v5946 = vsel %vm5593, %v4635, 0
        %v5949 = vsel %vm5593, %v4636, 0
        %v5952 = vsel %vm5593, %v4637, 0
        %v5955 = vsel %vm5593, %v4638, 0
        %v5958 = vsel %vm5593, %v4639, 0
        %v5961 = vsel %vm5593, %v4640, 0
        %v5964 = vsel %vm5593, %v4641, 0
        %v5967 = vsel %vm5593, %v4642, 0
        %v5970 = vsel %vm5593, %v4643, 0
        %v5973 = vsel %vm5593, %v4644, 0
        %v5976 = vsel %vm5593, %v4645, 0
        %v5979 = vsel %vm5593, %v4646, 0
        %v5982 = vsel %vm5593, %v4647, 0
        %v5985 = vsel %vm5593, %v4648, 0
        %v5988 = vsel %vm5593, %v4649, 0
        %v5991 = vsel %vm5593, %v4650, 0
        %v5994 = vsel %vm5593, %v4651, 0
        %v5997 = vsel %vm5593, %v4652, 0
        %v6000 = vsel %vm5593, %v4653, 0
        %v6003 = vsel %vm5593, %v4654, 0
        %v6006 = vsel %vm5593, %v4655, 0
        %v6009 = vsel %vm5593, %v4656, 0
        %v6012 = vsel %vm5593, %v4657, 0
        %v6015 = vsel %vm468, %v4660, 0
        %6017 = vmatprep.subr.mxu0 0.0
        %6018 = vmatpush1.msra.mxu0 %v4658
        %6019 = vmatprep.subr.mxu0 0.0
        %6020 = vmatpush1.msra.mxu0 %v4659
        %6021 = vmatprep.subr.mxu0 0.0
        %6022 = vmatpush1.msra.mxu0 %v6015
        %6023 = vmatprep.subr.mxu0 0.0
        %6024 = vmatpush1.msra.mxu0 0.0
        %6025 = vmatprep.subr.mxu0 0.0
        %6026 = vmatpush1.msra.mxu0 0.0
        %6027 = vmatprep.subr.mxu0 0.0
        %6028 = vmatpush1.msra.mxu0 0.0
        %6029 = vmatprep.subr.mxu0 0.0
        %6030 = vmatpush1.msra.mxu0 0.0
        %6031 = vmatprep.subr.mxu0 0.0
        %6032 = vmatpush1.msra.mxu0 0.0
        %6033 = vmatprep.subr.mxu0 0.0
        %6034 = vmatpush1.msra.mxu0 0.0
        %6035 = vmatprep.subr.mxu0 0.0
        %6036 = vmatpush1.msra.mxu0 0.0
        %6037 = vmatprep.subr.mxu0 0.0
        %6038 = vmatpush1.msra.mxu0 0.0
        %6039 = vmatprep.subr.mxu0 0.0
        %6040 = vmatpush1.msra.mxu0 0.0
        %6041 = vmatprep.subr.mxu0 0.0
        %6042 = vmatpush1.msra.mxu0 0.0
        %6043 = vmatprep.subr.mxu0 0.0
        %6044 = vmatpush1.msra.mxu0 0.0
        %6045 = vmatprep.subr.mxu0 0.0
        %6046 = vmatpush1.msra.mxu0 0.0
        %6047 = vmatprep.subr.mxu0 0.0
        %6048 = vmatpush1.msra.mxu0 0.0
        %6049 = vmatprep.subr.mxu0 0.0
        %6050 = vmatpush1.msra.mxu0 0.0
        %6051 = vmatprep.subr.mxu0 0.0
        %6052 = vmatpush1.msra.mxu0 0.0
        %6053 = vmatprep.subr.mxu0 0.0
        %6054 = vmatpush1.msra.mxu0 0.0
        %6055 = vmatprep.subr.mxu0 0.0
        %6056 = vmatpush1.msra.mxu0 0.0
        %6057 = vmatprep.subr.mxu0 0.0
        %6058 = vmatpush1.msra.mxu0 0.0
        %6059 = vmatprep.subr.mxu0 0.0
        %6060 = vmatpush1.msra.mxu0 0.0
        %6061 = vmatprep.subr.mxu0 0.0
        %6062 = vmatpush1.msra.mxu0 0.0
        %6063 = vmatprep.subr.mxu0 0.0
        %6064 = vmatpush1.msra.mxu0 0.0
        %6065 = vmatprep.subr.mxu0 0.0
        %6066 = vmatpush1.msra.mxu0 0.0
        %6067 = vmatprep.subr.mxu0 0.0
        %6068 = vmatpush1.msra.mxu0 0.0
        %6069 = vmatprep.subr.mxu0 0.0
        %6070 = vmatpush1.msra.mxu0 0.0
        %6071 = vmatprep.subr.mxu0 0.0
        %6072 = vmatpush1.msra.mxu0 0.0
        %6073 = vmatprep.subr.mxu0 0.0
        %6074 = vmatpush1.msra.mxu0 0.0
        %6075 = vmatprep.subr.mxu0 0.0
        %6076 = vmatpush1.msra.mxu0 0.0
        %6077 = vmatprep.subr.mxu0 0.0
        %6078 = vmatpush1.msra.mxu0 0.0
        %6079 = vmatprep.subr.mxu0 0.0
        %6080 = vmatpush1.msra.mxu0 0.0
        %6081 = vmatprep.mubr.f32.mxu0 0.0
        %6082 = vmatmul.mubr.f32.gmra.mrb[0].mxu0 %v5919
        %v6083 = vpop.f32.mrb[0].mxu0
        %v6084 = vadd.f32 %v5760, %v6083
        %v6085 = vpop.f32.mrb[0].mxu0
        %6086 = vmatprep.mubr.f32.mxu0 0.0
        %6087 = vmatmul.mubr.f32.gmra.mrb[0].mxu0 %v5922
        %v6088 = vpop.f32.mrb[0].mxu0
        %v6089 = vadd.f32 %v5765, %v6088
        %v6090 = vpop.f32.mrb[0].mxu0
        %6091 = vmatprep.mubr.f32.mxu0 0.0
        %6092 = vmatmul.mubr.f32.gmra.mrb[0].mxu0 %v5925
        %v6093 = vpop.f32.mrb[0].mxu0
        %v6094 = vadd.f32 %v5770, %v6093
        %v6095 = vpop.f32.mrb[0].mxu0
        %6096 = vmatprep.mubr.f32.mxu0 0.0
        %6097 = vmatmul.mubr.f32.gmra.mrb[0].mxu0 %v5928
        %v6098 = vpop.f32.mrb[0].mxu0
        %v6099 = vadd.f32 %v5775, %v6098
        %v6100 = vpop.f32.mrb[0].mxu0
        %6101 = vmatprep.mubr.f32.mxu0 0.0
        %6102 = vmatmul.mubr.f32.gmra.mrb[0].mxu0 %v5931
        %v6103 = vpop.f32.mrb[0].mxu0
        %v6104 = vadd.f32 %v5780, %v6103
        %v6105 = vpop.f32.mrb[0].mxu0
        %6106 = vmatprep.mubr.f32.mxu0 0.0
        %6107 = vmatmul.mubr.f32.gmra.mrb[0].mxu0 %v5934
        %v6108 = vpop.f32.mrb[0].mxu0
        %v6109 = vadd.f32 %v5785, %v6108
        %v6110 = vpop.f32.mrb[0].mxu0
        %6111 = vmatprep.mubr.f32.mxu0 0.0
        %6112 = vmatmul.mubr.f32.gmra.mrb[0].mxu0 %v5937
        %v6113 = vpop.f32.mrb[0].mxu0
        %v6114 = vadd.f32 %v5790, %v6113
        %v6115 = vpop.f32.mrb[0].mxu0
        %6116 = vmatprep.mubr.f32.mxu0 0.0
        %6117 = vmatmul.mubr.f32.gmra.mrb[0].mxu0 %v5940
        %v6118 = vpop.f32.mrb[0].mxu0
        %v6119 = vadd.f32 %v5795, %v6118
        %v6120 = vpop.f32.mrb[0].mxu0
        %6121 = vmatprep.mubr.f32.mxu0 0.0
        %6122 = vmatmul.mubr.f32.gmra.mrb[0].mxu0 %v5943
        %v6123 = vpop.f32.mrb[0].mxu0
        %v6124 = vadd.f32 %v5800, %v6123
        %v6125 = vpop.f32.mrb[0].mxu0
        %6126 = vmatprep.mubr.f32.mxu0 0.0
        %6127 = vmatmul.mubr.f32.gmra.mrb[0].mxu0 %v5946
        %v6128 = vpop.f32.mrb[0].mxu0
        %v6129 = vadd.f32 %v5805, %v6128
        %v6130 = vpop.f32.mrb[0].mxu0
        %6131 = vmatprep.mubr.f32.mxu0 0.0
        %6132 = vmatmul.mubr.f32.gmra.mrb[0].mxu0 %v5949
        %v6133 = vpop.f32.mrb[0].mxu0
        %v6134 = vadd.f32 %v5810, %v6133
        %v6135 = vpop.f32.mrb[0].mxu0
        %6136 = vmatprep.mubr.f32.mxu0 0.0
        %6137 = vmatmul.mubr.f32.gmra.mrb[0].mxu0 %v5952
        %v6138 = vpop.f32.mrb[0].mxu0
        %v6139 = vadd.f32 %v5815, %v6138
        %v6140 = vpop.f32.mrb[0].mxu0
        %6141 = vmatprep.mubr.f32.mxu0 0.0
        %6142 = vmatmul.mubr.f32.gmra.mrb[0].mxu0 %v5955
        %v6143 = vpop.f32.mrb[0].mxu0
        %v6144 = vadd.f32 %v5820, %v6143
        %v6145 = vpop.f32.mrb[0].mxu0
        %6146 = vmatprep.mubr.f32.mxu0 0.0
        %6147 = vmatmul.mubr.f32.gmra.mrb[0].mxu0 %v5958
        %v6148 = vpop.f32.mrb[0].mxu0
        %v6149 = vadd.f32 %v5825, %v6148
        %v6150 = vpop.f32.mrb[0].mxu0
        %6151 = vmatprep.mubr.f32.mxu0 0.0
        %6152 = vmatmul.mubr.f32.gmra.mrb[0].mxu0 %v5961
        %v6153 = vpop.f32.mrb[0].mxu0
        %v6154 = vadd.f32 %v5830, %v6153
        %v6155 = vpop.f32.mrb[0].mxu0
        %6156 = vmatprep.mubr.f32.mxu0 0.0
        %6157 = vmatmul.mubr.f32.gmra.mrb[0].mxu0 %v5964
        %v6158 = vpop.f32.mrb[0].mxu0
        %v6159 = vadd.f32 %v5835, %v6158
        %v6160 = vpop.f32.mrb[0].mxu0
        %6161 = vmatprep.mubr.f32.mxu0 0.0
        %6162 = vmatmul.mubr.f32.gmra.mrb[0].mxu0 %v5967
        %v6163 = vpop.f32.mrb[0].mxu0
        %v6164 = vadd.f32 %v5840, %v6163
        %v6165 = vpop.f32.mrb[0].mxu0
        %6166 = vmatprep.mubr.f32.mxu0 0.0
        %6167 = vmatmul.mubr.f32.gmra.mrb[0].mxu0 %v5970
        %v6168 = vpop.f32.mrb[0].mxu0
        %v6169 = vadd.f32 %v5845, %v6168
        %v6170 = vpop.f32.mrb[0].mxu0
        %6171 = vmatprep.mubr.f32.mxu0 0.0
        %6172 = vmatmul.mubr.f32.gmra.mrb[0].mxu0 %v5973
        %v6173 = vpop.f32.mrb[0].mxu0
        %v6174 = vadd.f32 %v5850, %v6173
        %v6175 = vpop.f32.mrb[0].mxu0
        %6176 = vmatprep.mubr.f32.mxu0 0.0
        %6177 = vmatmul.mubr.f32.gmra.mrb[0].mxu0 %v5976
        %v6178 = vpop.f32.mrb[0].mxu0
        %v6179 = vadd.f32 %v5855, %v6178
        %v6180 = vpop.f32.mrb[0].mxu0
        %6181 = vmatprep.mubr.f32.mxu0 0.0
        %6182 = vmatmul.mubr.f32.gmra.mrb[0].mxu0 %v5979
        %v6183 = vpop.f32.mrb[0].mxu0
        %v6184 = vadd.f32 %v5860, %v6183
        %v6185 = vpop.f32.mrb[0].mxu0
        %6186 = vmatprep.mubr.f32.mxu0 0.0
        %6187 = vmatmul.mubr.f32.gmra.mrb[0].mxu0 %v5982
        %v6188 = vpop.f32.mrb[0].mxu0
        %v6189 = vadd.f32 %v5865, %v6188
        %v6190 = vpop.f32.mrb[0].mxu0
        %6191 = vmatprep.mubr.f32.mxu0 0.0
        %6192 = vmatmul.mubr.f32.gmra.mrb[0].mxu0 %v5985
        %v6193 = vpop.f32.mrb[0].mxu0
        %v6194 = vadd.f32 %v5870, %v6193
        %v6195 = vpop.f32.mrb[0].mxu0
        %6196 = vmatprep.mubr.f32.mxu0 0.0
        %6197 = vmatmul.mubr.f32.gmra.mrb[0].mxu0 %v5988
        %v6198 = vpop.f32.mrb[0].mxu0
        %v6199 = vadd.f32 %v5875, %v6198
        %v6200 = vpop.f32.mrb[0].mxu0
        %6201 = vmatprep.mubr.f32.mxu0 0.0
        %6202 = vmatmul.mubr.f32.gmra.mrb[0].mxu0 %v5991
        %v6203 = vpop.f32.mrb[0].mxu0
        %v6204 = vadd.f32 %v5880, %v6203
        %v6205 = vpop.f32.mrb[0].mxu0
        %6206 = vmatprep.mubr.f32.mxu0 0.0
        %6207 = vmatmul.mubr.f32.gmra.mrb[0].mxu0 %v5994
        %v6208 = vpop.f32.mrb[0].mxu0
        %v6209 = vadd.f32 %v5885, %v6208
        %v6210 = vpop.f32.mrb[0].mxu0
        %6211 = vmatprep.mubr.f32.mxu0 0.0
        %6212 = vmatmul.mubr.f32.gmra.mrb[0].mxu0 %v5997
        %v6213 = vpop.f32.mrb[0].mxu0
        %v6214 = vadd.f32 %v5890, %v6213
        %v6215 = vpop.f32.mrb[0].mxu0
        %6216 = vmatprep.mubr.f32.mxu0 0.0
        %6217 = vmatmul.mubr.f32.gmra.mrb[0].mxu0 %v6000
        %v6218 = vpop.f32.mrb[0].mxu0
        %v6219 = vadd.f32 %v5895, %v6218
        %v6220 = vpop.f32.mrb[0].mxu0
        %6221 = vmatprep.mubr.f32.mxu0 0.0
        %6222 = vmatmul.mubr.f32.gmra.mrb[0].mxu0 %v6003
        %v6223 = vpop.f32.mrb[0].mxu0
        %v6224 = vadd.f32 %v5900, %v6223
        %v6225 = vpop.f32.mrb[0].mxu0
        %6226 = vmatprep.mubr.f32.mxu0 0.0
        %6227 = vmatmul.mubr.f32.gmra.mrb[0].mxu0 %v6006
        %v6228 = vpop.f32.mrb[0].mxu0
        %v6229 = vadd.f32 %v5905, %v6228
        %v6230 = vpop.f32.mrb[0].mxu0
        %6231 = vmatprep.mubr.f32.mxu0 0.0
        %6232 = vmatmul.mubr.f32.gmra.mrb[0].mxu0 %v6009
        %v6233 = vpop.f32.mrb[0].mxu0
        %v6234 = vadd.f32 %v5910, %v6233
        %v6235 = vpop.f32.mrb[0].mxu0
        %6236 = vmatprep.mubr.f32.mxu0 0.0
        %6237 = vmatmul.mubr.f32.gmra.mrb[0].mxu0 %v6012
        %v6238 = vpop.f32.mrb[0].mxu0
        %v6239 = vadd.f32 %v5915, %v6238
        %v6240 = vpop.f32.mrb[0].mxu0
        %6241 = vdwg.mxu0
        %v6242 = vld [vmem:[%s3567] sm:$0xff]
        %v6243 = vld [vmem:[%s3567 + $0x8] sm:$0xff]
        %v6244 = vld [vmem:[%s3567 + $0x10] sm:$0xf]
        %v6245 = vld [vmem:[%s3567 + $0x18] sm:$0xff]
        %v6246 = vld [vmem:[%s3567 + $0x20] sm:$0xff]
        %v6247 = vld [vmem:[%s3567 + $0x28] sm:$0xf]
        %v6248 = vld [vmem:[%s3567 + $0x30] sm:$0xff]
        %v6249 = vld [vmem:[%s3567 + $0x38] sm:$0xff]
        %v6250 = vld [vmem:[%s3567 + $0x40] sm:$0xf]
        %v6251 = vld [vmem:[%s3567 + $0x48] sm:$0xff]
        %v6252 = vld [vmem:[%s3567 + $0x50] sm:$0xff]
        %v6253 = vld [vmem:[%s3567 + $0x58] sm:$0xf]
        %v6254 = vld [vmem:[%s3567 + $0x60] sm:$0xff]
        %v6255 = vld [vmem:[%s3567 + $0x68] sm:$0xff]
        %v6256 = vld [vmem:[%s3567 + $0x70] sm:$0xf]
        %v6257 = vld [vmem:[%s3567 + $0x78] sm:$0xff]
        %v6258 = vld [vmem:[%s3567 + $0x80] sm:$0xff]
        %v6259 = vld [vmem:[%s3567 + $0x88] sm:$0xf]
        %v6260 = vld [vmem:[%s3567 + $0x90] sm:$0xff]
        %v6261 = vld [vmem:[%s3567 + $0x98] sm:$0xff]
        %v6262 = vld [vmem:[%s3567 + $0xa0] sm:$0xf]
        %v6263 = vld [vmem:[%s3567 + $0xa8] sm:$0xff]
        %v6264 = vld [vmem:[%s3567 + $0xb0] sm:$0xff]
        %v6265 = vld [vmem:[%s3567 + $0xb8] sm:$0xf]
        %v6266 = vld [vmem:[%s3567 + $0xc0] sm:$0xff]
        %v6267 = vld [vmem:[%s3567 + $0xc8] sm:$0xff]
        %v6268 = vld [vmem:[%s3567 + $0xd0] sm:$0xf]
        %v6269 = vld [vmem:[%s3567 + $0xd8] sm:$0xff]
        %v6270 = vld [vmem:[%s3567 + $0xe0] sm:$0xff]
        %v6271 = vld [vmem:[%s3567 + $0xe8] sm:$0xf]
        %v6272 = vld [vmem:[%s3567 + $0xf0] sm:$0xff]
        %v6273 = vld [vmem:[%s3567 + $0xf8] sm:$0xff]
        %v6274 = vld [vmem:[%s3567 + $0x100] sm:$0xf]
        %v6275 = vld [vmem:[%s3567 + $0x108] sm:$0xff]
        %v6276 = vld [vmem:[%s3567 + $0x110] sm:$0xff]
        %v6277 = vld [vmem:[%s3567 + $0x118] sm:$0xf]
        %v6278 = vld [vmem:[%s3567 + $0x120] sm:$0xff]
        %v6279 = vld [vmem:[%s3567 + $0x128] sm:$0xff]
        %v6280 = vld [vmem:[%s3567 + $0x130] sm:$0xf]
        %v6281 = vld [vmem:[%s3567 + $0x138] sm:$0xff]
        %v6282 = vld [vmem:[%s3567 + $0x140] sm:$0xff]
        %v6283 = vld [vmem:[%s3567 + $0x148] sm:$0xf]
        %v6284 = vld [vmem:[%s3567 + $0x150] sm:$0xff]
        %v6285 = vld [vmem:[%s3567 + $0x158] sm:$0xff]
        %v6286 = vld [vmem:[%s3567 + $0x160] sm:$0xf]
        %v6287 = vld [vmem:[%s3567 + $0x168] sm:$0xff]
        %v6288 = vld [vmem:[%s3567 + $0x170] sm:$0xff]
        %v6289 = vld [vmem:[%s3567 + $0x178] sm:$0xf]
        %v6338 = vrot.slane %v6242, 1
        %v6339 = vrot.slane %v6243, 1
        %v6340 = vsel %vm1027, %v6338, %v6339
        %v6341 = vrot.slane %v6244, 1
        %v6342 = vsel %vm1027, %v6339, %v6341
        %v6343 = vrot.slane %v6245, 1
        %v6344 = vrot.slane %v6246, 1
        %v6345 = vsel %vm1027, %v6343, %v6344
        %v6346 = vrot.slane %v6247, 1
        %v6347 = vsel %vm1027, %v6344, %v6346
        %v6348 = vrot.slane %v6248, 1
        %v6349 = vrot.slane %v6249, 1
        %v6350 = vsel %vm1027, %v6348, %v6349
        %v6351 = vrot.slane %v6250, 1
        %v6352 = vsel %vm1027, %v6349, %v6351
        %v6353 = vrot.slane %v6251, 1
        %v6354 = vrot.slane %v6252, 1
        %v6355 = vsel %vm1027, %v6353, %v6354
        %v6356 = vrot.slane %v6253, 1
        %v6357 = vsel %vm1027, %v6354, %v6356
        %v6358 = vrot.slane %v6254, 1
        %v6359 = vrot.slane %v6255, 1
        %v6360 = vsel %vm1027, %v6358, %v6359
        %v6361 = vrot.slane %v6256, 1
        %v6362 = vsel %vm1027, %v6359, %v6361
        %v6363 = vrot.slane %v6257, 1
        %v6364 = vrot.slane %v6258, 1
        %v6365 = vsel %vm1027, %v6363, %v6364
        %v6366 = vrot.slane %v6259, 1
        %v6367 = vsel %vm1027, %v6364, %v6366
        %v6368 = vrot.slane %v6260, 1
        %v6369 = vrot.slane %v6261, 1
        %v6370 = vsel %vm1027, %v6368, %v6369
        %v6371 = vrot.slane %v6262, 1
        %v6372 = vsel %vm1027, %v6369, %v6371
        %v6373 = vrot.slane %v6263, 1
        %v6374 = vrot.slane %v6264, 1
        %v6375 = vsel %vm1027, %v6373, %v6374
        %v6376 = vrot.slane %v6265, 1
        %v6377 = vsel %vm1027, %v6374, %v6376
        %v6378 = vrot.slane %v6266, 1
        %v6379 = vrot.slane %v6267, 1
        %v6380 = vsel %vm1027, %v6378, %v6379
        %v6381 = vrot.slane %v6268, 1
        %v6382 = vsel %vm1027, %v6379, %v6381
        %v6383 = vrot.slane %v6269, 1
        %v6384 = vrot.slane %v6270, 1
        %v6385 = vsel %vm1027, %v6383, %v6384
        %v6386 = vrot.slane %v6271, 1
        %v6387 = vsel %vm1027, %v6384, %v6386
        %v6388 = vrot.slane %v6272, 1
        %v6389 = vrot.slane %v6273, 1
        %v6390 = vsel %vm1027, %v6388, %v6389
        %v6391 = vrot.slane %v6274, 1
        %v6392 = vsel %vm1027, %v6389, %v6391
        %v6393 = vrot.slane %v6275, 1
        %v6394 = vrot.slane %v6276, 1
        %v6395 = vsel %vm1027, %v6393, %v6394
        %v6396 = vrot.slane %v6277, 1
        %v6397 = vsel %vm1027, %v6394, %v6396
        %v6398 = vrot.slane %v6278, 1
        %v6399 = vrot.slane %v6279, 1
        %v6400 = vsel %vm1027, %v6398, %v6399
        %v6401 = vrot.slane %v6280, 1
        %v6402 = vsel %vm1027, %v6399, %v6401
        %v6403 = vrot.slane %v6281, 1
        %v6404 = vrot.slane %v6282, 1
        %v6405 = vsel %vm1027, %v6403, %v6404
        %v6406 = vrot.slane %v6283, 1
        %v6407 = vsel %vm1027, %v6404, %v6406
        %v6408 = vrot.slane %v6284, 1
        %v6409 = vrot.slane %v6285, 1
        %v6410 = vsel %vm1027, %v6408, %v6409
        %v6411 = vrot.slane %v6286, 1
        %v6412 = vsel %vm1027, %v6409, %v6411
        %v6413 = vrot.slane %v6287, 1
        %v6414 = vrot.slane %v6288, 1
        %v6415 = vsel %vm1027, %v6413, %v6414
        %v6416 = vrot.slane %v6289, 1
        %v6417 = vsel %vm1027, %v6414, %v6416
        %6418 = vrot.lane.b32.xlu0 %v6340, 4
        %v6419 = vpop.permute.xlu0 %6418
        %6420 = vrot.lane.b32.xlu0 %v6342, 4
        %v6421 = vpop.permute.xlu0 %6420
        %6422 = vrot.lane.b32.xlu0 %v6345, 4
        %v6423 = vpop.permute.xlu0 %6422
        %6424 = vrot.lane.b32.xlu0 %v6347, 4
        %v6425 = vpop.permute.xlu0 %6424
        %6426 = vrot.lane.b32.xlu0 %v6350, 4
        %v6427 = vpop.permute.xlu0 %6426
        %6428 = vrot.lane.b32.xlu0 %v6352, 4
        %v6429 = vpop.permute.xlu0 %6428
        %6430 = vrot.lane.b32.xlu0 %v6355, 4
        %v6431 = vpop.permute.xlu0 %6430
        %6432 = vrot.lane.b32.xlu0 %v6357, 4
        %v6433 = vpop.permute.xlu0 %6432
        %6434 = vrot.lane.b32.xlu0 %v6360, 4
        %v6435 = vpop.permute.xlu0 %6434
        %6436 = vrot.lane.b32.xlu0 %v6362, 4
        %v6437 = vpop.permute.xlu0 %6436
        %6438 = vrot.lane.b32.xlu0 %v6365, 4
        %v6439 = vpop.permute.xlu0 %6438
        %6440 = vrot.lane.b32.xlu0 %v6367, 4
        %v6441 = vpop.permute.xlu0 %6440
        %6442 = vrot.lane.b32.xlu0 %v6370, 4
        %v6443 = vpop.permute.xlu0 %6442
        %6444 = vrot.lane.b32.xlu0 %v6372, 4
        %v6445 = vpop.permute.xlu0 %6444
        %6446 = vrot.lane.b32.xlu0 %v6375, 4
        %v6447 = vpop.permute.xlu0 %6446
        %6448 = vrot.lane.b32.xlu0 %v6377, 4
        %v6449 = vpop.permute.xlu0 %6448
        %6450 = vrot.lane.b32.xlu0 %v6380, 4
        %v6451 = vpop.permute.xlu0 %6450
        %6452 = vrot.lane.b32.xlu0 %v6382, 4
        %v6453 = vpop.permute.xlu0 %6452
        %6454 = vrot.lane.b32.xlu0 %v6385, 4
        %v6455 = vpop.permute.xlu0 %6454
        %6456 = vrot.lane.b32.xlu0 %v6387, 4
        %v6457 = vpop.permute.xlu0 %6456
        %6458 = vrot.lane.b32.xlu0 %v6390, 4
        %v6459 = vpop.permute.xlu0 %6458
        %6460 = vrot.lane.b32.xlu0 %v6392, 4
        %v6461 = vpop.permute.xlu0 %6460
        %6462 = vrot.lane.b32.xlu0 %v6395, 4
        %v6463 = vpop.permute.xlu0 %6462
        %6464 = vrot.lane.b32.xlu0 %v6397, 4
        %v6465 = vpop.permute.xlu0 %6464
        %6466 = vrot.lane.b32.xlu0 %v6400, 4
        %v6467 = vpop.permute.xlu0 %6466
        %6468 = vrot.lane.b32.xlu0 %v6402, 4
        %v6469 = vpop.permute.xlu0 %6468
        %6470 = vrot.lane.b32.xlu0 %v6405, 4
        %v6471 = vpop.permute.xlu0 %6470
        %6472 = vrot.lane.b32.xlu0 %v6407, 4
        %v6473 = vpop.permute.xlu0 %6472
        %6474 = vrot.lane.b32.xlu0 %v6410, 4
        %v6475 = vpop.permute.xlu0 %6474
        %6476 = vrot.lane.b32.xlu0 %v6412, 4
        %v6477 = vpop.permute.xlu0 %6476
        %6478 = vrot.lane.b32.xlu0 %v6415, 4
        %v6479 = vpop.permute.xlu0 %6478
        %6480 = vrot.lane.b32.xlu0 %v6417, 4
        %v6481 = vpop.permute.xlu0 %6480
        %v6514 = vrot.slane %v6242, 2
        %v6515 = vrot.slane %v6243, 2
        %v6516 = vsel %vm1204, %v6514, %v6515
        %v6517 = vrot.slane %v6244, 2
        %v6518 = vsel %vm1204, %v6515, %v6517
        %v6519 = vrot.slane %v6245, 2
        %v6520 = vrot.slane %v6246, 2
        %v6521 = vsel %vm1204, %v6519, %v6520
        %v6522 = vrot.slane %v6247, 2
        %v6523 = vsel %vm1204, %v6520, %v6522
        %v6524 = vrot.slane %v6248, 2
        %v6525 = vrot.slane %v6249, 2
        %v6526 = vsel %vm1204, %v6524, %v6525
        %v6527 = vrot.slane %v6250, 2
        %v6528 = vsel %vm1204, %v6525, %v6527
        %v6529 = vrot.slane %v6251, 2
        %v6530 = vrot.slane %v6252, 2
        %v6531 = vsel %vm1204, %v6529, %v6530
        %v6532 = vrot.slane %v6253, 2
        %v6533 = vsel %vm1204, %v6530, %v6532
        %v6534 = vrot.slane %v6254, 2
        %v6535 = vrot.slane %v6255, 2
        %v6536 = vsel %vm1204, %v6534, %v6535
        %v6537 = vrot.slane %v6256, 2
        %v6538 = vsel %vm1204, %v6535, %v6537
        %v6539 = vrot.slane %v6257, 2
        %v6540 = vrot.slane %v6258, 2
        %v6541 = vsel %vm1204, %v6539, %v6540
        %v6542 = vrot.slane %v6259, 2
        %v6543 = vsel %vm1204, %v6540, %v6542
        %v6544 = vrot.slane %v6260, 2
        %v6545 = vrot.slane %v6261, 2
        %v6546 = vsel %vm1204, %v6544, %v6545
        %v6547 = vrot.slane %v6262, 2
        %v6548 = vsel %vm1204, %v6545, %v6547
        %v6549 = vrot.slane %v6263, 2
        %v6550 = vrot.slane %v6264, 2
        %v6551 = vsel %vm1204, %v6549, %v6550
        %v6552 = vrot.slane %v6265, 2
        %v6553 = vsel %vm1204, %v6550, %v6552
        %v6554 = vrot.slane %v6266, 2
        %v6555 = vrot.slane %v6267, 2
        %v6556 = vsel %vm1204, %v6554, %v6555
        %v6557 = vrot.slane %v6268, 2
        %v6558 = vsel %vm1204, %v6555, %v6557
        %v6559 = vrot.slane %v6269, 2
        %v6560 = vrot.slane %v6270, 2
        %v6561 = vsel %vm1204, %v6559, %v6560
        %v6562 = vrot.slane %v6271, 2
        %v6563 = vsel %vm1204, %v6560, %v6562
        %v6564 = vrot.slane %v6272, 2
        %v6565 = vrot.slane %v6273, 2
        %v6566 = vsel %vm1204, %v6564, %v6565
        %v6567 = vrot.slane %v6274, 2
        %v6568 = vsel %vm1204, %v6565, %v6567
        %v6569 = vrot.slane %v6275, 2
        %v6570 = vrot.slane %v6276, 2
        %v6571 = vsel %vm1204, %v6569, %v6570
        %v6572 = vrot.slane %v6277, 2
        %v6573 = vsel %vm1204, %v6570, %v6572
        %v6574 = vrot.slane %v6278, 2
        %v6575 = vrot.slane %v6279, 2
        %v6576 = vsel %vm1204, %v6574, %v6575
        %v6577 = vrot.slane %v6280, 2
        %v6578 = vsel %vm1204, %v6575, %v6577
        %v6579 = vrot.slane %v6281, 2
        %v6580 = vrot.slane %v6282, 2
        %v6581 = vsel %vm1204, %v6579, %v6580
        %v6582 = vrot.slane %v6283, 2
        %v6583 = vsel %vm1204, %v6580, %v6582
        %v6584 = vrot.slane %v6284, 2
        %v6585 = vrot.slane %v6285, 2
        %v6586 = vsel %vm1204, %v6584, %v6585
        %v6587 = vrot.slane %v6286, 2
        %v6588 = vsel %vm1204, %v6585, %v6587
        %v6589 = vrot.slane %v6287, 2
        %v6590 = vrot.slane %v6288, 2
        %v6591 = vsel %vm1204, %v6589, %v6590
        %v6592 = vrot.slane %v6289, 2
        %v6593 = vsel %vm1204, %v6590, %v6592
        %6594 = vrot.lane.b32.xlu0 %v6516, 8
        %v6595 = vpop.permute.xlu0 %6594
        %6596 = vrot.lane.b32.xlu0 %v6518, 8
        %v6597 = vpop.permute.xlu0 %6596
        %6598 = vrot.lane.b32.xlu0 %v6521, 8
        %v6599 = vpop.permute.xlu0 %6598
        %6600 = vrot.lane.b32.xlu0 %v6523, 8
        %v6601 = vpop.permute.xlu0 %6600
        %6602 = vrot.lane.b32.xlu0 %v6526, 8
        %v6603 = vpop.permute.xlu0 %6602
        %6604 = vrot.lane.b32.xlu0 %v6528, 8
        %v6605 = vpop.permute.xlu0 %6604
        %6606 = vrot.lane.b32.xlu0 %v6531, 8
        %v6607 = vpop.permute.xlu0 %6606
        %6608 = vrot.lane.b32.xlu0 %v6533, 8
        %v6609 = vpop.permute.xlu0 %6608
        %6610 = vrot.lane.b32.xlu0 %v6536, 8
        %v6611 = vpop.permute.xlu0 %6610
        %6612 = vrot.lane.b32.xlu0 %v6538, 8
        %v6613 = vpop.permute.xlu0 %6612
        %6614 = vrot.lane.b32.xlu0 %v6541, 8
        %v6615 = vpop.permute.xlu0 %6614
        %6616 = vrot.lane.b32.xlu0 %v6543, 8
        %v6617 = vpop.permute.xlu0 %6616
        %6618 = vrot.lane.b32.xlu0 %v6546, 8
        %v6619 = vpop.permute.xlu0 %6618
        %6620 = vrot.lane.b32.xlu0 %v6548, 8
        %v6621 = vpop.permute.xlu0 %6620
        %6622 = vrot.lane.b32.xlu0 %v6551, 8
        %v6623 = vpop.permute.xlu0 %6622
        %6624 = vrot.lane.b32.xlu0 %v6553, 8
        %v6625 = vpop.permute.xlu0 %6624
        %6626 = vrot.lane.b32.xlu0 %v6556, 8
        %v6627 = vpop.permute.xlu0 %6626
        %6628 = vrot.lane.b32.xlu0 %v6558, 8
        %v6629 = vpop.permute.xlu0 %6628
        %6630 = vrot.lane.b32.xlu0 %v6561, 8
        %v6631 = vpop.permute.xlu0 %6630
        %6632 = vrot.lane.b32.xlu0 %v6563, 8
        %v6633 = vpop.permute.xlu0 %6632
        %6634 = vrot.lane.b32.xlu0 %v6566, 8
        %v6635 = vpop.permute.xlu0 %6634
        %6636 = vrot.lane.b32.xlu0 %v6568, 8
        %v6637 = vpop.permute.xlu0 %6636
        %6638 = vrot.lane.b32.xlu0 %v6571, 8
        %v6639 = vpop.permute.xlu0 %6638
        %6640 = vrot.lane.b32.xlu0 %v6573, 8
        %v6641 = vpop.permute.xlu0 %6640
        %6642 = vrot.lane.b32.xlu0 %v6576, 8
        %v6643 = vpop.permute.xlu0 %6642
        %6644 = vrot.lane.b32.xlu0 %v6578, 8
        %v6645 = vpop.permute.xlu0 %6644
        %6646 = vrot.lane.b32.xlu0 %v6581, 8
        %v6647 = vpop.permute.xlu0 %6646
        %6648 = vrot.lane.b32.xlu0 %v6583, 8
        %v6649 = vpop.permute.xlu0 %6648
        %6650 = vrot.lane.b32.xlu0 %v6586, 8
        %v6651 = vpop.permute.xlu0 %6650
        %6652 = vrot.lane.b32.xlu0 %v6588, 8
        %v6653 = vpop.permute.xlu0 %6652
        %6654 = vrot.lane.b32.xlu0 %v6591, 8
        %v6655 = vpop.permute.xlu0 %6654
        %6656 = vrot.lane.b32.xlu0 %v6593, 8
        %v6657 = vpop.permute.xlu0 %6656
        %v6690 = vrot.slane %v6242, 3
        %v6691 = vrot.slane %v6243, 3
        %v6692 = vsel %vm4176, %v6690, %v6691
        %v6693 = vrot.slane %v6244, 3
        %v6694 = vsel %vm4176, %v6691, %v6693
        %v6695 = vrot.slane %v6245, 3
        %v6696 = vrot.slane %v6246, 3
        %v6697 = vsel %vm4176, %v6695, %v6696
        %v6698 = vrot.slane %v6247, 3
        %v6699 = vsel %vm4176, %v6696, %v6698
        %v6700 = vrot.slane %v6248, 3
        %v6701 = vrot.slane %v6249, 3
        %v6702 = vsel %vm4176, %v6700, %v6701
        %v6703 = vrot.slane %v6250, 3
        %v6704 = vsel %vm4176, %v6701, %v6703
        %v6705 = vrot.slane %v6251, 3
        %v6706 = vrot.slane %v6252, 3
        %v6707 = vsel %vm4176, %v6705, %v6706
        %v6708 = vrot.slane %v6253, 3
        %v6709 = vsel %vm4176, %v6706, %v6708
        %v6710 = vrot.slane %v6254, 3
        %v6711 = vrot.slane %v6255, 3
        %v6712 = vsel %vm4176, %v6710, %v6711
        %v6713 = vrot.slane %v6256, 3
        %v6714 = vsel %vm4176, %v6711, %v6713
        %v6715 = vrot.slane %v6257, 3
        %v6716 = vrot.slane %v6258, 3
        %v6717 = vsel %vm4176, %v6715, %v6716
        %v6718 = vrot.slane %v6259, 3
        %v6719 = vsel %vm4176, %v6716, %v6718
        %v6720 = vrot.slane %v6260, 3
        %v6721 = vrot.slane %v6261, 3
        %v6722 = vsel %vm4176, %v6720, %v6721
        %v6723 = vrot.slane %v6262, 3
        %v6724 = vsel %vm4176, %v6721, %v6723
        %v6725 = vrot.slane %v6263, 3
        %v6726 = vrot.slane %v6264, 3
        %v6727 = vsel %vm4176, %v6725, %v6726
        %v6728 = vrot.slane %v6265, 3
        %v6729 = vsel %vm4176, %v6726, %v6728
        %v6730 = vrot.slane %v6266, 3
        %v6731 = vrot.slane %v6267, 3
        %v6732 = vsel %vm4176, %v6730, %v6731
        %v6733 = vrot.slane %v6268, 3
        %v6734 = vsel %vm4176, %v6731, %v6733
        %v6735 = vrot.slane %v6269, 3
        %v6736 = vrot.slane %v6270, 3
        %v6737 = vsel %vm4176, %v6735, %v6736
        %v6738 = vrot.slane %v6271, 3
        %v6739 = vsel %vm4176, %v6736, %v6738
        %v6740 = vrot.slane %v6272, 3
        %v6741 = vrot.slane %v6273, 3
        %v6742 = vsel %vm4176, %v6740, %v6741
        %v6743 = vrot.slane %v6274, 3
        %v6744 = vsel %vm4176, %v6741, %v6743
        %v6745 = vrot.slane %v6275, 3
        %v6746 = vrot.slane %v6276, 3
        %v6747 = vsel %vm4176, %v6745, %v6746
        %v6748 = vrot.slane %v6277, 3
        %v6749 = vsel %vm4176, %v6746, %v6748
        %v6750 = vrot.slane %v6278, 3
        %v6751 = vrot.slane %v6279, 3
        %v6752 = vsel %vm4176, %v6750, %v6751
        %v6753 = vrot.slane %v6280, 3
        %v6754 = vsel %vm4176, %v6751, %v6753
        %v6755 = vrot.slane %v6281, 3
        %v6756 = vrot.slane %v6282, 3
        %v6757 = vsel %vm4176, %v6755, %v6756
        %v6758 = vrot.slane %v6283, 3
        %v6759 = vsel %vm4176, %v6756, %v6758
        %v6760 = vrot.slane %v6284, 3
        %v6761 = vrot.slane %v6285, 3
        %v6762 = vsel %vm4176, %v6760, %v6761
        %v6763 = vrot.slane %v6286, 3
        %v6764 = vsel %vm4176, %v6761, %v6763
        %v6765 = vrot.slane %v6287, 3
        %v6766 = vrot.slane %v6288, 3
        %v6767 = vsel %vm4176, %v6765, %v6766
        %v6768 = vrot.slane %v6289, 3
        %v6769 = vsel %vm4176, %v6766, %v6768
        %6770 = vrot.lane.b32.xlu0 %v6692, 12
        %v6771 = vpop.permute.xlu0 %6770
        %6772 = vrot.lane.b32.xlu0 %v6694, 12
        %v6773 = vpop.permute.xlu0 %6772
        %6774 = vrot.lane.b32.xlu0 %v6697, 12
        %v6775 = vpop.permute.xlu0 %6774
        %6776 = vrot.lane.b32.xlu0 %v6699, 12
        %v6777 = vpop.permute.xlu0 %6776
        %6778 = vrot.lane.b32.xlu0 %v6702, 12
        %v6779 = vpop.permute.xlu0 %6778
        %6780 = vrot.lane.b32.xlu0 %v6704, 12
        %v6781 = vpop.permute.xlu0 %6780
        %6782 = vrot.lane.b32.xlu0 %v6707, 12
        %v6783 = vpop.permute.xlu0 %6782
        %6784 = vrot.lane.b32.xlu0 %v6709, 12
        %v6785 = vpop.permute.xlu0 %6784
        %6786 = vrot.lane.b32.xlu0 %v6712, 12
        %v6787 = vpop.permute.xlu0 %6786
        %6788 = vrot.lane.b32.xlu0 %v6714, 12
        %v6789 = vpop.permute.xlu0 %6788
        %6790 = vrot.lane.b32.xlu0 %v6717, 12
        %v6791 = vpop.permute.xlu0 %6790
        %6792 = vrot.lane.b32.xlu0 %v6719, 12
        %v6793 = vpop.permute.xlu0 %6792
        %6794 = vrot.lane.b32.xlu0 %v6722, 12
        %v6795 = vpop.permute.xlu0 %6794
        %6796 = vrot.lane.b32.xlu0 %v6724, 12
        %v6797 = vpop.permute.xlu0 %6796
        %6798 = vrot.lane.b32.xlu0 %v6727, 12
        %v6799 = vpop.permute.xlu0 %6798
        %6800 = vrot.lane.b32.xlu0 %v6729, 12
        %v6801 = vpop.permute.xlu0 %6800
        %6802 = vrot.lane.b32.xlu0 %v6732, 12
        %v6803 = vpop.permute.xlu0 %6802
        %6804 = vrot.lane.b32.xlu0 %v6734, 12
        %v6805 = vpop.permute.xlu0 %6804
        %6806 = vrot.lane.b32.xlu0 %v6737, 12
        %v6807 = vpop.permute.xlu0 %6806
        %6808 = vrot.lane.b32.xlu0 %v6739, 12
        %v6809 = vpop.permute.xlu0 %6808
        %6810 = vrot.lane.b32.xlu0 %v6742, 12
        %v6811 = vpop.permute.xlu0 %6810
        %6812 = vrot.lane.b32.xlu0 %v6744, 12
        %v6813 = vpop.permute.xlu0 %6812
        %6814 = vrot.lane.b32.xlu0 %v6747, 12
        %v6815 = vpop.permute.xlu0 %6814
        %6816 = vrot.lane.b32.xlu0 %v6749, 12
        %v6817 = vpop.permute.xlu0 %6816
        %6818 = vrot.lane.b32.xlu0 %v6752, 12
        %v6819 = vpop.permute.xlu0 %6818
        %6820 = vrot.lane.b32.xlu0 %v6754, 12
        %v6821 = vpop.permute.xlu0 %6820
        %6822 = vrot.lane.b32.xlu0 %v6757, 12
        %v6823 = vpop.permute.xlu0 %6822
        %6824 = vrot.lane.b32.xlu0 %v6759, 12
        %v6825 = vpop.permute.xlu0 %6824
        %6826 = vrot.lane.b32.xlu0 %v6762, 12
        %v6827 = vpop.permute.xlu0 %6826
        %6828 = vrot.lane.b32.xlu0 %v6764, 12
        %v6829 = vpop.permute.xlu0 %6828
        %6830 = vrot.lane.b32.xlu0 %v6767, 12
        %v6831 = vpop.permute.xlu0 %6830
        %6832 = vrot.lane.b32.xlu0 %v6769, 12
        %v6833 = vpop.permute.xlu0 %6832
        %v6866 = vrot.slane %v6242, 4
        %v6867 = vrot.slane %v6243, 4
        %v6868 = vsel %vm468, %v6866, %v6867
        %v6869 = vrot.slane %v6244, 4
        %v6870 = vsel %vm468, %v6867, %v6869
        %v6871 = vrot.slane %v6245, 4
        %v6872 = vrot.slane %v6246, 4
        %v6873 = vsel %vm468, %v6871, %v6872
        %v6874 = vrot.slane %v6247, 4
        %v6875 = vsel %vm468, %v6872, %v6874
        %v6876 = vrot.slane %v6248, 4
        %v6877 = vrot.slane %v6249, 4
        %v6878 = vsel %vm468, %v6876, %v6877
        %v6879 = vrot.slane %v6250, 4
        %v6880 = vsel %vm468, %v6877, %v6879
        %v6881 = vrot.slane %v6251, 4
        %v6882 = vrot.slane %v6252, 4
        %v6883 = vsel %vm468, %v6881, %v6882
        %v6884 = vrot.slane %v6253, 4
        %v6885 = vsel %vm468, %v6882, %v6884
        %v6886 = vrot.slane %v6254, 4
        %v6887 = vrot.slane %v6255, 4
        %v6888 = vsel %vm468, %v6886, %v6887
        %v6889 = vrot.slane %v6256, 4
        %v6890 = vsel %vm468, %v6887, %v6889
        %v6891 = vrot.slane %v6257, 4
        %v6892 = vrot.slane %v6258, 4
        %v6893 = vsel %vm468, %v6891, %v6892
        %v6894 = vrot.slane %v6259, 4
        %v6895 = vsel %vm468, %v6892, %v6894
        %v6896 = vrot.slane %v6260, 4
        %v6897 = vrot.slane %v6261, 4
        %v6898 = vsel %vm468, %v6896, %v6897
        %v6899 = vrot.slane %v6262, 4
        %v6900 = vsel %vm468, %v6897, %v6899
        %v6901 = vrot.slane %v6263, 4
        %v6902 = vrot.slane %v6264, 4
        %v6903 = vsel %vm468, %v6901, %v6902
        %v6904 = vrot.slane %v6265, 4
        %v6905 = vsel %vm468, %v6902, %v6904
        %v6906 = vrot.slane %v6266, 4
        %v6907 = vrot.slane %v6267, 4
        %v6908 = vsel %vm468, %v6906, %v6907
        %v6909 = vrot.slane %v6268, 4
        %v6910 = vsel %vm468, %v6907, %v6909
        %v6911 = vrot.slane %v6269, 4
        %v6912 = vrot.slane %v6270, 4
        %v6913 = vsel %vm468, %v6911, %v6912
        %v6914 = vrot.slane %v6271, 4
        %v6915 = vsel %vm468, %v6912, %v6914
        %v6916 = vrot.slane %v6272, 4
        %v6917 = vrot.slane %v6273, 4
        %v6918 = vsel %vm468, %v6916, %v6917
        %v6919 = vrot.slane %v6274, 4
        %v6920 = vsel %vm468, %v6917, %v6919
        %v6921 = vrot.slane %v6275, 4
        %v6922 = vrot.slane %v6276, 4
        %v6923 = vsel %vm468, %v6921, %v6922
        %v6924 = vrot.slane %v6277, 4
        %v6925 = vsel %vm468, %v6922, %v6924
        %v6926 = vrot.slane %v6278, 4
        %v6927 = vrot.slane %v6279, 4
        %v6928 = vsel %vm468, %v6926, %v6927
        %v6929 = vrot.slane %v6280, 4
        %v6930 = vsel %vm468, %v6927, %v6929
        %v6931 = vrot.slane %v6281, 4
        %v6932 = vrot.slane %v6282, 4
        %v6933 = vsel %vm468, %v6931, %v6932
        %v6934 = vrot.slane %v6283, 4
        %v6935 = vsel %vm468, %v6932, %v6934
        %v6936 = vrot.slane %v6284, 4
        %v6937 = vrot.slane %v6285, 4
        %v6938 = vsel %vm468, %v6936, %v6937
        %v6939 = vrot.slane %v6286, 4
        %v6940 = vsel %vm468, %v6937, %v6939
        %v6941 = vrot.slane %v6287, 4
        %v6942 = vrot.slane %v6288, 4
        %v6943 = vsel %vm468, %v6941, %v6942
        %v6944 = vrot.slane %v6289, 4
        %v6945 = vsel %vm468, %v6942, %v6944
        %6946 = vrot.lane.b32.xlu0 %v6868, 16
        %v6947 = vpop.permute.xlu0 %6946
        %6948 = vrot.lane.b32.xlu0 %v6870, 16
        %v6949 = vpop.permute.xlu0 %6948
        %6950 = vrot.lane.b32.xlu0 %v6873, 16
        %v6951 = vpop.permute.xlu0 %6950
        %6952 = vrot.lane.b32.xlu0 %v6875, 16
        %v6953 = vpop.permute.xlu0 %6952
        %6954 = vrot.lane.b32.xlu0 %v6878, 16
        %v6955 = vpop.permute.xlu0 %6954
        %6956 = vrot.lane.b32.xlu0 %v6880, 16
        %v6957 = vpop.permute.xlu0 %6956
        %6958 = vrot.lane.b32.xlu0 %v6883, 16
        %v6959 = vpop.permute.xlu0 %6958
        %6960 = vrot.lane.b32.xlu0 %v6885, 16
        %v6961 = vpop.permute.xlu0 %6960
        %6962 = vrot.lane.b32.xlu0 %v6888, 16
        %v6963 = vpop.permute.xlu0 %6962
        %6964 = vrot.lane.b32.xlu0 %v6890, 16
        %v6965 = vpop.permute.xlu0 %6964
        %6966 = vrot.lane.b32.xlu0 %v6893, 16
        %v6967 = vpop.permute.xlu0 %6966
        %6968 = vrot.lane.b32.xlu0 %v6895, 16
        %v6969 = vpop.permute.xlu0 %6968
        %6970 = vrot.lane.b32.xlu0 %v6898, 16
        %v6971 = vpop.permute.xlu0 %6970
        %6972 = vrot.lane.b32.xlu0 %v6900, 16
        %v6973 = vpop.permute.xlu0 %6972
        %6974 = vrot.lane.b32.xlu0 %v6903, 16
        %v6975 = vpop.permute.xlu0 %6974
        %6976 = vrot.lane.b32.xlu0 %v6905, 16
        %v6977 = vpop.permute.xlu0 %6976
        %6978 = vrot.lane.b32.xlu0 %v6908, 16
        %v6979 = vpop.permute.xlu0 %6978
        %6980 = vrot.lane.b32.xlu0 %v6910, 16
        %v6981 = vpop.permute.xlu0 %6980
        %6982 = vrot.lane.b32.xlu0 %v6913, 16
        %v6983 = vpop.permute.xlu0 %6982
        %6984 = vrot.lane.b32.xlu0 %v6915, 16
        %v6985 = vpop.permute.xlu0 %6984
        %6986 = vrot.lane.b32.xlu0 %v6918, 16
        %v6987 = vpop.permute.xlu0 %6986
        %6988 = vrot.lane.b32.xlu0 %v6920, 16
        %v6989 = vpop.permute.xlu0 %6988
        %6990 = vrot.lane.b32.xlu0 %v6923, 16
        %v6991 = vpop.permute.xlu0 %6990
        %6992 = vrot.lane.b32.xlu0 %v6925, 16
        %v6993 = vpop.permute.xlu0 %6992
        %6994 = vrot.lane.b32.xlu0 %v6928, 16
        %v6995 = vpop.permute.xlu0 %6994
        %6996 = vrot.lane.b32.xlu0 %v6930, 16
        %v6997 = vpop.permute.xlu0 %6996
        %6998 = vrot.lane.b32.xlu0 %v6933, 16
        %v6999 = vpop.permute.xlu0 %6998
        %7000 = vrot.lane.b32.xlu0 %v6935, 16
        %v7001 = vpop.permute.xlu0 %7000
        %7002 = vrot.lane.b32.xlu0 %v6938, 16
        %v7003 = vpop.permute.xlu0 %7002
        %7004 = vrot.lane.b32.xlu0 %v6940, 16
        %v7005 = vpop.permute.xlu0 %7004
        %7006 = vrot.lane.b32.xlu0 %v6943, 16
        %v7007 = vpop.permute.xlu0 %7006
        %7008 = vrot.lane.b32.xlu0 %v6945, 16
        %v7009 = vpop.permute.xlu0 %7008
        %v7042 = vsel %vm371, %v6242, %v6419
        %v7043 = vsel %vm371, %v6243, %v6421
        %v7044 = vsel %vm371, %v6245, %v6423
        %v7045 = vsel %vm371, %v6246, %v6425
        %v7046 = vsel %vm371, %v6248, %v6427
        %v7047 = vsel %vm371, %v6249, %v6429
        %v7048 = vsel %vm371, %v6251, %v6431
        %v7049 = vsel %vm371, %v6252, %v6433
        %v7050 = vsel %vm371, %v6254, %v6435
        %v7051 = vsel %vm371, %v6255, %v6437
        %v7052 = vsel %vm371, %v6257, %v6439
        %v7053 = vsel %vm371, %v6258, %v6441
        %v7054 = vsel %vm371, %v6260, %v6443
        %v7055 = vsel %vm371, %v6261, %v6445
        %v7056 = vsel %vm371, %v6263, %v6447
        %v7057 = vsel %vm371, %v6264, %v6449
        %v7058 = vsel %vm371, %v6266, %v6451
        %v7059 = vsel %vm371, %v6267, %v6453
        %v7060 = vsel %vm371, %v6269, %v6455
        %v7061 = vsel %vm371, %v6270, %v6457
        %v7062 = vsel %vm371, %v6272, %v6459
        %v7063 = vsel %vm371, %v6273, %v6461
        %v7064 = vsel %vm371, %v6275, %v6463
        %v7065 = vsel %vm371, %v6276, %v6465
        %v7066 = vsel %vm371, %v6278, %v6467
        %v7067 = vsel %vm371, %v6279, %v6469
        %v7068 = vsel %vm371, %v6281, %v6471
        %v7069 = vsel %vm371, %v6282, %v6473
        %v7070 = vsel %vm371, %v6284, %v6475
        %v7071 = vsel %vm371, %v6285, %v6477
        %v7072 = vsel %vm371, %v6287, %v6479
        %v7073 = vsel %vm371, %v6288, %v6481
        %v7074 = vsel %vm1413, %v7042, %v6595
        %v7075 = vsel %vm1413, %v7043, %v6597
        %v7076 = vsel %vm1413, %v7044, %v6599
        %v7077 = vsel %vm1413, %v7045, %v6601
        %v7078 = vsel %vm1413, %v7046, %v6603
        %v7079 = vsel %vm1413, %v7047, %v6605
        %v7080 = vsel %vm1413, %v7048, %v6607
        %v7081 = vsel %vm1413, %v7049, %v6609
        %v7082 = vsel %vm1413, %v7050, %v6611
        %v7083 = vsel %vm1413, %v7051, %v6613
        %v7084 = vsel %vm1413, %v7052, %v6615
        %v7085 = vsel %vm1413, %v7053, %v6617
        %v7086 = vsel %vm1413, %v7054, %v6619
        %v7087 = vsel %vm1413, %v7055, %v6621
        %v7088 = vsel %vm1413, %v7056, %v6623
        %v7089 = vsel %vm1413, %v7057, %v6625
        %v7090 = vsel %vm1413, %v7058, %v6627
        %v7091 = vsel %vm1413, %v7059, %v6629
        %v7092 = vsel %vm1413, %v7060, %v6631
        %v7093 = vsel %vm1413, %v7061, %v6633
        %v7094 = vsel %vm1413, %v7062, %v6635
        %v7095 = vsel %vm1413, %v7063, %v6637
        %v7096 = vsel %vm1413, %v7064, %v6639
        %v7097 = vsel %vm1413, %v7065, %v6641
        %v7098 = vsel %vm1413, %v7066, %v6643
        %v7099 = vsel %vm1413, %v7067, %v6645
        %v7100 = vsel %vm1413, %v7068, %v6647
        %v7101 = vsel %vm1413, %v7069, %v6649
        %v7102 = vsel %vm1413, %v7070, %v6651
        %v7103 = vsel %vm1413, %v7071, %v6653
        %v7104 = vsel %vm1413, %v7072, %v6655
        %v7105 = vsel %vm1413, %v7073, %v6657
        %v7106 = vsel %vm1962, %v7074, %v6771
        %v7107 = vsel %vm1962, %v7075, %v6773
        %v7108 = vsel %vm1962, %v7076, %v6775
        %v7109 = vsel %vm1962, %v7077, %v6777
        %v7110 = vsel %vm1962, %v7078, %v6779
        %v7111 = vsel %vm1962, %v7079, %v6781
        %v7112 = vsel %vm1962, %v7080, %v6783
        %v7113 = vsel %vm1962, %v7081, %v6785
        %v7114 = vsel %vm1962, %v7082, %v6787
        %v7115 = vsel %vm1962, %v7083, %v6789
        %v7116 = vsel %vm1962, %v7084, %v6791
        %v7117 = vsel %vm1962, %v7085, %v6793
        %v7118 = vsel %vm1962, %v7086, %v6795
        %v7119 = vsel %vm1962, %v7087, %v6797
        %v7120 = vsel %vm1962, %v7088, %v6799
        %v7121 = vsel %vm1962, %v7089, %v6801
        %v7122 = vsel %vm1962, %v7090, %v6803
        %v7123 = vsel %vm1962, %v7091, %v6805
        %v7124 = vsel %vm1962, %v7092, %v6807
        %v7125 = vsel %vm1962, %v7093, %v6809
        %v7126 = vsel %vm1962, %v7094, %v6811
        %v7127 = vsel %vm1962, %v7095, %v6813
        %v7128 = vsel %vm1962, %v7096, %v6815
        %v7129 = vsel %vm1962, %v7097, %v6817
        %v7130 = vsel %vm1962, %v7098, %v6819
        %v7131 = vsel %vm1962, %v7099, %v6821
        %v7132 = vsel %vm1962, %v7100, %v6823
        %v7133 = vsel %vm1962, %v7101, %v6825
        %v7134 = vsel %vm1962, %v7102, %v6827
        %v7135 = vsel %vm1962, %v7103, %v6829
        %v7136 = vsel %vm1962, %v7104, %v6831
        %v7137 = vsel %vm1962, %v7105, %v6833
        %v7138 = vsel %vm4625, %v7106, %v6947
        %v7139 = vsel %vm4625, %v7107, %v6949
        %v7140 = vsel %vm4625, %v7108, %v6951
        %v7141 = vsel %vm4625, %v7109, %v6953
        %v7142 = vsel %vm4625, %v7110, %v6955
        %v7143 = vsel %vm4625, %v7111, %v6957
        %v7144 = vsel %vm4625, %v7112, %v6959
        %v7145 = vsel %vm4625, %v7113, %v6961
        %v7146 = vsel %vm4625, %v7114, %v6963
        %v7147 = vsel %vm4625, %v7115, %v6965
        %v7148 = vsel %vm4625, %v7116, %v6967
        %v7149 = vsel %vm4625, %v7117, %v6969
        %v7150 = vsel %vm4625, %v7118, %v6971
        %v7151 = vsel %vm4625, %v7119, %v6973
        %v7152 = vsel %vm4625, %v7120, %v6975
        %v7153 = vsel %vm4625, %v7121, %v6977
        %v7154 = vsel %vm4625, %v7122, %v6979
        %v7155 = vsel %vm4625, %v7123, %v6981
        %v7156 = vsel %vm4625, %v7124, %v6983
        %v7157 = vsel %vm4625, %v7125, %v6985
        %v7158 = vsel %vm4625, %v7126, %v6987
        %v7159 = vsel %vm4625, %v7127, %v6989
        %v7160 = vsel %vm4625, %v7128, %v6991
        %v7161 = vsel %vm4625, %v7129, %v6993
        %v7162 = vsel %vm4625, %v7130, %v6995
        %v7163 = vsel %vm4625, %v7131, %v6997
        %v7164 = vsel %vm4625, %v7132, %v6999
        %v7165 = vsel %vm4625, %v7133, %v7001
        %v7166 = vsel %vm4625, %v7134, %v7003
        %v7167 = vsel %vm4625, %v7135, %v7005
        %v7168 = vsel %vm4625, %v7136, %v7007
        %v7169 = vsel %vm4625, %v7137, %v7009
        %v7170 = vld [vmem:[%s5 + $0x28] sm:$0xff]
        %v7171 = vld [vmem:[%s5 + $0x30] sm:$0xff]
        %v7172 = vld [vmem:[%s5 + $0x38] sm:$0xf]
        %v7174 = vsel %vm5593, %v7138, 0
        %v7177 = vsel %vm5593, %v7139, 0
        %v7180 = vsel %vm5593, %v7140, 0
        %v7183 = vsel %vm5593, %v7141, 0
        %v7186 = vsel %vm5593, %v7142, 0
        %v7189 = vsel %vm5593, %v7143, 0
        %v7192 = vsel %vm5593, %v7144, 0
        %v7195 = vsel %vm5593, %v7145, 0
        %v7198 = vsel %vm5593, %v7146, 0
        %v7201 = vsel %vm5593, %v7147, 0
        %v7204 = vsel %vm5593, %v7148, 0
        %v7207 = vsel %vm5593, %v7149, 0
        %v7210 = vsel %vm5593, %v7150, 0
        %v7213 = vsel %vm5593, %v7151, 0
        %v7216 = vsel %vm5593, %v7152, 0
        %v7219 = vsel %vm5593, %v7153, 0
        %v7222 = vsel %vm5593, %v7154, 0
        %v7225 = vsel %vm5593, %v7155, 0
        %v7228 = vsel %vm5593, %v7156, 0
        %v7231 = vsel %vm5593, %v7157, 0
        %v7234 = vsel %vm5593, %v7158, 0
        %v7237 = vsel %vm5593, %v7159, 0
        %v7240 = vsel %vm5593, %v7160, 0
        %v7243 = vsel %vm5593, %v7161, 0
        %v7246 = vsel %vm5593, %v7162, 0
        %v7249 = vsel %vm5593, %v7163, 0
        %v7252 = vsel %vm5593, %v7164, 0
        %v7255 = vsel %vm5593, %v7165, 0
        %v7258 = vsel %vm5593, %v7166, 0
        %v7261 = vsel %vm5593, %v7167, 0
        %v7264 = vsel %vm5593, %v7168, 0
        %v7267 = vsel %vm5593, %v7169, 0
        %v7270 = vsel %vm468, %v7172, 0
        %7272 = vmatprep.subr.mxu0 0.0
        %7273 = vmatpush1.msra.mxu0 %v7170
        %7274 = vmatprep.subr.mxu0 0.0
        %7275 = vmatpush1.msra.mxu0 %v7171
        %7276 = vmatprep.subr.mxu0 0.0
        %7277 = vmatpush1.msra.mxu0 %v7270
        %7278 = vmatprep.subr.mxu0 0.0
        %7279 = vmatpush1.msra.mxu0 0.0
        %7280 = vmatprep.subr.mxu0 0.0
        %7281 = vmatpush1.msra.mxu0 0.0
        %7282 = vmatprep.subr.mxu0 0.0
        %7283 = vmatpush1.msra.mxu0 0.0
        %7284 = vmatprep.subr.mxu0 0.0
        %7285 = vmatpush1.msra.mxu0 0.0
        %7286 = vmatprep.subr.mxu0 0.0
        %7287 = vmatpush1.msra.mxu0 0.0
        %7288 = vmatprep.subr.mxu0 0.0
        %7289 = vmatpush1.msra.mxu0 0.0
        %7290 = vmatprep.subr.mxu0 0.0
        %7291 = vmatpush1.msra.mxu0 0.0
        %7292 = vmatprep.subr.mxu0 0.0
        %7293 = vmatpush1.msra.mxu0 0.0
        %7294 = vmatprep.subr.mxu0 0.0
        %7295 = vmatpush1.msra.mxu0 0.0
        %7296 = vmatprep.subr.mxu0 0.0
        %7297 = vmatpush1.msra.mxu0 0.0
        %7298 = vmatprep.subr.mxu0 0.0
        %7299 = vmatpush1.msra.mxu0 0.0
        %7300 = vmatprep.subr.mxu0 0.0
        %7301 = vmatpush1.msra.mxu0 0.0
        %7302 = vmatprep.subr.mxu0 0.0
        %7303 = vmatpush1.msra.mxu0 0.0
        %7304 = vmatprep.subr.mxu0 0.0
        %7305 = vmatpush1.msra.mxu0 0.0
        %7306 = vmatprep.subr.mxu0 0.0
        %7307 = vmatpush1.msra.mxu0 0.0
        %7308 = vmatprep.subr.mxu0 0.0
        %7309 = vmatpush1.msra.mxu0 0.0
        %7310 = vmatprep.subr.mxu0 0.0
        %7311 = vmatpush1.msra.mxu0 0.0
        %7312 = vmatprep.subr.mxu0 0.0
        %7313 = vmatpush1.msra.mxu0 0.0
        %7314 = vmatprep.subr.mxu0 0.0
        %7315 = vmatpush1.msra.mxu0 0.0
        %7316 = vmatprep.subr.mxu0 0.0
        %7317 = vmatpush1.msra.mxu0 0.0
        %7318 = vmatprep.subr.mxu0 0.0
        %7319 = vmatpush1.msra.mxu0 0.0
        %7320 = vmatprep.subr.mxu0 0.0
        %7321 = vmatpush1.msra.mxu0 0.0
        %7322 = vmatprep.subr.mxu0 0.0
        %7323 = vmatpush1.msra.mxu0 0.0
        %7324 = vmatprep.subr.mxu0 0.0
        %7325 = vmatpush1.msra.mxu0 0.0
        %7326 = vmatprep.subr.mxu0 0.0
        %7327 = vmatpush1.msra.mxu0 0.0
        %7328 = vmatprep.subr.mxu0 0.0
        %7329 = vmatpush1.msra.mxu0 0.0
        %7330 = vmatprep.subr.mxu0 0.0
        %7331 = vmatpush1.msra.mxu0 0.0
        %7332 = vmatprep.subr.mxu0 0.0
        %7333 = vmatpush1.msra.mxu0 0.0
        %7334 = vmatprep.subr.mxu0 0.0
        %7335 = vmatpush1.msra.mxu0 0.0
        %7336 = vmatprep.mubr.f32.mxu0 0.0
        %7337 = vmatmul.mubr.f32.gmra.mrb[0].mxu0 %v7174
        %v7338 = vpop.f32.mrb[0].mxu0
        %v7339 = vadd.f32 0.0, %v7338
        %v7340 = vpop.f32.mrb[0].mxu0
        %7341 = vmatprep.mubr.f32.mxu0 0.0
        %7342 = vmatmul.mubr.f32.gmra.mrb[0].mxu0 %v7177
        %v7343 = vpop.f32.mrb[0].mxu0
        %v7344 = vadd.f32 0.0, %v7343
        %v7345 = vpop.f32.mrb[0].mxu0
        %7346 = vmatprep.mubr.f32.mxu0 0.0
        %7347 = vmatmul.mubr.f32.gmra.mrb[0].mxu0 %v7180
        %v7348 = vpop.f32.mrb[0].mxu0
        %v7349 = vadd.f32 0.0, %v7348
        %v7350 = vpop.f32.mrb[0].mxu0
        %7351 = vmatprep.mubr.f32.mxu0 0.0
        %7352 = vmatmul.mubr.f32.gmra.mrb[0].mxu0 %v7183
        %v7353 = vpop.f32.mrb[0].mxu0
        %v7354 = vadd.f32 0.0, %v7353
        %v7355 = vpop.f32.mrb[0].mxu0
        %7356 = vmatprep.mubr.f32.mxu0 0.0
        %7357 = vmatmul.mubr.f32.gmra.mrb[0].mxu0 %v7186
        %v7358 = vpop.f32.mrb[0].mxu0
        %v7359 = vadd.f32 0.0, %v7358
        %v7360 = vpop.f32.mrb[0].mxu0
        %7361 = vmatprep.mubr.f32.mxu0 0.0
        %7362 = vmatmul.mubr.f32.gmra.mrb[0].mxu0 %v7189
        %v7363 = vpop.f32.mrb[0].mxu0
        %v7364 = vadd.f32 0.0, %v7363
        %v7365 = vpop.f32.mrb[0].mxu0
        %7366 = vmatprep.mubr.f32.mxu0 0.0
        %7367 = vmatmul.mubr.f32.gmra.mrb[0].mxu0 %v7192
        %v7368 = vpop.f32.mrb[0].mxu0
        %v7369 = vadd.f32 0.0, %v7368
        %v7370 = vpop.f32.mrb[0].mxu0
        %7371 = vmatprep.mubr.f32.mxu0 0.0
        %7372 = vmatmul.mubr.f32.gmra.mrb[0].mxu0 %v7195
        %v7373 = vpop.f32.mrb[0].mxu0
        %v7374 = vadd.f32 0.0, %v7373
        %v7375 = vpop.f32.mrb[0].mxu0
        %7376 = vmatprep.mubr.f32.mxu0 0.0
        %7377 = vmatmul.mubr.f32.gmra.mrb[0].mxu0 %v7198
        %v7378 = vpop.f32.mrb[0].mxu0
        %v7379 = vadd.f32 0.0, %v7378
        %v7380 = vpop.f32.mrb[0].mxu0
        %7381 = vmatprep.mubr.f32.mxu0 0.0
        %7382 = vmatmul.mubr.f32.gmra.mrb[0].mxu0 %v7201
        %v7383 = vpop.f32.mrb[0].mxu0
        %v7384 = vadd.f32 0.0, %v7383
        %v7385 = vpop.f32.mrb[0].mxu0
        %7386 = vmatprep.mubr.f32.mxu0 0.0
        %7387 = vmatmul.mubr.f32.gmra.mrb[0].mxu0 %v7204
        %v7388 = vpop.f32.mrb[0].mxu0
        %v7389 = vadd.f32 0.0, %v7388
        %v7390 = vpop.f32.mrb[0].mxu0
        %7391 = vmatprep.mubr.f32.mxu0 0.0
        %7392 = vmatmul.mubr.f32.gmra.mrb[0].mxu0 %v7207
        %v7393 = vpop.f32.mrb[0].mxu0
        %v7394 = vadd.f32 0.0, %v7393
        %v7395 = vpop.f32.mrb[0].mxu0
        %7396 = vmatprep.mubr.f32.mxu0 0.0
        %7397 = vmatmul.mubr.f32.gmra.mrb[0].mxu0 %v7210
        %v7398 = vpop.f32.mrb[0].mxu0
        %v7399 = vadd.f32 0.0, %v7398
        %v7400 = vpop.f32.mrb[0].mxu0
        %7401 = vmatprep.mubr.f32.mxu0 0.0
        %7402 = vmatmul.mubr.f32.gmra.mrb[0].mxu0 %v7213
        %v7403 = vpop.f32.mrb[0].mxu0
        %v7404 = vadd.f32 0.0, %v7403
        %v7405 = vpop.f32.mrb[0].mxu0
        %7406 = vmatprep.mubr.f32.mxu0 0.0
        %7407 = vmatmul.mubr.f32.gmra.mrb[0].mxu0 %v7216
        %v7408 = vpop.f32.mrb[0].mxu0
        %v7409 = vadd.f32 0.0, %v7408
        %v7410 = vpop.f32.mrb[0].mxu0
        %7411 = vmatprep.mubr.f32.mxu0 0.0
        %7412 = vmatmul.mubr.f32.gmra.mrb[0].mxu0 %v7219
        %v7413 = vpop.f32.mrb[0].mxu0
        %v7414 = vadd.f32 0.0, %v7413
        %v7415 = vpop.f32.mrb[0].mxu0
        %7416 = vmatprep.mubr.f32.mxu0 0.0
        %7417 = vmatmul.mubr.f32.gmra.mrb[0].mxu0 %v7222
        %v7418 = vpop.f32.mrb[0].mxu0
        %v7419 = vadd.f32 0.0, %v7418
        %v7420 = vpop.f32.mrb[0].mxu0
        %7421 = vmatprep.mubr.f32.mxu0 0.0
        %7422 = vmatmul.mubr.f32.gmra.mrb[0].mxu0 %v7225
        %v7423 = vpop.f32.mrb[0].mxu0
        %v7424 = vadd.f32 0.0, %v7423
        %v7425 = vpop.f32.mrb[0].mxu0
        %7426 = vmatprep.mubr.f32.mxu0 0.0
        %7427 = vmatmul.mubr.f32.gmra.mrb[0].mxu0 %v7228
        %v7428 = vpop.f32.mrb[0].mxu0
        %v7429 = vadd.f32 0.0, %v7428
        %v7430 = vpop.f32.mrb[0].mxu0
        %7431 = vmatprep.mubr.f32.mxu0 0.0
        %7432 = vmatmul.mubr.f32.gmra.mrb[0].mxu0 %v7231
        %v7433 = vpop.f32.mrb[0].mxu0
        %v7434 = vadd.f32 0.0, %v7433
        %v7435 = vpop.f32.mrb[0].mxu0
        %7436 = vmatprep.mubr.f32.mxu0 0.0
        %7437 = vmatmul.mubr.f32.gmra.mrb[0].mxu0 %v7234
        %v7438 = vpop.f32.mrb[0].mxu0
        %v7439 = vadd.f32 0.0, %v7438
        %v7440 = vpop.f32.mrb[0].mxu0
        %7441 = vmatprep.mubr.f32.mxu0 0.0
        %7442 = vmatmul.mubr.f32.gmra.mrb[0].mxu0 %v7237
        %v7443 = vpop.f32.mrb[0].mxu0
        %v7444 = vadd.f32 0.0, %v7443
        %v7445 = vpop.f32.mrb[0].mxu0
        %7446 = vmatprep.mubr.f32.mxu0 0.0
        %7447 = vmatmul.mubr.f32.gmra.mrb[0].mxu0 %v7240
        %v7448 = vpop.f32.mrb[0].mxu0
        %v7449 = vadd.f32 0.0, %v7448
        %v7450 = vpop.f32.mrb[0].mxu0
        %7451 = vmatprep.mubr.f32.mxu0 0.0
        %7452 = vmatmul.mubr.f32.gmra.mrb[0].mxu0 %v7243
        %v7453 = vpop.f32.mrb[0].mxu0
        %v7454 = vadd.f32 0.0, %v7453
        %v7455 = vpop.f32.mrb[0].mxu0
        %7456 = vmatprep.mubr.f32.mxu0 0.0
        %7457 = vmatmul.mubr.f32.gmra.mrb[0].mxu0 %v7246
        %v7458 = vpop.f32.mrb[0].mxu0
        %v7459 = vadd.f32 0.0, %v7458
        %v7460 = vpop.f32.mrb[0].mxu0
        %7461 = vmatprep.mubr.f32.mxu0 0.0
        %7462 = vmatmul.mubr.f32.gmra.mrb[0].mxu0 %v7249
        %v7463 = vpop.f32.mrb[0].mxu0
        %v7464 = vadd.f32 0.0, %v7463
        %v7465 = vpop.f32.mrb[0].mxu0
        %7466 = vmatprep.mubr.f32.mxu0 0.0
        %7467 = vmatmul.mubr.f32.gmra.mrb[0].mxu0 %v7252
        %v7468 = vpop.f32.mrb[0].mxu0
        %v7469 = vadd.f32 0.0, %v7468
        %v7470 = vpop.f32.mrb[0].mxu0
        %7471 = vmatprep.mubr.f32.mxu0 0.0
        %7472 = vmatmul.mubr.f32.gmra.mrb[0].mxu0 %v7255
        %v7473 = vpop.f32.mrb[0].mxu0
        %v7474 = vadd.f32 0.0, %v7473
        %v7475 = vpop.f32.mrb[0].mxu0
        %7476 = vmatprep.mubr.f32.mxu0 0.0
        %7477 = vmatmul.mubr.f32.gmra.mrb[0].mxu0 %v7258
        %v7478 = vpop.f32.mrb[0].mxu0
        %v7479 = vadd.f32 0.0, %v7478
        %v7480 = vpop.f32.mrb[0].mxu0
        %7481 = vmatprep.mubr.f32.mxu0 0.0
        %7482 = vmatmul.mubr.f32.gmra.mrb[0].mxu0 %v7261
        %v7483 = vpop.f32.mrb[0].mxu0
        %v7484 = vadd.f32 0.0, %v7483
        %v7485 = vpop.f32.mrb[0].mxu0
        %7486 = vmatprep.mubr.f32.mxu0 0.0
        %7487 = vmatmul.mubr.f32.gmra.mrb[0].mxu0 %v7264
        %v7488 = vpop.f32.mrb[0].mxu0
        %v7489 = vadd.f32 0.0, %v7488
        %v7490 = vpop.f32.mrb[0].mxu0
        %7491 = vmatprep.mubr.f32.mxu0 0.0
        %7492 = vmatmul.mubr.f32.gmra.mrb[0].mxu0 %v7267
        %v7493 = vpop.f32.mrb[0].mxu0
        %v7494 = vadd.f32 0.0, %v7493
        %v7495 = vpop.f32.mrb[0].mxu0
        %7496 = vdwg.mxu0
        %v7497 = vadd.f32 %v6084, %v7339
        %v7498 = vadd.f32 %v6089, %v7344
        %v7499 = vadd.f32 %v6094, %v7349
        %v7500 = vadd.f32 %v6099, %v7354
        %v7501 = vadd.f32 %v6104, %v7359
        %v7502 = vadd.f32 %v6109, %v7364
        %v7503 = vadd.f32 %v6114, %v7369
        %v7504 = vadd.f32 %v6119, %v7374
        %v7505 = vadd.f32 %v6124, %v7379
        %v7506 = vadd.f32 %v6129, %v7384
        %v7507 = vadd.f32 %v6134, %v7389
        %v7508 = vadd.f32 %v6139, %v7394
        %v7509 = vadd.f32 %v6144, %v7399
        %v7510 = vadd.f32 %v6149, %v7404
        %v7511 = vadd.f32 %v6154, %v7409
        %v7512 = vadd.f32 %v6159, %v7414
        %v7513 = vadd.f32 %v6164, %v7419
        %v7514 = vadd.f32 %v6169, %v7424
        %v7515 = vadd.f32 %v6174, %v7429
        %v7516 = vadd.f32 %v6179, %v7434
        %v7517 = vadd.f32 %v6184, %v7439
        %v7518 = vadd.f32 %v6189, %v7444
        %v7519 = vadd.f32 %v6194, %v7449
        %v7520 = vadd.f32 %v6199, %v7454
        %v7521 = vadd.f32 %v6204, %v7459
        %v7522 = vadd.f32 %v6209, %v7464
        %v7523 = vadd.f32 %v6214, %v7469
        %v7524 = vadd.f32 %v6219, %v7474
        %v7525 = vadd.f32 %v6224, %v7479
        %v7526 = vadd.f32 %v6229, %v7484
        %v7527 = vadd.f32 %v6234, %v7489
        %v7528 = vadd.f32 %v6239, %v7494
        %s7529 = scalar_lea.vmem [#allocation3], 72
        %v7530 = vld [vmem:[%s7529] sm:$0xff]
        %v7531 = vld [vmem:[%s7529 + $0x8] sm:$0xff]
        %v7532 = vld [vmem:[%s7529 + $0x10] sm:$0xf]
        %v7533 = vld [vmem:[%s7529 + $0x18] sm:$0xff]
        %v7534 = vld [vmem:[%s7529 + $0x20] sm:$0xff]
        %v7535 = vld [vmem:[%s7529 + $0x28] sm:$0xf]
        %v7536 = vld [vmem:[%s7529 + $0x30] sm:$0xff]
        %v7537 = vld [vmem:[%s7529 + $0x38] sm:$0xff]
        %v7538 = vld [vmem:[%s7529 + $0x40] sm:$0xf]
        %v7539 = vld [vmem:[%s7529 + $0x48] sm:$0xff]
        %v7540 = vld [vmem:[%s7529 + $0x50] sm:$0xff]
        %v7541 = vld [vmem:[%s7529 + $0x58] sm:$0xf]
        %v7542 = vld [vmem:[%s7529 + $0x60] sm:$0xff]
        %v7543 = vld [vmem:[%s7529 + $0x68] sm:$0xff]
        %v7544 = vld [vmem:[%s7529 + $0x70] sm:$0xf]
        %v7545 = vld [vmem:[%s7529 + $0x78] sm:$0xff]
        %v7546 = vld [vmem:[%s7529 + $0x80] sm:$0xff]
        %v7547 = vld [vmem:[%s7529 + $0x88] sm:$0xf]
        %v7548 = vld [vmem:[%s7529 + $0x90] sm:$0xff]
        %v7549 = vld [vmem:[%s7529 + $0x98] sm:$0xff]
        %v7550 = vld [vmem:[%s7529 + $0xa0] sm:$0xf]
        %v7551 = vld [vmem:[%s7529 + $0xa8] sm:$0xff]
        %v7552 = vld [vmem:[%s7529 + $0xb0] sm:$0xff]
        %v7553 = vld [vmem:[%s7529 + $0xb8] sm:$0xf]
        %v7554 = vld [vmem:[%s7529 + $0xc0] sm:$0xff]
        %v7555 = vld [vmem:[%s7529 + $0xc8] sm:$0xff]
        %v7556 = vld [vmem:[%s7529 + $0xd0] sm:$0xf]
        %v7557 = vld [vmem:[%s7529 + $0xd8] sm:$0xff]
        %v7558 = vld [vmem:[%s7529 + $0xe0] sm:$0xff]
        %v7559 = vld [vmem:[%s7529 + $0xe8] sm:$0xf]
        %v7560 = vld [vmem:[%s7529 + $0xf0] sm:$0xff]
        %v7561 = vld [vmem:[%s7529 + $0xf8] sm:$0xff]
        %v7562 = vld [vmem:[%s7529 + $0x100] sm:$0xf]
        %v7563 = vld [vmem:[%s7529 + $0x108] sm:$0xff]
        %v7564 = vld [vmem:[%s7529 + $0x110] sm:$0xff]
        %v7565 = vld [vmem:[%s7529 + $0x118] sm:$0xf]
        %v7566 = vld [vmem:[%s7529 + $0x120] sm:$0xff]
        %v7567 = vld [vmem:[%s7529 + $0x128] sm:$0xff]
        %v7568 = vld [vmem:[%s7529 + $0x130] sm:$0xf]
        %v7569 = vld [vmem:[%s7529 + $0x138] sm:$0xff]
        %v7570 = vld [vmem:[%s7529 + $0x140] sm:$0xff]
        %v7571 = vld [vmem:[%s7529 + $0x148] sm:$0xf]
        %v7572 = vld [vmem:[%s7529 + $0x150] sm:$0xff]
        %v7573 = vld [vmem:[%s7529 + $0x158] sm:$0xff]
        %v7574 = vld [vmem:[%s7529 + $0x160] sm:$0xf]
        %v7575 = vld [vmem:[%s7529 + $0x168] sm:$0xff]
        %v7576 = vld [vmem:[%s7529 + $0x170] sm:$0xff]
        %v7577 = vld [vmem:[%s7529 + $0x178] sm:$0xf]
        %v7626 = vrot.slane %v7530, 1
        %v7627 = vrot.slane %v7531, 1
        %v7628 = vsel %vm1027, %v7626, %v7627
        %v7629 = vrot.slane %v7532, 1
        %v7630 = vsel %vm1027, %v7627, %v7629
        %v7631 = vrot.slane %v7533, 1
        %v7632 = vrot.slane %v7534, 1
        %v7633 = vsel %vm1027, %v7631, %v7632
        %v7634 = vrot.slane %v7535, 1
        %v7635 = vsel %vm1027, %v7632, %v7634
        %v7636 = vrot.slane %v7536, 1
        %v7637 = vrot.slane %v7537, 1
        %v7638 = vsel %vm1027, %v7636, %v7637
        %v7639 = vrot.slane %v7538, 1
        %v7640 = vsel %vm1027, %v7637, %v7639
        %v7641 = vrot.slane %v7539, 1
        %v7642 = vrot.slane %v7540, 1
        %v7643 = vsel %vm1027, %v7641, %v7642
        %v7644 = vrot.slane %v7541, 1
        %v7645 = vsel %vm1027, %v7642, %v7644
        %v7646 = vrot.slane %v7542, 1
        %v7647 = vrot.slane %v7543, 1
        %v7648 = vsel %vm1027, %v7646, %v7647
        %v7649 = vrot.slane %v7544, 1
        %v7650 = vsel %vm1027, %v7647, %v7649
        %v7651 = vrot.slane %v7545, 1
        %v7652 = vrot.slane %v7546, 1
        %v7653 = vsel %vm1027, %v7651, %v7652
        %v7654 = vrot.slane %v7547, 1
        %v7655 = vsel %vm1027, %v7652, %v7654
        %v7656 = vrot.slane %v7548, 1
        %v7657 = vrot.slane %v7549, 1
        %v7658 = vsel %vm1027, %v7656, %v7657
        %v7659 = vrot.slane %v7550, 1
        %v7660 = vsel %vm1027, %v7657, %v7659
        %v7661 = vrot.slane %v7551, 1
        %v7662 = vrot.slane %v7552, 1
        %v7663 = vsel %vm1027, %v7661, %v7662
        %v7664 = vrot.slane %v7553, 1
        %v7665 = vsel %vm1027, %v7662, %v7664
        %v7666 = vrot.slane %v7554, 1
        %v7667 = vrot.slane %v7555, 1
        %v7668 = vsel %vm1027, %v7666, %v7667
        %v7669 = vrot.slane %v7556, 1
        %v7670 = vsel %vm1027, %v7667, %v7669
        %v7671 = vrot.slane %v7557, 1
        %v7672 = vrot.slane %v7558, 1
        %v7673 = vsel %vm1027, %v7671, %v7672
        %v7674 = vrot.slane %v7559, 1
        %v7675 = vsel %vm1027, %v7672, %v7674
        %v7676 = vrot.slane %v7560, 1
        %v7677 = vrot.slane %v7561, 1
        %v7678 = vsel %vm1027, %v7676, %v7677
        %v7679 = vrot.slane %v7562, 1
        %v7680 = vsel %vm1027, %v7677, %v7679
        %v7681 = vrot.slane %v7563, 1
        %v7682 = vrot.slane %v7564, 1
        %v7683 = vsel %vm1027, %v7681, %v7682
        %v7684 = vrot.slane %v7565, 1
        %v7685 = vsel %vm1027, %v7682, %v7684
        %v7686 = vrot.slane %v7566, 1
        %v7687 = vrot.slane %v7567, 1
        %v7688 = vsel %vm1027, %v7686, %v7687
        %v7689 = vrot.slane %v7568, 1
        %v7690 = vsel %vm1027, %v7687, %v7689
        %v7691 = vrot.slane %v7569, 1
        %v7692 = vrot.slane %v7570, 1
        %v7693 = vsel %vm1027, %v7691, %v7692
        %v7694 = vrot.slane %v7571, 1
        %v7695 = vsel %vm1027, %v7692, %v7694
        %v7696 = vrot.slane %v7572, 1
        %v7697 = vrot.slane %v7573, 1
        %v7698 = vsel %vm1027, %v7696, %v7697
        %v7699 = vrot.slane %v7574, 1
        %v7700 = vsel %vm1027, %v7697, %v7699
        %v7701 = vrot.slane %v7575, 1
        %v7702 = vrot.slane %v7576, 1
        %v7703 = vsel %vm1027, %v7701, %v7702
        %v7704 = vrot.slane %v7577, 1
        %v7705 = vsel %vm1027, %v7702, %v7704
        %7706 = vrot.lane.b32.xlu0 %v7628, 4
        %v7707 = vpop.permute.xlu0 %7706
        %7708 = vrot.lane.b32.xlu0 %v7630, 4
        %v7709 = vpop.permute.xlu0 %7708
        %7710 = vrot.lane.b32.xlu0 %v7633, 4
        %v7711 = vpop.permute.xlu0 %7710
        %7712 = vrot.lane.b32.xlu0 %v7635, 4
        %v7713 = vpop.permute.xlu0 %7712
        %7714 = vrot.lane.b32.xlu0 %v7638, 4
        %v7715 = vpop.permute.xlu0 %7714
        %7716 = vrot.lane.b32.xlu0 %v7640, 4
        %v7717 = vpop.permute.xlu0 %7716
        %7718 = vrot.lane.b32.xlu0 %v7643, 4
        %v7719 = vpop.permute.xlu0 %7718
        %7720 = vrot.lane.b32.xlu0 %v7645, 4
        %v7721 = vpop.permute.xlu0 %7720
        %7722 = vrot.lane.b32.xlu0 %v7648, 4
        %v7723 = vpop.permute.xlu0 %7722
        %7724 = vrot.lane.b32.xlu0 %v7650, 4
        %v7725 = vpop.permute.xlu0 %7724
        %7726 = vrot.lane.b32.xlu0 %v7653, 4
        %v7727 = vpop.permute.xlu0 %7726
        %7728 = vrot.lane.b32.xlu0 %v7655, 4
        %v7729 = vpop.permute.xlu0 %7728
        %7730 = vrot.lane.b32.xlu0 %v7658, 4
        %v7731 = vpop.permute.xlu0 %7730
        %7732 = vrot.lane.b32.xlu0 %v7660, 4
        %v7733 = vpop.permute.xlu0 %7732
        %7734 = vrot.lane.b32.xlu0 %v7663, 4
        %v7735 = vpop.permute.xlu0 %7734
        %7736 = vrot.lane.b32.xlu0 %v7665, 4
        %v7737 = vpop.permute.xlu0 %7736
        %7738 = vrot.lane.b32.xlu0 %v7668, 4
        %v7739 = vpop.permute.xlu0 %7738
        %7740 = vrot.lane.b32.xlu0 %v7670, 4
        %v7741 = vpop.permute.xlu0 %7740
        %7742 = vrot.lane.b32.xlu0 %v7673, 4
        %v7743 = vpop.permute.xlu0 %7742
        %7744 = vrot.lane.b32.xlu0 %v7675, 4
        %v7745 = vpop.permute.xlu0 %7744
        %7746 = vrot.lane.b32.xlu0 %v7678, 4
        %v7747 = vpop.permute.xlu0 %7746
        %7748 = vrot.lane.b32.xlu0 %v7680, 4
        %v7749 = vpop.permute.xlu0 %7748
        %7750 = vrot.lane.b32.xlu0 %v7683, 4
        %v7751 = vpop.permute.xlu0 %7750
        %7752 = vrot.lane.b32.xlu0 %v7685, 4
        %v7753 = vpop.permute.xlu0 %7752
        %7754 = vrot.lane.b32.xlu0 %v7688, 4
        %v7755 = vpop.permute.xlu0 %7754
        %7756 = vrot.lane.b32.xlu0 %v7690, 4
        %v7757 = vpop.permute.xlu0 %7756
        %7758 = vrot.lane.b32.xlu0 %v7693, 4
        %v7759 = vpop.permute.xlu0 %7758
        %7760 = vrot.lane.b32.xlu0 %v7695, 4
        %v7761 = vpop.permute.xlu0 %7760
        %7762 = vrot.lane.b32.xlu0 %v7698, 4
        %v7763 = vpop.permute.xlu0 %7762
        %7764 = vrot.lane.b32.xlu0 %v7700, 4
        %v7765 = vpop.permute.xlu0 %7764
        %7766 = vrot.lane.b32.xlu0 %v7703, 4
        %v7767 = vpop.permute.xlu0 %7766
        %7768 = vrot.lane.b32.xlu0 %v7705, 4
        %v7769 = vpop.permute.xlu0 %7768
        %v7802 = vrot.slane %v7530, 2
        %v7803 = vrot.slane %v7531, 2
        %v7804 = vsel %vm1204, %v7802, %v7803
        %v7805 = vrot.slane %v7532, 2
        %v7806 = vsel %vm1204, %v7803, %v7805
        %v7807 = vrot.slane %v7533, 2
        %v7808 = vrot.slane %v7534, 2
        %v7809 = vsel %vm1204, %v7807, %v7808
        %v7810 = vrot.slane %v7535, 2
        %v7811 = vsel %vm1204, %v7808, %v7810
        %v7812 = vrot.slane %v7536, 2
        %v7813 = vrot.slane %v7537, 2
        %v7814 = vsel %vm1204, %v7812, %v7813
        %v7815 = vrot.slane %v7538, 2
        %v7816 = vsel %vm1204, %v7813, %v7815
        %v7817 = vrot.slane %v7539, 2
        %v7818 = vrot.slane %v7540, 2
        %v7819 = vsel %vm1204, %v7817, %v7818
        %v7820 = vrot.slane %v7541, 2
        %v7821 = vsel %vm1204, %v7818, %v7820
        %v7822 = vrot.slane %v7542, 2
        %v7823 = vrot.slane %v7543, 2
        %v7824 = vsel %vm1204, %v7822, %v7823
        %v7825 = vrot.slane %v7544, 2
        %v7826 = vsel %vm1204, %v7823, %v7825
        %v7827 = vrot.slane %v7545, 2
        %v7828 = vrot.slane %v7546, 2
        %v7829 = vsel %vm1204, %v7827, %v7828
        %v7830 = vrot.slane %v7547, 2
        %v7831 = vsel %vm1204, %v7828, %v7830
        %v7832 = vrot.slane %v7548, 2
        %v7833 = vrot.slane %v7549, 2
        %v7834 = vsel %vm1204, %v7832, %v7833
        %v7835 = vrot.slane %v7550, 2
        %v7836 = vsel %vm1204, %v7833, %v7835
        %v7837 = vrot.slane %v7551, 2
        %v7838 = vrot.slane %v7552, 2
        %v7839 = vsel %vm1204, %v7837, %v7838
        %v7840 = vrot.slane %v7553, 2
        %v7841 = vsel %vm1204, %v7838, %v7840
        %v7842 = vrot.slane %v7554, 2
        %v7843 = vrot.slane %v7555, 2
        %v7844 = vsel %vm1204, %v7842, %v7843
        %v7845 = vrot.slane %v7556, 2
        %v7846 = vsel %vm1204, %v7843, %v7845
        %v7847 = vrot.slane %v7557, 2
        %v7848 = vrot.slane %v7558, 2
        %v7849 = vsel %vm1204, %v7847, %v7848
        %v7850 = vrot.slane %v7559, 2
        %v7851 = vsel %vm1204, %v7848, %v7850
        %v7852 = vrot.slane %v7560, 2
        %v7853 = vrot.slane %v7561, 2
        %v7854 = vsel %vm1204, %v7852, %v7853
        %v7855 = vrot.slane %v7562, 2
        %v7856 = vsel %vm1204, %v7853, %v7855
        %v7857 = vrot.slane %v7563, 2
        %v7858 = vrot.slane %v7564, 2
        %v7859 = vsel %vm1204, %v7857, %v7858
        %v7860 = vrot.slane %v7565, 2
        %v7861 = vsel %vm1204, %v7858, %v7860
        %v7862 = vrot.slane %v7566, 2
        %v7863 = vrot.slane %v7567, 2
        %v7864 = vsel %vm1204, %v7862, %v7863
        %v7865 = vrot.slane %v7568, 2
        %v7866 = vsel %vm1204, %v7863, %v7865
        %v7867 = vrot.slane %v7569, 2
        %v7868 = vrot.slane %v7570, 2
        %v7869 = vsel %vm1204, %v7867, %v7868
        %v7870 = vrot.slane %v7571, 2
        %v7871 = vsel %vm1204, %v7868, %v7870
        %v7872 = vrot.slane %v7572, 2
        %v7873 = vrot.slane %v7573, 2
        %v7874 = vsel %vm1204, %v7872, %v7873
        %v7875 = vrot.slane %v7574, 2
        %v7876 = vsel %vm1204, %v7873, %v7875
        %v7877 = vrot.slane %v7575, 2
        %v7878 = vrot.slane %v7576, 2
        %v7879 = vsel %vm1204, %v7877, %v7878
        %v7880 = vrot.slane %v7577, 2
        %v7881 = vsel %vm1204, %v7878, %v7880
        %7882 = vrot.lane.b32.xlu0 %v7804, 8
        %v7883 = vpop.permute.xlu0 %7882
        %7884 = vrot.lane.b32.xlu0 %v7806, 8
        %v7885 = vpop.permute.xlu0 %7884
        %7886 = vrot.lane.b32.xlu0 %v7809, 8
        %v7887 = vpop.permute.xlu0 %7886
        %7888 = vrot.lane.b32.xlu0 %v7811, 8
        %v7889 = vpop.permute.xlu0 %7888
        %7890 = vrot.lane.b32.xlu0 %v7814, 8
        %v7891 = vpop.permute.xlu0 %7890
        %7892 = vrot.lane.b32.xlu0 %v7816, 8
        %v7893 = vpop.permute.xlu0 %7892
        %7894 = vrot.lane.b32.xlu0 %v7819, 8
        %v7895 = vpop.permute.xlu0 %7894
        %7896 = vrot.lane.b32.xlu0 %v7821, 8
        %v7897 = vpop.permute.xlu0 %7896
        %7898 = vrot.lane.b32.xlu0 %v7824, 8
        %v7899 = vpop.permute.xlu0 %7898
        %7900 = vrot.lane.b32.xlu0 %v7826, 8
        %v7901 = vpop.permute.xlu0 %7900
        %7902 = vrot.lane.b32.xlu0 %v7829, 8
        %v7903 = vpop.permute.xlu0 %7902
        %7904 = vrot.lane.b32.xlu0 %v7831, 8
        %v7905 = vpop.permute.xlu0 %7904
        %7906 = vrot.lane.b32.xlu0 %v7834, 8
        %v7907 = vpop.permute.xlu0 %7906
        %7908 = vrot.lane.b32.xlu0 %v7836, 8
        %v7909 = vpop.permute.xlu0 %7908
        %7910 = vrot.lane.b32.xlu0 %v7839, 8
        %v7911 = vpop.permute.xlu0 %7910
        %7912 = vrot.lane.b32.xlu0 %v7841, 8
        %v7913 = vpop.permute.xlu0 %7912
        %7914 = vrot.lane.b32.xlu0 %v7844, 8
        %v7915 = vpop.permute.xlu0 %7914
        %7916 = vrot.lane.b32.xlu0 %v7846, 8
        %v7917 = vpop.permute.xlu0 %7916
        %7918 = vrot.lane.b32.xlu0 %v7849, 8
        %v7919 = vpop.permute.xlu0 %7918
        %7920 = vrot.lane.b32.xlu0 %v7851, 8
        %v7921 = vpop.permute.xlu0 %7920
        %7922 = vrot.lane.b32.xlu0 %v7854, 8
        %v7923 = vpop.permute.xlu0 %7922
        %7924 = vrot.lane.b32.xlu0 %v7856, 8
        %v7925 = vpop.permute.xlu0 %7924
        %7926 = vrot.lane.b32.xlu0 %v7859, 8
        %v7927 = vpop.permute.xlu0 %7926
        %7928 = vrot.lane.b32.xlu0 %v7861, 8
        %v7929 = vpop.permute.xlu0 %7928
        %7930 = vrot.lane.b32.xlu0 %v7864, 8
        %v7931 = vpop.permute.xlu0 %7930
        %7932 = vrot.lane.b32.xlu0 %v7866, 8
        %v7933 = vpop.permute.xlu0 %7932
        %7934 = vrot.lane.b32.xlu0 %v7869, 8
        %v7935 = vpop.permute.xlu0 %7934
        %7936 = vrot.lane.b32.xlu0 %v7871, 8
        %v7937 = vpop.permute.xlu0 %7936
        %7938 = vrot.lane.b32.xlu0 %v7874, 8
        %v7939 = vpop.permute.xlu0 %7938
        %7940 = vrot.lane.b32.xlu0 %v7876, 8
        %v7941 = vpop.permute.xlu0 %7940
        %7942 = vrot.lane.b32.xlu0 %v7879, 8
        %v7943 = vpop.permute.xlu0 %7942
        %7944 = vrot.lane.b32.xlu0 %v7881, 8
        %v7945 = vpop.permute.xlu0 %7944
        %v7978 = vrot.slane %v7530, 3
        %v7979 = vrot.slane %v7531, 3
        %v7980 = vsel %vm4176, %v7978, %v7979
        %v7981 = vrot.slane %v7532, 3
        %v7982 = vsel %vm4176, %v7979, %v7981
        %v7983 = vrot.slane %v7533, 3
        %v7984 = vrot.slane %v7534, 3
        %v7985 = vsel %vm4176, %v7983, %v7984
        %v7986 = vrot.slane %v7535, 3
        %v7987 = vsel %vm4176, %v7984, %v7986
        %v7988 = vrot.slane %v7536, 3
        %v7989 = vrot.slane %v7537, 3
        %v7990 = vsel %vm4176, %v7988, %v7989
        %v7991 = vrot.slane %v7538, 3
        %v7992 = vsel %vm4176, %v7989, %v7991
        %v7993 = vrot.slane %v7539, 3
        %v7994 = vrot.slane %v7540, 3
        %v7995 = vsel %vm4176, %v7993, %v7994
        %v7996 = vrot.slane %v7541, 3
        %v7997 = vsel %vm4176, %v7994, %v7996
        %v7998 = vrot.slane %v7542, 3
        %v7999 = vrot.slane %v7543, 3
        %v8000 = vsel %vm4176, %v7998, %v7999
        %v8001 = vrot.slane %v7544, 3
        %v8002 = vsel %vm4176, %v7999, %v8001
        %v8003 = vrot.slane %v7545, 3
        %v8004 = vrot.slane %v7546, 3
        %v8005 = vsel %vm4176, %v8003, %v8004
        %v8006 = vrot.slane %v7547, 3
        %v8007 = vsel %vm4176, %v8004, %v8006
        %v8008 = vrot.slane %v7548, 3
        %v8009 = vrot.slane %v7549, 3
        %v8010 = vsel %vm4176, %v8008, %v8009
        %v8011 = vrot.slane %v7550, 3
        %v8012 = vsel %vm4176, %v8009, %v8011
        %v8013 = vrot.slane %v7551, 3
        %v8014 = vrot.slane %v7552, 3
        %v8015 = vsel %vm4176, %v8013, %v8014
        %v8016 = vrot.slane %v7553, 3
        %v8017 = vsel %vm4176, %v8014, %v8016
        %v8018 = vrot.slane %v7554, 3
        %v8019 = vrot.slane %v7555, 3
        %v8020 = vsel %vm4176, %v8018, %v8019
        %v8021 = vrot.slane %v7556, 3
        %v8022 = vsel %vm4176, %v8019, %v8021
        %v8023 = vrot.slane %v7557, 3
        %v8024 = vrot.slane %v7558, 3
        %v8025 = vsel %vm4176, %v8023, %v8024
        %v8026 = vrot.slane %v7559, 3
        %v8027 = vsel %vm4176, %v8024, %v8026
        %v8028 = vrot.slane %v7560, 3
        %v8029 = vrot.slane %v7561, 3
        %v8030 = vsel %vm4176, %v8028, %v8029
        %v8031 = vrot.slane %v7562, 3
        %v8032 = vsel %vm4176, %v8029, %v8031
        %v8033 = vrot.slane %v7563, 3
        %v8034 = vrot.slane %v7564, 3
        %v8035 = vsel %vm4176, %v8033, %v8034
        %v8036 = vrot.slane %v7565, 3
        %v8037 = vsel %vm4176, %v8034, %v8036
        %v8038 = vrot.slane %v7566, 3
        %v8039 = vrot.slane %v7567, 3
        %v8040 = vsel %vm4176, %v8038, %v8039
        %v8041 = vrot.slane %v7568, 3
        %v8042 = vsel %vm4176, %v8039, %v8041
        %v8043 = vrot.slane %v7569, 3
        %v8044 = vrot.slane %v7570, 3
        %v8045 = vsel %vm4176, %v8043, %v8044
        %v8046 = vrot.slane %v7571, 3
        %v8047 = vsel %vm4176, %v8044, %v8046
        %v8048 = vrot.slane %v7572, 3
        %v8049 = vrot.slane %v7573, 3
        %v8050 = vsel %vm4176, %v8048, %v8049
        %v8051 = vrot.slane %v7574, 3
        %v8052 = vsel %vm4176, %v8049, %v8051
        %v8053 = vrot.slane %v7575, 3
        %v8054 = vrot.slane %v7576, 3
        %v8055 = vsel %vm4176, %v8053, %v8054
        %v8056 = vrot.slane %v7577, 3
        %v8057 = vsel %vm4176, %v8054, %v8056
        %8058 = vrot.lane.b32.xlu0 %v7980, 12
        %v8059 = vpop.permute.xlu0 %8058
        %8060 = vrot.lane.b32.xlu0 %v7982, 12
        %v8061 = vpop.permute.xlu0 %8060
        %8062 = vrot.lane.b32.xlu0 %v7985, 12
        %v8063 = vpop.permute.xlu0 %8062
        %8064 = vrot.lane.b32.xlu0 %v7987, 12
        %v8065 = vpop.permute.xlu0 %8064
        %8066 = vrot.lane.b32.xlu0 %v7990, 12
        %v8067 = vpop.permute.xlu0 %8066
        %8068 = vrot.lane.b32.xlu0 %v7992, 12
        %v8069 = vpop.permute.xlu0 %8068
        %8070 = vrot.lane.b32.xlu0 %v7995, 12
        %v8071 = vpop.permute.xlu0 %8070
        %8072 = vrot.lane.b32.xlu0 %v7997, 12
        %v8073 = vpop.permute.xlu0 %8072
        %8074 = vrot.lane.b32.xlu0 %v8000, 12
        %v8075 = vpop.permute.xlu0 %8074
        %8076 = vrot.lane.b32.xlu0 %v8002, 12
        %v8077 = vpop.permute.xlu0 %8076
        %8078 = vrot.lane.b32.xlu0 %v8005, 12
        %v8079 = vpop.permute.xlu0 %8078
        %8080 = vrot.lane.b32.xlu0 %v8007, 12
        %v8081 = vpop.permute.xlu0 %8080
        %8082 = vrot.lane.b32.xlu0 %v8010, 12
        %v8083 = vpop.permute.xlu0 %8082
        %8084 = vrot.lane.b32.xlu0 %v8012, 12
        %v8085 = vpop.permute.xlu0 %8084
        %8086 = vrot.lane.b32.xlu0 %v8015, 12
        %v8087 = vpop.permute.xlu0 %8086
        %8088 = vrot.lane.b32.xlu0 %v8017, 12
        %v8089 = vpop.permute.xlu0 %8088
        %8090 = vrot.lane.b32.xlu0 %v8020, 12
        %v8091 = vpop.permute.xlu0 %8090
        %8092 = vrot.lane.b32.xlu0 %v8022, 12
        %v8093 = vpop.permute.xlu0 %8092
        %8094 = vrot.lane.b32.xlu0 %v8025, 12
        %v8095 = vpop.permute.xlu0 %8094
        %8096 = vrot.lane.b32.xlu0 %v8027, 12
        %v8097 = vpop.permute.xlu0 %8096
        %8098 = vrot.lane.b32.xlu0 %v8030, 12
        %v8099 = vpop.permute.xlu0 %8098
        %8100 = vrot.lane.b32.xlu0 %v8032, 12
        %v8101 = vpop.permute.xlu0 %8100
        %8102 = vrot.lane.b32.xlu0 %v8035, 12
        %v8103 = vpop.permute.xlu0 %8102
        %8104 = vrot.lane.b32.xlu0 %v8037, 12
        %v8105 = vpop.permute.xlu0 %8104
        %8106 = vrot.lane.b32.xlu0 %v8040, 12
        %v8107 = vpop.permute.xlu0 %8106
        %8108 = vrot.lane.b32.xlu0 %v8042, 12
        %v8109 = vpop.permute.xlu0 %8108
        %8110 = vrot.lane.b32.xlu0 %v8045, 12
        %v8111 = vpop.permute.xlu0 %8110
        %8112 = vrot.lane.b32.xlu0 %v8047, 12
        %v8113 = vpop.permute.xlu0 %8112
        %8114 = vrot.lane.b32.xlu0 %v8050, 12
        %v8115 = vpop.permute.xlu0 %8114
        %8116 = vrot.lane.b32.xlu0 %v8052, 12
        %v8117 = vpop.permute.xlu0 %8116
        %8118 = vrot.lane.b32.xlu0 %v8055, 12
        %v8119 = vpop.permute.xlu0 %8118
        %8120 = vrot.lane.b32.xlu0 %v8057, 12
        %v8121 = vpop.permute.xlu0 %8120
        %v8154 = vrot.slane %v7530, 4
        %v8155 = vrot.slane %v7531, 4
        %v8156 = vsel %vm468, %v8154, %v8155
        %v8157 = vrot.slane %v7532, 4
        %v8158 = vsel %vm468, %v8155, %v8157
        %v8159 = vrot.slane %v7533, 4
        %v8160 = vrot.slane %v7534, 4
        %v8161 = vsel %vm468, %v8159, %v8160
        %v8162 = vrot.slane %v7535, 4
        %v8163 = vsel %vm468, %v8160, %v8162
        %v8164 = vrot.slane %v7536, 4
        %v8165 = vrot.slane %v7537, 4
        %v8166 = vsel %vm468, %v8164, %v8165
        %v8167 = vrot.slane %v7538, 4
        %v8168 = vsel %vm468, %v8165, %v8167
        %v8169 = vrot.slane %v7539, 4
        %v8170 = vrot.slane %v7540, 4
        %v8171 = vsel %vm468, %v8169, %v8170
        %v8172 = vrot.slane %v7541, 4
        %v8173 = vsel %vm468, %v8170, %v8172
        %v8174 = vrot.slane %v7542, 4
        %v8175 = vrot.slane %v7543, 4
        %v8176 = vsel %vm468, %v8174, %v8175
        %v8177 = vrot.slane %v7544, 4
        %v8178 = vsel %vm468, %v8175, %v8177
        %v8179 = vrot.slane %v7545, 4
        %v8180 = vrot.slane %v7546, 4
        %v8181 = vsel %vm468, %v8179, %v8180
        %v8182 = vrot.slane %v7547, 4
        %v8183 = vsel %vm468, %v8180, %v8182
        %v8184 = vrot.slane %v7548, 4
        %v8185 = vrot.slane %v7549, 4
        %v8186 = vsel %vm468, %v8184, %v8185
        %v8187 = vrot.slane %v7550, 4
        %v8188 = vsel %vm468, %v8185, %v8187
        %v8189 = vrot.slane %v7551, 4
        %v8190 = vrot.slane %v7552, 4
        %v8191 = vsel %vm468, %v8189, %v8190
        %v8192 = vrot.slane %v7553, 4
        %v8193 = vsel %vm468, %v8190, %v8192
        %v8194 = vrot.slane %v7554, 4
        %v8195 = vrot.slane %v7555, 4
        %v8196 = vsel %vm468, %v8194, %v8195
        %v8197 = vrot.slane %v7556, 4
        %v8198 = vsel %vm468, %v8195, %v8197
        %v8199 = vrot.slane %v7557, 4
        %v8200 = vrot.slane %v7558, 4
        %v8201 = vsel %vm468, %v8199, %v8200
        %v8202 = vrot.slane %v7559, 4
        %v8203 = vsel %vm468, %v8200, %v8202
        %v8204 = vrot.slane %v7560, 4
        %v8205 = vrot.slane %v7561, 4
        %v8206 = vsel %vm468, %v8204, %v8205
        %v8207 = vrot.slane %v7562, 4
        %v8208 = vsel %vm468, %v8205, %v8207
        %v8209 = vrot.slane %v7563, 4
        %v8210 = vrot.slane %v7564, 4
        %v8211 = vsel %vm468, %v8209, %v8210
        %v8212 = vrot.slane %v7565, 4
        %v8213 = vsel %vm468, %v8210, %v8212
        %v8214 = vrot.slane %v7566, 4
        %v8215 = vrot.slane %v7567, 4
        %v8216 = vsel %vm468, %v8214, %v8215
        %v8217 = vrot.slane %v7568, 4
        %v8218 = vsel %vm468, %v8215, %v8217
        %v8219 = vrot.slane %v7569, 4
        %v8220 = vrot.slane %v7570, 4
        %v8221 = vsel %vm468, %v8219, %v8220
        %v8222 = vrot.slane %v7571, 4
        %v8223 = vsel %vm468, %v8220, %v8222
        %v8224 = vrot.slane %v7572, 4
        %v8225 = vrot.slane %v7573, 4
        %v8226 = vsel %vm468, %v8224, %v8225
        %v8227 = vrot.slane %v7574, 4
        %v8228 = vsel %vm468, %v8225, %v8227
        %v8229 = vrot.slane %v7575, 4
        %v8230 = vrot.slane %v7576, 4
        %v8231 = vsel %vm468, %v8229, %v8230
        %v8232 = vrot.slane %v7577, 4
        %v8233 = vsel %vm468, %v8230, %v8232
        %8234 = vrot.lane.b32.xlu0 %v8156, 16
        %v8235 = vpop.permute.xlu0 %8234
        %8236 = vrot.lane.b32.xlu0 %v8158, 16
        %v8237 = vpop.permute.xlu0 %8236
        %8238 = vrot.lane.b32.xlu0 %v8161, 16
        %v8239 = vpop.permute.xlu0 %8238
        %8240 = vrot.lane.b32.xlu0 %v8163, 16
        %v8241 = vpop.permute.xlu0 %8240
        %8242 = vrot.lane.b32.xlu0 %v8166, 16
        %v8243 = vpop.permute.xlu0 %8242
        %8244 = vrot.lane.b32.xlu0 %v8168, 16
        %v8245 = vpop.permute.xlu0 %8244
        %8246 = vrot.lane.b32.xlu0 %v8171, 16
        %v8247 = vpop.permute.xlu0 %8246
        %8248 = vrot.lane.b32.xlu0 %v8173, 16
        %v8249 = vpop.permute.xlu0 %8248
        %8250 = vrot.lane.b32.xlu0 %v8176, 16
        %v8251 = vpop.permute.xlu0 %8250
        %8252 = vrot.lane.b32.xlu0 %v8178, 16
        %v8253 = vpop.permute.xlu0 %8252
        %8254 = vrot.lane.b32.xlu0 %v8181, 16
        %v8255 = vpop.permute.xlu0 %8254
        %8256 = vrot.lane.b32.xlu0 %v8183, 16
        %v8257 = vpop.permute.xlu0 %8256
        %8258 = vrot.lane.b32.xlu0 %v8186, 16
        %v8259 = vpop.permute.xlu0 %8258
        %8260 = vrot.lane.b32.xlu0 %v8188, 16
        %v8261 = vpop.permute.xlu0 %8260
        %8262 = vrot.lane.b32.xlu0 %v8191, 16
        %v8263 = vpop.permute.xlu0 %8262
        %8264 = vrot.lane.b32.xlu0 %v8193, 16
        %v8265 = vpop.permute.xlu0 %8264
        %8266 = vrot.lane.b32.xlu0 %v8196, 16
        %v8267 = vpop.permute.xlu0 %8266
        %8268 = vrot.lane.b32.xlu0 %v8198, 16
        %v8269 = vpop.permute.xlu0 %8268
        %8270 = vrot.lane.b32.xlu0 %v8201, 16
        %v8271 = vpop.permute.xlu0 %8270
        %8272 = vrot.lane.b32.xlu0 %v8203, 16
        %v8273 = vpop.permute.xlu0 %8272
        %8274 = vrot.lane.b32.xlu0 %v8206, 16
        %v8275 = vpop.permute.xlu0 %8274
        %8276 = vrot.lane.b32.xlu0 %v8208, 16
        %v8277 = vpop.permute.xlu0 %8276
        %8278 = vrot.lane.b32.xlu0 %v8211, 16
        %v8279 = vpop.permute.xlu0 %8278
        %8280 = vrot.lane.b32.xlu0 %v8213, 16
        %v8281 = vpop.permute.xlu0 %8280
        %8282 = vrot.lane.b32.xlu0 %v8216, 16
        %v8283 = vpop.permute.xlu0 %8282
        %8284 = vrot.lane.b32.xlu0 %v8218, 16
        %v8285 = vpop.permute.xlu0 %8284
        %8286 = vrot.lane.b32.xlu0 %v8221, 16
        %v8287 = vpop.permute.xlu0 %8286
        %8288 = vrot.lane.b32.xlu0 %v8223, 16
        %v8289 = vpop.permute.xlu0 %8288
        %8290 = vrot.lane.b32.xlu0 %v8226, 16
        %v8291 = vpop.permute.xlu0 %8290
        %8292 = vrot.lane.b32.xlu0 %v8228, 16
        %v8293 = vpop.permute.xlu0 %8292
        %8294 = vrot.lane.b32.xlu0 %v8231, 16
        %v8295 = vpop.permute.xlu0 %8294
        %8296 = vrot.lane.b32.xlu0 %v8233, 16
        %v8297 = vpop.permute.xlu0 %8296
        %v8330 = vsel %vm371, %v7530, %v7707
        %v8331 = vsel %vm371, %v7531, %v7709
        %v8332 = vsel %vm371, %v7533, %v7711
        %v8333 = vsel %vm371, %v7534, %v7713
        %v8334 = vsel %vm371, %v7536, %v7715
        %v8335 = vsel %vm371, %v7537, %v7717
        %v8336 = vsel %vm371, %v7539, %v7719
        %v8337 = vsel %vm371, %v7540, %v7721
        %v8338 = vsel %vm371, %v7542, %v7723
        %v8339 = vsel %vm371, %v7543, %v7725
        %v8340 = vsel %vm371, %v7545, %v7727
        %v8341 = vsel %vm371, %v7546, %v7729
        %v8342 = vsel %vm371, %v7548, %v7731
        %v8343 = vsel %vm371, %v7549, %v7733
        %v8344 = vsel %vm371, %v7551, %v7735
        %v8345 = vsel %vm371, %v7552, %v7737
        %v8346 = vsel %vm371, %v7554, %v7739
        %v8347 = vsel %vm371, %v7555, %v7741
        %v8348 = vsel %vm371, %v7557, %v7743
        %v8349 = vsel %vm371, %v7558, %v7745
        %v8350 = vsel %vm371, %v7560, %v7747
        %v8351 = vsel %vm371, %v7561, %v7749
        %v8352 = vsel %vm371, %v7563, %v7751
        %v8353 = vsel %vm371, %v7564, %v7753
        %v8354 = vsel %vm371, %v7566, %v7755
        %v8355 = vsel %vm371, %v7567, %v7757
        %v8356 = vsel %vm371, %v7569, %v7759
        %v8357 = vsel %vm371, %v7570, %v7761
        %v8358 = vsel %vm371, %v7572, %v7763
        %v8359 = vsel %vm371, %v7573, %v7765
        %v8360 = vsel %vm371, %v7575, %v7767
        %v8361 = vsel %vm371, %v7576, %v7769
        %v8362 = vsel %vm1413, %v8330, %v7883
        %v8363 = vsel %vm1413, %v8331, %v7885
        %v8364 = vsel %vm1413, %v8332, %v7887
        %v8365 = vsel %vm1413, %v8333, %v7889
        %v8366 = vsel %vm1413, %v8334, %v7891
        %v8367 = vsel %vm1413, %v8335, %v7893
        %v8368 = vsel %vm1413, %v8336, %v7895
        %v8369 = vsel %vm1413, %v8337, %v7897
        %v8370 = vsel %vm1413, %v8338, %v7899
        %v8371 = vsel %vm1413, %v8339, %v7901
        %v8372 = vsel %vm1413, %v8340, %v7903
        %v8373 = vsel %vm1413, %v8341, %v7905
        %v8374 = vsel %vm1413, %v8342, %v7907
        %v8375 = vsel %vm1413, %v8343, %v7909
        %v8376 = vsel %vm1413, %v8344, %v7911
        %v8377 = vsel %vm1413, %v8345, %v7913
        %v8378 = vsel %vm1413, %v8346, %v7915
        %v8379 = vsel %vm1413, %v8347, %v7917
        %v8380 = vsel %vm1413, %v8348, %v7919
        %v8381 = vsel %vm1413, %v8349, %v7921
        %v8382 = vsel %vm1413, %v8350, %v7923
        %v8383 = vsel %vm1413, %v8351, %v7925
        %v8384 = vsel %vm1413, %v8352, %v7927
        %v8385 = vsel %vm1413, %v8353, %v7929
        %v8386 = vsel %vm1413, %v8354, %v7931
        %v8387 = vsel %vm1413, %v8355, %v7933
        %v8388 = vsel %vm1413, %v8356, %v7935
        %v8389 = vsel %vm1413, %v8357, %v7937
        %v8390 = vsel %vm1413, %v8358, %v7939
        %v8391 = vsel %vm1413, %v8359, %v7941
        %v8392 = vsel %vm1413, %v8360, %v7943
        %v8393 = vsel %vm1413, %v8361, %v7945
        %v8394 = vsel %vm1962, %v8362, %v8059
        %v8395 = vsel %vm1962, %v8363, %v8061
        %v8396 = vsel %vm1962, %v8364, %v8063
        %v8397 = vsel %vm1962, %v8365, %v8065
        %v8398 = vsel %vm1962, %v8366, %v8067
        %v8399 = vsel %vm1962, %v8367, %v8069
        %v8400 = vsel %vm1962, %v8368, %v8071
        %v8401 = vsel %vm1962, %v8369, %v8073
        %v8402 = vsel %vm1962, %v8370, %v8075
        %v8403 = vsel %vm1962, %v8371, %v8077
        %v8404 = vsel %vm1962, %v8372, %v8079
        %v8405 = vsel %vm1962, %v8373, %v8081
        %v8406 = vsel %vm1962, %v8374, %v8083
        %v8407 = vsel %vm1962, %v8375, %v8085
        %v8408 = vsel %vm1962, %v8376, %v8087
        %v8409 = vsel %vm1962, %v8377, %v8089
        %v8410 = vsel %vm1962, %v8378, %v8091
        %v8411 = vsel %vm1962, %v8379, %v8093
        %v8412 = vsel %vm1962, %v8380, %v8095
        %v8413 = vsel %vm1962, %v8381, %v8097
        %v8414 = vsel %vm1962, %v8382, %v8099
        %v8415 = vsel %vm1962, %v8383, %v8101
        %v8416 = vsel %vm1962, %v8384, %v8103
        %v8417 = vsel %vm1962, %v8385, %v8105
        %v8418 = vsel %vm1962, %v8386, %v8107
        %v8419 = vsel %vm1962, %v8387, %v8109
        %v8420 = vsel %vm1962, %v8388, %v8111
        %v8421 = vsel %vm1962, %v8389, %v8113
        %v8422 = vsel %vm1962, %v8390, %v8115
        %v8423 = vsel %vm1962, %v8391, %v8117
        %v8424 = vsel %vm1962, %v8392, %v8119
        %v8425 = vsel %vm1962, %v8393, %v8121
        %v8426 = vsel %vm4625, %v8394, %v8235
        %v8427 = vsel %vm4625, %v8395, %v8237
        %v8428 = vsel %vm4625, %v8396, %v8239
        %v8429 = vsel %vm4625, %v8397, %v8241
        %v8430 = vsel %vm4625, %v8398, %v8243
        %v8431 = vsel %vm4625, %v8399, %v8245
        %v8432 = vsel %vm4625, %v8400, %v8247
        %v8433 = vsel %vm4625, %v8401, %v8249
        %v8434 = vsel %vm4625, %v8402, %v8251
        %v8435 = vsel %vm4625, %v8403, %v8253
        %v8436 = vsel %vm4625, %v8404, %v8255
        %v8437 = vsel %vm4625, %v8405, %v8257
        %v8438 = vsel %vm4625, %v8406, %v8259
        %v8439 = vsel %vm4625, %v8407, %v8261
        %v8440 = vsel %vm4625, %v8408, %v8263
        %v8441 = vsel %vm4625, %v8409, %v8265
        %v8442 = vsel %vm4625, %v8410, %v8267
        %v8443 = vsel %vm4625, %v8411, %v8269
        %v8444 = vsel %vm4625, %v8412, %v8271
        %v8445 = vsel %vm4625, %v8413, %v8273
        %v8446 = vsel %vm4625, %v8414, %v8275
        %v8447 = vsel %vm4625, %v8415, %v8277
        %v8448 = vsel %vm4625, %v8416, %v8279
        %v8449 = vsel %vm4625, %v8417, %v8281
        %v8450 = vsel %vm4625, %v8418, %v8283
        %v8451 = vsel %vm4625, %v8419, %v8285
        %v8452 = vsel %vm4625, %v8420, %v8287
        %v8453 = vsel %vm4625, %v8421, %v8289
        %v8454 = vsel %vm4625, %v8422, %v8291
        %v8455 = vsel %vm4625, %v8423, %v8293
        %v8456 = vsel %vm4625, %v8424, %v8295
        %v8457 = vsel %vm4625, %v8425, %v8297
        %v8458 = vld [vmem:[%s5 + $0x3c] sm:$0xff]
        %v8459 = vld [vmem:[%s5 + $0x44] sm:$0xff]
        %v8460 = vld [vmem:[%s5 + $0x4c] sm:$0xf]
        %v8462 = vsel %vm5593, %v8426, 0
        %v8465 = vsel %vm5593, %v8427, 0
        %v8468 = vsel %vm5593, %v8428, 0
        %v8471 = vsel %vm5593, %v8429, 0
        %v8474 = vsel %vm5593, %v8430, 0
        %v8477 = vsel %vm5593, %v8431, 0
        %v8480 = vsel %vm5593, %v8432, 0
        %v8483 = vsel %vm5593, %v8433, 0
        %v8486 = vsel %vm5593, %v8434, 0
        %v8489 = vsel %vm5593, %v8435, 0
        %v8492 = vsel %vm5593, %v8436, 0
        %v8495 = vsel %vm5593, %v8437, 0
        %v8498 = vsel %vm5593, %v8438, 0
        %v8501 = vsel %vm5593, %v8439, 0
        %v8504 = vsel %vm5593, %v8440, 0
        %v8507 = vsel %vm5593, %v8441, 0
        %v8510 = vsel %vm5593, %v8442, 0
        %v8513 = vsel %vm5593, %v8443, 0
        %v8516 = vsel %vm5593, %v8444, 0
        %v8519 = vsel %vm5593, %v8445, 0
        %v8522 = vsel %vm5593, %v8446, 0
        %v8525 = vsel %vm5593, %v8447, 0
        %v8528 = vsel %vm5593, %v8448, 0
        %v8531 = vsel %vm5593, %v8449, 0
        %v8534 = vsel %vm5593, %v8450, 0
        %v8537 = vsel %vm5593, %v8451, 0
        %v8540 = vsel %vm5593, %v8452, 0
        %v8543 = vsel %vm5593, %v8453, 0
        %v8546 = vsel %vm5593, %v8454, 0
        %v8549 = vsel %vm5593, %v8455, 0
        %v8552 = vsel %vm5593, %v8456, 0
        %v8555 = vsel %vm5593, %v8457, 0
        %v8558 = vsel %vm468, %v8460, 0
        %8560 = vmatprep.subr.mxu0 0.0
        %8561 = vmatpush1.msra.mxu0 %v8458
        %8562 = vmatprep.subr.mxu0 0.0
        %8563 = vmatpush1.msra.mxu0 %v8459
        %8564 = vmatprep.subr.mxu0 0.0
        %8565 = vmatpush1.msra.mxu0 %v8558
        %8566 = vmatprep.subr.mxu0 0.0
        %8567 = vmatpush1.msra.mxu0 0.0
        %8568 = vmatprep.subr.mxu0 0.0
        %8569 = vmatpush1.msra.mxu0 0.0
        %8570 = vmatprep.subr.mxu0 0.0
        %8571 = vmatpush1.msra.mxu0 0.0
        %8572 = vmatprep.subr.mxu0 0.0
        %8573 = vmatpush1.msra.mxu0 0.0
        %8574 = vmatprep.subr.mxu0 0.0
        %8575 = vmatpush1.msra.mxu0 0.0
        %8576 = vmatprep.subr.mxu0 0.0
        %8577 = vmatpush1.msra.mxu0 0.0
        %8578 = vmatprep.subr.mxu0 0.0
        %8579 = vmatpush1.msra.mxu0 0.0
        %8580 = vmatprep.subr.mxu0 0.0
        %8581 = vmatpush1.msra.mxu0 0.0
        %8582 = vmatprep.subr.mxu0 0.0
        %8583 = vmatpush1.msra.mxu0 0.0
        %8584 = vmatprep.subr.mxu0 0.0
        %8585 = vmatpush1.msra.mxu0 0.0
        %8586 = vmatprep.subr.mxu0 0.0
        %8587 = vmatpush1.msra.mxu0 0.0
        %8588 = vmatprep.subr.mxu0 0.0
        %8589 = vmatpush1.msra.mxu0 0.0
        %8590 = vmatprep.subr.mxu0 0.0
        %8591 = vmatpush1.msra.mxu0 0.0
        %8592 = vmatprep.subr.mxu0 0.0
        %8593 = vmatpush1.msra.mxu0 0.0
        %8594 = vmatprep.subr.mxu0 0.0
        %8595 = vmatpush1.msra.mxu0 0.0
        %8596 = vmatprep.subr.mxu0 0.0
        %8597 = vmatpush1.msra.mxu0 0.0
        %8598 = vmatprep.subr.mxu0 0.0
        %8599 = vmatpush1.msra.mxu0 0.0
        %8600 = vmatprep.subr.mxu0 0.0
        %8601 = vmatpush1.msra.mxu0 0.0
        %8602 = vmatprep.subr.mxu0 0.0
        %8603 = vmatpush1.msra.mxu0 0.0
        %8604 = vmatprep.subr.mxu0 0.0
        %8605 = vmatpush1.msra.mxu0 0.0
        %8606 = vmatprep.subr.mxu0 0.0
        %8607 = vmatpush1.msra.mxu0 0.0
        %8608 = vmatprep.subr.mxu0 0.0
        %8609 = vmatpush1.msra.mxu0 0.0
        %8610 = vmatprep.subr.mxu0 0.0
        %8611 = vmatpush1.msra.mxu0 0.0
        %8612 = vmatprep.subr.mxu0 0.0
        %8613 = vmatpush1.msra.mxu0 0.0
        %8614 = vmatprep.subr.mxu0 0.0
        %8615 = vmatpush1.msra.mxu0 0.0
        %8616 = vmatprep.subr.mxu0 0.0
        %8617 = vmatpush1.msra.mxu0 0.0
        %8618 = vmatprep.subr.mxu0 0.0
        %8619 = vmatpush1.msra.mxu0 0.0
        %8620 = vmatprep.subr.mxu0 0.0
        %8621 = vmatpush1.msra.mxu0 0.0
        %8622 = vmatprep.subr.mxu0 0.0
        %8623 = vmatpush1.msra.mxu0 0.0
        %8624 = vmatprep.mubr.f32.mxu0 0.0
        %8625 = vmatmul.mubr.f32.gmra.mrb[0].mxu0 %v8462
        %v8626 = vpop.f32.mrb[0].mxu0
        %v8627 = vadd.f32 0.0, %v8626
        %v8628 = vpop.f32.mrb[0].mxu0
        %8629 = vmatprep.mubr.f32.mxu0 0.0
        %8630 = vmatmul.mubr.f32.gmra.mrb[0].mxu0 %v8465
        %v8631 = vpop.f32.mrb[0].mxu0
        %v8632 = vadd.f32 0.0, %v8631
        %v8633 = vpop.f32.mrb[0].mxu0
        %8634 = vmatprep.mubr.f32.mxu0 0.0
        %8635 = vmatmul.mubr.f32.gmra.mrb[0].mxu0 %v8468
        %v8636 = vpop.f32.mrb[0].mxu0
        %v8637 = vadd.f32 0.0, %v8636
        %v8638 = vpop.f32.mrb[0].mxu0
        %8639 = vmatprep.mubr.f32.mxu0 0.0
        %8640 = vmatmul.mubr.f32.gmra.mrb[0].mxu0 %v8471
        %v8641 = vpop.f32.mrb[0].mxu0
        %v8642 = vadd.f32 0.0, %v8641
        %v8643 = vpop.f32.mrb[0].mxu0
        %8644 = vmatprep.mubr.f32.mxu0 0.0
        %8645 = vmatmul.mubr.f32.gmra.mrb[0].mxu0 %v8474
        %v8646 = vpop.f32.mrb[0].mxu0
        %v8647 = vadd.f32 0.0, %v8646
        %v8648 = vpop.f32.mrb[0].mxu0
        %8649 = vmatprep.mubr.f32.mxu0 0.0
        %8650 = vmatmul.mubr.f32.gmra.mrb[0].mxu0 %v8477
        %v8651 = vpop.f32.mrb[0].mxu0
        %v8652 = vadd.f32 0.0, %v8651
        %v8653 = vpop.f32.mrb[0].mxu0
        %8654 = vmatprep.mubr.f32.mxu0 0.0
        %8655 = vmatmul.mubr.f32.gmra.mrb[0].mxu0 %v8480
        %v8656 = vpop.f32.mrb[0].mxu0
        %v8657 = vadd.f32 0.0, %v8656
        %v8658 = vpop.f32.mrb[0].mxu0
        %8659 = vmatprep.mubr.f32.mxu0 0.0
        %8660 = vmatmul.mubr.f32.gmra.mrb[0].mxu0 %v8483
        %v8661 = vpop.f32.mrb[0].mxu0
        %v8662 = vadd.f32 0.0, %v8661
        %v8663 = vpop.f32.mrb[0].mxu0
        %8664 = vmatprep.mubr.f32.mxu0 0.0
        %8665 = vmatmul.mubr.f32.gmra.mrb[0].mxu0 %v8486
        %v8666 = vpop.f32.mrb[0].mxu0
        %v8667 = vadd.f32 0.0, %v8666
        %v8668 = vpop.f32.mrb[0].mxu0
        %8669 = vmatprep.mubr.f32.mxu0 0.0
        %8670 = vmatmul.mubr.f32.gmra.mrb[0].mxu0 %v8489
        %v8671 = vpop.f32.mrb[0].mxu0
        %v8672 = vadd.f32 0.0, %v8671
        %v8673 = vpop.f32.mrb[0].mxu0
        %8674 = vmatprep.mubr.f32.mxu0 0.0
        %8675 = vmatmul.mubr.f32.gmra.mrb[0].mxu0 %v8492
        %v8676 = vpop.f32.mrb[0].mxu0
        %v8677 = vadd.f32 0.0, %v8676
        %v8678 = vpop.f32.mrb[0].mxu0
        %8679 = vmatprep.mubr.f32.mxu0 0.0
        %8680 = vmatmul.mubr.f32.gmra.mrb[0].mxu0 %v8495
        %v8681 = vpop.f32.mrb[0].mxu0
        %v8682 = vadd.f32 0.0, %v8681
        %v8683 = vpop.f32.mrb[0].mxu0
        %8684 = vmatprep.mubr.f32.mxu0 0.0
        %8685 = vmatmul.mubr.f32.gmra.mrb[0].mxu0 %v8498
        %v8686 = vpop.f32.mrb[0].mxu0
        %v8687 = vadd.f32 0.0, %v8686
        %v8688 = vpop.f32.mrb[0].mxu0
        %8689 = vmatprep.mubr.f32.mxu0 0.0
        %8690 = vmatmul.mubr.f32.gmra.mrb[0].mxu0 %v8501
        %v8691 = vpop.f32.mrb[0].mxu0
        %v8692 = vadd.f32 0.0, %v8691
        %v8693 = vpop.f32.mrb[0].mxu0
        %8694 = vmatprep.mubr.f32.mxu0 0.0
        %8695 = vmatmul.mubr.f32.gmra.mrb[0].mxu0 %v8504
        %v8696 = vpop.f32.mrb[0].mxu0
        %v8697 = vadd.f32 0.0, %v8696
        %v8698 = vpop.f32.mrb[0].mxu0
        %8699 = vmatprep.mubr.f32.mxu0 0.0
        %8700 = vmatmul.mubr.f32.gmra.mrb[0].mxu0 %v8507
        %v8701 = vpop.f32.mrb[0].mxu0
        %v8702 = vadd.f32 0.0, %v8701
        %v8703 = vpop.f32.mrb[0].mxu0
        %8704 = vmatprep.mubr.f32.mxu0 0.0
        %8705 = vmatmul.mubr.f32.gmra.mrb[0].mxu0 %v8510
        %v8706 = vpop.f32.mrb[0].mxu0
        %v8707 = vadd.f32 0.0, %v8706
        %v8708 = vpop.f32.mrb[0].mxu0
        %8709 = vmatprep.mubr.f32.mxu0 0.0
        %8710 = vmatmul.mubr.f32.gmra.mrb[0].mxu0 %v8513
        %v8711 = vpop.f32.mrb[0].mxu0
        %v8712 = vadd.f32 0.0, %v8711
        %v8713 = vpop.f32.mrb[0].mxu0
        %8714 = vmatprep.mubr.f32.mxu0 0.0
        %8715 = vmatmul.mubr.f32.gmra.mrb[0].mxu0 %v8516
        %v8716 = vpop.f32.mrb[0].mxu0
        %v8717 = vadd.f32 0.0, %v8716
        %v8718 = vpop.f32.mrb[0].mxu0
        %8719 = vmatprep.mubr.f32.mxu0 0.0
        %8720 = vmatmul.mubr.f32.gmra.mrb[0].mxu0 %v8519
        %v8721 = vpop.f32.mrb[0].mxu0
        %v8722 = vadd.f32 0.0, %v8721
        %v8723 = vpop.f32.mrb[0].mxu0
        %8724 = vmatprep.mubr.f32.mxu0 0.0
        %8725 = vmatmul.mubr.f32.gmra.mrb[0].mxu0 %v8522
        %v8726 = vpop.f32.mrb[0].mxu0
        %v8727 = vadd.f32 0.0, %v8726
        %v8728 = vpop.f32.mrb[0].mxu0
        %8729 = vmatprep.mubr.f32.mxu0 0.0
        %8730 = vmatmul.mubr.f32.gmra.mrb[0].mxu0 %v8525
        %v8731 = vpop.f32.mrb[0].mxu0
        %v8732 = vadd.f32 0.0, %v8731
        %v8733 = vpop.f32.mrb[0].mxu0
        %8734 = vmatprep.mubr.f32.mxu0 0.0
        %8735 = vmatmul.mubr.f32.gmra.mrb[0].mxu0 %v8528
        %v8736 = vpop.f32.mrb[0].mxu0
        %v8737 = vadd.f32 0.0, %v8736
        %v8738 = vpop.f32.mrb[0].mxu0
        %8739 = vmatprep.mubr.f32.mxu0 0.0
        %8740 = vmatmul.mubr.f32.gmra.mrb[0].mxu0 %v8531
        %v8741 = vpop.f32.mrb[0].mxu0
        %v8742 = vadd.f32 0.0, %v8741
        %v8743 = vpop.f32.mrb[0].mxu0
        %8744 = vmatprep.mubr.f32.mxu0 0.0
        %8745 = vmatmul.mubr.f32.gmra.mrb[0].mxu0 %v8534
        %v8746 = vpop.f32.mrb[0].mxu0
        %v8747 = vadd.f32 0.0, %v8746
        %v8748 = vpop.f32.mrb[0].mxu0
        %8749 = vmatprep.mubr.f32.mxu0 0.0
        %8750 = vmatmul.mubr.f32.gmra.mrb[0].mxu0 %v8537
        %v8751 = vpop.f32.mrb[0].mxu0
        %v8752 = vadd.f32 0.0, %v8751
        %v8753 = vpop.f32.mrb[0].mxu0
        %8754 = vmatprep.mubr.f32.mxu0 0.0
        %8755 = vmatmul.mubr.f32.gmra.mrb[0].mxu0 %v8540
        %v8756 = vpop.f32.mrb[0].mxu0
        %v8757 = vadd.f32 0.0, %v8756
        %v8758 = vpop.f32.mrb[0].mxu0
        %8759 = vmatprep.mubr.f32.mxu0 0.0
        %8760 = vmatmul.mubr.f32.gmra.mrb[0].mxu0 %v8543
        %v8761 = vpop.f32.mrb[0].mxu0
        %v8762 = vadd.f32 0.0, %v8761
        %v8763 = vpop.f32.mrb[0].mxu0
        %8764 = vmatprep.mubr.f32.mxu0 0.0
        %8765 = vmatmul.mubr.f32.gmra.mrb[0].mxu0 %v8546
        %v8766 = vpop.f32.mrb[0].mxu0
        %v8767 = vadd.f32 0.0, %v8766
        %v8768 = vpop.f32.mrb[0].mxu0
        %8769 = vmatprep.mubr.f32.mxu0 0.0
        %8770 = vmatmul.mubr.f32.gmra.mrb[0].mxu0 %v8549
        %v8771 = vpop.f32.mrb[0].mxu0
        %v8772 = vadd.f32 0.0, %v8771
        %v8773 = vpop.f32.mrb[0].mxu0
        %8774 = vmatprep.mubr.f32.mxu0 0.0
        %8775 = vmatmul.mubr.f32.gmra.mrb[0].mxu0 %v8552
        %v8776 = vpop.f32.mrb[0].mxu0
        %v8777 = vadd.f32 0.0, %v8776
        %v8778 = vpop.f32.mrb[0].mxu0
        %8779 = vmatprep.mubr.f32.mxu0 0.0
        %8780 = vmatmul.mubr.f32.gmra.mrb[0].mxu0 %v8555
        %v8781 = vpop.f32.mrb[0].mxu0
        %v8782 = vadd.f32 0.0, %v8781
        %v8783 = vpop.f32.mrb[0].mxu0
        %8784 = vdwg.mxu0
        %v8785 = vadd.f32 %v7497, %v8627
        %v8786 = vadd.f32 %v7498, %v8632
        %v8787 = vadd.f32 %v7499, %v8637
        %v8788 = vadd.f32 %v7500, %v8642
        %v8789 = vadd.f32 %v7501, %v8647
        %v8790 = vadd.f32 %v7502, %v8652
        %v8791 = vadd.f32 %v7503, %v8657
        %v8792 = vadd.f32 %v7504, %v8662
        %v8793 = vadd.f32 %v7505, %v8667
        %v8794 = vadd.f32 %v7506, %v8672
        %v8795 = vadd.f32 %v7507, %v8677
        %v8796 = vadd.f32 %v7508, %v8682
        %v8797 = vadd.f32 %v7509, %v8687
        %v8798 = vadd.f32 %v7510, %v8692
        %v8799 = vadd.f32 %v7511, %v8697
        %v8800 = vadd.f32 %v7512, %v8702
        %v8801 = vadd.f32 %v7513, %v8707
        %v8802 = vadd.f32 %v7514, %v8712
        %v8803 = vadd.f32 %v7515, %v8717
        %v8804 = vadd.f32 %v7516, %v8722
        %v8805 = vadd.f32 %v7517, %v8727
        %v8806 = vadd.f32 %v7518, %v8732
        %v8807 = vadd.f32 %v7519, %v8737
        %v8808 = vadd.f32 %v7520, %v8742
        %v8809 = vadd.f32 %v7521, %v8747
        %v8810 = vadd.f32 %v7522, %v8752
        %v8811 = vadd.f32 %v7523, %v8757
        %v8812 = vadd.f32 %v7524, %v8762
        %v8813 = vadd.f32 %v7525, %v8767
        %v8814 = vadd.f32 %v7526, %v8772
        %v8815 = vadd.f32 %v7527, %v8777
        %v8816 = vadd.f32 %v7528, %v8782
        %s8817 = scalar_lea.vmem [#allocation3], 96
        %v8818 = vld [vmem:[%s8817] sm:$0xff]
        %v8819 = vld [vmem:[%s8817 + $0x8] sm:$0xff]
        %v8820 = vld [vmem:[%s8817 + $0x10] sm:$0xf]
        %v8821 = vld [vmem:[%s8817 + $0x18] sm:$0xff]
        %v8822 = vld [vmem:[%s8817 + $0x20] sm:$0xff]
        %v8823 = vld [vmem:[%s8817 + $0x28] sm:$0xf]
        %v8824 = vld [vmem:[%s8817 + $0x30] sm:$0xff]
        %v8825 = vld [vmem:[%s8817 + $0x38] sm:$0xff]
        %v8826 = vld [vmem:[%s8817 + $0x40] sm:$0xf]
        %v8827 = vld [vmem:[%s8817 + $0x48] sm:$0xff]
        %v8828 = vld [vmem:[%s8817 + $0x50] sm:$0xff]
        %v8829 = vld [vmem:[%s8817 + $0x58] sm:$0xf]
        %v8830 = vld [vmem:[%s8817 + $0x60] sm:$0xff]
        %v8831 = vld [vmem:[%s8817 + $0x68] sm:$0xff]
        %v8832 = vld [vmem:[%s8817 + $0x70] sm:$0xf]
        %v8833 = vld [vmem:[%s8817 + $0x78] sm:$0xff]
        %v8834 = vld [vmem:[%s8817 + $0x80] sm:$0xff]
        %v8835 = vld [vmem:[%s8817 + $0x88] sm:$0xf]
        %v8836 = vld [vmem:[%s8817 + $0x90] sm:$0xff]
        %v8837 = vld [vmem:[%s8817 + $0x98] sm:$0xff]
        %v8838 = vld [vmem:[%s8817 + $0xa0] sm:$0xf]
        %v8839 = vld [vmem:[%s8817 + $0xa8] sm:$0xff]
        %v8840 = vld [vmem:[%s8817 + $0xb0] sm:$0xff]
        %v8841 = vld [vmem:[%s8817 + $0xb8] sm:$0xf]
        %v8842 = vld [vmem:[%s8817 + $0xc0] sm:$0xff]
        %v8843 = vld [vmem:[%s8817 + $0xc8] sm:$0xff]
        %v8844 = vld [vmem:[%s8817 + $0xd0] sm:$0xf]
        %v8845 = vld [vmem:[%s8817 + $0xd8] sm:$0xff]
        %v8846 = vld [vmem:[%s8817 + $0xe0] sm:$0xff]
        %v8847 = vld [vmem:[%s8817 + $0xe8] sm:$0xf]
        %v8848 = vld [vmem:[%s8817 + $0xf0] sm:$0xff]
        %v8849 = vld [vmem:[%s8817 + $0xf8] sm:$0xff]
        %v8850 = vld [vmem:[%s8817 + $0x100] sm:$0xf]
        %v8851 = vld [vmem:[%s8817 + $0x108] sm:$0xff]
        %v8852 = vld [vmem:[%s8817 + $0x110] sm:$0xff]
        %v8853 = vld [vmem:[%s8817 + $0x118] sm:$0xf]
        %v8854 = vld [vmem:[%s8817 + $0x120] sm:$0xff]
        %v8855 = vld [vmem:[%s8817 + $0x128] sm:$0xff]
        %v8856 = vld [vmem:[%s8817 + $0x130] sm:$0xf]
        %v8857 = vld [vmem:[%s8817 + $0x138] sm:$0xff]
        %v8858 = vld [vmem:[%s8817 + $0x140] sm:$0xff]
        %v8859 = vld [vmem:[%s8817 + $0x148] sm:$0xf]
        %v8860 = vld [vmem:[%s8817 + $0x150] sm:$0xff]
        %v8861 = vld [vmem:[%s8817 + $0x158] sm:$0xff]
        %v8862 = vld [vmem:[%s8817 + $0x160] sm:$0xf]
        %v8863 = vld [vmem:[%s8817 + $0x168] sm:$0xff]
        %v8864 = vld [vmem:[%s8817 + $0x170] sm:$0xff]
        %v8865 = vld [vmem:[%s8817 + $0x178] sm:$0xf]
        %v8914 = vrot.slane %v8818, 1
        %v8915 = vrot.slane %v8819, 1
        %v8916 = vsel %vm1027, %v8914, %v8915
        %v8917 = vrot.slane %v8820, 1
        %v8918 = vsel %vm1027, %v8915, %v8917
        %v8919 = vrot.slane %v8821, 1
        %v8920 = vrot.slane %v8822, 1
        %v8921 = vsel %vm1027, %v8919, %v8920
        %v8922 = vrot.slane %v8823, 1
        %v8923 = vsel %vm1027, %v8920, %v8922
        %v8924 = vrot.slane %v8824, 1
        %v8925 = vrot.slane %v8825, 1
        %v8926 = vsel %vm1027, %v8924, %v8925
        %v8927 = vrot.slane %v8826, 1
        %v8928 = vsel %vm1027, %v8925, %v8927
        %v8929 = vrot.slane %v8827, 1
        %v8930 = vrot.slane %v8828, 1
        %v8931 = vsel %vm1027, %v8929, %v8930
        %v8932 = vrot.slane %v8829, 1
        %v8933 = vsel %vm1027, %v8930, %v8932
        %v8934 = vrot.slane %v8830, 1
        %v8935 = vrot.slane %v8831, 1
        %v8936 = vsel %vm1027, %v8934, %v8935
        %v8937 = vrot.slane %v8832, 1
        %v8938 = vsel %vm1027, %v8935, %v8937
        %v8939 = vrot.slane %v8833, 1
        %v8940 = vrot.slane %v8834, 1
        %v8941 = vsel %vm1027, %v8939, %v8940
        %v8942 = vrot.slane %v8835, 1
        %v8943 = vsel %vm1027, %v8940, %v8942
        %v8944 = vrot.slane %v8836, 1
        %v8945 = vrot.slane %v8837, 1
        %v8946 = vsel %vm1027, %v8944, %v8945
        %v8947 = vrot.slane %v8838, 1
        %v8948 = vsel %vm1027, %v8945, %v8947
        %v8949 = vrot.slane %v8839, 1
        %v8950 = vrot.slane %v8840, 1
        %v8951 = vsel %vm1027, %v8949, %v8950
        %v8952 = vrot.slane %v8841, 1
        %v8953 = vsel %vm1027, %v8950, %v8952
        %v8954 = vrot.slane %v8842, 1
        %v8955 = vrot.slane %v8843, 1
        %v8956 = vsel %vm1027, %v8954, %v8955
        %v8957 = vrot.slane %v8844, 1
        %v8958 = vsel %vm1027, %v8955, %v8957
        %v8959 = vrot.slane %v8845, 1
        %v8960 = vrot.slane %v8846, 1
        %v8961 = vsel %vm1027, %v8959, %v8960
        %v8962 = vrot.slane %v8847, 1
        %v8963 = vsel %vm1027, %v8960, %v8962
        %v8964 = vrot.slane %v8848, 1
        %v8965 = vrot.slane %v8849, 1
        %v8966 = vsel %vm1027, %v8964, %v8965
        %v8967 = vrot.slane %v8850, 1
        %v8968 = vsel %vm1027, %v8965, %v8967
        %v8969 = vrot.slane %v8851, 1
        %v8970 = vrot.slane %v8852, 1
        %v8971 = vsel %vm1027, %v8969, %v8970
        %v8972 = vrot.slane %v8853, 1
        %v8973 = vsel %vm1027, %v8970, %v8972
        %v8974 = vrot.slane %v8854, 1
        %v8975 = vrot.slane %v8855, 1
        %v8976 = vsel %vm1027, %v8974, %v8975
        %v8977 = vrot.slane %v8856, 1
        %v8978 = vsel %vm1027, %v8975, %v8977
        %v8979 = vrot.slane %v8857, 1
        %v8980 = vrot.slane %v8858, 1
        %v8981 = vsel %vm1027, %v8979, %v8980
        %v8982 = vrot.slane %v8859, 1
        %v8983 = vsel %vm1027, %v8980, %v8982
        %v8984 = vrot.slane %v8860, 1
        %v8985 = vrot.slane %v8861, 1
        %v8986 = vsel %vm1027, %v8984, %v8985
        %v8987 = vrot.slane %v8862, 1
        %v8988 = vsel %vm1027, %v8985, %v8987
        %v8989 = vrot.slane %v8863, 1
        %v8990 = vrot.slane %v8864, 1
        %v8991 = vsel %vm1027, %v8989, %v8990
        %v8992 = vrot.slane %v8865, 1
        %v8993 = vsel %vm1027, %v8990, %v8992
        %8994 = vrot.lane.b32.xlu0 %v8916, 4
        %v8995 = vpop.permute.xlu0 %8994
        %8996 = vrot.lane.b32.xlu0 %v8918, 4
        %v8997 = vpop.permute.xlu0 %8996
        %8998 = vrot.lane.b32.xlu0 %v8921, 4
        %v8999 = vpop.permute.xlu0 %8998
        %9000 = vrot.lane.b32.xlu0 %v8923, 4
        %v9001 = vpop.permute.xlu0 %9000
        %9002 = vrot.lane.b32.xlu0 %v8926, 4
        %v9003 = vpop.permute.xlu0 %9002
        %9004 = vrot.lane.b32.xlu0 %v8928, 4
        %v9005 = vpop.permute.xlu0 %9004
        %9006 = vrot.lane.b32.xlu0 %v8931, 4
        %v9007 = vpop.permute.xlu0 %9006
        %9008 = vrot.lane.b32.xlu0 %v8933, 4
        %v9009 = vpop.permute.xlu0 %9008
        %9010 = vrot.lane.b32.xlu0 %v8936, 4
        %v9011 = vpop.permute.xlu0 %9010
        %9012 = vrot.lane.b32.xlu0 %v8938, 4
        %v9013 = vpop.permute.xlu0 %9012
        %9014 = vrot.lane.b32.xlu0 %v8941, 4
        %v9015 = vpop.permute.xlu0 %9014
        %9016 = vrot.lane.b32.xlu0 %v8943, 4
        %v9017 = vpop.permute.xlu0 %9016
        %9018 = vrot.lane.b32.xlu0 %v8946, 4
        %v9019 = vpop.permute.xlu0 %9018
        %9020 = vrot.lane.b32.xlu0 %v8948, 4
        %v9021 = vpop.permute.xlu0 %9020
        %9022 = vrot.lane.b32.xlu0 %v8951, 4
        %v9023 = vpop.permute.xlu0 %9022
        %9024 = vrot.lane.b32.xlu0 %v8953, 4
        %v9025 = vpop.permute.xlu0 %9024
        %9026 = vrot.lane.b32.xlu0 %v8956, 4
        %v9027 = vpop.permute.xlu0 %9026
        %9028 = vrot.lane.b32.xlu0 %v8958, 4
        %v9029 = vpop.permute.xlu0 %9028
        %9030 = vrot.lane.b32.xlu0 %v8961, 4
        %v9031 = vpop.permute.xlu0 %9030
        %9032 = vrot.lane.b32.xlu0 %v8963, 4
        %v9033 = vpop.permute.xlu0 %9032
        %9034 = vrot.lane.b32.xlu0 %v8966, 4
        %v9035 = vpop.permute.xlu0 %9034
        %9036 = vrot.lane.b32.xlu0 %v8968, 4
        %v9037 = vpop.permute.xlu0 %9036
        %9038 = vrot.lane.b32.xlu0 %v8971, 4
        %v9039 = vpop.permute.xlu0 %9038
        %9040 = vrot.lane.b32.xlu0 %v8973, 4
        %v9041 = vpop.permute.xlu0 %9040
        %9042 = vrot.lane.b32.xlu0 %v8976, 4
        %v9043 = vpop.permute.xlu0 %9042
        %9044 = vrot.lane.b32.xlu0 %v8978, 4
        %v9045 = vpop.permute.xlu0 %9044
        %9046 = vrot.lane.b32.xlu0 %v8981, 4
        %v9047 = vpop.permute.xlu0 %9046
        %9048 = vrot.lane.b32.xlu0 %v8983, 4
        %v9049 = vpop.permute.xlu0 %9048
        %9050 = vrot.lane.b32.xlu0 %v8986, 4
        %v9051 = vpop.permute.xlu0 %9050
        %9052 = vrot.lane.b32.xlu0 %v8988, 4
        %v9053 = vpop.permute.xlu0 %9052
        %9054 = vrot.lane.b32.xlu0 %v8991, 4
        %v9055 = vpop.permute.xlu0 %9054
        %9056 = vrot.lane.b32.xlu0 %v8993, 4
        %v9057 = vpop.permute.xlu0 %9056
        %v9090 = vrot.slane %v8818, 2
        %v9091 = vrot.slane %v8819, 2
        %v9092 = vsel %vm1204, %v9090, %v9091
        %v9093 = vrot.slane %v8820, 2
        %v9094 = vsel %vm1204, %v9091, %v9093
        %v9095 = vrot.slane %v8821, 2
        %v9096 = vrot.slane %v8822, 2
        %v9097 = vsel %vm1204, %v9095, %v9096
        %v9098 = vrot.slane %v8823, 2
        %v9099 = vsel %vm1204, %v9096, %v9098
        %v9100 = vrot.slane %v8824, 2
        %v9101 = vrot.slane %v8825, 2
        %v9102 = vsel %vm1204, %v9100, %v9101
        %v9103 = vrot.slane %v8826, 2
        %v9104 = vsel %vm1204, %v9101, %v9103
        %v9105 = vrot.slane %v8827, 2
        %v9106 = vrot.slane %v8828, 2
        %v9107 = vsel %vm1204, %v9105, %v9106
        %v9108 = vrot.slane %v8829, 2
        %v9109 = vsel %vm1204, %v9106, %v9108
        %v9110 = vrot.slane %v8830, 2
        %v9111 = vrot.slane %v8831, 2
        %v9112 = vsel %vm1204, %v9110, %v9111
        %v9113 = vrot.slane %v8832, 2
        %v9114 = vsel %vm1204, %v9111, %v9113
        %v9115 = vrot.slane %v8833, 2
        %v9116 = vrot.slane %v8834, 2
        %v9117 = vsel %vm1204, %v9115, %v9116
        %v9118 = vrot.slane %v8835, 2
        %v9119 = vsel %vm1204, %v9116, %v9118
        %v9120 = vrot.slane %v8836, 2
        %v9121 = vrot.slane %v8837, 2
        %v9122 = vsel %vm1204, %v9120, %v9121
        %v9123 = vrot.slane %v8838, 2
        %v9124 = vsel %vm1204, %v9121, %v9123
        %v9125 = vrot.slane %v8839, 2
        %v9126 = vrot.slane %v8840, 2
        %v9127 = vsel %vm1204, %v9125, %v9126
        %v9128 = vrot.slane %v8841, 2
        %v9129 = vsel %vm1204, %v9126, %v9128
        %v9130 = vrot.slane %v8842, 2
        %v9131 = vrot.slane %v8843, 2
        %v9132 = vsel %vm1204, %v9130, %v9131
        %v9133 = vrot.slane %v8844, 2
        %v9134 = vsel %vm1204, %v9131, %v9133
        %v9135 = vrot.slane %v8845, 2
        %v9136 = vrot.slane %v8846, 2
        %v9137 = vsel %vm1204, %v9135, %v9136
        %v9138 = vrot.slane %v8847, 2
        %v9139 = vsel %vm1204, %v9136, %v9138
        %v9140 = vrot.slane %v8848, 2
        %v9141 = vrot.slane %v8849, 2
        %v9142 = vsel %vm1204, %v9140, %v9141
        %v9143 = vrot.slane %v8850, 2
        %v9144 = vsel %vm1204, %v9141, %v9143
        %v9145 = vrot.slane %v8851, 2
        %v9146 = vrot.slane %v8852, 2
        %v9147 = vsel %vm1204, %v9145, %v9146
        %v9148 = vrot.slane %v8853, 2
        %v9149 = vsel %vm1204, %v9146, %v9148
        %v9150 = vrot.slane %v8854, 2
        %v9151 = vrot.slane %v8855, 2
        %v9152 = vsel %vm1204, %v9150, %v9151
        %v9153 = vrot.slane %v8856, 2
        %v9154 = vsel %vm1204, %v9151, %v9153
        %v9155 = vrot.slane %v8857, 2
        %v9156 = vrot.slane %v8858, 2
        %v9157 = vsel %vm1204, %v9155, %v9156
        %v9158 = vrot.slane %v8859, 2
        %v9159 = vsel %vm1204, %v9156, %v9158
        %v9160 = vrot.slane %v8860, 2
        %v9161 = vrot.slane %v8861, 2
        %v9162 = vsel %vm1204, %v9160, %v9161
        %v9163 = vrot.slane %v8862, 2
        %v9164 = vsel %vm1204, %v9161, %v9163
        %v9165 = vrot.slane %v8863, 2
        %v9166 = vrot.slane %v8864, 2
        %v9167 = vsel %vm1204, %v9165, %v9166
        %v9168 = vrot.slane %v8865, 2
        %v9169 = vsel %vm1204, %v9166, %v9168
        %9170 = vrot.lane.b32.xlu0 %v9092, 8
        %v9171 = vpop.permute.xlu0 %9170
        %9172 = vrot.lane.b32.xlu0 %v9094, 8
        %v9173 = vpop.permute.xlu0 %9172
        %9174 = vrot.lane.b32.xlu0 %v9097, 8
        %v9175 = vpop.permute.xlu0 %9174
        %9176 = vrot.lane.b32.xlu0 %v9099, 8
        %v9177 = vpop.permute.xlu0 %9176
        %9178 = vrot.lane.b32.xlu0 %v9102, 8
        %v9179 = vpop.permute.xlu0 %9178
        %9180 = vrot.lane.b32.xlu0 %v9104, 8
        %v9181 = vpop.permute.xlu0 %9180
        %9182 = vrot.lane.b32.xlu0 %v9107, 8
        %v9183 = vpop.permute.xlu0 %9182
        %9184 = vrot.lane.b32.xlu0 %v9109, 8
        %v9185 = vpop.permute.xlu0 %9184
        %9186 = vrot.lane.b32.xlu0 %v9112, 8
        %v9187 = vpop.permute.xlu0 %9186
        %9188 = vrot.lane.b32.xlu0 %v9114, 8
        %v9189 = vpop.permute.xlu0 %9188
        %9190 = vrot.lane.b32.xlu0 %v9117, 8
        %v9191 = vpop.permute.xlu0 %9190
        %9192 = vrot.lane.b32.xlu0 %v9119, 8
        %v9193 = vpop.permute.xlu0 %9192
        %9194 = vrot.lane.b32.xlu0 %v9122, 8
        %v9195 = vpop.permute.xlu0 %9194
        %9196 = vrot.lane.b32.xlu0 %v9124, 8
        %v9197 = vpop.permute.xlu0 %9196
        %9198 = vrot.lane.b32.xlu0 %v9127, 8
        %v9199 = vpop.permute.xlu0 %9198
        %9200 = vrot.lane.b32.xlu0 %v9129, 8
        %v9201 = vpop.permute.xlu0 %9200
        %9202 = vrot.lane.b32.xlu0 %v9132, 8
        %v9203 = vpop.permute.xlu0 %9202
        %9204 = vrot.lane.b32.xlu0 %v9134, 8
        %v9205 = vpop.permute.xlu0 %9204
        %9206 = vrot.lane.b32.xlu0 %v9137, 8
        %v9207 = vpop.permute.xlu0 %9206
        %9208 = vrot.lane.b32.xlu0 %v9139, 8
        %v9209 = vpop.permute.xlu0 %9208
        %9210 = vrot.lane.b32.xlu0 %v9142, 8
        %v9211 = vpop.permute.xlu0 %9210
        %9212 = vrot.lane.b32.xlu0 %v9144, 8
        %v9213 = vpop.permute.xlu0 %9212
        %9214 = vrot.lane.b32.xlu0 %v9147, 8
        %v9215 = vpop.permute.xlu0 %9214
        %9216 = vrot.lane.b32.xlu0 %v9149, 8
        %v9217 = vpop.permute.xlu0 %9216
        %9218 = vrot.lane.b32.xlu0 %v9152, 8
        %v9219 = vpop.permute.xlu0 %9218
        %9220 = vrot.lane.b32.xlu0 %v9154, 8
        %v9221 = vpop.permute.xlu0 %9220
        %9222 = vrot.lane.b32.xlu0 %v9157, 8
        %v9223 = vpop.permute.xlu0 %9222
        %9224 = vrot.lane.b32.xlu0 %v9159, 8
        %v9225 = vpop.permute.xlu0 %9224
        %9226 = vrot.lane.b32.xlu0 %v9162, 8
        %v9227 = vpop.permute.xlu0 %9226
        %9228 = vrot.lane.b32.xlu0 %v9164, 8
        %v9229 = vpop.permute.xlu0 %9228
        %9230 = vrot.lane.b32.xlu0 %v9167, 8
        %v9231 = vpop.permute.xlu0 %9230
        %9232 = vrot.lane.b32.xlu0 %v9169, 8
        %v9233 = vpop.permute.xlu0 %9232
        %v9266 = vrot.slane %v8818, 3
        %v9267 = vrot.slane %v8819, 3
        %v9268 = vsel %vm4176, %v9266, %v9267
        %v9269 = vrot.slane %v8820, 3
        %v9270 = vsel %vm4176, %v9267, %v9269
        %v9271 = vrot.slane %v8821, 3
        %v9272 = vrot.slane %v8822, 3
        %v9273 = vsel %vm4176, %v9271, %v9272
        %v9274 = vrot.slane %v8823, 3
        %v9275 = vsel %vm4176, %v9272, %v9274
        %v9276 = vrot.slane %v8824, 3
        %v9277 = vrot.slane %v8825, 3
        %v9278 = vsel %vm4176, %v9276, %v9277
        %v9279 = vrot.slane %v8826, 3
        %v9280 = vsel %vm4176, %v9277, %v9279
        %v9281 = vrot.slane %v8827, 3
        %v9282 = vrot.slane %v8828, 3
        %v9283 = vsel %vm4176, %v9281, %v9282
        %v9284 = vrot.slane %v8829, 3
        %v9285 = vsel %vm4176, %v9282, %v9284
        %v9286 = vrot.slane %v8830, 3
        %v9287 = vrot.slane %v8831, 3
        %v9288 = vsel %vm4176, %v9286, %v9287
        %v9289 = vrot.slane %v8832, 3
        %v9290 = vsel %vm4176, %v9287, %v9289
        %v9291 = vrot.slane %v8833, 3
        %v9292 = vrot.slane %v8834, 3
        %v9293 = vsel %vm4176, %v9291, %v9292
        %v9294 = vrot.slane %v8835, 3
        %v9295 = vsel %vm4176, %v9292, %v9294
        %v9296 = vrot.slane %v8836, 3
        %v9297 = vrot.slane %v8837, 3
        %v9298 = vsel %vm4176, %v9296, %v9297
        %v9299 = vrot.slane %v8838, 3
        %v9300 = vsel %vm4176, %v9297, %v9299
        %v9301 = vrot.slane %v8839, 3
        %v9302 = vrot.slane %v8840, 3
        %v9303 = vsel %vm4176, %v9301, %v9302
        %v9304 = vrot.slane %v8841, 3
        %v9305 = vsel %vm4176, %v9302, %v9304
        %v9306 = vrot.slane %v8842, 3
        %v9307 = vrot.slane %v8843, 3
        %v9308 = vsel %vm4176, %v9306, %v9307
        %v9309 = vrot.slane %v8844, 3
        %v9310 = vsel %vm4176, %v9307, %v9309
        %v9311 = vrot.slane %v8845, 3
        %v9312 = vrot.slane %v8846, 3
        %v9313 = vsel %vm4176, %v9311, %v9312
        %v9314 = vrot.slane %v8847, 3
        %v9315 = vsel %vm4176, %v9312, %v9314
        %v9316 = vrot.slane %v8848, 3
        %v9317 = vrot.slane %v8849, 3
        %v9318 = vsel %vm4176, %v9316, %v9317
        %v9319 = vrot.slane %v8850, 3
        %v9320 = vsel %vm4176, %v9317, %v9319
        %v9321 = vrot.slane %v8851, 3
        %v9322 = vrot.slane %v8852, 3
        %v9323 = vsel %vm4176, %v9321, %v9322
        %v9324 = vrot.slane %v8853, 3
        %v9325 = vsel %vm4176, %v9322, %v9324
        %v9326 = vrot.slane %v8854, 3
        %v9327 = vrot.slane %v8855, 3
        %v9328 = vsel %vm4176, %v9326, %v9327
        %v9329 = vrot.slane %v8856, 3
        %v9330 = vsel %vm4176, %v9327, %v9329
        %v9331 = vrot.slane %v8857, 3
        %v9332 = vrot.slane %v8858, 3
        %v9333 = vsel %vm4176, %v9331, %v9332
        %v9334 = vrot.slane %v8859, 3
        %v9335 = vsel %vm4176, %v9332, %v9334
        %v9336 = vrot.slane %v8860, 3
        %v9337 = vrot.slane %v8861, 3
        %v9338 = vsel %vm4176, %v9336, %v9337
        %v9339 = vrot.slane %v8862, 3
        %v9340 = vsel %vm4176, %v9337, %v9339
        %v9341 = vrot.slane %v8863, 3
        %v9342 = vrot.slane %v8864, 3
        %v9343 = vsel %vm4176, %v9341, %v9342
        %v9344 = vrot.slane %v8865, 3
        %v9345 = vsel %vm4176, %v9342, %v9344
        %9346 = vrot.lane.b32.xlu0 %v9268, 12
        %v9347 = vpop.permute.xlu0 %9346
        %9348 = vrot.lane.b32.xlu0 %v9270, 12
        %v9349 = vpop.permute.xlu0 %9348
        %9350 = vrot.lane.b32.xlu0 %v9273, 12
        %v9351 = vpop.permute.xlu0 %9350
        %9352 = vrot.lane.b32.xlu0 %v9275, 12
        %v9353 = vpop.permute.xlu0 %9352
        %9354 = vrot.lane.b32.xlu0 %v9278, 12
        %v9355 = vpop.permute.xlu0 %9354
        %9356 = vrot.lane.b32.xlu0 %v9280, 12
        %v9357 = vpop.permute.xlu0 %9356
        %9358 = vrot.lane.b32.xlu0 %v9283, 12
        %v9359 = vpop.permute.xlu0 %9358
        %9360 = vrot.lane.b32.xlu0 %v9285, 12
        %v9361 = vpop.permute.xlu0 %9360
        %9362 = vrot.lane.b32.xlu0 %v9288, 12
        %v9363 = vpop.permute.xlu0 %9362
        %9364 = vrot.lane.b32.xlu0 %v9290, 12
        %v9365 = vpop.permute.xlu0 %9364
        %9366 = vrot.lane.b32.xlu0 %v9293, 12
        %v9367 = vpop.permute.xlu0 %9366
        %9368 = vrot.lane.b32.xlu0 %v9295, 12
        %v9369 = vpop.permute.xlu0 %9368
        %9370 = vrot.lane.b32.xlu0 %v9298, 12
        %v9371 = vpop.permute.xlu0 %9370
        %9372 = vrot.lane.b32.xlu0 %v9300, 12
        %v9373 = vpop.permute.xlu0 %9372
        %9374 = vrot.lane.b32.xlu0 %v9303, 12
        %v9375 = vpop.permute.xlu0 %9374
        %9376 = vrot.lane.b32.xlu0 %v9305, 12
        %v9377 = vpop.permute.xlu0 %9376
        %9378 = vrot.lane.b32.xlu0 %v9308, 12
        %v9379 = vpop.permute.xlu0 %9378
        %9380 = vrot.lane.b32.xlu0 %v9310, 12
        %v9381 = vpop.permute.xlu0 %9380
        %9382 = vrot.lane.b32.xlu0 %v9313, 12
        %v9383 = vpop.permute.xlu0 %9382
        %9384 = vrot.lane.b32.xlu0 %v9315, 12
        %v9385 = vpop.permute.xlu0 %9384
        %9386 = vrot.lane.b32.xlu0 %v9318, 12
        %v9387 = vpop.permute.xlu0 %9386
        %9388 = vrot.lane.b32.xlu0 %v9320, 12
        %v9389 = vpop.permute.xlu0 %9388
        %9390 = vrot.lane.b32.xlu0 %v9323, 12
        %v9391 = vpop.permute.xlu0 %9390
        %9392 = vrot.lane.b32.xlu0 %v9325, 12
        %v9393 = vpop.permute.xlu0 %9392
        %9394 = vrot.lane.b32.xlu0 %v9328, 12
        %v9395 = vpop.permute.xlu0 %9394
        %9396 = vrot.lane.b32.xlu0 %v9330, 12
        %v9397 = vpop.permute.xlu0 %9396
        %9398 = vrot.lane.b32.xlu0 %v9333, 12
        %v9399 = vpop.permute.xlu0 %9398
        %9400 = vrot.lane.b32.xlu0 %v9335, 12
        %v9401 = vpop.permute.xlu0 %9400
        %9402 = vrot.lane.b32.xlu0 %v9338, 12
        %v9403 = vpop.permute.xlu0 %9402
        %9404 = vrot.lane.b32.xlu0 %v9340, 12
        %v9405 = vpop.permute.xlu0 %9404
        %9406 = vrot.lane.b32.xlu0 %v9343, 12
        %v9407 = vpop.permute.xlu0 %9406
        %9408 = vrot.lane.b32.xlu0 %v9345, 12
        %v9409 = vpop.permute.xlu0 %9408
        %v9442 = vrot.slane %v8818, 4
        %v9443 = vrot.slane %v8819, 4
        %v9444 = vsel %vm468, %v9442, %v9443
        %v9445 = vrot.slane %v8820, 4
        %v9446 = vsel %vm468, %v9443, %v9445
        %v9447 = vrot.slane %v8821, 4
        %v9448 = vrot.slane %v8822, 4
        %v9449 = vsel %vm468, %v9447, %v9448
        %v9450 = vrot.slane %v8823, 4
        %v9451 = vsel %vm468, %v9448, %v9450
        %v9452 = vrot.slane %v8824, 4
        %v9453 = vrot.slane %v8825, 4
        %v9454 = vsel %vm468, %v9452, %v9453
        %v9455 = vrot.slane %v8826, 4
        %v9456 = vsel %vm468, %v9453, %v9455
        %v9457 = vrot.slane %v8827, 4
        %v9458 = vrot.slane %v8828, 4
        %v9459 = vsel %vm468, %v9457, %v9458
        %v9460 = vrot.slane %v8829, 4
        %v9461 = vsel %vm468, %v9458, %v9460
        %v9462 = vrot.slane %v8830, 4
        %v9463 = vrot.slane %v8831, 4
        %v9464 = vsel %vm468, %v9462, %v9463
        %v9465 = vrot.slane %v8832, 4
        %v9466 = vsel %vm468, %v9463, %v9465
        %v9467 = vrot.slane %v8833, 4
        %v9468 = vrot.slane %v8834, 4
        %v9469 = vsel %vm468, %v9467, %v9468
        %v9470 = vrot.slane %v8835, 4
        %v9471 = vsel %vm468, %v9468, %v9470
        %v9472 = vrot.slane %v8836, 4
        %v9473 = vrot.slane %v8837, 4
        %v9474 = vsel %vm468, %v9472, %v9473
        %v9475 = vrot.slane %v8838, 4
        %v9476 = vsel %vm468, %v9473, %v9475
        %v9477 = vrot.slane %v8839, 4
        %v9478 = vrot.slane %v8840, 4
        %v9479 = vsel %vm468, %v9477, %v9478
        %v9480 = vrot.slane %v8841, 4
        %v9481 = vsel %vm468, %v9478, %v9480
        %v9482 = vrot.slane %v8842, 4
        %v9483 = vrot.slane %v8843, 4
        %v9484 = vsel %vm468, %v9482, %v9483
        %v9485 = vrot.slane %v8844, 4
        %v9486 = vsel %vm468, %v9483, %v9485
        %v9487 = vrot.slane %v8845, 4
        %v9488 = vrot.slane %v8846, 4
        %v9489 = vsel %vm468, %v9487, %v9488
        %v9490 = vrot.slane %v8847, 4
        %v9491 = vsel %vm468, %v9488, %v9490
        %v9492 = vrot.slane %v8848, 4
        %v9493 = vrot.slane %v8849, 4
        %v9494 = vsel %vm468, %v9492, %v9493
        %v9495 = vrot.slane %v8850, 4
        %v9496 = vsel %vm468, %v9493, %v9495
        %v9497 = vrot.slane %v8851, 4
        %v9498 = vrot.slane %v8852, 4
        %v9499 = vsel %vm468, %v9497, %v9498
        %v9500 = vrot.slane %v8853, 4
        %v9501 = vsel %vm468, %v9498, %v9500
        %v9502 = vrot.slane %v8854, 4
        %v9503 = vrot.slane %v8855, 4
        %v9504 = vsel %vm468, %v9502, %v9503
        %v9505 = vrot.slane %v8856, 4
        %v9506 = vsel %vm468, %v9503, %v9505
        %v9507 = vrot.slane %v8857, 4
        %v9508 = vrot.slane %v8858, 4
        %v9509 = vsel %vm468, %v9507, %v9508
        %v9510 = vrot.slane %v8859, 4
        %v9511 = vsel %vm468, %v9508, %v9510
        %v9512 = vrot.slane %v8860, 4
        %v9513 = vrot.slane %v8861, 4
        %v9514 = vsel %vm468, %v9512, %v9513
        %v9515 = vrot.slane %v8862, 4
        %v9516 = vsel %vm468, %v9513, %v9515
        %v9517 = vrot.slane %v8863, 4
        %v9518 = vrot.slane %v8864, 4
        %v9519 = vsel %vm468, %v9517, %v9518
        %v9520 = vrot.slane %v8865, 4
        %v9521 = vsel %vm468, %v9518, %v9520
        %9522 = vrot.lane.b32.xlu0 %v9444, 16
        %v9523 = vpop.permute.xlu0 %9522
        %9524 = vrot.lane.b32.xlu0 %v9446, 16
        %v9525 = vpop.permute.xlu0 %9524
        %9526 = vrot.lane.b32.xlu0 %v9449, 16
        %v9527 = vpop.permute.xlu0 %9526
        %9528 = vrot.lane.b32.xlu0 %v9451, 16
        %v9529 = vpop.permute.xlu0 %9528
        %9530 = vrot.lane.b32.xlu0 %v9454, 16
        %v9531 = vpop.permute.xlu0 %9530
        %9532 = vrot.lane.b32.xlu0 %v9456, 16
        %v9533 = vpop.permute.xlu0 %9532
        %9534 = vrot.lane.b32.xlu0 %v9459, 16
        %v9535 = vpop.permute.xlu0 %9534
        %9536 = vrot.lane.b32.xlu0 %v9461, 16
        %v9537 = vpop.permute.xlu0 %9536
        %9538 = vrot.lane.b32.xlu0 %v9464, 16
        %v9539 = vpop.permute.xlu0 %9538
        %9540 = vrot.lane.b32.xlu0 %v9466, 16
        %v9541 = vpop.permute.xlu0 %9540
        %9542 = vrot.lane.b32.xlu0 %v9469, 16
        %v9543 = vpop.permute.xlu0 %9542
        %9544 = vrot.lane.b32.xlu0 %v9471, 16
        %v9545 = vpop.permute.xlu0 %9544
        %9546 = vrot.lane.b32.xlu0 %v9474, 16
        %v9547 = vpop.permute.xlu0 %9546
        %9548 = vrot.lane.b32.xlu0 %v9476, 16
        %v9549 = vpop.permute.xlu0 %9548
        %9550 = vrot.lane.b32.xlu0 %v9479, 16
        %v9551 = vpop.permute.xlu0 %9550
        %9552 = vrot.lane.b32.xlu0 %v9481, 16
        %v9553 = vpop.permute.xlu0 %9552
        %9554 = vrot.lane.b32.xlu0 %v9484, 16
        %v9555 = vpop.permute.xlu0 %9554
        %9556 = vrot.lane.b32.xlu0 %v9486, 16
        %v9557 = vpop.permute.xlu0 %9556
        %9558 = vrot.lane.b32.xlu0 %v9489, 16
        %v9559 = vpop.permute.xlu0 %9558
        %9560 = vrot.lane.b32.xlu0 %v9491, 16
        %v9561 = vpop.permute.xlu0 %9560
        %9562 = vrot.lane.b32.xlu0 %v9494, 16
        %v9563 = vpop.permute.xlu0 %9562
        %9564 = vrot.lane.b32.xlu0 %v9496, 16
        %v9565 = vpop.permute.xlu0 %9564
        %9566 = vrot.lane.b32.xlu0 %v9499, 16
        %v9567 = vpop.permute.xlu0 %9566
        %9568 = vrot.lane.b32.xlu0 %v9501, 16
        %v9569 = vpop.permute.xlu0 %9568
        %9570 = vrot.lane.b32.xlu0 %v9504, 16
        %v9571 = vpop.permute.xlu0 %9570
        %9572 = vrot.lane.b32.xlu0 %v9506, 16
        %v9573 = vpop.permute.xlu0 %9572
        %9574 = vrot.lane.b32.xlu0 %v9509, 16
        %v9575 = vpop.permute.xlu0 %9574
        %9576 = vrot.lane.b32.xlu0 %v9511, 16
        %v9577 = vpop.permute.xlu0 %9576
        %9578 = vrot.lane.b32.xlu0 %v9514, 16
        %v9579 = vpop.permute.xlu0 %9578
        %9580 = vrot.lane.b32.xlu0 %v9516, 16
        %v9581 = vpop.permute.xlu0 %9580
        %9582 = vrot.lane.b32.xlu0 %v9519, 16
        %v9583 = vpop.permute.xlu0 %9582
        %9584 = vrot.lane.b32.xlu0 %v9521, 16
        %v9585 = vpop.permute.xlu0 %9584
        %v9618 = vsel %vm371, %v8818, %v8995
        %v9619 = vsel %vm371, %v8819, %v8997
        %v9620 = vsel %vm371, %v8821, %v8999
        %v9621 = vsel %vm371, %v8822, %v9001
        %v9622 = vsel %vm371, %v8824, %v9003
        %v9623 = vsel %vm371, %v8825, %v9005
        %v9624 = vsel %vm371, %v8827, %v9007
        %v9625 = vsel %vm371, %v8828, %v9009
        %v9626 = vsel %vm371, %v8830, %v9011
        %v9627 = vsel %vm371, %v8831, %v9013
        %v9628 = vsel %vm371, %v8833, %v9015
        %v9629 = vsel %vm371, %v8834, %v9017
        %v9630 = vsel %vm371, %v8836, %v9019
        %v9631 = vsel %vm371, %v8837, %v9021
        %v9632 = vsel %vm371, %v8839, %v9023
        %v9633 = vsel %vm371, %v8840, %v9025
        %v9634 = vsel %vm371, %v8842, %v9027
        %v9635 = vsel %vm371, %v8843, %v9029
        %v9636 = vsel %vm371, %v8845, %v9031
        %v9637 = vsel %vm371, %v8846, %v9033
        %v9638 = vsel %vm371, %v8848, %v9035
        %v9639 = vsel %vm371, %v8849, %v9037
        %v9640 = vsel %vm371, %v8851, %v9039
        %v9641 = vsel %vm371, %v8852, %v9041
        %v9642 = vsel %vm371, %v8854, %v9043
        %v9643 = vsel %vm371, %v8855, %v9045
        %v9644 = vsel %vm371, %v8857, %v9047
        %v9645 = vsel %vm371, %v8858, %v9049
        %v9646 = vsel %vm371, %v8860, %v9051
        %v9647 = vsel %vm371, %v8861, %v9053
        %v9648 = vsel %vm371, %v8863, %v9055
        %v9649 = vsel %vm371, %v8864, %v9057
        %v9650 = vsel %vm1413, %v9618, %v9171
        %v9651 = vsel %vm1413, %v9619, %v9173
        %v9652 = vsel %vm1413, %v9620, %v9175
        %v9653 = vsel %vm1413, %v9621, %v9177
        %v9654 = vsel %vm1413, %v9622, %v9179
        %v9655 = vsel %vm1413, %v9623, %v9181
        %v9656 = vsel %vm1413, %v9624, %v9183
        %v9657 = vsel %vm1413, %v9625, %v9185
        %v9658 = vsel %vm1413, %v9626, %v9187
        %v9659 = vsel %vm1413, %v9627, %v9189
        %v9660 = vsel %vm1413, %v9628, %v9191
        %v9661 = vsel %vm1413, %v9629, %v9193
        %v9662 = vsel %vm1413, %v9630, %v9195
        %v9663 = vsel %vm1413, %v9631, %v9197
        %v9664 = vsel %vm1413, %v9632, %v9199
        %v9665 = vsel %vm1413, %v9633, %v9201
        %v9666 = vsel %vm1413, %v9634, %v9203
        %v9667 = vsel %vm1413, %v9635, %v9205
        %v9668 = vsel %vm1413, %v9636, %v9207
        %v9669 = vsel %vm1413, %v9637, %v9209
        %v9670 = vsel %vm1413, %v9638, %v9211
        %v9671 = vsel %vm1413, %v9639, %v9213
        %v9672 = vsel %vm1413, %v9640, %v9215
        %v9673 = vsel %vm1413, %v9641, %v9217
        %v9674 = vsel %vm1413, %v9642, %v9219
        %v9675 = vsel %vm1413, %v9643, %v9221
        %v9676 = vsel %vm1413, %v9644, %v9223
        %v9677 = vsel %vm1413, %v9645, %v9225
        %v9678 = vsel %vm1413, %v9646, %v9227
        %v9679 = vsel %vm1413, %v9647, %v9229
        %v9680 = vsel %vm1413, %v9648, %v9231
        %v9681 = vsel %vm1413, %v9649, %v9233
        %v9682 = vsel %vm1962, %v9650, %v9347
        %v9683 = vsel %vm1962, %v9651, %v9349
        %v9684 = vsel %vm1962, %v9652, %v9351
        %v9685 = vsel %vm1962, %v9653, %v9353
        %v9686 = vsel %vm1962, %v9654, %v9355
        %v9687 = vsel %vm1962, %v9655, %v9357
        %v9688 = vsel %vm1962, %v9656, %v9359
        %v9689 = vsel %vm1962, %v9657, %v9361
        %v9690 = vsel %vm1962, %v9658, %v9363
        %v9691 = vsel %vm1962, %v9659, %v9365
        %v9692 = vsel %vm1962, %v9660, %v9367
        %v9693 = vsel %vm1962, %v9661, %v9369
        %v9694 = vsel %vm1962, %v9662, %v9371
        %v9695 = vsel %vm1962, %v9663, %v9373
        %v9696 = vsel %vm1962, %v9664, %v9375
        %v9697 = vsel %vm1962, %v9665, %v9377
        %v9698 = vsel %vm1962, %v9666, %v9379
        %v9699 = vsel %vm1962, %v9667, %v9381
        %v9700 = vsel %vm1962, %v9668, %v9383
        %v9701 = vsel %vm1962, %v9669, %v9385
        %v9702 = vsel %vm1962, %v9670, %v9387
        %v9703 = vsel %vm1962, %v9671, %v9389
        %v9704 = vsel %vm1962, %v9672, %v9391
        %v9705 = vsel %vm1962, %v9673, %v9393
        %v9706 = vsel %vm1962, %v9674, %v9395
        %v9707 = vsel %vm1962, %v9675, %v9397
        %v9708 = vsel %vm1962, %v9676, %v9399
        %v9709 = vsel %vm1962, %v9677, %v9401
        %v9710 = vsel %vm1962, %v9678, %v9403
        %v9711 = vsel %vm1962, %v9679, %v9405
        %v9712 = vsel %vm1962, %v9680, %v9407
        %v9713 = vsel %vm1962, %v9681, %v9409
        %v9714 = vsel %vm4625, %v9682, %v9523
        %v9715 = vsel %vm4625, %v9683, %v9525
        %v9716 = vsel %vm4625, %v9684, %v9527
        %v9717 = vsel %vm4625, %v9685, %v9529
        %v9718 = vsel %vm4625, %v9686, %v9531
        %v9719 = vsel %vm4625, %v9687, %v9533
        %v9720 = vsel %vm4625, %v9688, %v9535
        %v9721 = vsel %vm4625, %v9689, %v9537
        %v9722 = vsel %vm4625, %v9690, %v9539
        %v9723 = vsel %vm4625, %v9691, %v9541
        %v9724 = vsel %vm4625, %v9692, %v9543
        %v9725 = vsel %vm4625, %v9693, %v9545
        %v9726 = vsel %vm4625, %v9694, %v9547
        %v9727 = vsel %vm4625, %v9695, %v9549
        %v9728 = vsel %vm4625, %v9696, %v9551
        %v9729 = vsel %vm4625, %v9697, %v9553
        %v9730 = vsel %vm4625, %v9698, %v9555
        %v9731 = vsel %vm4625, %v9699, %v9557
        %v9732 = vsel %vm4625, %v9700, %v9559
        %v9733 = vsel %vm4625, %v9701, %v9561
        %v9734 = vsel %vm4625, %v9702, %v9563
        %v9735 = vsel %vm4625, %v9703, %v9565
        %v9736 = vsel %vm4625, %v9704, %v9567
        %v9737 = vsel %vm4625, %v9705, %v9569
        %v9738 = vsel %vm4625, %v9706, %v9571
        %v9739 = vsel %vm4625, %v9707, %v9573
        %v9740 = vsel %vm4625, %v9708, %v9575
        %v9741 = vsel %vm4625, %v9709, %v9577
        %v9742 = vsel %vm4625, %v9710, %v9579
        %v9743 = vsel %vm4625, %v9711, %v9581
        %v9744 = vsel %vm4625, %v9712, %v9583
        %v9745 = vsel %vm4625, %v9713, %v9585
        %v9746 = vld [vmem:[%s5 + $0x50] sm:$0xff]
        %v9747 = vld [vmem:[%s5 + $0x58] sm:$0xff]
        %v9748 = vld [vmem:[%s5 + $0x60] sm:$0xf]
        %v9750 = vsel %vm5593, %v9714, 0
        %v9753 = vsel %vm5593, %v9715, 0
        %v9756 = vsel %vm5593, %v9716, 0
        %v9759 = vsel %vm5593, %v9717, 0
        %v9762 = vsel %vm5593, %v9718, 0
        %v9765 = vsel %vm5593, %v9719, 0
        %v9768 = vsel %vm5593, %v9720, 0
        %v9771 = vsel %vm5593, %v9721, 0
        %v9774 = vsel %vm5593, %v9722, 0
        %v9777 = vsel %vm5593, %v9723, 0
        %v9780 = vsel %vm5593, %v9724, 0
        %v9783 = vsel %vm5593, %v9725, 0
        %v9786 = vsel %vm5593, %v9726, 0
        %v9789 = vsel %vm5593, %v9727, 0
        %v9792 = vsel %vm5593, %v9728, 0
        %v9795 = vsel %vm5593, %v9729, 0
        %v9798 = vsel %vm5593, %v9730, 0
        %v9801 = vsel %vm5593, %v9731, 0
        %v9804 = vsel %vm5593, %v9732, 0
        %v9807 = vsel %vm5593, %v9733, 0
        %v9810 = vsel %vm5593, %v9734, 0
        %v9813 = vsel %vm5593, %v9735, 0
        %v9816 = vsel %vm5593, %v9736, 0
        %v9819 = vsel %vm5593, %v9737, 0
        %v9822 = vsel %vm5593, %v9738, 0
        %v9825 = vsel %vm5593, %v9739, 0
        %v9828 = vsel %vm5593, %v9740, 0
        %v9831 = vsel %vm5593, %v9741, 0
        %v9834 = vsel %vm5593, %v9742, 0
        %v9837 = vsel %vm5593, %v9743, 0
        %v9840 = vsel %vm5593, %v9744, 0
        %v9843 = vsel %vm5593, %v9745, 0
        %v9846 = vsel %vm468, %v9748, 0
        %9848 = vmatprep.subr.mxu0 0.0
        %9849 = vmatpush1.msra.mxu0 %v9746
        %9850 = vmatprep.subr.mxu0 0.0
        %9851 = vmatpush1.msra.mxu0 %v9747
        %9852 = vmatprep.subr.mxu0 0.0
        %9853 = vmatpush1.msra.mxu0 %v9846
        %9854 = vmatprep.subr.mxu0 0.0
        %9855 = vmatpush1.msra.mxu0 0.0
        %9856 = vmatprep.subr.mxu0 0.0
        %9857 = vmatpush1.msra.mxu0 0.0
        %9858 = vmatprep.subr.mxu0 0.0
        %9859 = vmatpush1.msra.mxu0 0.0
        %9860 = vmatprep.subr.mxu0 0.0
        %9861 = vmatpush1.msra.mxu0 0.0
        %9862 = vmatprep.subr.mxu0 0.0
        %9863 = vmatpush1.msra.mxu0 0.0
        %9864 = vmatprep.subr.mxu0 0.0
        %9865 = vmatpush1.msra.mxu0 0.0
        %9866 = vmatprep.subr.mxu0 0.0
        %9867 = vmatpush1.msra.mxu0 0.0
        %9868 = vmatprep.subr.mxu0 0.0
        %9869 = vmatpush1.msra.mxu0 0.0
        %9870 = vmatprep.subr.mxu0 0.0
        %9871 = vmatpush1.msra.mxu0 0.0
        %9872 = vmatprep.subr.mxu0 0.0
        %9873 = vmatpush1.msra.mxu0 0.0
        %9874 = vmatprep.subr.mxu0 0.0
        %9875 = vmatpush1.msra.mxu0 0.0
        %9876 = vmatprep.subr.mxu0 0.0
        %9877 = vmatpush1.msra.mxu0 0.0
        %9878 = vmatprep.subr.mxu0 0.0
        %9879 = vmatpush1.msra.mxu0 0.0
        %9880 = vmatprep.subr.mxu0 0.0
        %9881 = vmatpush1.msra.mxu0 0.0
        %9882 = vmatprep.subr.mxu0 0.0
        %9883 = vmatpush1.msra.mxu0 0.0
        %9884 = vmatprep.subr.mxu0 0.0
        %9885 = vmatpush1.msra.mxu0 0.0
        %9886 = vmatprep.subr.mxu0 0.0
        %9887 = vmatpush1.msra.mxu0 0.0
        %9888 = vmatprep.subr.mxu0 0.0
        %9889 = vmatpush1.msra.mxu0 0.0
        %9890 = vmatprep.subr.mxu0 0.0
        %9891 = vmatpush1.msra.mxu0 0.0
        %9892 = vmatprep.subr.mxu0 0.0
        %9893 = vmatpush1.msra.mxu0 0.0
        %9894 = vmatprep.subr.mxu0 0.0
        %9895 = vmatpush1.msra.mxu0 0.0
        %9896 = vmatprep.subr.mxu0 0.0
        %9897 = vmatpush1.msra.mxu0 0.0
        %9898 = vmatprep.subr.mxu0 0.0
        %9899 = vmatpush1.msra.mxu0 0.0
        %9900 = vmatprep.subr.mxu0 0.0
        %9901 = vmatpush1.msra.mxu0 0.0
        %9902 = vmatprep.subr.mxu0 0.0
        %9903 = vmatpush1.msra.mxu0 0.0
        %9904 = vmatprep.subr.mxu0 0.0
        %9905 = vmatpush1.msra.mxu0 0.0
        %9906 = vmatprep.subr.mxu0 0.0
        %9907 = vmatpush1.msra.mxu0 0.0
        %9908 = vmatprep.subr.mxu0 0.0
        %9909 = vmatpush1.msra.mxu0 0.0
        %9910 = vmatprep.subr.mxu0 0.0
        %9911 = vmatpush1.msra.mxu0 0.0
        %9912 = vmatprep.mubr.f32.mxu0 0.0
        %9913 = vmatmul.mubr.f32.gmra.mrb[0].mxu0 %v9750
        %v9914 = vpop.f32.mrb[0].mxu0
        %v9915 = vadd.f32 0.0, %v9914
        %v9916 = vpop.f32.mrb[0].mxu0
        %9917 = vmatprep.mubr.f32.mxu0 0.0
        %9918 = vmatmul.mubr.f32.gmra.mrb[0].mxu0 %v9753
        %v9919 = vpop.f32.mrb[0].mxu0
        %v9920 = vadd.f32 0.0, %v9919
        %v9921 = vpop.f32.mrb[0].mxu0
        %9922 = vmatprep.mubr.f32.mxu0 0.0
        %9923 = vmatmul.mubr.f32.gmra.mrb[0].mxu0 %v9756
        %v9924 = vpop.f32.mrb[0].mxu0
        %v9925 = vadd.f32 0.0, %v9924
        %v9926 = vpop.f32.mrb[0].mxu0
        %9927 = vmatprep.mubr.f32.mxu0 0.0
        %9928 = vmatmul.mubr.f32.gmra.mrb[0].mxu0 %v9759
        %v9929 = vpop.f32.mrb[0].mxu0
        %v9930 = vadd.f32 0.0, %v9929
        %v9931 = vpop.f32.mrb[0].mxu0
        %9932 = vmatprep.mubr.f32.mxu0 0.0
        %9933 = vmatmul.mubr.f32.gmra.mrb[0].mxu0 %v9762
        %v9934 = vpop.f32.mrb[0].mxu0
        %v9935 = vadd.f32 0.0, %v9934
        %v9936 = vpop.f32.mrb[0].mxu0
        %9937 = vmatprep.mubr.f32.mxu0 0.0
        %9938 = vmatmul.mubr.f32.gmra.mrb[0].mxu0 %v9765
        %v9939 = vpop.f32.mrb[0].mxu0
        %v9940 = vadd.f32 0.0, %v9939
        %v9941 = vpop.f32.mrb[0].mxu0
        %9942 = vmatprep.mubr.f32.mxu0 0.0
        %9943 = vmatmul.mubr.f32.gmra.mrb[0].mxu0 %v9768
        %v9944 = vpop.f32.mrb[0].mxu0
        %v9945 = vadd.f32 0.0, %v9944
        %v9946 = vpop.f32.mrb[0].mxu0
        %9947 = vmatprep.mubr.f32.mxu0 0.0
        %9948 = vmatmul.mubr.f32.gmra.mrb[0].mxu0 %v9771
        %v9949 = vpop.f32.mrb[0].mxu0
        %v9950 = vadd.f32 0.0, %v9949
        %v9951 = vpop.f32.mrb[0].mxu0
        %9952 = vmatprep.mubr.f32.mxu0 0.0
        %9953 = vmatmul.mubr.f32.gmra.mrb[0].mxu0 %v9774
        %v9954 = vpop.f32.mrb[0].mxu0
        %v9955 = vadd.f32 0.0, %v9954
        %v9956 = vpop.f32.mrb[0].mxu0
        %9957 = vmatprep.mubr.f32.mxu0 0.0
        %9958 = vmatmul.mubr.f32.gmra.mrb[0].mxu0 %v9777
        %v9959 = vpop.f32.mrb[0].mxu0
        %v9960 = vadd.f32 0.0, %v9959
        %v9961 = vpop.f32.mrb[0].mxu0
        %9962 = vmatprep.mubr.f32.mxu0 0.0
        %9963 = vmatmul.mubr.f32.gmra.mrb[0].mxu0 %v9780
        %v9964 = vpop.f32.mrb[0].mxu0
        %v9965 = vadd.f32 0.0, %v9964
        %v9966 = vpop.f32.mrb[0].mxu0
        %9967 = vmatprep.mubr.f32.mxu0 0.0
        %9968 = vmatmul.mubr.f32.gmra.mrb[0].mxu0 %v9783
        %v9969 = vpop.f32.mrb[0].mxu0
        %v9970 = vadd.f32 0.0, %v9969
        %v9971 = vpop.f32.mrb[0].mxu0
        %9972 = vmatprep.mubr.f32.mxu0 0.0
        %9973 = vmatmul.mubr.f32.gmra.mrb[0].mxu0 %v9786
        %v9974 = vpop.f32.mrb[0].mxu0
        %v9975 = vadd.f32 0.0, %v9974
        %v9976 = vpop.f32.mrb[0].mxu0
        %9977 = vmatprep.mubr.f32.mxu0 0.0
        %9978 = vmatmul.mubr.f32.gmra.mrb[0].mxu0 %v9789
        %v9979 = vpop.f32.mrb[0].mxu0
        %v9980 = vadd.f32 0.0, %v9979
        %v9981 = vpop.f32.mrb[0].mxu0
        %9982 = vmatprep.mubr.f32.mxu0 0.0
        %9983 = vmatmul.mubr.f32.gmra.mrb[0].mxu0 %v9792
        %v9984 = vpop.f32.mrb[0].mxu0
        %v9985 = vadd.f32 0.0, %v9984
        %v9986 = vpop.f32.mrb[0].mxu0
        %9987 = vmatprep.mubr.f32.mxu0 0.0
        %9988 = vmatmul.mubr.f32.gmra.mrb[0].mxu0 %v9795
        %v9989 = vpop.f32.mrb[0].mxu0
        %v9990 = vadd.f32 0.0, %v9989
        %v9991 = vpop.f32.mrb[0].mxu0
        %9992 = vmatprep.mubr.f32.mxu0 0.0
        %9993 = vmatmul.mubr.f32.gmra.mrb[0].mxu0 %v9798
        %v9994 = vpop.f32.mrb[0].mxu0
        %v9995 = vadd.f32 0.0, %v9994
        %v9996 = vpop.f32.mrb[0].mxu0
        %9997 = vmatprep.mubr.f32.mxu0 0.0
        %9998 = vmatmul.mubr.f32.gmra.mrb[0].mxu0 %v9801
        %v9999 = vpop.f32.mrb[0].mxu0
        %v10000 = vadd.f32 0.0, %v9999
        %v10001 = vpop.f32.mrb[0].mxu0
        %10002 = vmatprep.mubr.f32.mxu0 0.0
        %10003 = vmatmul.mubr.f32.gmra.mrb[0].mxu0 %v9804
        %v10004 = vpop.f32.mrb[0].mxu0
        %v10005 = vadd.f32 0.0, %v10004
        %v10006 = vpop.f32.mrb[0].mxu0
        %10007 = vmatprep.mubr.f32.mxu0 0.0
        %10008 = vmatmul.mubr.f32.gmra.mrb[0].mxu0 %v9807
        %v10009 = vpop.f32.mrb[0].mxu0
        %v10010 = vadd.f32 0.0, %v10009
        %v10011 = vpop.f32.mrb[0].mxu0
        %10012 = vmatprep.mubr.f32.mxu0 0.0
        %10013 = vmatmul.mubr.f32.gmra.mrb[0].mxu0 %v9810
        %v10014 = vpop.f32.mrb[0].mxu0
        %v10015 = vadd.f32 0.0, %v10014
        %v10016 = vpop.f32.mrb[0].mxu0
        %10017 = vmatprep.mubr.f32.mxu0 0.0
        %10018 = vmatmul.mubr.f32.gmra.mrb[0].mxu0 %v9813
        %v10019 = vpop.f32.mrb[0].mxu0
        %v10020 = vadd.f32 0.0, %v10019
        %v10021 = vpop.f32.mrb[0].mxu0
        %10022 = vmatprep.mubr.f32.mxu0 0.0
        %10023 = vmatmul.mubr.f32.gmra.mrb[0].mxu0 %v9816
        %v10024 = vpop.f32.mrb[0].mxu0
        %v10025 = vadd.f32 0.0, %v10024
        %v10026 = vpop.f32.mrb[0].mxu0
        %10027 = vmatprep.mubr.f32.mxu0 0.0
        %10028 = vmatmul.mubr.f32.gmra.mrb[0].mxu0 %v9819
        %v10029 = vpop.f32.mrb[0].mxu0
        %v10030 = vadd.f32 0.0, %v10029
        %v10031 = vpop.f32.mrb[0].mxu0
        %10032 = vmatprep.mubr.f32.mxu0 0.0
        %10033 = vmatmul.mubr.f32.gmra.mrb[0].mxu0 %v9822
        %v10034 = vpop.f32.mrb[0].mxu0
        %v10035 = vadd.f32 0.0, %v10034
        %v10036 = vpop.f32.mrb[0].mxu0
        %10037 = vmatprep.mubr.f32.mxu0 0.0
        %10038 = vmatmul.mubr.f32.gmra.mrb[0].mxu0 %v9825
        %v10039 = vpop.f32.mrb[0].mxu0
        %v10040 = vadd.f32 0.0, %v10039
        %v10041 = vpop.f32.mrb[0].mxu0
        %10042 = vmatprep.mubr.f32.mxu0 0.0
        %10043 = vmatmul.mubr.f32.gmra.mrb[0].mxu0 %v9828
        %v10044 = vpop.f32.mrb[0].mxu0
        %v10045 = vadd.f32 0.0, %v10044
        %v10046 = vpop.f32.mrb[0].mxu0
        %10047 = vmatprep.mubr.f32.mxu0 0.0
        %10048 = vmatmul.mubr.f32.gmra.mrb[0].mxu0 %v9831
        %v10049 = vpop.f32.mrb[0].mxu0
        %v10050 = vadd.f32 0.0, %v10049
        %v10051 = vpop.f32.mrb[0].mxu0
        %10052 = vmatprep.mubr.f32.mxu0 0.0
        %10053 = vmatmul.mubr.f32.gmra.mrb[0].mxu0 %v9834
        %v10054 = vpop.f32.mrb[0].mxu0
        %v10055 = vadd.f32 0.0, %v10054
        %v10056 = vpop.f32.mrb[0].mxu0
        %10057 = vmatprep.mubr.f32.mxu0 0.0
        %10058 = vmatmul.mubr.f32.gmra.mrb[0].mxu0 %v9837
        %v10059 = vpop.f32.mrb[0].mxu0
        %v10060 = vadd.f32 0.0, %v10059
        %v10061 = vpop.f32.mrb[0].mxu0
        %10062 = vmatprep.mubr.f32.mxu0 0.0
        %10063 = vmatmul.mubr.f32.gmra.mrb[0].mxu0 %v9840
        %v10064 = vpop.f32.mrb[0].mxu0
        %v10065 = vadd.f32 0.0, %v10064
        %v10066 = vpop.f32.mrb[0].mxu0
        %10067 = vmatprep.mubr.f32.mxu0 0.0
        %10068 = vmatmul.mubr.f32.gmra.mrb[0].mxu0 %v9843
        %v10069 = vpop.f32.mrb[0].mxu0
        %v10070 = vadd.f32 0.0, %v10069
        %v10071 = vpop.f32.mrb[0].mxu0
        %10072 = vdwg.mxu0
        %v10073 = vadd.f32 %v8785, %v9915
        %v10074 = vadd.f32 %v8786, %v9920
        %v10075 = vadd.f32 %v8787, %v9925
        %v10076 = vadd.f32 %v8788, %v9930
        %v10077 = vadd.f32 %v8789, %v9935
        %v10078 = vadd.f32 %v8790, %v9940
        %v10079 = vadd.f32 %v8791, %v9945
        %v10080 = vadd.f32 %v8792, %v9950
        %v10081 = vadd.f32 %v8793, %v9955
        %v10082 = vadd.f32 %v8794, %v9960
        %v10083 = vadd.f32 %v8795, %v9965
        %v10084 = vadd.f32 %v8796, %v9970
        %v10085 = vadd.f32 %v8797, %v9975
        %v10086 = vadd.f32 %v8798, %v9980
        %v10087 = vadd.f32 %v8799, %v9985
        %v10088 = vadd.f32 %v8800, %v9990
        %v10089 = vadd.f32 %v8801, %v9995
        %v10090 = vadd.f32 %v8802, %v10000
        %v10091 = vadd.f32 %v8803, %v10005
        %v10092 = vadd.f32 %v8804, %v10010
        %v10093 = vadd.f32 %v8805, %v10015
        %v10094 = vadd.f32 %v8806, %v10020
        %v10095 = vadd.f32 %v8807, %v10025
        %v10096 = vadd.f32 %v8808, %v10030
        %v10097 = vadd.f32 %v8809, %v10035
        %v10098 = vadd.f32 %v8810, %v10040
        %v10099 = vadd.f32 %v8811, %v10045
        %v10100 = vadd.f32 %v8812, %v10050
        %v10101 = vadd.f32 %v8813, %v10055
        %v10102 = vadd.f32 %v8814, %v10060
        %v10103 = vadd.f32 %v8815, %v10065
        %v10104 = vadd.f32 %v8816, %v10070
        %v10105 = vld [vmem:[%s6] sm:$0x1]
        %v10107 = vlaneseq
        %v10108 = vshrl.u32 %v10107, 7
        %v10109 = vsub.s32 0, %v10108
        %v10110 = vrot.slane %v10105, %v10109
        %v10112 = vadd.f32 %v10073, %v10110
        %v10113 = vadd.f32 %v10074, %v10110
        %v10114 = vadd.f32 %v10075, %v10110
        %v10115 = vadd.f32 %v10076, %v10110
        %v10116 = vadd.f32 %v10077, %v10110
        %v10117 = vadd.f32 %v10078, %v10110
        %v10118 = vadd.f32 %v10079, %v10110
        %v10119 = vadd.f32 %v10080, %v10110
        %v10120 = vadd.f32 %v10081, %v10110
        %v10121 = vadd.f32 %v10082, %v10110
        %v10122 = vadd.f32 %v10083, %v10110
        %v10123 = vadd.f32 %v10084, %v10110
        %v10124 = vadd.f32 %v10085, %v10110
        %v10125 = vadd.f32 %v10086, %v10110
        %v10126 = vadd.f32 %v10087, %v10110
        %v10127 = vadd.f32 %v10088, %v10110
        %v10128 = vadd.f32 %v10089, %v10110
        %v10129 = vadd.f32 %v10090, %v10110
        %v10130 = vadd.f32 %v10091, %v10110
        %v10131 = vadd.f32 %v10092, %v10110
        %v10132 = vadd.f32 %v10093, %v10110
        %v10133 = vadd.f32 %v10094, %v10110
        %v10134 = vadd.f32 %v10095, %v10110
        %v10135 = vadd.f32 %v10096, %v10110
        %v10136 = vadd.f32 %v10097, %v10110
        %v10137 = vadd.f32 %v10098, %v10110
        %v10138 = vadd.f32 %v10099, %v10110
        %v10139 = vadd.f32 %v10100, %v10110
        %v10140 = vadd.f32 %v10101, %v10110
        %v10141 = vadd.f32 %v10102, %v10110
        %v10142 = vadd.f32 %v10103, %v10110
        %v10143 = vadd.f32 %v10104, %v10110
        %v10144 = vmax.f32 %v10112, 0.0
        %v10145 = vmax.f32 %v10113, 0.0
        %v10146 = vmax.f32 %v10114, 0.0
        %v10147 = vmax.f32 %v10115, 0.0
        %v10148 = vmax.f32 %v10116, 0.0
        %v10149 = vmax.f32 %v10117, 0.0
        %v10150 = vmax.f32 %v10118, 0.0
        %v10151 = vmax.f32 %v10119, 0.0
        %v10152 = vmax.f32 %v10120, 0.0
        %v10153 = vmax.f32 %v10121, 0.0
        %v10154 = vmax.f32 %v10122, 0.0
        %v10155 = vmax.f32 %v10123, 0.0
        %v10156 = vmax.f32 %v10124, 0.0
        %v10157 = vmax.f32 %v10125, 0.0
        %v10158 = vmax.f32 %v10126, 0.0
        %v10159 = vmax.f32 %v10127, 0.0
        %v10160 = vmax.f32 %v10128, 0.0
        %v10161 = vmax.f32 %v10129, 0.0
        %v10162 = vmax.f32 %v10130, 0.0
        %v10163 = vmax.f32 %v10131, 0.0
        %v10164 = vmax.f32 %v10132, 0.0
        %v10165 = vmax.f32 %v10133, 0.0
        %v10166 = vmax.f32 %v10134, 0.0
        %v10167 = vmax.f32 %v10135, 0.0
        %v10168 = vmax.f32 %v10136, 0.0
        %v10169 = vmax.f32 %v10137, 0.0
        %v10170 = vmax.f32 %v10138, 0.0
        %v10171 = vmax.f32 %v10139, 0.0
        %v10172 = vmax.f32 %v10140, 0.0
        %v10173 = vmax.f32 %v10141, 0.0
        %v10174 = vmax.f32 %v10142, 0.0
        %v10175 = vmax.f32 %v10143, 0.0
        %vm10176 = vcmask 1040384
        %v10177 = vrot.slane %v331, 7
        %v10178 = vrot.slane %v332, 7
        %v10179 = vsel %vm10176, %v10177, %v10178
        %v10180 = vrot.slane %v333, 7
        %v10181 = vrot.slane %v334, 7
        %v10182 = vsel %vm10176, %v10180, %v10181
        %v10183 = vrot.slane %v335, 7
        %v10184 = vrot.slane %v336, 7
        %v10185 = vsel %vm10176, %v10183, %v10184
        %v10186 = vrot.slane %v337, 7
        %v10187 = vrot.slane %v338, 7
        %v10188 = vsel %vm10176, %v10186, %v10187
        %v10189 = vrot.slane %v339, 7
        %v10190 = vrot.slane %v340, 7
        %v10191 = vsel %vm10176, %v10189, %v10190
        %v10192 = vrot.slane %v341, 7
        %v10193 = vrot.slane %v342, 7
        %v10194 = vsel %vm10176, %v10192, %v10193
        %v10195 = vrot.slane %v343, 7
        %v10196 = vrot.slane %v344, 7
        %v10197 = vsel %vm10176, %v10195, %v10196
        %v10198 = vrot.slane %v345, 7
        %v10199 = vrot.slane %v346, 7
        %v10200 = vsel %vm10176, %v10198, %v10199
        %v10201 = vrot.slane %v347, 7
        %v10202 = vrot.slane %v348, 7
        %v10203 = vsel %vm10176, %v10201, %v10202
        %v10204 = vrot.slane %v349, 7
        %v10205 = vrot.slane %v350, 7
        %v10206 = vsel %vm10176, %v10204, %v10205
        %v10207 = vrot.slane %v351, 7
        %v10208 = vrot.slane %v352, 7
        %v10209 = vsel %vm10176, %v10207, %v10208
        %v10210 = vrot.slane %v353, 7
        %v10211 = vrot.slane %v354, 7
        %v10212 = vsel %vm10176, %v10210, %v10211
        %v10213 = vrot.slane %v355, 7
        %v10214 = vrot.slane %v356, 7
        %v10215 = vsel %vm10176, %v10213, %v10214
        %v10216 = vrot.slane %v357, 7
        %v10217 = vrot.slane %v358, 7
        %v10218 = vsel %vm10176, %v10216, %v10217
        %v10219 = vrot.slane %v359, 7
        %v10220 = vrot.slane %v360, 7
        %v10221 = vsel %vm10176, %v10219, %v10220
        %v10222 = vrot.slane %v361, 7
        %v10223 = vrot.slane %v362, 7
        %v10224 = vsel %vm10176, %v10222, %v10223
        %v10257 = vsel %vm10176, -inf, %v10177
        %v10258 = vsel %vm10176, -inf, %v10180
        %v10259 = vsel %vm10176, -inf, %v10183
        %v10260 = vsel %vm10176, -inf, %v10186
        %v10261 = vsel %vm10176, -inf, %v10189
        %v10262 = vsel %vm10176, -inf, %v10192
        %v10263 = vsel %vm10176, -inf, %v10195
        %v10264 = vsel %vm10176, -inf, %v10198
        %v10265 = vsel %vm10176, -inf, %v10201
        %v10266 = vsel %vm10176, -inf, %v10204
        %v10267 = vsel %vm10176, -inf, %v10207
        %v10268 = vsel %vm10176, -inf, %v10210
        %v10269 = vsel %vm10176, -inf, %v10213
        %v10270 = vsel %vm10176, -inf, %v10216
        %v10271 = vsel %vm10176, -inf, %v10219
        %v10272 = vsel %vm10176, -inf, %v10222
        %v10273 = vrot.slane %v331, 1
        %v10274 = vrot.slane %v332, 1
        %v10275 = vsel %vm1027, %v10273, %v10274
        %v10276 = vrot.slane %v333, 1
        %v10277 = vrot.slane %v334, 1
        %v10278 = vsel %vm1027, %v10276, %v10277
        %v10279 = vrot.slane %v335, 1
        %v10280 = vrot.slane %v336, 1
        %v10281 = vsel %vm1027, %v10279, %v10280
        %v10282 = vrot.slane %v337, 1
        %v10283 = vrot.slane %v338, 1
        %v10284 = vsel %vm1027, %v10282, %v10283
        %v10285 = vrot.slane %v339, 1
        %v10286 = vrot.slane %v340, 1
        %v10287 = vsel %vm1027, %v10285, %v10286
        %v10288 = vrot.slane %v341, 1
        %v10289 = vrot.slane %v342, 1
        %v10290 = vsel %vm1027, %v10288, %v10289
        %v10291 = vrot.slane %v343, 1
        %v10292 = vrot.slane %v344, 1
        %v10293 = vsel %vm1027, %v10291, %v10292
        %v10294 = vrot.slane %v345, 1
        %v10295 = vrot.slane %v346, 1
        %v10296 = vsel %vm1027, %v10294, %v10295
        %v10297 = vrot.slane %v347, 1
        %v10298 = vrot.slane %v348, 1
        %v10299 = vsel %vm1027, %v10297, %v10298
        %v10300 = vrot.slane %v349, 1
        %v10301 = vrot.slane %v350, 1
        %v10302 = vsel %vm1027, %v10300, %v10301
        %v10303 = vrot.slane %v351, 1
        %v10304 = vrot.slane %v352, 1
        %v10305 = vsel %vm1027, %v10303, %v10304
        %v10306 = vrot.slane %v353, 1
        %v10307 = vrot.slane %v354, 1
        %v10308 = vsel %vm1027, %v10306, %v10307
        %v10309 = vrot.slane %v355, 1
        %v10310 = vrot.slane %v356, 1
        %v10311 = vsel %vm1027, %v10309, %v10310
        %v10312 = vrot.slane %v357, 1
        %v10313 = vrot.slane %v358, 1
        %v10314 = vsel %vm1027, %v10312, %v10313
        %v10315 = vrot.slane %v359, 1
        %v10316 = vrot.slane %v360, 1
        %v10317 = vsel %vm1027, %v10315, %v10316
        %v10318 = vrot.slane %v361, 1
        %v10319 = vrot.slane %v362, 1
        %v10320 = vsel %vm1027, %v10318, %v10319
        %v10353 = vsel %vm1027, %v10274, -inf
        %v10354 = vsel %vm1027, %v10277, -inf
        %v10355 = vsel %vm1027, %v10280, -inf
        %v10356 = vsel %vm1027, %v10283, -inf
        %v10357 = vsel %vm1027, %v10286, -inf
        %v10358 = vsel %vm1027, %v10289, -inf
        %v10359 = vsel %vm1027, %v10292, -inf
        %v10360 = vsel %vm1027, %v10295, -inf
        %v10361 = vsel %vm1027, %v10298, -inf
        %v10362 = vsel %vm1027, %v10301, -inf
        %v10363 = vsel %vm1027, %v10304, -inf
        %v10364 = vsel %vm1027, %v10307, -inf
        %v10365 = vsel %vm1027, %v10310, -inf
        %v10366 = vsel %vm1027, %v10313, -inf
        %v10367 = vsel %vm1027, %v10316, -inf
        %v10368 = vsel %vm1027, %v10319, -inf
        %v10369 = vmax.f32 %v10257, %v331
        %v10370 = vmax.f32 %v10179, %v332
        %v10371 = vmax.f32 %v10258, %v333
        %v10372 = vmax.f32 %v10182, %v334
        %v10373 = vmax.f32 %v10259, %v335
        %v10374 = vmax.f32 %v10185, %v336
        %v10375 = vmax.f32 %v10260, %v337
        %v10376 = vmax.f32 %v10188, %v338
        %v10377 = vmax.f32 %v10261, %v339
        %v10378 = vmax.f32 %v10191, %v340
        %v10379 = vmax.f32 %v10262, %v341
        %v10380 = vmax.f32 %v10194, %v342
        %v10381 = vmax.f32 %v10263, %v343
        %v10382 = vmax.f32 %v10197, %v344
        %v10383 = vmax.f32 %v10264, %v345
        %v10384 = vmax.f32 %v10200, %v346
        %v10385 = vmax.f32 %v10265, %v347
        %v10386 = vmax.f32 %v10203, %v348
        %v10387 = vmax.f32 %v10266, %v349
        %v10388 = vmax.f32 %v10206, %v350
        %v10389 = vmax.f32 %v10267, %v351
        %v10390 = vmax.f32 %v10209, %v352
        %v10391 = vmax.f32 %v10268, %v353
        %v10392 = vmax.f32 %v10212, %v354
        %v10393 = vmax.f32 %v10269, %v355
        %v10394 = vmax.f32 %v10215, %v356
        %v10395 = vmax.f32 %v10270, %v357
        %v10396 = vmax.f32 %v10218, %v358
        %v10397 = vmax.f32 %v10271, %v359
        %v10398 = vmax.f32 %v10221, %v360
        %v10399 = vmax.f32 %v10272, %v361
        %v10400 = vmax.f32 %v10224, %v362
        %v10401 = vmax.f32 %v10369, %v10275
        %v10402 = vmax.f32 %v10370, %v10353
        %v10403 = vmax.f32 %v10371, %v10278
        %v10404 = vmax.f32 %v10372, %v10354
        %v10405 = vmax.f32 %v10373, %v10281
        %v10406 = vmax.f32 %v10374, %v10355
        %v10407 = vmax.f32 %v10375, %v10284
        %v10408 = vmax.f32 %v10376, %v10356
        %v10409 = vmax.f32 %v10377, %v10287
        %v10410 = vmax.f32 %v10378, %v10357
        %v10411 = vmax.f32 %v10379, %v10290
        %v10412 = vmax.f32 %v10380, %v10358
        %v10413 = vmax.f32 %v10381, %v10293
        %v10414 = vmax.f32 %v10382, %v10359
        %v10415 = vmax.f32 %v10383, %v10296
        %v10416 = vmax.f32 %v10384, %v10360
        %v10417 = vmax.f32 %v10385, %v10299
        %v10418 = vmax.f32 %v10386, %v10361
        %v10419 = vmax.f32 %v10387, %v10302
        %v10420 = vmax.f32 %v10388, %v10362
        %v10421 = vmax.f32 %v10389, %v10305
        %v10422 = vmax.f32 %v10390, %v10363
        %v10423 = vmax.f32 %v10391, %v10308
        %v10424 = vmax.f32 %v10392, %v10364
        %v10425 = vmax.f32 %v10393, %v10311
        %v10426 = vmax.f32 %v10394, %v10365
        %v10427 = vmax.f32 %v10395, %v10314
        %v10428 = vmax.f32 %v10396, %v10366
        %v10429 = vmax.f32 %v10397, %v10317
        %v10430 = vmax.f32 %v10398, %v10367
        %v10431 = vmax.f32 %v10399, %v10320
        %v10432 = vmax.f32 %v10400, %v10368
        %v10433 = vmax.f32 %v10401, %v10403
        %v10434 = vmax.f32 %v10402, %v10404
        %v10435 = vmax.f32 %v10403, %v10405
        %v10436 = vmax.f32 %v10404, %v10406
        %v10437 = vmax.f32 %v10405, %v10407
        %v10438 = vmax.f32 %v10406, %v10408
        %v10439 = vmax.f32 %v10407, %v10409
        %v10440 = vmax.f32 %v10408, %v10410
        %v10441 = vmax.f32 %v10409, %v10411
        %v10442 = vmax.f32 %v10410, %v10412
        %v10443 = vmax.f32 %v10411, %v10413
        %v10444 = vmax.f32 %v10412, %v10414
        %v10445 = vmax.f32 %v10413, %v10415
        %v10446 = vmax.f32 %v10414, %v10416
        %v10447 = vmax.f32 %v10415, %v10417
        %v10448 = vmax.f32 %v10416, %v10418
        %v10449 = vmax.f32 %v10417, %v10419
        %v10450 = vmax.f32 %v10418, %v10420
        %v10451 = vmax.f32 %v10419, %v10421
        %v10452 = vmax.f32 %v10420, %v10422
        %v10453 = vmax.f32 %v10421, %v10423
        %v10454 = vmax.f32 %v10422, %v10424
        %v10455 = vmax.f32 %v10423, %v10425
        %v10456 = vmax.f32 %v10424, %v10426
        %v10457 = vmax.f32 %v10425, %v10427
        %v10458 = vmax.f32 %v10426, %v10428
        %v10459 = vmax.f32 %v10427, %v10429
        %v10460 = vmax.f32 %v10428, %v10430
        %v10461 = vmax.f32 %v10429, %v10431
        %v10462 = vmax.f32 %v10430, %v10432
        %v10463 = vmax.f32 %v10433, %v10405
        %v10464 = vmax.f32 %v10434, %v10406
        %v10465 = vmax.f32 %v10435, %v10407
        %v10466 = vmax.f32 %v10436, %v10408
        %v10467 = vmax.f32 %v10437, %v10409
        %v10468 = vmax.f32 %v10438, %v10410
        %v10469 = vmax.f32 %v10439, %v10411
        %v10470 = vmax.f32 %v10440, %v10412
        %v10471 = vmax.f32 %v10441, %v10413
        %v10472 = vmax.f32 %v10442, %v10414
        %v10473 = vmax.f32 %v10443, %v10415
        %v10474 = vmax.f32 %v10444, %v10416
        %v10475 = vmax.f32 %v10445, %v10417
        %v10476 = vmax.f32 %v10446, %v10418
        %v10477 = vmax.f32 %v10447, %v10419
        %v10478 = vmax.f32 %v10448, %v10420
        %v10479 = vmax.f32 %v10449, %v10421
        %v10480 = vmax.f32 %v10450, %v10422
        %v10481 = vmax.f32 %v10451, %v10423
        %v10482 = vmax.f32 %v10452, %v10424
        %v10483 = vmax.f32 %v10453, %v10425
        %v10484 = vmax.f32 %v10454, %v10426
        %v10485 = vmax.f32 %v10455, %v10427
        %v10486 = vmax.f32 %v10456, %v10428
        %v10487 = vmax.f32 %v10457, %v10429
        %v10488 = vmax.f32 %v10458, %v10430
        %v10489 = vmax.f32 %v10459, %v10431
        %v10490 = vmax.f32 %v10460, %v10432
        %v10491 = vld [vmem:[%s7] sm:$0xf]
        %v10492 = vld [vmem:[%s8] sm:$0x1]
        %v10494 = vlaneseq
        %v10495 = vshrl.u32 %v10494, 7
        %v10496 = vsub.s32 0, %v10495
        %v10497 = vrot.slane %v10492, %v10496
        %v10500 = vsel %vm371, %v10433, 0
        %v10503 = vsel %vm371, %v10434, 0
        %v10506 = vsel %vm371, %v10463, 0
        %v10509 = vsel %vm371, %v10464, 0
        %v10512 = vsel %vm371, %v10465, 0
        %v10515 = vsel %vm371, %v10466, 0
        %v10518 = vsel %vm371, %v10467, 0
        %v10521 = vsel %vm371, %v10468, 0
        %v10524 = vsel %vm371, %v10469, 0
        %v10527 = vsel %vm371, %v10470, 0
        %v10530 = vsel %vm371, %v10471, 0
        %v10533 = vsel %vm371, %v10472, 0
        %v10536 = vsel %vm371, %v10473, 0
        %v10539 = vsel %vm371, %v10474, 0
        %v10542 = vsel %vm371, %v10475, 0
        %v10545 = vsel %vm371, %v10476, 0
        %v10548 = vsel %vm371, %v10477, 0
        %v10551 = vsel %vm371, %v10478, 0
        %v10554 = vsel %vm371, %v10479, 0
        %v10557 = vsel %vm371, %v10480, 0
        %v10560 = vsel %vm371, %v10481, 0
        %v10563 = vsel %vm371, %v10482, 0
        %v10566 = vsel %vm371, %v10483, 0
        %v10569 = vsel %vm371, %v10484, 0
        %v10572 = vsel %vm371, %v10485, 0
        %v10575 = vsel %vm371, %v10486, 0
        %v10578 = vsel %vm371, %v10487, 0
        %v10581 = vsel %vm371, %v10488, 0
        %v10584 = vsel %vm371, %v10489, 0
        %v10587 = vsel %vm371, %v10490, 0
        %v10590 = vsel %vm371, %v10461, 0
        %v10593 = vsel %vm371, %v10462, 0
        %v10596 = vsel %vm468, %v10491, 0
        %10598 = vmatprep.subr.mxu0 0.0
        %10599 = vmatpush1.msra.mxu0 %v10596
        %10600 = vmatprep.subr.mxu0 0.0
        %10601 = vmatpush1.msra.mxu0 0.0
        %10602 = vmatprep.subr.mxu0 0.0
        %10603 = vmatpush1.msra.mxu0 0.0
        %10604 = vmatprep.subr.mxu0 0.0
        %10605 = vmatpush1.msra.mxu0 0.0
        %10606 = vmatprep.subr.mxu0 0.0
        %10607 = vmatpush1.msra.mxu0 0.0
        %10608 = vmatprep.subr.mxu0 0.0
        %10609 = vmatpush1.msra.mxu0 0.0
        %10610 = vmatprep.subr.mxu0 0.0
        %10611 = vmatpush1.msra.mxu0 0.0
        %10612 = vmatprep.subr.mxu0 0.0
        %10613 = vmatpush1.msra.mxu0 0.0
        %10614 = vmatprep.subr.mxu0 0.0
        %10615 = vmatpush1.msra.mxu0 0.0
        %10616 = vmatprep.subr.mxu0 0.0
        %10617 = vmatpush1.msra.mxu0 0.0
        %10618 = vmatprep.subr.mxu0 0.0
        %10619 = vmatpush1.msra.mxu0 0.0
        %10620 = vmatprep.subr.mxu0 0.0
        %10621 = vmatpush1.msra.mxu0 0.0
        %10622 = vmatprep.subr.mxu0 0.0
        %10623 = vmatpush1.msra.mxu0 0.0
        %10624 = vmatprep.subr.mxu0 0.0
        %10625 = vmatpush1.msra.mxu0 0.0
        %10626 = vmatprep.subr.mxu0 0.0
        %10627 = vmatpush1.msra.mxu0 0.0
        %10628 = vmatprep.subr.mxu0 0.0
        %10629 = vmatpush1.msra.mxu0 0.0
        %10630 = vmatprep.subr.mxu0 0.0
        %10631 = vmatpush1.msra.mxu0 0.0
        %10632 = vmatprep.subr.mxu0 0.0
        %10633 = vmatpush1.msra.mxu0 0.0
        %10634 = vmatprep.subr.mxu0 0.0
        %10635 = vmatpush1.msra.mxu0 0.0
        %10636 = vmatprep.subr.mxu0 0.0
        %10637 = vmatpush1.msra.mxu0 0.0
        %10638 = vmatprep.subr.mxu0 0.0
        %10639 = vmatpush1.msra.mxu0 0.0
        %10640 = vmatprep.subr.mxu0 0.0
        %10641 = vmatpush1.msra.mxu0 0.0
        %10642 = vmatprep.subr.mxu0 0.0
        %10643 = vmatpush1.msra.mxu0 0.0
        %10644 = vmatprep.subr.mxu0 0.0
        %10645 = vmatpush1.msra.mxu0 0.0
        %10646 = vmatprep.subr.mxu0 0.0
        %10647 = vmatpush1.msra.mxu0 0.0
        %10648 = vmatprep.subr.mxu0 0.0
        %10649 = vmatpush1.msra.mxu0 0.0
        %10650 = vmatprep.subr.mxu0 0.0
        %10651 = vmatpush1.msra.mxu0 0.0
        %10652 = vmatprep.subr.mxu0 0.0
        %10653 = vmatpush1.msra.mxu0 0.0
        %10654 = vmatprep.subr.mxu0 0.0
        %10655 = vmatpush1.msra.mxu0 0.0
        %10656 = vmatprep.subr.mxu0 0.0
        %10657 = vmatpush1.msra.mxu0 0.0
        %10658 = vmatprep.subr.mxu0 0.0
        %10659 = vmatpush1.msra.mxu0 0.0
        %10660 = vmatprep.subr.mxu0 0.0
        %10661 = vmatpush1.msra.mxu0 0.0
        %10662 = vmatprep.mubr.f32.mxu0 0.0
        %10663 = vmatmul.mubr.f32.gmra.mrb[0].mxu0 %v10500
        %v10664 = vpop.f32.mrb[0].mxu0
        %v10665 = vadd.f32 %v10497, %v10664
        %v10666 = vpop.f32.mrb[0].mxu0
        %10667 = vmatprep.mubr.f32.mxu0 0.0
        %10668 = vmatmul.mubr.f32.gmra.mrb[0].mxu0 %v10503
        %v10669 = vpop.f32.mrb[0].mxu0
        %v10670 = vadd.f32 %v10497, %v10669
        %v10671 = vpop.f32.mrb[0].mxu0
        %10672 = vmatprep.mubr.f32.mxu0 0.0
        %10673 = vmatmul.mubr.f32.gmra.mrb[0].mxu0 %v10506
        %v10674 = vpop.f32.mrb[0].mxu0
        %v10675 = vadd.f32 %v10497, %v10674
        %v10676 = vpop.f32.mrb[0].mxu0
        %10677 = vmatprep.mubr.f32.mxu0 0.0
        %10678 = vmatmul.mubr.f32.gmra.mrb[0].mxu0 %v10509
        %v10679 = vpop.f32.mrb[0].mxu0
        %v10680 = vadd.f32 %v10497, %v10679
        %v10681 = vpop.f32.mrb[0].mxu0
        %10682 = vmatprep.mubr.f32.mxu0 0.0
        %10683 = vmatmul.mubr.f32.gmra.mrb[0].mxu0 %v10512
        %v10684 = vpop.f32.mrb[0].mxu0
        %v10685 = vadd.f32 %v10497, %v10684
        %v10686 = vpop.f32.mrb[0].mxu0
        %10687 = vmatprep.mubr.f32.mxu0 0.0
        %10688 = vmatmul.mubr.f32.gmra.mrb[0].mxu0 %v10515
        %v10689 = vpop.f32.mrb[0].mxu0
        %v10690 = vadd.f32 %v10497, %v10689
        %v10691 = vpop.f32.mrb[0].mxu0
        %10692 = vmatprep.mubr.f32.mxu0 0.0
        %10693 = vmatmul.mubr.f32.gmra.mrb[0].mxu0 %v10518
        %v10694 = vpop.f32.mrb[0].mxu0
        %v10695 = vadd.f32 %v10497, %v10694
        %v10696 = vpop.f32.mrb[0].mxu0
        %10697 = vmatprep.mubr.f32.mxu0 0.0
        %10698 = vmatmul.mubr.f32.gmra.mrb[0].mxu0 %v10521
        %v10699 = vpop.f32.mrb[0].mxu0
        %v10700 = vadd.f32 %v10497, %v10699
        %v10701 = vpop.f32.mrb[0].mxu0
        %10702 = vmatprep.mubr.f32.mxu0 0.0
        %10703 = vmatmul.mubr.f32.gmra.mrb[0].mxu0 %v10524
        %v10704 = vpop.f32.mrb[0].mxu0
        %v10705 = vadd.f32 %v10497, %v10704
        %v10706 = vpop.f32.mrb[0].mxu0
        %10707 = vmatprep.mubr.f32.mxu0 0.0
        %10708 = vmatmul.mubr.f32.gmra.mrb[0].mxu0 %v10527
        %v10709 = vpop.f32.mrb[0].mxu0
        %v10710 = vadd.f32 %v10497, %v10709
        %v10711 = vpop.f32.mrb[0].mxu0
        %10712 = vmatprep.mubr.f32.mxu0 0.0
        %10713 = vmatmul.mubr.f32.gmra.mrb[0].mxu0 %v10530
        %v10714 = vpop.f32.mrb[0].mxu0
        %v10715 = vadd.f32 %v10497, %v10714
        %v10716 = vpop.f32.mrb[0].mxu0
        %10717 = vmatprep.mubr.f32.mxu0 0.0
        %10718 = vmatmul.mubr.f32.gmra.mrb[0].mxu0 %v10533
        %v10719 = vpop.f32.mrb[0].mxu0
        %v10720 = vadd.f32 %v10497, %v10719
        %v10721 = vpop.f32.mrb[0].mxu0
        %10722 = vmatprep.mubr.f32.mxu0 0.0
        %10723 = vmatmul.mubr.f32.gmra.mrb[0].mxu0 %v10536
        %v10724 = vpop.f32.mrb[0].mxu0
        %v10725 = vadd.f32 %v10497, %v10724
        %v10726 = vpop.f32.mrb[0].mxu0
        %10727 = vmatprep.mubr.f32.mxu0 0.0
        %10728 = vmatmul.mubr.f32.gmra.mrb[0].mxu0 %v10539
        %v10729 = vpop.f32.mrb[0].mxu0
        %v10730 = vadd.f32 %v10497, %v10729
        %v10731 = vpop.f32.mrb[0].mxu0
        %10732 = vmatprep.mubr.f32.mxu0 0.0
        %10733 = vmatmul.mubr.f32.gmra.mrb[0].mxu0 %v10542
        %v10734 = vpop.f32.mrb[0].mxu0
        %v10735 = vadd.f32 %v10497, %v10734
        %v10736 = vpop.f32.mrb[0].mxu0
        %10737 = vmatprep.mubr.f32.mxu0 0.0
        %10738 = vmatmul.mubr.f32.gmra.mrb[0].mxu0 %v10545
        %v10739 = vpop.f32.mrb[0].mxu0
        %v10740 = vadd.f32 %v10497, %v10739
        %v10741 = vpop.f32.mrb[0].mxu0
        %10742 = vmatprep.mubr.f32.mxu0 0.0
        %10743 = vmatmul.mubr.f32.gmra.mrb[0].mxu0 %v10548
        %v10744 = vpop.f32.mrb[0].mxu0
        %v10745 = vadd.f32 %v10497, %v10744
        %v10746 = vpop.f32.mrb[0].mxu0
        %10747 = vmatprep.mubr.f32.mxu0 0.0
        %10748 = vmatmul.mubr.f32.gmra.mrb[0].mxu0 %v10551
        %v10749 = vpop.f32.mrb[0].mxu0
        %v10750 = vadd.f32 %v10497, %v10749
        %v10751 = vpop.f32.mrb[0].mxu0
        %10752 = vmatprep.mubr.f32.mxu0 0.0
        %10753 = vmatmul.mubr.f32.gmra.mrb[0].mxu0 %v10554
        %v10754 = vpop.f32.mrb[0].mxu0
        %v10755 = vadd.f32 %v10497, %v10754
        %v10756 = vpop.f32.mrb[0].mxu0
        %10757 = vmatprep.mubr.f32.mxu0 0.0
        %10758 = vmatmul.mubr.f32.gmra.mrb[0].mxu0 %v10557
        %v10759 = vpop.f32.mrb[0].mxu0
        %v10760 = vadd.f32 %v10497, %v10759
        %v10761 = vpop.f32.mrb[0].mxu0
        %10762 = vmatprep.mubr.f32.mxu0 0.0
        %10763 = vmatmul.mubr.f32.gmra.mrb[0].mxu0 %v10560
        %v10764 = vpop.f32.mrb[0].mxu0
        %v10765 = vadd.f32 %v10497, %v10764
        %v10766 = vpop.f32.mrb[0].mxu0
        %10767 = vmatprep.mubr.f32.mxu0 0.0
        %10768 = vmatmul.mubr.f32.gmra.mrb[0].mxu0 %v10563
        %v10769 = vpop.f32.mrb[0].mxu0
        %v10770 = vadd.f32 %v10497, %v10769
        %v10771 = vpop.f32.mrb[0].mxu0
        %10772 = vmatprep.mubr.f32.mxu0 0.0
        %10773 = vmatmul.mubr.f32.gmra.mrb[0].mxu0 %v10566
        %v10774 = vpop.f32.mrb[0].mxu0
        %v10775 = vadd.f32 %v10497, %v10774
        %v10776 = vpop.f32.mrb[0].mxu0
        %10777 = vmatprep.mubr.f32.mxu0 0.0
        %10778 = vmatmul.mubr.f32.gmra.mrb[0].mxu0 %v10569
        %v10779 = vpop.f32.mrb[0].mxu0
        %v10780 = vadd.f32 %v10497, %v10779
        %v10781 = vpop.f32.mrb[0].mxu0
        %10782 = vmatprep.mubr.f32.mxu0 0.0
        %10783 = vmatmul.mubr.f32.gmra.mrb[0].mxu0 %v10572
        %v10784 = vpop.f32.mrb[0].mxu0
        %v10785 = vadd.f32 %v10497, %v10784
        %v10786 = vpop.f32.mrb[0].mxu0
        %10787 = vmatprep.mubr.f32.mxu0 0.0
        %10788 = vmatmul.mubr.f32.gmra.mrb[0].mxu0 %v10575
        %v10789 = vpop.f32.mrb[0].mxu0
        %v10790 = vadd.f32 %v10497, %v10789
        %v10791 = vpop.f32.mrb[0].mxu0
        %10792 = vmatprep.mubr.f32.mxu0 0.0
        %10793 = vmatmul.mubr.f32.gmra.mrb[0].mxu0 %v10578
        %v10794 = vpop.f32.mrb[0].mxu0
        %v10795 = vadd.f32 %v10497, %v10794
        %v10796 = vpop.f32.mrb[0].mxu0
        %10797 = vmatprep.mubr.f32.mxu0 0.0
        %10798 = vmatmul.mubr.f32.gmra.mrb[0].mxu0 %v10581
        %v10799 = vpop.f32.mrb[0].mxu0
        %v10800 = vadd.f32 %v10497, %v10799
        %v10801 = vpop.f32.mrb[0].mxu0
        %10802 = vmatprep.mubr.f32.mxu0 0.0
        %10803 = vmatmul.mubr.f32.gmra.mrb[0].mxu0 %v10584
        %v10804 = vpop.f32.mrb[0].mxu0
        %v10805 = vadd.f32 %v10497, %v10804
        %v10806 = vpop.f32.mrb[0].mxu0
        %10807 = vmatprep.mubr.f32.mxu0 0.0
        %10808 = vmatmul.mubr.f32.gmra.mrb[0].mxu0 %v10587
        %v10809 = vpop.f32.mrb[0].mxu0
        %v10810 = vadd.f32 %v10497, %v10809
        %v10811 = vpop.f32.mrb[0].mxu0
        %10812 = vmatprep.mubr.f32.mxu0 0.0
        %10813 = vmatmul.mubr.f32.gmra.mrb[0].mxu0 %v10590
        %v10814 = vpop.f32.mrb[0].mxu0
        %v10815 = vadd.f32 %v10497, %v10814
        %v10816 = vpop.f32.mrb[0].mxu0
        %10817 = vmatprep.mubr.f32.mxu0 0.0
        %10818 = vmatmul.mubr.f32.gmra.mrb[0].mxu0 %v10593
        %v10819 = vpop.f32.mrb[0].mxu0
        %v10820 = vadd.f32 %v10497, %v10819
        %v10821 = vpop.f32.mrb[0].mxu0
        %10822 = vdwg.mxu0
        %v10823 = vmax.f32 %v10665, 0.0
        %v10824 = vmax.f32 %v10670, 0.0
        %v10825 = vmax.f32 %v10675, 0.0
        %v10826 = vmax.f32 %v10680, 0.0
        %v10827 = vmax.f32 %v10685, 0.0
        %v10828 = vmax.f32 %v10690, 0.0
        %v10829 = vmax.f32 %v10695, 0.0
        %v10830 = vmax.f32 %v10700, 0.0
        %v10831 = vmax.f32 %v10705, 0.0
        %v10832 = vmax.f32 %v10710, 0.0
        %v10833 = vmax.f32 %v10715, 0.0
        %v10834 = vmax.f32 %v10720, 0.0
        %v10835 = vmax.f32 %v10725, 0.0
        %v10836 = vmax.f32 %v10730, 0.0
        %v10837 = vmax.f32 %v10735, 0.0
        %v10838 = vmax.f32 %v10740, 0.0
        %v10839 = vmax.f32 %v10745, 0.0
        %v10840 = vmax.f32 %v10750, 0.0
        %v10841 = vmax.f32 %v10755, 0.0
        %v10842 = vmax.f32 %v10760, 0.0
        %v10843 = vmax.f32 %v10765, 0.0
        %v10844 = vmax.f32 %v10770, 0.0
        %v10845 = vmax.f32 %v10775, 0.0
        %v10846 = vmax.f32 %v10780, 0.0
        %v10847 = vmax.f32 %v10785, 0.0
        %v10848 = vmax.f32 %v10790, 0.0
        %v10849 = vmax.f32 %v10795, 0.0
        %v10850 = vmax.f32 %v10800, 0.0
        %v10851 = vmax.f32 %v10805, 0.0
        %v10852 = vmax.f32 %v10810, 0.0
        %v10853 = vmax.f32 %v10815, 0.0
        %v10854 = vmax.f32 %v10820, 0.0
        %10887 = vrot.lane.b32.xlu0 %v3521, 8
        %v10888 = vpop.permute.xlu0 %10887
        %10889 = vrot.lane.b32.xlu0 %v3522, 8
        %v10890 = vpop.permute.xlu0 %10889
        %10891 = vrot.lane.b32.xlu0 %v3523, 8
        %v10892 = vpop.permute.xlu0 %10891
        %10893 = vrot.lane.b32.xlu0 %v3524, 8
        %v10894 = vpop.permute.xlu0 %10893
        %10895 = vrot.lane.b32.xlu0 %v3525, 8
        %v10896 = vpop.permute.xlu0 %10895
        %10897 = vrot.lane.b32.xlu0 %v3526, 8
        %v10898 = vpop.permute.xlu0 %10897
        %10899 = vrot.lane.b32.xlu0 %v3527, 8
        %v10900 = vpop.permute.xlu0 %10899
        %10901 = vrot.lane.b32.xlu0 %v3528, 8
        %v10902 = vpop.permute.xlu0 %10901
        %10903 = vrot.lane.b32.xlu0 %v3529, 8
        %v10904 = vpop.permute.xlu0 %10903
        %10905 = vrot.lane.b32.xlu0 %v3530, 8
        %v10906 = vpop.permute.xlu0 %10905
        %10907 = vrot.lane.b32.xlu0 %v3531, 8
        %v10908 = vpop.permute.xlu0 %10907
        %10909 = vrot.lane.b32.xlu0 %v3532, 8
        %v10910 = vpop.permute.xlu0 %10909
        %10911 = vrot.lane.b32.xlu0 %v3533, 8
        %v10912 = vpop.permute.xlu0 %10911
        %10913 = vrot.lane.b32.xlu0 %v3534, 8
        %v10914 = vpop.permute.xlu0 %10913
        %10915 = vrot.lane.b32.xlu0 %v3535, 8
        %v10916 = vpop.permute.xlu0 %10915
        %10917 = vrot.lane.b32.xlu0 %v3536, 8
        %v10918 = vpop.permute.xlu0 %10917
        %10919 = vrot.lane.b32.xlu0 %v3537, 8
        %v10920 = vpop.permute.xlu0 %10919
        %10921 = vrot.lane.b32.xlu0 %v3538, 8
        %v10922 = vpop.permute.xlu0 %10921
        %10923 = vrot.lane.b32.xlu0 %v3539, 8
        %v10924 = vpop.permute.xlu0 %10923
        %10925 = vrot.lane.b32.xlu0 %v3540, 8
        %v10926 = vpop.permute.xlu0 %10925
        %10927 = vrot.lane.b32.xlu0 %v3541, 8
        %v10928 = vpop.permute.xlu0 %10927
        %10929 = vrot.lane.b32.xlu0 %v3542, 8
        %v10930 = vpop.permute.xlu0 %10929
        %10931 = vrot.lane.b32.xlu0 %v3543, 8
        %v10932 = vpop.permute.xlu0 %10931
        %10933 = vrot.lane.b32.xlu0 %v3544, 8
        %v10934 = vpop.permute.xlu0 %10933
        %10935 = vrot.lane.b32.xlu0 %v3545, 8
        %v10936 = vpop.permute.xlu0 %10935
        %10937 = vrot.lane.b32.xlu0 %v3546, 8
        %v10938 = vpop.permute.xlu0 %10937
        %10939 = vrot.lane.b32.xlu0 %v3547, 8
        %v10940 = vpop.permute.xlu0 %10939
        %10941 = vrot.lane.b32.xlu0 %v3548, 8
        %v10942 = vpop.permute.xlu0 %10941
        %10943 = vrot.lane.b32.xlu0 %v3549, 8
        %v10944 = vpop.permute.xlu0 %10943
        %10945 = vrot.lane.b32.xlu0 %v3550, 8
        %v10946 = vpop.permute.xlu0 %10945
        %10947 = vrot.lane.b32.xlu0 %v3551, 8
        %v10948 = vpop.permute.xlu0 %10947
        %10949 = vrot.lane.b32.xlu0 %v3552, 8
        %v10950 = vpop.permute.xlu0 %10949
        %11015 = vrot.lane.b32.xlu0 %v10144, 16
        %v11016 = vpop.permute.xlu0 %11015
        %11017 = vrot.lane.b32.xlu0 %v10145, 16
        %v11018 = vpop.permute.xlu0 %11017
        %11019 = vrot.lane.b32.xlu0 %v10146, 16
        %v11020 = vpop.permute.xlu0 %11019
        %11021 = vrot.lane.b32.xlu0 %v10147, 16
        %v11022 = vpop.permute.xlu0 %11021
        %11023 = vrot.lane.b32.xlu0 %v10148, 16
        %v11024 = vpop.permute.xlu0 %11023
        %11025 = vrot.lane.b32.xlu0 %v10149, 16
        %v11026 = vpop.permute.xlu0 %11025
        %11027 = vrot.lane.b32.xlu0 %v10150, 16
        %v11028 = vpop.permute.xlu0 %11027
        %11029 = vrot.lane.b32.xlu0 %v10151, 16
        %v11030 = vpop.permute.xlu0 %11029
        %11031 = vrot.lane.b32.xlu0 %v10152, 16
        %v11032 = vpop.permute.xlu0 %11031
        %11033 = vrot.lane.b32.xlu0 %v10153, 16
        %v11034 = vpop.permute.xlu0 %11033
        %11035 = vrot.lane.b32.xlu0 %v10154, 16
        %v11036 = vpop.permute.xlu0 %11035
        %11037 = vrot.lane.b32.xlu0 %v10155, 16
        %v11038 = vpop.permute.xlu0 %11037
        %11039 = vrot.lane.b32.xlu0 %v10156, 16
        %v11040 = vpop.permute.xlu0 %11039
        %11041 = vrot.lane.b32.xlu0 %v10157, 16
        %v11042 = vpop.permute.xlu0 %11041
        %11043 = vrot.lane.b32.xlu0 %v10158, 16
        %v11044 = vpop.permute.xlu0 %11043
        %11045 = vrot.lane.b32.xlu0 %v10159, 16
        %v11046 = vpop.permute.xlu0 %11045
        %11047 = vrot.lane.b32.xlu0 %v10160, 16
        %v11048 = vpop.permute.xlu0 %11047
        %11049 = vrot.lane.b32.xlu0 %v10161, 16
        %v11050 = vpop.permute.xlu0 %11049
        %11051 = vrot.lane.b32.xlu0 %v10162, 16
        %v11052 = vpop.permute.xlu0 %11051
        %11053 = vrot.lane.b32.xlu0 %v10163, 16
        %v11054 = vpop.permute.xlu0 %11053
        %11055 = vrot.lane.b32.xlu0 %v10164, 16
        %v11056 = vpop.permute.xlu0 %11055
        %11057 = vrot.lane.b32.xlu0 %v10165, 16
        %v11058 = vpop.permute.xlu0 %11057
        %11059 = vrot.lane.b32.xlu0 %v10166, 16
        %v11060 = vpop.permute.xlu0 %11059
        %11061 = vrot.lane.b32.xlu0 %v10167, 16
        %v11062 = vpop.permute.xlu0 %11061
        %11063 = vrot.lane.b32.xlu0 %v10168, 16
        %v11064 = vpop.permute.xlu0 %11063
        %11065 = vrot.lane.b32.xlu0 %v10169, 16
        %v11066 = vpop.permute.xlu0 %11065
        %11067 = vrot.lane.b32.xlu0 %v10170, 16
        %v11068 = vpop.permute.xlu0 %11067
        %11069 = vrot.lane.b32.xlu0 %v10171, 16
        %v11070 = vpop.permute.xlu0 %11069
        %11071 = vrot.lane.b32.xlu0 %v10172, 16
        %v11072 = vpop.permute.xlu0 %11071
        %11073 = vrot.lane.b32.xlu0 %v10173, 16
        %v11074 = vpop.permute.xlu0 %11073
        %11075 = vrot.lane.b32.xlu0 %v10174, 16
        %v11076 = vpop.permute.xlu0 %11075
        %11077 = vrot.lane.b32.xlu0 %v10175, 16
        %v11078 = vpop.permute.xlu0 %11077
        %11143 = vrot.lane.b32.xlu0 %v10823, 24
        %v11144 = vpop.permute.xlu0 %11143
        %11145 = vrot.lane.b32.xlu0 %v10824, 24
        %v11146 = vpop.permute.xlu0 %11145
        %11147 = vrot.lane.b32.xlu0 %v10825, 24
        %v11148 = vpop.permute.xlu0 %11147
        %11149 = vrot.lane.b32.xlu0 %v10826, 24
        %v11150 = vpop.permute.xlu0 %11149
        %11151 = vrot.lane.b32.xlu0 %v10827, 24
        %v11152 = vpop.permute.xlu0 %11151
        %11153 = vrot.lane.b32.xlu0 %v10828, 24
        %v11154 = vpop.permute.xlu0 %11153
        %11155 = vrot.lane.b32.xlu0 %v10829, 24
        %v11156 = vpop.permute.xlu0 %11155
        %11157 = vrot.lane.b32.xlu0 %v10830, 24
        %v11158 = vpop.permute.xlu0 %11157
        %11159 = vrot.lane.b32.xlu0 %v10831, 24
        %v11160 = vpop.permute.xlu0 %11159
        %11161 = vrot.lane.b32.xlu0 %v10832, 24
        %v11162 = vpop.permute.xlu0 %11161
        %11163 = vrot.lane.b32.xlu0 %v10833, 24
        %v11164 = vpop.permute.xlu0 %11163
        %11165 = vrot.lane.b32.xlu0 %v10834, 24
        %v11166 = vpop.permute.xlu0 %11165
        %11167 = vrot.lane.b32.xlu0 %v10835, 24
        %v11168 = vpop.permute.xlu0 %11167
        %11169 = vrot.lane.b32.xlu0 %v10836, 24
        %v11170 = vpop.permute.xlu0 %11169
        %11171 = vrot.lane.b32.xlu0 %v10837, 24
        %v11172 = vpop.permute.xlu0 %11171
        %11173 = vrot.lane.b32.xlu0 %v10838, 24
        %v11174 = vpop.permute.xlu0 %11173
        %11175 = vrot.lane.b32.xlu0 %v10839, 24
        %v11176 = vpop.permute.xlu0 %11175
        %11177 = vrot.lane.b32.xlu0 %v10840, 24
        %v11178 = vpop.permute.xlu0 %11177
        %11179 = vrot.lane.b32.xlu0 %v10841, 24
        %v11180 = vpop.permute.xlu0 %11179
        %11181 = vrot.lane.b32.xlu0 %v10842, 24
        %v11182 = vpop.permute.xlu0 %11181
        %11183 = vrot.lane.b32.xlu0 %v10843, 24
        %v11184 = vpop.permute.xlu0 %11183
        %11185 = vrot.lane.b32.xlu0 %v10844, 24
        %v11186 = vpop.permute.xlu0 %11185
        %11187 = vrot.lane.b32.xlu0 %v10845, 24
        %v11188 = vpop.permute.xlu0 %11187
        %11189 = vrot.lane.b32.xlu0 %v10846, 24
        %v11190 = vpop.permute.xlu0 %11189
        %11191 = vrot.lane.b32.xlu0 %v10847, 24
        %v11192 = vpop.permute.xlu0 %11191
        %11193 = vrot.lane.b32.xlu0 %v10848, 24
        %v11194 = vpop.permute.xlu0 %11193
        %11195 = vrot.lane.b32.xlu0 %v10849, 24
        %v11196 = vpop.permute.xlu0 %11195
        %11197 = vrot.lane.b32.xlu0 %v10850, 24
        %v11198 = vpop.permute.xlu0 %11197
        %11199 = vrot.lane.b32.xlu0 %v10851, 24
        %v11200 = vpop.permute.xlu0 %11199
        %11201 = vrot.lane.b32.xlu0 %v10852, 24
        %v11202 = vpop.permute.xlu0 %11201
        %11203 = vrot.lane.b32.xlu0 %v10853, 24
        %v11204 = vpop.permute.xlu0 %11203
        %11205 = vrot.lane.b32.xlu0 %v10854, 24
        %v11206 = vpop.permute.xlu0 %11205
        %v11239 = vsel %vm1413, %v697, %v10888
        %v11240 = vsel %vm1413, %v698, %v10890
        %v11241 = vsel %vm1413, %v699, %v10892
        %v11242 = vsel %vm1413, %v700, %v10894
        %v11243 = vsel %vm1413, %v701, %v10896
        %v11244 = vsel %vm1413, %v702, %v10898
        %v11245 = vsel %vm1413, %v703, %v10900
        %v11246 = vsel %vm1413, %v704, %v10902
        %v11247 = vsel %vm1413, %v705, %v10904
        %v11248 = vsel %vm1413, %v706, %v10906
        %v11249 = vsel %vm1413, %v707, %v10908
        %v11250 = vsel %vm1413, %v708, %v10910
        %v11251 = vsel %vm1413, %v709, %v10912
        %v11252 = vsel %vm1413, %v710, %v10914
        %v11253 = vsel %vm1413, %v711, %v10916
        %v11254 = vsel %vm1413, %v712, %v10918
        %v11255 = vsel %vm1413, %v713, %v10920
        %v11256 = vsel %vm1413, %v714, %v10922
        %v11257 = vsel %vm1413, %v715, %v10924
        %v11258 = vsel %vm1413, %v716, %v10926
        %v11259 = vsel %vm1413, %v717, %v10928
        %v11260 = vsel %vm1413, %v718, %v10930
        %v11261 = vsel %vm1413, %v719, %v10932
        %v11262 = vsel %vm1413, %v720, %v10934
        %v11263 = vsel %vm1413, %v721, %v10936
        %v11264 = vsel %vm1413, %v722, %v10938
        %v11265 = vsel %vm1413, %v723, %v10940
        %v11266 = vsel %vm1413, %v724, %v10942
        %v11267 = vsel %vm1413, %v725, %v10944
        %v11268 = vsel %vm1413, %v726, %v10946
        %v11269 = vsel %vm1413, %v727, %v10948
        %v11270 = vsel %vm1413, %v728, %v10950
        %v11271 = vsel %vm4625, %v11239, %v11016
        %v11272 = vsel %vm4625, %v11240, %v11018
        %v11273 = vsel %vm4625, %v11241, %v11020
        %v11274 = vsel %vm4625, %v11242, %v11022
        %v11275 = vsel %vm4625, %v11243, %v11024
        %v11276 = vsel %vm4625, %v11244, %v11026
        %v11277 = vsel %vm4625, %v11245, %v11028
        %v11278 = vsel %vm4625, %v11246, %v11030
        %v11279 = vsel %vm4625, %v11247, %v11032
        %v11280 = vsel %vm4625, %v11248, %v11034
        %v11281 = vsel %vm4625, %v11249, %v11036
        %v11282 = vsel %vm4625, %v11250, %v11038
        %v11283 = vsel %vm4625, %v11251, %v11040
        %v11284 = vsel %vm4625, %v11252, %v11042
        %v11285 = vsel %vm4625, %v11253, %v11044
        %v11286 = vsel %vm4625, %v11254, %v11046
        %v11287 = vsel %vm4625, %v11255, %v11048
        %v11288 = vsel %vm4625, %v11256, %v11050
        %v11289 = vsel %vm4625, %v11257, %v11052
        %v11290 = vsel %vm4625, %v11258, %v11054
        %v11291 = vsel %vm4625, %v11259, %v11056
        %v11292 = vsel %vm4625, %v11260, %v11058
        %v11293 = vsel %vm4625, %v11261, %v11060
        %v11294 = vsel %vm4625, %v11262, %v11062
        %v11295 = vsel %vm4625, %v11263, %v11064
        %v11296 = vsel %vm4625, %v11264, %v11066
        %v11297 = vsel %vm4625, %v11265, %v11068
        %v11298 = vsel %vm4625, %v11266, %v11070
        %v11299 = vsel %vm4625, %v11267, %v11072
        %v11300 = vsel %vm4625, %v11268, %v11074
        %v11301 = vsel %vm4625, %v11269, %v11076
        %v11302 = vsel %vm4625, %v11270, %v11078
        %vm11303 = vcmask 195584
        %v11304 = vsel %vm11303, %v11271, %v11144
        %v11305 = vsel %vm11303, %v11272, %v11146
        %v11306 = vsel %vm11303, %v11273, %v11148
        %v11307 = vsel %vm11303, %v11274, %v11150
        %v11308 = vsel %vm11303, %v11275, %v11152
        %v11309 = vsel %vm11303, %v11276, %v11154
        %v11310 = vsel %vm11303, %v11277, %v11156
        %v11311 = vsel %vm11303, %v11278, %v11158
        %v11312 = vsel %vm11303, %v11279, %v11160
        %v11313 = vsel %vm11303, %v11280, %v11162
        %v11314 = vsel %vm11303, %v11281, %v11164
        %v11315 = vsel %vm11303, %v11282, %v11166
        %v11316 = vsel %vm11303, %v11283, %v11168
        %v11317 = vsel %vm11303, %v11284, %v11170
        %v11318 = vsel %vm11303, %v11285, %v11172
        %v11319 = vsel %vm11303, %v11286, %v11174
        %v11320 = vsel %vm11303, %v11287, %v11176
        %v11321 = vsel %vm11303, %v11288, %v11178
        %v11322 = vsel %vm11303, %v11289, %v11180
        %v11323 = vsel %vm11303, %v11290, %v11182
        %v11324 = vsel %vm11303, %v11291, %v11184
        %v11325 = vsel %vm11303, %v11292, %v11186
        %v11326 = vsel %vm11303, %v11293, %v11188
        %v11327 = vsel %vm11303, %v11294, %v11190
        %v11328 = vsel %vm11303, %v11295, %v11192
        %v11329 = vsel %vm11303, %v11296, %v11194
        %v11330 = vsel %vm11303, %v11297, %v11196
        %v11331 = vsel %vm11303, %v11298, %v11198
        %v11332 = vsel %vm11303, %v11299, %v11200
        %v11333 = vsel %vm11303, %v11300, %v11202
        %v11334 = vsel %vm11303, %v11301, %v11204
        %v11335 = vsel %vm11303, %v11302, %v11206
        %vm11336 = vcmask 261120
        %11337 = vst.msk [vmem:[%s325] sm:$0xff] %vm11336, %v11304
        %11338 = vst.msk [vmem:[%s325 + $0x8] sm:$0xff] %vm11336, %v11305
        %11339 = vst.msk [vmem:[%s325 + $0x10] sm:$0xff] %vm11336, %v11306
        %11340 = vst.msk [vmem:[%s325 + $0x18] sm:$0xff] %vm11336, %v11307
        %11341 = vst.msk [vmem:[%s325 + $0x20] sm:$0xff] %vm11336, %v11308
        %11342 = vst.msk [vmem:[%s325 + $0x28] sm:$0xff] %vm11336, %v11309
        %11343 = vst.msk [vmem:[%s325 + $0x30] sm:$0xff] %vm11336, %v11310
        %11344 = vst.msk [vmem:[%s325 + $0x38] sm:$0xff] %vm11336, %v11311
        %11345 = vst.msk [vmem:[%s325 + $0x40] sm:$0xff] %vm11336, %v11312
        %11346 = vst.msk [vmem:[%s325 + $0x48] sm:$0xff] %vm11336, %v11313
        %11347 = vst.msk [vmem:[%s325 + $0x50] sm:$0xff] %vm11336, %v11314
        %11348 = vst.msk [vmem:[%s325 + $0x58] sm:$0xff] %vm11336, %v11315
        %11349 = vst.msk [vmem:[%s325 + $0x60] sm:$0xff] %vm11336, %v11316
        %11350 = vst.msk [vmem:[%s325 + $0x68] sm:$0xff] %vm11336, %v11317
        %11351 = vst.msk [vmem:[%s325 + $0x70] sm:$0xff] %vm11336, %v11318
        %11352 = vst.msk [vmem:[%s325 + $0x78] sm:$0xff] %vm11336, %v11319
        %11353 = vst.msk [vmem:[%s325 + $0x80] sm:$0xff] %vm11336, %v11320
        %11354 = vst.msk [vmem:[%s325 + $0x88] sm:$0xff] %vm11336, %v11321
        %11355 = vst.msk [vmem:[%s325 + $0x90] sm:$0xff] %vm11336, %v11322
        %11356 = vst.msk [vmem:[%s325 + $0x98] sm:$0xff] %vm11336, %v11323
        %11357 = vst.msk [vmem:[%s325 + $0xa0] sm:$0xff] %vm11336, %v11324
        %11358 = vst.msk [vmem:[%s325 + $0xa8] sm:$0xff] %vm11336, %v11325
        %11359 = vst.msk [vmem:[%s325 + $0xb0] sm:$0xff] %vm11336, %v11326
        %11360 = vst.msk [vmem:[%s325 + $0xb8] sm:$0xff] %vm11336, %v11327
        %11361 = vst.msk [vmem:[%s325 + $0xc0] sm:$0xff] %vm11336, %v11328
        %11362 = vst.msk [vmem:[%s325 + $0xc8] sm:$0xff] %vm11336, %v11329
        %11363 = vst.msk [vmem:[%s325 + $0xd0] sm:$0xff] %vm11336, %v11330
        %11364 = vst.msk [vmem:[%s325 + $0xd8] sm:$0xff] %vm11336, %v11331
        %11365 = vst.msk [vmem:[%s325 + $0xe0] sm:$0xff] %vm11336, %v11332
        %11366 = vst.msk [vmem:[%s325 + $0xe8] sm:$0xff] %vm11336, %v11333
        %11367 = vst.msk [vmem:[%s325 + $0xf0] sm:$0xff] %vm11336, %v11334
        %11368 = vst.msk [vmem:[%s325 + $0xf8] sm:$0xff] %vm11336, %v11335
        %s11369 = sand.u32 %s225, 1
        %s11370 = scalar_lea.sflag [#allocation5], %s11369
        %s11371 = sand.u32 %s225, 1
        %s11372 = smul.addr %s11371, 256
        %s11373 = scalar_lea.vmem [#allocation4], %s11372
        // Predicated region
        $region57: #{inception_forward.1} parent=55 // pred_check
          %p11374 = pneg %p235
        $region58: #{inception_forward.1} parent=55 // pred_check_branch
          %11376 = sbr.rel (%p11374) target = $region60
        $region59: #{inception_forward.1} parent=55 // pred_region
          %s11378 = ssub.s32 4096, 4096
          %11379 = vsyncadd %s11370, %s11378
          %s11380 = smul.addr %s23, 32
          %s11381 = smul.addr %s11380, 128
          %s11382 = scalar_lea.hbm %s9, %s11381
          %s11383 = sshll.u32 %s11373, 4
          %s11384 = int_to_ptr.vmem [resolvable:$true] %s11383
          %11389 = dma.vmem_to_hbm [thread:$0]  %s11384, 4096, %s11382, %s11370, 128, 128, 8
        $region60: #{inception_forward.1} parent=55 // pred_fallthru
          _
      $region56: #{inception_forward.1} parent=5 // pred_fallthru
        _
      %p11390 = scmp.le.s32.totalorder 2, %s18
      // Predicated region
      $region61: #{inception_forward.1} parent=5 // pred_check
        %p11391 = pneg %p11390
      $region62: #{inception_forward.1} parent=5 // pred_check_branch
        %11393 = sbr.rel (%p11391) target = $region64
      $region63: #{inception_forward.1} parent=5 // pred_region
        %s11394 = ssub.s32 %s18, 2
        // Predicated region
        $region65: #{inception_forward.1} parent=63 // pred_check
          %p11395 = pneg %p241
        $region66: #{inception_forward.1} parent=63 // pred_check_branch
          %11397 = sbr.rel (%p11395) target = $region68
        $region67: #{inception_forward.1} parent=63 // pred_region
          %s11398 = sand.u32 %s226, 1
          %s11399 = scalar_lea.sflag [#allocation5], %s11398
          %s11400 = sand.u32 %s226, 1
          %s11401 = smul.addr %s11400, 256
          %s11402 = scalar_lea.vmem [#allocation4], %s11401
          %11403 = dma.done %s11399, 4096
        $region68: #{inception_forward.1} parent=63 // pred_fallthru
          _
      $region64: #{inception_forward.1} parent=5 // pred_fallthru
        _
    $region6: #{inception_forward.1} parent=1 // loop_footer
      %s22 = sadd.s32 1, %s18
    $region7: #{inception_forward.1} parent=1 // loop_footer_branch
      %17 = sbr.rel target = $region3
    $region8: #{inception_forward.1} parent=1 // loop_exit
      _
    %11404 = vsyncpa [#allocation5], 1
    %s11405 = scalar_lea.sflag [#allocation5], 1
    %11406 = vsyncpa %s11405, 1

</llo_original>
